<compile_context>
chip_gen: v7x
topology: tpu7x:2x2x1
jax: 0.10.0
libtpu: 0.0.40
codegen_flags: <defaults>
</compile_context>

<pallas_src>
import functools
import math

import numpy as np
import jax
import jax.numpy as jnp
from jax import lax
from jax.experimental import pallas as pl
from jax.experimental.pallas import tpu as pltpu

LN_EPS = 1e-5                 # torch.nn.LayerNorm default
MASK_NEG = -1e9               # finite stand-in for -inf (exp underflows to 0)
MXU_DTYPE = jnp.bfloat16      # matmul operand dtype (f32 accumulation)


# ------------------------------ fused kernel --------------------------------

def swin_block_kernel(x_ref, mask_ref, rel_ref,
                      ln1g_ref, ln1b_ref, wqkv_ref, bqkv_ref,
                      wproj_ref, bproj_ref,
                      ln2g_ref, ln2b_ref, w1_ref, b1_ref, w2_ref, b2_ref,
                      o_ref, *, n_heads, head_dim):
    """One Swin Block on one (p, p, C) window tile, fully fused.

    x_ref    : (p, p, C)  window read directly from the (rolled) NHWC slab
    mask_ref : (pp, pp)   additive shift-window mask (0 / -1e9)
    rel_ref  : (nh, pp, pp) relative-position bias
    o_ref    : (p, p, C)  x + MSA + MLP (both residuals applied)
    """
    p1, p2, c = x_ref.shape
    pp = p1 * p2
    cdt = wqkv_ref.dtype                              # MXU operand dtype

    x = x_ref[...].reshape(pp, c)                     # window tokens, f32

    # ---- LN1 (f32 statistics) ----
    mu = jnp.mean(x, axis=-1, keepdims=True)
    var = jnp.mean((x - mu) ** 2, axis=-1, keepdims=True)
    xn = (x - mu) * lax.rsqrt(var + LN_EPS) * ln1g_ref[...] + ln1b_ref[...]

    # ---- QKV projection (bf16 MXU operands, f32 accumulation) ----
    # NB: the 1/sqrt(head_dim) scale is already folded into the q columns.
    qkv = jnp.dot(xn.astype(cdt), wqkv_ref[...],
                  preferred_element_type=jnp.float32) + bqkv_ref[...]   # (pp, 3C)

    rel = rel_ref[...]                                # (nh, pp, pp) f32
    mask = mask_ref[...]                              # (pp, pp) f32 additive

    # ---- per-head windowed attention (static loop, n_heads small) ----
    heads = []
    for h in range(n_heads):
        q = qkv[:, h * head_dim:(h + 1) * head_dim]                       # (pp, hd)
        k = qkv[:, (n_heads + h) * head_dim:(n_heads + h + 1) * head_dim]
        v = qkv[:, (2 * n_heads + h) * head_dim:(2 * n_heads + h + 1) * head_dim]

        sim = jnp.einsum('pd,qd->pq', q.astype(cdt), k.astype(cdt),
                         preferred_element_type=jnp.float32)              # (pp, pp)
        sim = sim + rel[h] + mask                                         # f32

        m = jnp.max(sim, axis=-1, keepdims=True)
        e = jnp.exp(sim - m)
        probs = e / jnp.sum(e, axis=-1, keepdims=True)                    # exact softmax

        heads.append(jnp.dot(probs.astype(cdt), v.astype(cdt),
                             preferred_element_type=jnp.float32))         # (pp, hd)

    attn = jnp.concatenate(heads, axis=-1)                                # (pp, C)
    proj = jnp.dot(attn.astype(cdt), wproj_ref[...],
                   preferred_element_type=jnp.float32) + bproj_ref[...]   # single K=C proj
    y = x + proj                                                          # residual 1

    # ---- LN2 + MLP (fused into the same VMEM-resident pass) ----
    mu2 = jnp.mean(y, axis=-1, keepdims=True)
    var2 = jnp.mean((y - mu2) ** 2, axis=-1, keepdims=True)
    yn = (y - mu2) * lax.rsqrt(var2 + LN_EPS) * ln2g_ref[...] + ln2b_ref[...]

    hid = jnp.dot(yn.astype(cdt), w1_ref[...],
                  preferred_element_type=jnp.float32) + b1_ref[...]       # (pp, 4C)
    # exact (erf-based) GELU, matching torch.nn.GELU default, f32
    hid = 0.5 * hid * (1.0 + lax.erf(hid * (1.0 / math.sqrt(2.0))))
    mlp = jnp.dot(hid.astype(cdt), w2_ref[...],
                  preferred_element_type=jnp.float32) + b2_ref[...]       # (pp, C)

    o_ref[...] = (y + mlp).reshape(p1, p2, c)                             # residual 2


# ------------------------------ pallas wrapper -------------------------------

def swin_block_apply(x, kp, *, window_size, head_dim):
    """One fused Swin Block on an NHWC slab (already cyclically shifted for SW)."""
    B, H, W, C = x.shape
    p = window_size
    assert H % p == 0 and W % p == 0, "spatial dims must be divisible by window_size"
    if p % 8 != 0 and p != W:
        # TODO(synk): XLA window-partition fallback for small / unaligned windows.
        raise ValueError("window_size must be a multiple of 8 (sublane alignment)")
    hw, ww = H // p, W // p
    pp = p * p
    nh = C // head_dim
    C3 = kp['w_qkv'].shape[1]
    Ch = kp['w1'].shape[1]

    if kp['mask'].shape[0] == 1:            # 'W' block: single all-zero mask tile
        mask_map = lambda b, i, j: (0, 0, 0, 0)
    else:                                   # 'SW' block: mask depends on window pos
        mask_map = lambda b, i, j: (i, j, 0, 0)
    cmap = lambda b, i, j: (0, 0)           # replicated weights / biases
    cmap3 = lambda b, i, j: (0, 0, 0)

    kern = functools.partial(swin_block_kernel, n_heads=nh, head_dim=head_dim)
    return pl.pallas_call(
        kern,
        out_shape=jax.ShapeDtypeStruct(x.shape, x.dtype),
        grid=(B, hw, ww),
        in_specs=[
            pl.BlockSpec((None, p, p, C), lambda b, i, j: (b, i, j, 0)),  # x window
            pl.BlockSpec((None, None, pp, pp), mask_map),                 # shift mask
            pl.BlockSpec((nh, pp, pp), cmap3),                            # rel-pos bias
            pl.BlockSpec((1, C), cmap), pl.BlockSpec((1, C), cmap),       # ln1 g, b
            pl.BlockSpec((C, C3), cmap), pl.BlockSpec((1, C3), cmap),     # w_qkv, b_qkv
            pl.BlockSpec((C, C), cmap), pl.BlockSpec((1, C), cmap),       # w_proj, b
            pl.BlockSpec((1, C), cmap), pl.BlockSpec((1, C), cmap),       # ln2 g, b
            pl.BlockSpec((C, Ch), cmap), pl.BlockSpec((1, Ch), cmap),     # w1, b1
            pl.BlockSpec((Ch, C), cmap), pl.BlockSpec((1, C), cmap),      # w2, b2
        ],
        out_specs=pl.BlockSpec((None, p, p, C), lambda b, i, j: (b, i, j, 0)),
        compiler_params=pltpu.CompilerParams(
            dimension_semantics=("parallel", "parallel", "parallel"),
            vmem_limit_bytes=32 * 1024 * 1024),
    )(x, kp['mask'], kp['rel'],
      kp['ln1_g'], kp['ln1_b'], kp['w_qkv'], kp['b_qkv'],
      kp['w_proj'], kp['b_proj'],
      kp['ln2_g'], kp['ln2_b'], kp['w1'], kp['b1'], kp['w2'], kp['b2'])


# ------------------- bias / mask / parameter preparation ---------------------

def relative_embedding(rel_pos, p):
    # rel_pos: (n_heads, 2p-1, 2p-1) -> (n_heads, p*p, p*p); matches the reference.
    cord = np.array([[i, j] for i in range(p) for j in range(p)])
    relation = cord[:, None, :] - cord[None, :, :] + p - 1
    return rel_pos[:, relation[:, :, 0], relation[:, :, 1]]


def shift_window_mask(hw, ww, p, shift):
    # boolean shift-window mask -> additive float mask (0 / -1e9), (nw, pp, pp)
    m = np.zeros((hw, ww, p, p, p, p), dtype=bool)
    s = p - shift
    m[-1, :, :s, :, s:, :] = True
    m[-1, :, s:, :, :s, :] = True
    m[:, -1, :, :s, :, s:] = True
    m[:, -1, :, s:, :, :s] = True
    m = m.reshape(hw * ww, p * p, p * p)
    return np.where(m, MASK_NEG, 0.0).astype(np.float32)


def prepare_block_params(raw, *, window_size, head_dim, hw, ww, wtype,
                         mxu_dtype=MXU_DTYPE):
    """Kernel-ready parameters: scale folded into q columns, bf16 MXU weights,
    (1, n) biases, precomputed relative bias + additive shift mask."""
    C = raw['ln1_g'].shape[0]
    p = window_size
    pp = p * p
    scale = head_dim ** (-0.5)

    # fold the attention scale into the q columns (one-time weight transform)
    col_scale = np.concatenate([np.full((C,), scale, np.float32),
                                np.ones((2 * C,), np.float32)])
    w_qkv = raw['msa']['w_qkv'] * col_scale[None, :]
    b_qkv = raw['msa']['b_qkv'] * col_scale

    rel = relative_embedding(np.asarray(raw['msa']['rel_pos']), p)  # (nh, pp, pp)
    if wtype == 'W':
        mask = np.zeros((1, 1, pp, pp), np.float32)                 # constant block
    else:
        mask = shift_window_mask(hw, ww, p, p // 2).reshape(hw, ww, pp, pp)

    return {
        'ln1_g': raw['ln1_g'].reshape(1, C), 'ln1_b': raw['ln1_b'].reshape(1, C),
        'w_qkv': jnp.asarray(w_qkv).astype(mxu_dtype),
        'b_qkv': jnp.asarray(b_qkv).reshape(1, 3 * C),
        'rel': jnp.asarray(rel, jnp.float32),
        'mask': jnp.asarray(mask, jnp.float32),
        'w_proj': raw['msa']['w_proj'].astype(mxu_dtype),
        'b_proj': raw['msa']['b_proj'].reshape(1, C),
        'ln2_g': raw['ln2_g'].reshape(1, C), 'ln2_b': raw['ln2_b'].reshape(1, C),
        'w1': raw['w1'].astype(mxu_dtype), 'b1': raw['b1'].reshape(1, 4 * C),
        'w2': raw['w2'].astype(mxu_dtype), 'b2': raw['b2'].reshape(1, C),
    }


def effective_hw(H, W, window_size):
    if W <= window_size or H <= window_size:
        pr = (window_size - H) // 2
        pc = (window_size - W) // 2
        H = H + 2 * pr + 1
        W = W + 2 * pc + 1
    return H, W


# ------------------------------- model forward --------------------------------

def swin_block_forward(x_nchw, prep, *, window_size, head_dim):
    """NCHW in / NCHW out, matching the PyTorch SwinBlock (drop_path = 0)."""
    B, C, H, W = x_nchw.shape
    if W <= window_size or H <= window_size:
        pr = (window_size - H) // 2
        pc = (window_size - W) // 2
        x_nchw = jnp.pad(x_nchw, ((0, 0), (0, 0), (pr, pr + 1), (pc, pc + 1)))
    s = window_size // 2

    x = jnp.transpose(x_nchw, (0, 2, 3, 1))             # b c h w -> b h w c
    # Block 1 ('W'): one fused pallas_call; window partition lives in the index_map.
    x = swin_block_apply(x, prep['block1'], window_size=window_size, head_dim=head_dim)
    # Block 2 ('SW'): cyclic shift is the only remaining XLA glue.
    x = jnp.roll(x, shift=(-s, -s), axis=(1, 2))
    x = swin_block_apply(x, prep['block2'], window_size=window_size, head_dim=head_dim)
    x = jnp.roll(x, shift=(s, s), axis=(1, 2))
    return jnp.transpose(x, (0, 3, 1, 2))               # b h w c -> b c h w


# ------------------------------ parameter init --------------------------------

def _dense(key, cin, cout, std=0.02):
    return jax.random.normal(key, (cin, cout), jnp.float32) * std


def init_block_params(key, C, head_dim, window_size):
    n_heads = C // head_dim
    ks = jax.random.split(key, 5)
    return {
        'ln1_g': jnp.ones((C,), jnp.float32),
        'ln1_b': jnp.zeros((C,), jnp.float32),
        'ln2_g': jnp.ones((C,), jnp.float32),
        'ln2_b': jnp.zeros((C,), jnp.float32),
        'msa': {
            'w_qkv': _dense(ks[0], C, 3 * C),           # (in, out) layout
            'b_qkv': jnp.zeros((3 * C,), jnp.float32),
            'rel_pos': jax.random.normal(
                ks[1], (n_heads, 2 * window_size - 1, 2 * window_size - 1),
                jnp.float32) * 0.02,
            'w_proj': _dense(ks[2], C, C),
            'b_proj': jnp.zeros((C,), jnp.float32),
        },
        'w1': _dense(ks[3], C, 4 * C),
        'b1': jnp.zeros((4 * C,), jnp.float32),
        'w2': _dense(ks[4], 4 * C, C),
        'b2': jnp.zeros((C,), jnp.float32),
    }


def init_params(key, C, head_dim, window_size):
    k1, k2 = jax.random.split(key)
    return {'block1': init_block_params(k1, C, head_dim, window_size),
            'block2': init_block_params(k2, C, head_dim, window_size)}


# ---------------------------------- main ---------------------------------------

if __name__ == "__main__":
    # Swin-B-like stage: C multiple of 128 -> every lane dim (C, 3C, 4C) is
    # 128-aligned (lane-dense loads/stores); window 8 keeps (p, p, C) blocks
    # sublane-aligned so the window partition folds into the BlockSpec.
    B, C, H, W = 2, 128, 16, 16
    head_dim = 32                     # n_heads = 4
    window_size = 8                   # 8x8 windows of 64 tokens

    key = jax.random.PRNGKey(0)
    key, xk, pk = jax.random.split(key, 3)
    x = jax.random.normal(xk, (B, C, H, W), jnp.float32)
    raw = init_params(pk, C, head_dim, window_size)

    Heff, Weff = effective_hw(H, W, window_size)
    hw, ww = Heff // window_size, Weff // window_size
    prep = {
        'block1': prepare_block_params(raw['block1'], window_size=window_size,
                                       head_dim=head_dim, hw=hw, ww=ww, wtype='W'),
        'block2': prepare_block_params(raw['block2'], window_size=window_size,
                                       head_dim=head_dim, hw=hw, ww=ww, wtype='SW'),
    }

    fwd = jax.jit(functools.partial(swin_block_forward,
                                    window_size=window_size, head_dim=head_dim))
    out = fwd(x, prep)
    jax.block_until_ready(out)
    assert out.shape == (B, C, Heff, Weff) and out.dtype == jnp.float32
    assert bool(jnp.all(jnp.isfinite(out)))
    print("KERNEL_OK")
</pallas_src>

<mosaic_0001>
module attributes {stable_mosaic.version = 11 : i64} {
  func.func @swin_block_kernel(%arg0: i32, %arg1: i32, %arg2: i32, %arg3: memref<1x8x8x128xf32, #tpu.memory_space<vmem>>, %arg4: memref<1x1x64x64xf32, #tpu.memory_space<vmem>>, %arg5: memref<4x64x64xf32, #tpu.memory_space<vmem>>, %arg6: memref<1x128xf32, #tpu.memory_space<vmem>>, %arg7: memref<1x128xf32, #tpu.memory_space<vmem>>, %arg8: memref<128x384xbf16, #tpu.memory_space<vmem>>, %arg9: memref<1x384xf32, #tpu.memory_space<vmem>>, %arg10: memref<128x128xbf16, #tpu.memory_space<vmem>>, %arg11: memref<1x128xf32, #tpu.memory_space<vmem>>, %arg12: memref<1x128xf32, #tpu.memory_space<vmem>>, %arg13: memref<1x128xf32, #tpu.memory_space<vmem>>, %arg14: memref<128x512xbf16, #tpu.memory_space<vmem>>, %arg15: memref<1x512xf32, #tpu.memory_space<vmem>>, %arg16: memref<512x128xbf16, #tpu.memory_space<vmem>>, %arg17: memref<1x128xf32, #tpu.memory_space<vmem>>, %arg18: memref<1x8x8x128xf32, #tpu.memory_space<vmem>>) attributes {dimension_semantics = [#tpu.dimension_semantics<parallel>, #tpu.dimension_semantics<parallel>, #tpu.dimension_semantics<parallel>], iteration_bounds = array<i64: 2, 2, 2>, scalar_prefetch = 0 : i64, scratch_operands = 0 : i64, tpu.core_type = #tpu.core_type<tc>, window_params = [{transform_indices = @transform_0, window_bounds = array<i64: 1, 8, 8, 128>}, {pipeline_mode = #tpu.pipeline_mode<synchronous>, transform_indices = @transform_1, window_bounds = array<i64: 1, 1, 64, 64>}, {pipeline_mode = #tpu.pipeline_mode<synchronous>, transform_indices = @transform_2, window_bounds = array<i64: 4, 64, 64>}, {pipeline_mode = #tpu.pipeline_mode<synchronous>, transform_indices = @transform_3, window_bounds = array<i64: 1, 128>}, {pipeline_mode = #tpu.pipeline_mode<synchronous>, transform_indices = @transform_4, window_bounds = array<i64: 1, 128>}, {pipeline_mode = #tpu.pipeline_mode<synchronous>, transform_indices = @transform_5, window_bounds = array<i64: 128, 384>}, {pipeline_mode = #tpu.pipeline_mode<synchronous>, transform_indices = @transform_6, window_bounds = array<i64: 1, 384>}, {pipeline_mode = #tpu.pipeline_mode<synchronous>, transform_indices = @transform_7, window_bounds = array<i64: 128, 128>}, {pipeline_mode = #tpu.pipeline_mode<synchronous>, transform_indices = @transform_8, window_bounds = array<i64: 1, 128>}, {pipeline_mode = #tpu.pipeline_mode<synchronous>, transform_indices = @transform_9, window_bounds = array<i64: 1, 128>}, {pipeline_mode = #tpu.pipeline_mode<synchronous>, transform_indices = @transform_10, window_bounds = array<i64: 1, 128>}, {pipeline_mode = #tpu.pipeline_mode<synchronous>, transform_indices = @transform_11, window_bounds = array<i64: 128, 512>}, {pipeline_mode = #tpu.pipeline_mode<synchronous>, transform_indices = @transform_12, window_bounds = array<i64: 1, 512>}, {pipeline_mode = #tpu.pipeline_mode<synchronous>, transform_indices = @transform_13, window_bounds = array<i64: 512, 128>}, {pipeline_mode = #tpu.pipeline_mode<synchronous>, transform_indices = @transform_14, window_bounds = array<i64: 1, 128>}, {transform_indices = @transform_15, window_bounds = array<i64: 1, 8, 8, 128>}]} {
    %c0 = arith.constant 0 : index
    %c0_0 = arith.constant 0 : index
    %c0_1 = arith.constant 0 : index
    %c0_2 = arith.constant 0 : index
    %0 = vector.load %arg3[%c0, %c0_0, %c0_1, %c0_2] : memref<1x8x8x128xf32, #tpu.memory_space<vmem>>, vector<1x8x8x128xf32>
    %1 = vector.shape_cast %0 : vector<1x8x8x128xf32> to vector<8x8x128xf32>
    %2 = vector.shape_cast %1 : vector<8x8x128xf32> to vector<64x128xf32>
    %cst = arith.constant dense<0.000000e+00> : vector<64xf32>
    %3 = vector.multi_reduction <add>, %2, %cst [1] : vector<64x128xf32> to vector<64xf32>
    %4 = vector.shape_cast %3 : vector<64xf32> to vector<64x1xf32>
    %cst_3 = arith.constant 1.280000e+02 : f32
    %5 = vector.broadcast %cst_3 : f32 to vector<64x1xf32>
    %6 = arith.divf %4, %5 : vector<64x1xf32>
    %7 = vector.broadcast %6 : vector<64x1xf32> to vector<64x128xf32>
    %8 = arith.subf %2, %7 : vector<64x128xf32>
    %9 = arith.mulf %8, %8 : vector<64x128xf32>
    %cst_4 = arith.constant dense<0.000000e+00> : vector<64xf32>
    %10 = vector.multi_reduction <add>, %9, %cst_4 [1] : vector<64x128xf32> to vector<64xf32>
    %11 = vector.shape_cast %10 : vector<64xf32> to vector<64x1xf32>
    %cst_5 = arith.constant 1.280000e+02 : f32
    %12 = vector.broadcast %cst_5 : f32 to vector<64x1xf32>
    %13 = arith.divf %11, %12 : vector<64x1xf32>
    %14 = vector.broadcast %6 : vector<64x1xf32> to vector<64x128xf32>
    %15 = arith.subf %2, %14 : vector<64x128xf32>
    %cst_6 = arith.constant 9.99999974E-6 : f32
    %16 = vector.broadcast %cst_6 : f32 to vector<64x1xf32>
    %17 = arith.addf %13, %16 : vector<64x1xf32>
    %18 = math.rsqrt %17 : vector<64x1xf32>
    %19 = vector.broadcast %18 : vector<64x1xf32> to vector<64x128xf32>
    %20 = arith.mulf %15, %19 : vector<64x128xf32>
    %c0_7 = arith.constant 0 : index
    %c0_8 = arith.constant 0 : index
    %21 = vector.load %arg6[%c0_7, %c0_8] : memref<1x128xf32, #tpu.memory_space<vmem>>, vector<1x128xf32>
    %22 = vector.broadcast %21 : vector<1x128xf32> to vector<64x128xf32>
    %23 = arith.mulf %20, %22 : vector<64x128xf32>
    %c0_9 = arith.constant 0 : index
    %c0_10 = arith.constant 0 : index
    %24 = vector.load %arg7[%c0_9, %c0_10] : memref<1x128xf32, #tpu.memory_space<vmem>>, vector<1x128xf32>
    %25 = vector.broadcast %24 : vector<1x128xf32> to vector<64x128xf32>
    %26 = arith.addf %23, %25 : vector<64x128xf32>
    %27 = arith.truncf %26 : vector<64x128xf32> to vector<64x128xbf16>
    %c0_11 = arith.constant 0 : index
    %c0_12 = arith.constant 0 : index
    %28 = vector.load %arg8[%c0_11, %c0_12] : memref<128x384xbf16, #tpu.memory_space<vmem>>, vector<128x384xbf16>
    %cst_13 = arith.constant dense<0.000000e+00> : vector<64x384xf32>
    %29 = tpu.matmul %27, %28, %cst_13 {dimension_numbers = #tpu.dot_dimension_numbers<[1], [0], [0], [1], [0, 0, 1, 1], [], []>} : vector<64x128xbf16>, vector<128x384xbf16>, vector<64x384xf32> -> vector<64x384xf32>
    %c0_14 = arith.constant 0 : index
    %c0_15 = arith.constant 0 : index
    %30 = vector.load %arg9[%c0_14, %c0_15] : memref<1x384xf32, #tpu.memory_space<vmem>>, vector<1x384xf32>
    %31 = vector.broadcast %30 : vector<1x384xf32> to vector<64x384xf32>
    %32 = arith.addf %29, %31 : vector<64x384xf32>
    %c0_16 = arith.constant 0 : index
    %c0_17 = arith.constant 0 : index
    %c0_18 = arith.constant 0 : index
    %33 = vector.load %arg5[%c0_16, %c0_17, %c0_18] : memref<4x64x64xf32, #tpu.memory_space<vmem>>, vector<4x64x64xf32>
    %c0_19 = arith.constant 0 : index
    %c0_20 = arith.constant 0 : index
    %c0_21 = arith.constant 0 : index
    %c0_22 = arith.constant 0 : index
    %34 = vector.load %arg4[%c0_19, %c0_20, %c0_21, %c0_22] : memref<1x1x64x64xf32, #tpu.memory_space<vmem>>, vector<1x1x64x64xf32>
    %35 = vector.shape_cast %34 : vector<1x1x64x64xf32> to vector<64x64xf32>
    %36 = vector.extract_strided_slice %32 {offsets = [0, 0], sizes = [64, 32], strides = [1, 1]} : vector<64x384xf32> to vector<64x32xf32>
    %37 = vector.extract_strided_slice %32 {offsets = [0, 128], sizes = [64, 32], strides = [1, 1]} : vector<64x384xf32> to vector<64x32xf32>
    %38 = vector.extract_strided_slice %32 {offsets = [0, 256], sizes = [64, 32], strides = [1, 1]} : vector<64x384xf32> to vector<64x32xf32>
    %39 = arith.truncf %36 : vector<64x32xf32> to vector<64x32xbf16>
    %40 = arith.truncf %37 : vector<64x32xf32> to vector<64x32xbf16>
    "tpu.trace_start"() <{level = 10 : i32, message = "pd,qd->pq"}> : () -> ()
    %cst_23 = arith.constant dense<0.000000e+00> : vector<64x64xf32>
    %41 = tpu.matmul %39, %40, %cst_23 {dimension_numbers = #tpu.dot_dimension_numbers<[1], [1], [0], [0], [0, 0, 1, 0], [], []>} : vector<64x32xbf16>, vector<64x32xbf16>, vector<64x64xf32> -> vector<64x64xf32>
    "tpu.trace_stop"() : () -> ()
    %42 = vector.extract_strided_slice %33 {offsets = [0, 0, 0], sizes = [1, 64, 64], strides = [1, 1, 1]} : vector<4x64x64xf32> to vector<1x64x64xf32>
    %43 = vector.shape_cast %42 : vector<1x64x64xf32> to vector<64x64xf32>
    %44 = arith.addf %41, %43 : vector<64x64xf32>
    %45 = arith.addf %44, %35 : vector<64x64xf32>
    %cst_24 = arith.constant dense<0xFF800000> : vector<64xf32>
    %46 = vector.multi_reduction <maximumf>, %45, %cst_24 [1] : vector<64x64xf32> to vector<64xf32>
    %47 = vector.shape_cast %46 : vector<64xf32> to vector<64x1xf32>
    %48 = vector.broadcast %47 : vector<64x1xf32> to vector<64x64xf32>
    %49 = arith.subf %45, %48 : vector<64x64xf32>
    %50 = math.exp %49 : vector<64x64xf32>
    %cst_25 = arith.constant dense<0.000000e+00> : vector<64xf32>
    %51 = vector.multi_reduction <add>, %50, %cst_25 [1] : vector<64x64xf32> to vector<64xf32>
    %52 = vector.shape_cast %51 : vector<64xf32> to vector<64x1xf32>
    %53 = vector.broadcast %52 : vector<64x1xf32> to vector<64x64xf32>
    %54 = arith.divf %50, %53 : vector<64x64xf32>
    %55 = arith.truncf %54 : vector<64x64xf32> to vector<64x64xbf16>
    %56 = arith.truncf %38 : vector<64x32xf32> to vector<64x32xbf16>
    %cst_26 = arith.constant dense<0.000000e+00> : vector<64x32xf32>
    %57 = tpu.matmul %55, %56, %cst_26 {dimension_numbers = #tpu.dot_dimension_numbers<[1], [0], [0], [1], [0, 0, 1, 1], [], []>} : vector<64x64xbf16>, vector<64x32xbf16>, vector<64x32xf32> -> vector<64x32xf32>
    %58 = vector.extract_strided_slice %32 {offsets = [0, 32], sizes = [64, 32], strides = [1, 1]} : vector<64x384xf32> to vector<64x32xf32>
    %59 = vector.extract_strided_slice %32 {offsets = [0, 160], sizes = [64, 32], strides = [1, 1]} : vector<64x384xf32> to vector<64x32xf32>
    %60 = vector.extract_strided_slice %32 {offsets = [0, 288], sizes = [64, 32], strides = [1, 1]} : vector<64x384xf32> to vector<64x32xf32>
    %61 = arith.truncf %58 : vector<64x32xf32> to vector<64x32xbf16>
    %62 = arith.truncf %59 : vector<64x32xf32> to vector<64x32xbf16>
    "tpu.trace_start"() <{level = 10 : i32, message = "pd,qd->pq"}> : () -> ()
    %cst_27 = arith.constant dense<0.000000e+00> : vector<64x64xf32>
    %63 = tpu.matmul %61, %62, %cst_27 {dimension_numbers = #tpu.dot_dimension_numbers<[1], [1], [0], [0], [0, 0, 1, 0], [], []>} : vector<64x32xbf16>, vector<64x32xbf16>, vector<64x64xf32> -> vector<64x64xf32>
    "tpu.trace_stop"() : () -> ()
    %64 = vector.extract_strided_slice %33 {offsets = [1, 0, 0], sizes = [1, 64, 64], strides = [1, 1, 1]} : vector<4x64x64xf32> to vector<1x64x64xf32>
    %65 = vector.shape_cast %64 : vector<1x64x64xf32> to vector<64x64xf32>
    %66 = arith.addf %63, %65 : vector<64x64xf32>
    %67 = arith.addf %66, %35 : vector<64x64xf32>
    %cst_28 = arith.constant dense<0xFF800000> : vector<64xf32>
    %68 = vector.multi_reduction <maximumf>, %67, %cst_28 [1] : vector<64x64xf32> to vector<64xf32>
    %69 = vector.shape_cast %68 : vector<64xf32> to vector<64x1xf32>
    %70 = vector.broadcast %69 : vector<64x1xf32> to vector<64x64xf32>
    %71 = arith.subf %67, %70 : vector<64x64xf32>
    %72 = math.exp %71 : vector<64x64xf32>
    %cst_29 = arith.constant dense<0.000000e+00> : vector<64xf32>
    %73 = vector.multi_reduction <add>, %72, %cst_29 [1] : vector<64x64xf32> to vector<64xf32>
    %74 = vector.shape_cast %73 : vector<64xf32> to vector<64x1xf32>
    %75 = vector.broadcast %74 : vector<64x1xf32> to vector<64x64xf32>
    %76 = arith.divf %72, %75 : vector<64x64xf32>
    %77 = arith.truncf %76 : vector<64x64xf32> to vector<64x64xbf16>
    %78 = arith.truncf %60 : vector<64x32xf32> to vector<64x32xbf16>
    %cst_30 = arith.constant dense<0.000000e+00> : vector<64x32xf32>
    %79 = tpu.matmul %77, %78, %cst_30 {dimension_numbers = #tpu.dot_dimension_numbers<[1], [0], [0], [1], [0, 0, 1, 1], [], []>} : vector<64x64xbf16>, vector<64x32xbf16>, vector<64x32xf32> -> vector<64x32xf32>
    %80 = vector.extract_strided_slice %32 {offsets = [0, 64], sizes = [64, 32], strides = [1, 1]} : vector<64x384xf32> to vector<64x32xf32>
    %81 = vector.extract_strided_slice %32 {offsets = [0, 192], sizes = [64, 32], strides = [1, 1]} : vector<64x384xf32> to vector<64x32xf32>
    %82 = vector.extract_strided_slice %32 {offsets = [0, 320], sizes = [64, 32], strides = [1, 1]} : vector<64x384xf32> to vector<64x32xf32>
    %83 = arith.truncf %80 : vector<64x32xf32> to vector<64x32xbf16>
    %84 = arith.truncf %81 : vector<64x32xf32> to vector<64x32xbf16>
    "tpu.trace_start"() <{level = 10 : i32, message = "pd,qd->pq"}> : () -> ()
    %cst_31 = arith.constant dense<0.000000e+00> : vector<64x64xf32>
    %85 = tpu.matmul %83, %84, %cst_31 {dimension_numbers = #tpu.dot_dimension_numbers<[1], [1], [0], [0], [0, 0, 1, 0], [], []>} : vector<64x32xbf16>, vector<64x32xbf16>, vector<64x64xf32> -> vector<64x64xf32>
    "tpu.trace_stop"() : () -> ()
    %86 = vector.extract_strided_slice %33 {offsets = [2, 0, 0], sizes = [1, 64, 64], strides = [1, 1, 1]} : vector<4x64x64xf32> to vector<1x64x64xf32>
    %87 = vector.shape_cast %86 : vector<1x64x64xf32> to vector<64x64xf32>
    %88 = arith.addf %85, %87 : vector<64x64xf32>
    %89 = arith.addf %88, %35 : vector<64x64xf32>
    %cst_32 = arith.constant dense<0xFF800000> : vector<64xf32>
    %90 = vector.multi_reduction <maximumf>, %89, %cst_32 [1] : vector<64x64xf32> to vector<64xf32>
    %91 = vector.shape_cast %90 : vector<64xf32> to vector<64x1xf32>
    %92 = vector.broadcast %91 : vector<64x1xf32> to vector<64x64xf32>
    %93 = arith.subf %89, %92 : vector<64x64xf32>
    %94 = math.exp %93 : vector<64x64xf32>
    %cst_33 = arith.constant dense<0.000000e+00> : vector<64xf32>
    %95 = vector.multi_reduction <add>, %94, %cst_33 [1] : vector<64x64xf32> to vector<64xf32>
    %96 = vector.shape_cast %95 : vector<64xf32> to vector<64x1xf32>
    %97 = vector.broadcast %96 : vector<64x1xf32> to vector<64x64xf32>
    %98 = arith.divf %94, %97 : vector<64x64xf32>
    %99 = arith.truncf %98 : vector<64x64xf32> to vector<64x64xbf16>
    %100 = arith.truncf %82 : vector<64x32xf32> to vector<64x32xbf16>
    %cst_34 = arith.constant dense<0.000000e+00> : vector<64x32xf32>
    %101 = tpu.matmul %99, %100, %cst_34 {dimension_numbers = #tpu.dot_dimension_numbers<[1], [0], [0], [1], [0, 0, 1, 1], [], []>} : vector<64x64xbf16>, vector<64x32xbf16>, vector<64x32xf32> -> vector<64x32xf32>
    %102 = vector.extract_strided_slice %32 {offsets = [0, 96], sizes = [64, 32], strides = [1, 1]} : vector<64x384xf32> to vector<64x32xf32>
    %103 = vector.extract_strided_slice %32 {offsets = [0, 224], sizes = [64, 32], strides = [1, 1]} : vector<64x384xf32> to vector<64x32xf32>
    %104 = vector.extract_strided_slice %32 {offsets = [0, 352], sizes = [64, 32], strides = [1, 1]} : vector<64x384xf32> to vector<64x32xf32>
    %105 = arith.truncf %102 : vector<64x32xf32> to vector<64x32xbf16>
    %106 = arith.truncf %103 : vector<64x32xf32> to vector<64x32xbf16>
    "tpu.trace_start"() <{level = 10 : i32, message = "pd,qd->pq"}> : () -> ()
    %cst_35 = arith.constant dense<0.000000e+00> : vector<64x64xf32>
    %107 = tpu.matmul %105, %106, %cst_35 {dimension_numbers = #tpu.dot_dimension_numbers<[1], [1], [0], [0], [0, 0, 1, 0], [], []>} : vector<64x32xbf16>, vector<64x32xbf16>, vector<64x64xf32> -> vector<64x64xf32>
    "tpu.trace_stop"() : () -> ()
    %108 = vector.extract_strided_slice %33 {offsets = [3, 0, 0], sizes = [1, 64, 64], strides = [1, 1, 1]} : vector<4x64x64xf32> to vector<1x64x64xf32>
    %109 = vector.shape_cast %108 : vector<1x64x64xf32> to vector<64x64xf32>
    %110 = arith.addf %107, %109 : vector<64x64xf32>
    %111 = arith.addf %110, %35 : vector<64x64xf32>
    %cst_36 = arith.constant dense<0xFF800000> : vector<64xf32>
    %112 = vector.multi_reduction <maximumf>, %111, %cst_36 [1] : vector<64x64xf32> to vector<64xf32>
    %113 = vector.shape_cast %112 : vector<64xf32> to vector<64x1xf32>
    %114 = vector.broadcast %113 : vector<64x1xf32> to vector<64x64xf32>
    %115 = arith.subf %111, %114 : vector<64x64xf32>
    %116 = math.exp %115 : vector<64x64xf32>
    %cst_37 = arith.constant dense<0.000000e+00> : vector<64xf32>
    %117 = vector.multi_reduction <add>, %116, %cst_37 [1] : vector<64x64xf32> to vector<64xf32>
    %118 = vector.shape_cast %117 : vector<64xf32> to vector<64x1xf32>
    %119 = vector.broadcast %118 : vector<64x1xf32> to vector<64x64xf32>
    %120 = arith.divf %116, %119 : vector<64x64xf32>
    %121 = arith.truncf %120 : vector<64x64xf32> to vector<64x64xbf16>
    %122 = arith.truncf %104 : vector<64x32xf32> to vector<64x32xbf16>
    %cst_38 = arith.constant dense<0.000000e+00> : vector<64x32xf32>
    %123 = tpu.matmul %121, %122, %cst_38 {dimension_numbers = #tpu.dot_dimension_numbers<[1], [0], [0], [1], [0, 0, 1, 1], [], []>} : vector<64x64xbf16>, vector<64x32xbf16>, vector<64x32xf32> -> vector<64x32xf32>
    %124 = tpu.concatenate %57, %79, %101, %123 in 1 : vector<64x32xf32>, vector<64x32xf32>, vector<64x32xf32>, vector<64x32xf32> -> vector<64x128xf32>
    %125 = arith.truncf %124 : vector<64x128xf32> to vector<64x128xbf16>
    %c0_39 = arith.constant 0 : index
    %c0_40 = arith.constant 0 : index
    %126 = vector.load %arg10[%c0_39, %c0_40] : memref<128x128xbf16, #tpu.memory_space<vmem>>, vector<128x128xbf16>
    %cst_41 = arith.constant dense<0.000000e+00> : vector<64x128xf32>
    %127 = tpu.matmul %125, %126, %cst_41 {dimension_numbers = #tpu.dot_dimension_numbers<[1], [0], [0], [1], [0, 0, 1, 1], [], []>} : vector<64x128xbf16>, vector<128x128xbf16>, vector<64x128xf32> -> vector<64x128xf32>
    %c0_42 = arith.constant 0 : index
    %c0_43 = arith.constant 0 : index
    %128 = vector.load %arg11[%c0_42, %c0_43] : memref<1x128xf32, #tpu.memory_space<vmem>>, vector<1x128xf32>
    %129 = vector.broadcast %128 : vector<1x128xf32> to vector<64x128xf32>
    %130 = arith.addf %127, %129 : vector<64x128xf32>
    %131 = arith.addf %2, %130 : vector<64x128xf32>
    %cst_44 = arith.constant dense<0.000000e+00> : vector<64xf32>
    %132 = vector.multi_reduction <add>, %131, %cst_44 [1] : vector<64x128xf32> to vector<64xf32>
    %133 = vector.shape_cast %132 : vector<64xf32> to vector<64x1xf32>
    %cst_45 = arith.constant 1.280000e+02 : f32
    %134 = vector.broadcast %cst_45 : f32 to vector<64x1xf32>
    %135 = arith.divf %133, %134 : vector<64x1xf32>
    %136 = vector.broadcast %135 : vector<64x1xf32> to vector<64x128xf32>
    %137 = arith.subf %131, %136 : vector<64x128xf32>
    %138 = arith.mulf %137, %137 : vector<64x128xf32>
    %cst_46 = arith.constant dense<0.000000e+00> : vector<64xf32>
    %139 = vector.multi_reduction <add>, %138, %cst_46 [1] : vector<64x128xf32> to vector<64xf32>
    %140 = vector.shape_cast %139 : vector<64xf32> to vector<64x1xf32>
    %cst_47 = arith.constant 1.280000e+02 : f32
    %141 = vector.broadcast %cst_47 : f32 to vector<64x1xf32>
    %142 = arith.divf %140, %141 : vector<64x1xf32>
    %143 = vector.broadcast %135 : vector<64x1xf32> to vector<64x128xf32>
    %144 = arith.subf %131, %143 : vector<64x128xf32>
    %cst_48 = arith.constant 9.99999974E-6 : f32
    %145 = vector.broadcast %cst_48 : f32 to vector<64x1xf32>
    %146 = arith.addf %142, %145 : vector<64x1xf32>
    %147 = math.rsqrt %146 : vector<64x1xf32>
    %148 = vector.broadcast %147 : vector<64x1xf32> to vector<64x128xf32>
    %149 = arith.mulf %144, %148 : vector<64x128xf32>
    %c0_49 = arith.constant 0 : index
    %c0_50 = arith.constant 0 : index
    %150 = vector.load %arg12[%c0_49, %c0_50] : memref<1x128xf32, #tpu.memory_space<vmem>>, vector<1x128xf32>
    %151 = vector.broadcast %150 : vector<1x128xf32> to vector<64x128xf32>
    %152 = arith.mulf %149, %151 : vector<64x128xf32>
    %c0_51 = arith.constant 0 : index
    %c0_52 = arith.constant 0 : index
    %153 = vector.load %arg13[%c0_51, %c0_52] : memref<1x128xf32, #tpu.memory_space<vmem>>, vector<1x128xf32>
    %154 = vector.broadcast %153 : vector<1x128xf32> to vector<64x128xf32>
    %155 = arith.addf %152, %154 : vector<64x128xf32>
    %156 = arith.truncf %155 : vector<64x128xf32> to vector<64x128xbf16>
    %c0_53 = arith.constant 0 : index
    %c0_54 = arith.constant 0 : index
    %157 = vector.load %arg14[%c0_53, %c0_54] : memref<128x512xbf16, #tpu.memory_space<vmem>>, vector<128x512xbf16>
    %cst_55 = arith.constant dense<0.000000e+00> : vector<64x512xf32>
    %158 = tpu.matmul %156, %157, %cst_55 {dimension_numbers = #tpu.dot_dimension_numbers<[1], [0], [0], [1], [0, 0, 1, 1], [], []>} : vector<64x128xbf16>, vector<128x512xbf16>, vector<64x512xf32> -> vector<64x512xf32>
    %c0_56 = arith.constant 0 : index
    %c0_57 = arith.constant 0 : index
    %159 = vector.load %arg15[%c0_56, %c0_57] : memref<1x512xf32, #tpu.memory_space<vmem>>, vector<1x512xf32>
    %160 = vector.broadcast %159 : vector<1x512xf32> to vector<64x512xf32>
    %161 = arith.addf %158, %160 : vector<64x512xf32>
    %cst_58 = arith.constant 5.000000e-01 : f32
    %162 = vector.broadcast %cst_58 : f32 to vector<64x512xf32>
    %163 = arith.mulf %162, %161 : vector<64x512xf32>
    %cst_59 = arith.constant 0.707106769 : f32
    %164 = vector.broadcast %cst_59 : f32 to vector<64x512xf32>
    %165 = arith.mulf %161, %164 : vector<64x512xf32>
    %166 = math.erf %165 : vector<64x512xf32>
    %cst_60 = arith.constant 1.000000e+00 : f32
    %167 = vector.broadcast %cst_60 : f32 to vector<64x512xf32>
    %168 = arith.addf %167, %166 : vector<64x512xf32>
    %169 = arith.mulf %163, %168 : vector<64x512xf32>
    %170 = arith.truncf %169 : vector<64x512xf32> to vector<64x512xbf16>
    %c0_61 = arith.constant 0 : index
    %c0_62 = arith.constant 0 : index
    %171 = vector.load %arg16[%c0_61, %c0_62] : memref<512x128xbf16, #tpu.memory_space<vmem>>, vector<512x128xbf16>
    %cst_63 = arith.constant dense<0.000000e+00> : vector<64x128xf32>
    %172 = tpu.matmul %170, %171, %cst_63 {dimension_numbers = #tpu.dot_dimension_numbers<[1], [0], [0], [1], [0, 0, 1, 1], [], []>} : vector<64x512xbf16>, vector<512x128xbf16>, vector<64x128xf32> -> vector<64x128xf32>
    %c0_64 = arith.constant 0 : index
    %c0_65 = arith.constant 0 : index
    %173 = vector.load %arg17[%c0_64, %c0_65] : memref<1x128xf32, #tpu.memory_space<vmem>>, vector<1x128xf32>
    %174 = vector.broadcast %173 : vector<1x128xf32> to vector<64x128xf32>
    %175 = arith.addf %172, %174 : vector<64x128xf32>
    %176 = arith.addf %131, %175 : vector<64x128xf32>
    %177 = vector.shape_cast %176 : vector<64x128xf32> to vector<8x8x128xf32>
    %c0_66 = arith.constant 0 : index
    %c0_67 = arith.constant 0 : index
    %c0_68 = arith.constant 0 : index
    %c0_69 = arith.constant 0 : index
    %178 = vector.load %arg18[%c0_66, %c0_67, %c0_68, %c0_69] : memref<1x8x8x128xf32, #tpu.memory_space<vmem>>, vector<1x8x8x128xf32>
    %179 = vector.shape_cast %178 : vector<1x8x8x128xf32> to vector<8x8x128xf32>
    %180 = vector.shape_cast %177 : vector<8x8x128xf32> to vector<1x8x8x128xf32>
    tpu.vector_store %arg18[%c0_66, %c0_67, %c0_68, %c0_69], %180 {strides = array<i32>} : memref<1x8x8x128xf32, #tpu.memory_space<vmem>>, vector<1x8x8x128xf32>,
    return
  }
  func.func @transform_0(%arg0: i32, %arg1: i32, %arg2: i32) -> (i32, i32, i32, i32) {
    %c0_i32 = arith.constant 0 : i32
    %c0_i32_0 = arith.constant 0 : i32
    return %arg0, %arg1, %arg2, %c0_i32 : i32, i32, i32, i32
  }
  func.func @transform_1(%arg0: i32, %arg1: i32, %arg2: i32) -> (i32, i32, i32, i32) {
    %c0_i32 = arith.constant 0 : i32
    %c0_i32_0 = arith.constant 0 : i32
    %c0_i32_1 = arith.constant 0 : i32
    %c0_i32_2 = arith.constant 0 : i32
    %c0_i32_3 = arith.constant 0 : i32
    return %c0_i32, %c0_i32_0, %c0_i32_1, %c0_i32_2 : i32, i32, i32, i32
  }
  func.func @transform_2(%arg0: i32, %arg1: i32, %arg2: i32) -> (i32, i32, i32) {
    %c0_i32 = arith.constant 0 : i32
    %c0_i32_0 = arith.constant 0 : i32
    %c0_i32_1 = arith.constant 0 : i32
    %c0_i32_2 = arith.constant 0 : i32
    return %c0_i32, %c0_i32_0, %c0_i32_1 : i32, i32, i32
  }
  func.func @transform_3(%arg0: i32, %arg1: i32, %arg2: i32) -> (i32, i32) {
    %c0_i32 = arith.constant 0 : i32
    %c0_i32_0 = arith.constant 0 : i32
    %c0_i32_1 = arith.constant 0 : i32
    return %c0_i32, %c0_i32_0 : i32, i32
  }
  func.func @transform_4(%arg0: i32, %arg1: i32, %arg2: i32) -> (i32, i32) {
    %c0_i32 = arith.constant 0 : i32
    %c0_i32_0 = arith.constant 0 : i32
    %c0_i32_1 = arith.constant 0 : i32
    return %c0_i32, %c0_i32_0 : i32, i32
  }
  func.func @transform_5(%arg0: i32, %arg1: i32, %arg2: i32) -> (i32, i32) {
    %c0_i32 = arith.constant 0 : i32
    %c0_i32_0 = arith.constant 0 : i32
    %c0_i32_1 = arith.constant 0 : i32
    return %c0_i32, %c0_i32_0 : i32, i32
  }
  func.func @transform_6(%arg0: i32, %arg1: i32, %arg2: i32) -> (i32, i32) {
    %c0_i32 = arith.constant 0 : i32
    %c0_i32_0 = arith.constant 0 : i32
    %c0_i32_1 = arith.constant 0 : i32
    return %c0_i32, %c0_i32_0 : i32, i32
  }
  func.func @transform_7(%arg0: i32, %arg1: i32, %arg2: i32) -> (i32, i32) {
    %c0_i32 = arith.constant 0 : i32
    %c0_i32_0 = arith.constant 0 : i32
    %c0_i32_1 = arith.constant 0 : i32
    return %c0_i32, %c0_i32_0 : i32, i32
  }
  func.func @transform_8(%arg0: i32, %arg1: i32, %arg2: i32) -> (i32, i32) {
    %c0_i32 = arith.constant 0 : i32
    %c0_i32_0 = arith.constant 0 : i32
    %c0_i32_1 = arith.constant 0 : i32
    return %c0_i32, %c0_i32_0 : i32, i32
  }
  func.func @transform_9(%arg0: i32, %arg1: i32, %arg2: i32) -> (i32, i32) {
    %c0_i32 = arith.constant 0 : i32
    %c0_i32_0 = arith.constant 0 : i32
    %c0_i32_1 = arith.constant 0 : i32
    return %c0_i32, %c0_i32_0 : i32, i32
  }
  func.func @transform_10(%arg0: i32, %arg1: i32, %arg2: i32) -> (i32, i32) {
    %c0_i32 = arith.constant 0 : i32
    %c0_i32_0 = arith.constant 0 : i32
    %c0_i32_1 = arith.constant 0 : i32
    return %c0_i32, %c0_i32_0 : i32, i32
  }
  func.func @transform_11(%arg0: i32, %arg1: i32, %arg2: i32) -> (i32, i32) {
    %c0_i32 = arith.constant 0 : i32
    %c0_i32_0 = arith.constant 0 : i32
    %c0_i32_1 = arith.constant 0 : i32
    return %c0_i32, %c0_i32_0 : i32, i32
  }
  func.func @transform_12(%arg0: i32, %arg1: i32, %arg2: i32) -> (i32, i32) {
    %c0_i32 = arith.constant 0 : i32
    %c0_i32_0 = arith.constant 0 : i32
    %c0_i32_1 = arith.constant 0 : i32
    return %c0_i32, %c0_i32_0 : i32, i32
  }
  func.func @transform_13(%arg0: i32, %arg1: i32, %arg2: i32) -> (i32, i32) {
    %c0_i32 = arith.constant 0 : i32
    %c0_i32_0 = arith.constant 0 : i32
    %c0_i32_1 = arith.constant 0 : i32
    return %c0_i32, %c0_i32_0 : i32, i32
  }
  func.func @transform_14(%arg0: i32, %arg1: i32, %arg2: i32) -> (i32, i32) {
    %c0_i32 = arith.constant 0 : i32
    %c0_i32_0 = arith.constant 0 : i32
    %c0_i32_1 = arith.constant 0 : i32
    return %c0_i32, %c0_i32_0 : i32, i32
  }
  func.func @transform_15(%arg0: i32, %arg1: i32, %arg2: i32) -> (i32, i32, i32, i32) {
    %c0_i32 = arith.constant 0 : i32
    %c0_i32_0 = arith.constant 0 : i32
    return %arg0, %arg1, %arg2, %c0_i32 : i32, i32, i32, i32
  }
}

module attributes {stable_mosaic.version = 11 : i64} {
  func.func @swin_block_kernel(%arg0: i32, %arg1: i32, %arg2: i32, %arg3: memref<1x8x8x128xf32, #tpu.memory_space<vmem>>, %arg4: memref<1x1x64x64xf32, #tpu.memory_space<vmem>>, %arg5: memref<4x64x64xf32, #tpu.memory_space<vmem>>, %arg6: memref<1x128xf32, #tpu.memory_space<vmem>>, %arg7: memref<1x128xf32, #tpu.memory_space<vmem>>, %arg8: memref<128x384xbf16, #tpu.memory_space<vmem>>, %arg9: memref<1x384xf32, #tpu.memory_space<vmem>>, %arg10: memref<128x128xbf16, #tpu.memory_space<vmem>>, %arg11: memref<1x128xf32, #tpu.memory_space<vmem>>, %arg12: memref<1x128xf32, #tpu.memory_space<vmem>>, %arg13: memref<1x128xf32, #tpu.memory_space<vmem>>, %arg14: memref<128x512xbf16, #tpu.memory_space<vmem>>, %arg15: memref<1x512xf32, #tpu.memory_space<vmem>>, %arg16: memref<512x128xbf16, #tpu.memory_space<vmem>>, %arg17: memref<1x128xf32, #tpu.memory_space<vmem>>, %arg18: memref<1x8x8x128xf32, #tpu.memory_space<vmem>>) attributes {dimension_semantics = [#tpu.dimension_semantics<parallel>, #tpu.dimension_semantics<parallel>, #tpu.dimension_semantics<parallel>], iteration_bounds = array<i64: 2, 2, 2>, scalar_prefetch = 0 : i64, scratch_operands = 0 : i64, tpu.core_type = #tpu.core_type<tc>, window_params = [{transform_indices = @transform_0, window_bounds = array<i64: 1, 8, 8, 128>}, {transform_indices = @transform_1, window_bounds = array<i64: 1, 1, 64, 64>}, {pipeline_mode = #tpu.pipeline_mode<synchronous>, transform_indices = @transform_2, window_bounds = array<i64: 4, 64, 64>}, {pipeline_mode = #tpu.pipeline_mode<synchronous>, transform_indices = @transform_3, window_bounds = array<i64: 1, 128>}, {pipeline_mode = #tpu.pipeline_mode<synchronous>, transform_indices = @transform_4, window_bounds = array<i64: 1, 128>}, {pipeline_mode = #tpu.pipeline_mode<synchronous>, transform_indices = @transform_5, window_bounds = array<i64: 128, 384>}, {pipeline_mode = #tpu.pipeline_mode<synchronous>, transform_indices = @transform_6, window_bounds = array<i64: 1, 384>}, {pipeline_mode = #tpu.pipeline_mode<synchronous>, transform_indices = @transform_7, window_bounds = array<i64: 128, 128>}, {pipeline_mode = #tpu.pipeline_mode<synchronous>, transform_indices = @transform_8, window_bounds = array<i64: 1, 128>}, {pipeline_mode = #tpu.pipeline_mode<synchronous>, transform_indices = @transform_9, window_bounds = array<i64: 1, 128>}, {pipeline_mode = #tpu.pipeline_mode<synchronous>, transform_indices = @transform_10, window_bounds = array<i64: 1, 128>}, {pipeline_mode = #tpu.pipeline_mode<synchronous>, transform_indices = @transform_11, window_bounds = array<i64: 128, 512>}, {pipeline_mode = #tpu.pipeline_mode<synchronous>, transform_indices = @transform_12, window_bounds = array<i64: 1, 512>}, {pipeline_mode = #tpu.pipeline_mode<synchronous>, transform_indices = @transform_13, window_bounds = array<i64: 512, 128>}, {pipeline_mode = #tpu.pipeline_mode<synchronous>, transform_indices = @transform_14, window_bounds = array<i64: 1, 128>}, {transform_indices = @transform_15, window_bounds = array<i64: 1, 8, 8, 128>}]} {
    %c0 = arith.constant 0 : index
    %c0_0 = arith.constant 0 : index
    %c0_1 = arith.constant 0 : index
    %c0_2 = arith.constant 0 : index
    %0 = vector.load %arg3[%c0, %c0_0, %c0_1, %c0_2] : memref<1x8x8x128xf32, #tpu.memory_space<vmem>>, vector<1x8x8x128xf32>
    %1 = vector.shape_cast %0 : vector<1x8x8x128xf32> to vector<8x8x128xf32>
    %2 = vector.shape_cast %1 : vector<8x8x128xf32> to vector<64x128xf32>
    %cst = arith.constant dense<0.000000e+00> : vector<64xf32>
    %3 = vector.multi_reduction <add>, %2, %cst [1] : vector<64x128xf32> to vector<64xf32>
    %4 = vector.shape_cast %3 : vector<64xf32> to vector<64x1xf32>
    %cst_3 = arith.constant 1.280000e+02 : f32
    %5 = vector.broadcast %cst_3 : f32 to vector<64x1xf32>
    %6 = arith.divf %4, %5 : vector<64x1xf32>
    %7 = vector.broadcast %6 : vector<64x1xf32> to vector<64x128xf32>
    %8 = arith.subf %2, %7 : vector<64x128xf32>
    %9 = arith.mulf %8, %8 : vector<64x128xf32>
    %cst_4 = arith.constant dense<0.000000e+00> : vector<64xf32>
    %10 = vector.multi_reduction <add>, %9, %cst_4 [1] : vector<64x128xf32> to vector<64xf32>
    %11 = vector.shape_cast %10 : vector<64xf32> to vector<64x1xf32>
    %cst_5 = arith.constant 1.280000e+02 : f32
    %12 = vector.broadcast %cst_5 : f32 to vector<64x1xf32>
    %13 = arith.divf %11, %12 : vector<64x1xf32>
    %14 = vector.broadcast %6 : vector<64x1xf32> to vector<64x128xf32>
    %15 = arith.subf %2, %14 : vector<64x128xf32>
    %cst_6 = arith.constant 9.99999974E-6 : f32
    %16 = vector.broadcast %cst_6 : f32 to vector<64x1xf32>
    %17 = arith.addf %13, %16 : vector<64x1xf32>
    %18 = math.rsqrt %17 : vector<64x1xf32>
    %19 = vector.broadcast %18 : vector<64x1xf32> to vector<64x128xf32>
    %20 = arith.mulf %15, %19 : vector<64x128xf32>
    %c0_7 = arith.constant 0 : index
    %c0_8 = arith.constant 0 : index
    %21 = vector.load %arg6[%c0_7, %c0_8] : memref<1x128xf32, #tpu.memory_space<vmem>>, vector<1x128xf32>
    %22 = vector.broadcast %21 : vector<1x128xf32> to vector<64x128xf32>
    %23 = arith.mulf %20, %22 : vector<64x128xf32>
    %c0_9 = arith.constant 0 : index
    %c0_10 = arith.constant 0 : index
    %24 = vector.load %arg7[%c0_9, %c0_10] : memref<1x128xf32, #tpu.memory_space<vmem>>, vector<1x128xf32>
    %25 = vector.broadcast %24 : vector<1x128xf32> to vector<64x128xf32>
    %26 = arith.addf %23, %25 : vector<64x128xf32>
    %27 = arith.truncf %26 : vector<64x128xf32> to vector<64x128xbf16>
    %c0_11 = arith.constant 0 : index
    %c0_12 = arith.constant 0 : index
    %28 = vector.load %arg8[%c0_11, %c0_12] : memref<128x384xbf16, #tpu.memory_space<vmem>>, vector<128x384xbf16>
    %cst_13 = arith.constant dense<0.000000e+00> : vector<64x384xf32>
    %29 = tpu.matmul %27, %28, %cst_13 {dimension_numbers = #tpu.dot_dimension_numbers<[1], [0], [0], [1], [0, 0, 1, 1], [], []>} : vector<64x128xbf16>, vector<128x384xbf16>, vector<64x384xf32> -> vector<64x384xf32>
    %c0_14 = arith.constant 0 : index
    %c0_15 = arith.constant 0 : index
    %30 = vector.load %arg9[%c0_14, %c0_15] : memref<1x384xf32, #tpu.memory_space<vmem>>, vector<1x384xf32>
    %31 = vector.broadcast %30 : vector<1x384xf32> to vector<64x384xf32>
    %32 = arith.addf %29, %31 : vector<64x384xf32>
    %c0_16 = arith.constant 0 : index
    %c0_17 = arith.constant 0 : index
    %c0_18 = arith.constant 0 : index
    %33 = vector.load %arg5[%c0_16, %c0_17, %c0_18] : memref<4x64x64xf32, #tpu.memory_space<vmem>>, vector<4x64x64xf32>
    %c0_19 = arith.constant 0 : index
    %c0_20 = arith.constant 0 : index
    %c0_21 = arith.constant 0 : index
    %c0_22 = arith.constant 0 : index
    %34 = vector.load %arg4[%c0_19, %c0_20, %c0_21, %c0_22] : memref<1x1x64x64xf32, #tpu.memory_space<vmem>>, vector<1x1x64x64xf32>
    %35 = vector.shape_cast %34 : vector<1x1x64x64xf32> to vector<64x64xf32>
    %36 = vector.extract_strided_slice %32 {offsets = [0, 0], sizes = [64, 32], strides = [1, 1]} : vector<64x384xf32> to vector<64x32xf32>
    %37 = vector.extract_strided_slice %32 {offsets = [0, 128], sizes = [64, 32], strides = [1, 1]} : vector<64x384xf32> to vector<64x32xf32>
    %38 = vector.extract_strided_slice %32 {offsets = [0, 256], sizes = [64, 32], strides = [1, 1]} : vector<64x384xf32> to vector<64x32xf32>
    %39 = arith.truncf %36 : vector<64x32xf32> to vector<64x32xbf16>
    %40 = arith.truncf %37 : vector<64x32xf32> to vector<64x32xbf16>
    "tpu.trace_start"() <{level = 10 : i32, message = "pd,qd->pq"}> : () -> ()
    %cst_23 = arith.constant dense<0.000000e+00> : vector<64x64xf32>
    %41 = tpu.matmul %39, %40, %cst_23 {dimension_numbers = #tpu.dot_dimension_numbers<[1], [1], [0], [0], [0, 0, 1, 0], [], []>} : vector<64x32xbf16>, vector<64x32xbf16>, vector<64x64xf32> -> vector<64x64xf32>
    "tpu.trace_stop"() : () -> ()
    %42 = vector.extract_strided_slice %33 {offsets = [0, 0, 0], sizes = [1, 64, 64], strides = [1, 1, 1]} : vector<4x64x64xf32> to vector<1x64x64xf32>
    %43 = vector.shape_cast %42 : vector<1x64x64xf32> to vector<64x64xf32>
    %44 = arith.addf %41, %43 : vector<64x64xf32>
    %45 = arith.addf %44, %35 : vector<64x64xf32>
    %cst_24 = arith.constant dense<0xFF800000> : vector<64xf32>
    %46 = vector.multi_reduction <maximumf>, %45, %cst_24 [1] : vector<64x64xf32> to vector<64xf32>
    %47 = vector.shape_cast %46 : vector<64xf32> to vector<64x1xf32>
    %48 = vector.broadcast %47 : vector<64x1xf32> to vector<64x64xf32>
    %49 = arith.subf %45, %48 : vector<64x64xf32>
    %50 = math.exp %49 : vector<64x64xf32>
    %cst_25 = arith.constant dense<0.000000e+00> : vector<64xf32>
    %51 = vector.multi_reduction <add>, %50, %cst_25 [1] : vector<64x64xf32> to vector<64xf32>
    %52 = vector.shape_cast %51 : vector<64xf32> to vector<64x1xf32>
    %53 = vector.broadcast %52 : vector<64x1xf32> to vector<64x64xf32>
    %54 = arith.divf %50, %53 : vector<64x64xf32>
    %55 = arith.truncf %54 : vector<64x64xf32> to vector<64x64xbf16>
    %56 = arith.truncf %38 : vector<64x32xf32> to vector<64x32xbf16>
    %cst_26 = arith.constant dense<0.000000e+00> : vector<64x32xf32>
    %57 = tpu.matmul %55, %56, %cst_26 {dimension_numbers = #tpu.dot_dimension_numbers<[1], [0], [0], [1], [0, 0, 1, 1], [], []>} : vector<64x64xbf16>, vector<64x32xbf16>, vector<64x32xf32> -> vector<64x32xf32>
    %58 = vector.extract_strided_slice %32 {offsets = [0, 32], sizes = [64, 32], strides = [1, 1]} : vector<64x384xf32> to vector<64x32xf32>
    %59 = vector.extract_strided_slice %32 {offsets = [0, 160], sizes = [64, 32], strides = [1, 1]} : vector<64x384xf32> to vector<64x32xf32>
    %60 = vector.extract_strided_slice %32 {offsets = [0, 288], sizes = [64, 32], strides = [1, 1]} : vector<64x384xf32> to vector<64x32xf32>
    %61 = arith.truncf %58 : vector<64x32xf32> to vector<64x32xbf16>
    %62 = arith.truncf %59 : vector<64x32xf32> to vector<64x32xbf16>
    "tpu.trace_start"() <{level = 10 : i32, message = "pd,qd->pq"}> : () -> ()
    %cst_27 = arith.constant dense<0.000000e+00> : vector<64x64xf32>
    %63 = tpu.matmul %61, %62, %cst_27 {dimension_numbers = #tpu.dot_dimension_numbers<[1], [1], [0], [0], [0, 0, 1, 0], [], []>} : vector<64x32xbf16>, vector<64x32xbf16>, vector<64x64xf32> -> vector<64x64xf32>
    "tpu.trace_stop"() : () -> ()
    %64 = vector.extract_strided_slice %33 {offsets = [1, 0, 0], sizes = [1, 64, 64], strides = [1, 1, 1]} : vector<4x64x64xf32> to vector<1x64x64xf32>
    %65 = vector.shape_cast %64 : vector<1x64x64xf32> to vector<64x64xf32>
    %66 = arith.addf %63, %65 : vector<64x64xf32>
    %67 = arith.addf %66, %35 : vector<64x64xf32>
    %cst_28 = arith.constant dense<0xFF800000> : vector<64xf32>
    %68 = vector.multi_reduction <maximumf>, %67, %cst_28 [1] : vector<64x64xf32> to vector<64xf32>
    %69 = vector.shape_cast %68 : vector<64xf32> to vector<64x1xf32>
    %70 = vector.broadcast %69 : vector<64x1xf32> to vector<64x64xf32>
    %71 = arith.subf %67, %70 : vector<64x64xf32>
    %72 = math.exp %71 : vector<64x64xf32>
    %cst_29 = arith.constant dense<0.000000e+00> : vector<64xf32>
    %73 = vector.multi_reduction <add>, %72, %cst_29 [1] : vector<64x64xf32> to vector<64xf32>
    %74 = vector.shape_cast %73 : vector<64xf32> to vector<64x1xf32>
    %75 = vector.broadcast %74 : vector<64x1xf32> to vector<64x64xf32>
    %76 = arith.divf %72, %75 : vector<64x64xf32>
    %77 = arith.truncf %76 : vector<64x64xf32> to vector<64x64xbf16>
    %78 = arith.truncf %60 : vector<64x32xf32> to vector<64x32xbf16>
    %cst_30 = arith.constant dense<0.000000e+00> : vector<64x32xf32>
    %79 = tpu.matmul %77, %78, %cst_30 {dimension_numbers = #tpu.dot_dimension_numbers<[1], [0], [0], [1], [0, 0, 1, 1], [], []>} : vector<64x64xbf16>, vector<64x32xbf16>, vector<64x32xf32> -> vector<64x32xf32>
    %80 = vector.extract_strided_slice %32 {offsets = [0, 64], sizes = [64, 32], strides = [1, 1]} : vector<64x384xf32> to vector<64x32xf32>
    %81 = vector.extract_strided_slice %32 {offsets = [0, 192], sizes = [64, 32], strides = [1, 1]} : vector<64x384xf32> to vector<64x32xf32>
    %82 = vector.extract_strided_slice %32 {offsets = [0, 320], sizes = [64, 32], strides = [1, 1]} : vector<64x384xf32> to vector<64x32xf32>
    %83 = arith.truncf %80 : vector<64x32xf32> to vector<64x32xbf16>
    %84 = arith.truncf %81 : vector<64x32xf32> to vector<64x32xbf16>
    "tpu.trace_start"() <{level = 10 : i32, message = "pd,qd->pq"}> : () -> ()
    %cst_31 = arith.constant dense<0.000000e+00> : vector<64x64xf32>
    %85 = tpu.matmul %83, %84, %cst_31 {dimension_numbers = #tpu.dot_dimension_numbers<[1], [1], [0], [0], [0, 0, 1, 0], [], []>} : vector<64x32xbf16>, vector<64x32xbf16>, vector<64x64xf32> -> vector<64x64xf32>
    "tpu.trace_stop"() : () -> ()
    %86 = vector.extract_strided_slice %33 {offsets = [2, 0, 0], sizes = [1, 64, 64], strides = [1, 1, 1]} : vector<4x64x64xf32> to vector<1x64x64xf32>
    %87 = vector.shape_cast %86 : vector<1x64x64xf32> to vector<64x64xf32>
    %88 = arith.addf %85, %87 : vector<64x64xf32>
    %89 = arith.addf %88, %35 : vector<64x64xf32>
    %cst_32 = arith.constant dense<0xFF800000> : vector<64xf32>
    %90 = vector.multi_reduction <maximumf>, %89, %cst_32 [1] : vector<64x64xf32> to vector<64xf32>
    %91 = vector.shape_cast %90 : vector<64xf32> to vector<64x1xf32>
    %92 = vector.broadcast %91 : vector<64x1xf32> to vector<64x64xf32>
    %93 = arith.subf %89, %92 : vector<64x64xf32>
    %94 = math.exp %93 : vector<64x64xf32>
    %cst_33 = arith.constant dense<0.000000e+00> : vector<64xf32>
    %95 = vector.multi_reduction <add>, %94, %cst_33 [1] : vector<64x64xf32> to vector<64xf32>
    %96 = vector.shape_cast %95 : vector<64xf32> to vector<64x1xf32>
    %97 = vector.broadcast %96 : vector<64x1xf32> to vector<64x64xf32>
    %98 = arith.divf %94, %97 : vector<64x64xf32>
    %99 = arith.truncf %98 : vector<64x64xf32> to vector<64x64xbf16>
    %100 = arith.truncf %82 : vector<64x32xf32> to vector<64x32xbf16>
    %cst_34 = arith.constant dense<0.000000e+00> : vector<64x32xf32>
    %101 = tpu.matmul %99, %100, %cst_34 {dimension_numbers = #tpu.dot_dimension_numbers<[1], [0], [0], [1], [0, 0, 1, 1], [], []>} : vector<64x64xbf16>, vector<64x32xbf16>, vector<64x32xf32> -> vector<64x32xf32>
    %102 = vector.extract_strided_slice %32 {offsets = [0, 96], sizes = [64, 32], strides = [1, 1]} : vector<64x384xf32> to vector<64x32xf32>
    %103 = vector.extract_strided_slice %32 {offsets = [0, 224], sizes = [64, 32], strides = [1, 1]} : vector<64x384xf32> to vector<64x32xf32>
    %104 = vector.extract_strided_slice %32 {offsets = [0, 352], sizes = [64, 32], strides = [1, 1]} : vector<64x384xf32> to vector<64x32xf32>
    %105 = arith.truncf %102 : vector<64x32xf32> to vector<64x32xbf16>
    %106 = arith.truncf %103 : vector<64x32xf32> to vector<64x32xbf16>
    "tpu.trace_start"() <{level = 10 : i32, message = "pd,qd->pq"}> : () -> ()
    %cst_35 = arith.constant dense<0.000000e+00> : vector<64x64xf32>
    %107 = tpu.matmul %105, %106, %cst_35 {dimension_numbers = #tpu.dot_dimension_numbers<[1], [1], [0], [0], [0, 0, 1, 0], [], []>} : vector<64x32xbf16>, vector<64x32xbf16>, vector<64x64xf32> -> vector<64x64xf32>
    "tpu.trace_stop"() : () -> ()
    %108 = vector.extract_strided_slice %33 {offsets = [3, 0, 0], sizes = [1, 64, 64], strides = [1, 1, 1]} : vector<4x64x64xf32> to vector<1x64x64xf32>
    %109 = vector.shape_cast %108 : vector<1x64x64xf32> to vector<64x64xf32>
    %110 = arith.addf %107, %109 : vector<64x64xf32>
    %111 = arith.addf %110, %35 : vector<64x64xf32>
    %cst_36 = arith.constant dense<0xFF800000> : vector<64xf32>
    %112 = vector.multi_reduction <maximumf>, %111, %cst_36 [1] : vector<64x64xf32> to vector<64xf32>
    %113 = vector.shape_cast %112 : vector<64xf32> to vector<64x1xf32>
    %114 = vector.broadcast %113 : vector<64x1xf32> to vector<64x64xf32>
    %115 = arith.subf %111, %114 : vector<64x64xf32>
    %116 = math.exp %115 : vector<64x64xf32>
    %cst_37 = arith.constant dense<0.000000e+00> : vector<64xf32>
    %117 = vector.multi_reduction <add>, %116, %cst_37 [1] : vector<64x64xf32> to vector<64xf32>
    %118 = vector.shape_cast %117 : vector<64xf32> to vector<64x1xf32>
    %119 = vector.broadcast %118 : vector<64x1xf32> to vector<64x64xf32>
    %120 = arith.divf %116, %119 : vector<64x64xf32>
    %121 = arith.truncf %120 : vector<64x64xf32> to vector<64x64xbf16>
    %122 = arith.truncf %104 : vector<64x32xf32> to vector<64x32xbf16>
    %cst_38 = arith.constant dense<0.000000e+00> : vector<64x32xf32>
    %123 = tpu.matmul %121, %122, %cst_38 {dimension_numbers = #tpu.dot_dimension_numbers<[1], [0], [0], [1], [0, 0, 1, 1], [], []>} : vector<64x64xbf16>, vector<64x32xbf16>, vector<64x32xf32> -> vector<64x32xf32>
    %124 = tpu.concatenate %57, %79, %101, %123 in 1 : vector<64x32xf32>, vector<64x32xf32>, vector<64x32xf32>, vector<64x32xf32> -> vector<64x128xf32>
    %125 = arith.truncf %124 : vector<64x128xf32> to vector<64x128xbf16>
    %c0_39 = arith.constant 0 : index
    %c0_40 = arith.constant 0 : index
    %126 = vector.load %arg10[%c0_39, %c0_40] : memref<128x128xbf16, #tpu.memory_space<vmem>>, vector<128x128xbf16>
    %cst_41 = arith.constant dense<0.000000e+00> : vector<64x128xf32>
    %127 = tpu.matmul %125, %126, %cst_41 {dimension_numbers = #tpu.dot_dimension_numbers<[1], [0], [0], [1], [0, 0, 1, 1], [], []>} : vector<64x128xbf16>, vector<128x128xbf16>, vector<64x128xf32> -> vector<64x128xf32>
    %c0_42 = arith.constant 0 : index
    %c0_43 = arith.constant 0 : index
    %128 = vector.load %arg11[%c0_42, %c0_43] : memref<1x128xf32, #tpu.memory_space<vmem>>, vector<1x128xf32>
    %129 = vector.broadcast %128 : vector<1x128xf32> to vector<64x128xf32>
    %130 = arith.addf %127, %129 : vector<64x128xf32>
    %131 = arith.addf %2, %130 : vector<64x128xf32>
    %cst_44 = arith.constant dense<0.000000e+00> : vector<64xf32>
    %132 = vector.multi_reduction <add>, %131, %cst_44 [1] : vector<64x128xf32> to vector<64xf32>
    %133 = vector.shape_cast %132 : vector<64xf32> to vector<64x1xf32>
    %cst_45 = arith.constant 1.280000e+02 : f32
    %134 = vector.broadcast %cst_45 : f32 to vector<64x1xf32>
    %135 = arith.divf %133, %134 : vector<64x1xf32>
    %136 = vector.broadcast %135 : vector<64x1xf32> to vector<64x128xf32>
    %137 = arith.subf %131, %136 : vector<64x128xf32>
    %138 = arith.mulf %137, %137 : vector<64x128xf32>
    %cst_46 = arith.constant dense<0.000000e+00> : vector<64xf32>
    %139 = vector.multi_reduction <add>, %138, %cst_46 [1] : vector<64x128xf32> to vector<64xf32>
    %140 = vector.shape_cast %139 : vector<64xf32> to vector<64x1xf32>
    %cst_47 = arith.constant 1.280000e+02 : f32
    %141 = vector.broadcast %cst_47 : f32 to vector<64x1xf32>
    %142 = arith.divf %140, %141 : vector<64x1xf32>
    %143 = vector.broadcast %135 : vector<64x1xf32> to vector<64x128xf32>
    %144 = arith.subf %131, %143 : vector<64x128xf32>
    %cst_48 = arith.constant 9.99999974E-6 : f32
    %145 = vector.broadcast %cst_48 : f32 to vector<64x1xf32>
    %146 = arith.addf %142, %145 : vector<64x1xf32>
    %147 = math.rsqrt %146 : vector<64x1xf32>
    %148 = vector.broadcast %147 : vector<64x1xf32> to vector<64x128xf32>
    %149 = arith.mulf %144, %148 : vector<64x128xf32>
    %c0_49 = arith.constant 0 : index
    %c0_50 = arith.constant 0 : index
    %150 = vector.load %arg12[%c0_49, %c0_50] : memref<1x128xf32, #tpu.memory_space<vmem>>, vector<1x128xf32>
    %151 = vector.broadcast %150 : vector<1x128xf32> to vector<64x128xf32>
    %152 = arith.mulf %149, %151 : vector<64x128xf32>
    %c0_51 = arith.constant 0 : index
    %c0_52 = arith.constant 0 : index
    %153 = vector.load %arg13[%c0_51, %c0_52] : memref<1x128xf32, #tpu.memory_space<vmem>>, vector<1x128xf32>
    %154 = vector.broadcast %153 : vector<1x128xf32> to vector<64x128xf32>
    %155 = arith.addf %152, %154 : vector<64x128xf32>
    %156 = arith.truncf %155 : vector<64x128xf32> to vector<64x128xbf16>
    %c0_53 = arith.constant 0 : index
    %c0_54 = arith.constant 0 : index
    %157 = vector.load %arg14[%c0_53, %c0_54] : memref<128x512xbf16, #tpu.memory_space<vmem>>, vector<128x512xbf16>
    %cst_55 = arith.constant dense<0.000000e+00> : vector<64x512xf32>
    %158 = tpu.matmul %156, %157, %cst_55 {dimension_numbers = #tpu.dot_dimension_numbers<[1], [0], [0], [1], [0, 0, 1, 1], [], []>} : vector<64x128xbf16>, vector<128x512xbf16>, vector<64x512xf32> -> vector<64x512xf32>
    %c0_56 = arith.constant 0 : index
    %c0_57 = arith.constant 0 : index
    %159 = vector.load %arg15[%c0_56, %c0_57] : memref<1x512xf32, #tpu.memory_space<vmem>>, vector<1x512xf32>
    %160 = vector.broadcast %159 : vector<1x512xf32> to vector<64x512xf32>
    %161 = arith.addf %158, %160 : vector<64x512xf32>
    %cst_58 = arith.constant 5.000000e-01 : f32
    %162 = vector.broadcast %cst_58 : f32 to vector<64x512xf32>
    %163 = arith.mulf %162, %161 : vector<64x512xf32>
    %cst_59 = arith.constant 0.707106769 : f32
    %164 = vector.broadcast %cst_59 : f32 to vector<64x512xf32>
    %165 = arith.mulf %161, %164 : vector<64x512xf32>
    %166 = math.erf %165 : vector<64x512xf32>
    %cst_60 = arith.constant 1.000000e+00 : f32
    %167 = vector.broadcast %cst_60 : f32 to vector<64x512xf32>
    %168 = arith.addf %167, %166 : vector<64x512xf32>
    %169 = arith.mulf %163, %168 : vector<64x512xf32>
    %170 = arith.truncf %169 : vector<64x512xf32> to vector<64x512xbf16>
    %c0_61 = arith.constant 0 : index
    %c0_62 = arith.constant 0 : index
    %171 = vector.load %arg16[%c0_61, %c0_62] : memref<512x128xbf16, #tpu.memory_space<vmem>>, vector<512x128xbf16>
    %cst_63 = arith.constant dense<0.000000e+00> : vector<64x128xf32>
    %172 = tpu.matmul %170, %171, %cst_63 {dimension_numbers = #tpu.dot_dimension_numbers<[1], [0], [0], [1], [0, 0, 1, 1], [], []>} : vector<64x512xbf16>, vector<512x128xbf16>, vector<64x128xf32> -> vector<64x128xf32>
    %c0_64 = arith.constant 0 : index
    %c0_65 = arith.constant 0 : index
    %173 = vector.load %arg17[%c0_64, %c0_65] : memref<1x128xf32, #tpu.memory_space<vmem>>, vector<1x128xf32>
    %174 = vector.broadcast %173 : vector<1x128xf32> to vector<64x128xf32>
    %175 = arith.addf %172, %174 : vector<64x128xf32>
    %176 = arith.addf %131, %175 : vector<64x128xf32>
    %177 = vector.shape_cast %176 : vector<64x128xf32> to vector<8x8x128xf32>
    %c0_66 = arith.constant 0 : index
    %c0_67 = arith.constant 0 : index
    %c0_68 = arith.constant 0 : index
    %c0_69 = arith.constant 0 : index
    %178 = vector.load %arg18[%c0_66, %c0_67, %c0_68, %c0_69] : memref<1x8x8x128xf32, #tpu.memory_space<vmem>>, vector<1x8x8x128xf32>
    %179 = vector.shape_cast %178 : vector<1x8x8x128xf32> to vector<8x8x128xf32>
    %180 = vector.shape_cast %177 : vector<8x8x128xf32> to vector<1x8x8x128xf32>
    tpu.vector_store %arg18[%c0_66, %c0_67, %c0_68, %c0_69], %180 {strides = array<i32>} : memref<1x8x8x128xf32, #tpu.memory_space<vmem>>, vector<1x8x8x128xf32>,
    return
  }
  func.func @transform_0(%arg0: i32, %arg1: i32, %arg2: i32) -> (i32, i32, i32, i32) {
    %c0_i32 = arith.constant 0 : i32
    %c0_i32_0 = arith.constant 0 : i32
    return %arg0, %arg1, %arg2, %c0_i32 : i32, i32, i32, i32
  }
  func.func @transform_1(%arg0: i32, %arg1: i32, %arg2: i32) -> (i32, i32, i32, i32) {
    %c0_i32 = arith.constant 0 : i32
    %c0_i32_0 = arith.constant 0 : i32
    %c0_i32_1 = arith.constant 0 : i32
    return %arg1, %arg2, %c0_i32, %c0_i32_0 : i32, i32, i32, i32
  }
  func.func @transform_2(%arg0: i32, %arg1: i32, %arg2: i32) -> (i32, i32, i32) {
    %c0_i32 = arith.constant 0 : i32
    %c0_i32_0 = arith.constant 0 : i32
    %c0_i32_1 = arith.constant 0 : i32
    %c0_i32_2 = arith.constant 0 : i32
    return %c0_i32, %c0_i32_0, %c0_i32_1 : i32, i32, i32
  }
  func.func @transform_3(%arg0: i32, %arg1: i32, %arg2: i32) -> (i32, i32) {
    %c0_i32 = arith.constant 0 : i32
    %c0_i32_0 = arith.constant 0 : i32
    %c0_i32_1 = arith.constant 0 : i32
    return %c0_i32, %c0_i32_0 : i32, i32
  }
  func.func @transform_4(%arg0: i32, %arg1: i32, %arg2: i32) -> (i32, i32) {
    %c0_i32 = arith.constant 0 : i32
    %c0_i32_0 = arith.constant 0 : i32
    %c0_i32_1 = arith.constant 0 : i32
    return %c0_i32, %c0_i32_0 : i32, i32
  }
  func.func @transform_5(%arg0: i32, %arg1: i32, %arg2: i32) -> (i32, i32) {
    %c0_i32 = arith.constant 0 : i32
    %c0_i32_0 = arith.constant 0 : i32
    %c0_i32_1 = arith.constant 0 : i32
    return %c0_i32, %c0_i32_0 : i32, i32
  }
  func.func @transform_6(%arg0: i32, %arg1: i32, %arg2: i32) -> (i32, i32) {
    %c0_i32 = arith.constant 0 : i32
    %c0_i32_0 = arith.constant 0 : i32
    %c0_i32_1 = arith.constant 0 : i32
    return %c0_i32, %c0_i32_0 : i32, i32
  }
  func.func @transform_7(%arg0: i32, %arg1: i32, %arg2: i32) -> (i32, i32) {
    %c0_i32 = arith.constant 0 : i32
    %c0_i32_0 = arith.constant 0 : i32
    %c0_i32_1 = arith.constant 0 : i32
    return %c0_i32, %c0_i32_0 : i32, i32
  }
  func.func @transform_8(%arg0: i32, %arg1: i32, %arg2: i32) -> (i32, i32) {
    %c0_i32 = arith.constant 0 : i32
    %c0_i32_0 = arith.constant 0 : i32
    %c0_i32_1 = arith.constant 0 : i32
    return %c0_i32, %c0_i32_0 : i32, i32
  }
  func.func @transform_9(%arg0: i32, %arg1: i32, %arg2: i32) -> (i32, i32) {
    %c0_i32 = arith.constant 0 : i32
    %c0_i32_0 = arith.constant 0 : i32
    %c0_i32_1 = arith.constant 0 : i32
    return %c0_i32, %c0_i32_0 : i32, i32
  }
  func.func @transform_10(%arg0: i32, %arg1: i32, %arg2: i32) -> (i32, i32) {
    %c0_i32 = arith.constant 0 : i32
    %c0_i32_0 = arith.constant 0 : i32
    %c0_i32_1 = arith.constant 0 : i32
    return %c0_i32, %c0_i32_0 : i32, i32
  }
  func.func @transform_11(%arg0: i32, %arg1: i32, %arg2: i32) -> (i32, i32) {
    %c0_i32 = arith.constant 0 : i32
    %c0_i32_0 = arith.constant 0 : i32
    %c0_i32_1 = arith.constant 0 : i32
    return %c0_i32, %c0_i32_0 : i32, i32
  }
  func.func @transform_12(%arg0: i32, %arg1: i32, %arg2: i32) -> (i32, i32) {
    %c0_i32 = arith.constant 0 : i32
    %c0_i32_0 = arith.constant 0 : i32
    %c0_i32_1 = arith.constant 0 : i32
    return %c0_i32, %c0_i32_0 : i32, i32
  }
  func.func @transform_13(%arg0: i32, %arg1: i32, %arg2: i32) -> (i32, i32) {
    %c0_i32 = arith.constant 0 : i32
    %c0_i32_0 = arith.constant 0 : i32
    %c0_i32_1 = arith.constant 0 : i32
    return %c0_i32, %c0_i32_0 : i32, i32
  }
  func.func @transform_14(%arg0: i32, %arg1: i32, %arg2: i32) -> (i32, i32) {
    %c0_i32 = arith.constant 0 : i32
    %c0_i32_0 = arith.constant 0 : i32
    %c0_i32_1 = arith.constant 0 : i32
    return %c0_i32, %c0_i32_0 : i32, i32
  }
  func.func @transform_15(%arg0: i32, %arg1: i32, %arg2: i32) -> (i32, i32, i32, i32) {
    %c0_i32 = arith.constant 0 : i32
    %c0_i32_0 = arith.constant 0 : i32
    return %arg0, %arg1, %arg2, %c0_i32 : i32, i32, i32, i32
  }
}

</mosaic_0001>

<llo_original>
// kernel: swin_block_forward.3
$region0: #{swin_block_forward.3}
  #allocation0 [shape = 'u32[]', space=smem, size = 0x4, offset = 0x4, fixed_abs, tag = 'smem constant byte address 0x4 - core index']
  #allocation1 [shape = 'u32[144,128]{1,0:T(1,128)}', space=vmem, size = 0x12000, scoped, tag = 'internal scratch']
  %s0 = inlined_call_operand.vmem [shape: f32[2,16,16,128], index: 0, kind: input, shape index: {}]
  %s1 = inlined_call_operand.vmem [shape: f32[2,2,64,64], index: 1, kind: input, shape index: {}]
  %s2 = inlined_call_operand.vmem [shape: f32[4,64,64], index: 2, kind: input, shape index: {}]
  %s3 = inlined_call_operand.vmem [shape: f32[1,128], index: 3, kind: input, shape index: {}]
  %s4 = inlined_call_operand.vmem [shape: f32[1,128], index: 4, kind: input, shape index: {}]
  %s5 = inlined_call_operand.vmem [shape: bf16[128,384], index: 5, kind: input, shape index: {}]
  %s6 = inlined_call_operand.vmem [shape: f32[1,384], index: 6, kind: input, shape index: {}]
  %s7 = inlined_call_operand.vmem [shape: bf16[128,128], index: 7, kind: input, shape index: {}]
  %s8 = inlined_call_operand.vmem [shape: f32[1,128], index: 8, kind: input, shape index: {}]
  %s9 = inlined_call_operand.vmem [shape: f32[1,128], index: 9, kind: input, shape index: {}]
  %s10 = inlined_call_operand.vmem [shape: f32[1,128], index: 10, kind: input, shape index: {}]
  %s11 = inlined_call_operand.vmem [shape: bf16[128,512], index: 11, kind: input, shape index: {}]
  %s12 = inlined_call_operand.vmem [shape: f32[1,512], index: 12, kind: input, shape index: {}]
  %s13 = inlined_call_operand.vmem [shape: bf16[512,128], index: 13, kind: input, shape index: {}]
  %s14 = inlined_call_operand.vmem [shape: f32[1,128], index: 14, kind: input, shape index: {}]
  %s15 = inlined_call_operand.vmem [shape: f32[2,16,16,128], index: 15, kind: output, shape index: {}]
  %s16 = sld [smem:[#allocation0]]
  $region165: #{swin_block_forward.3} parent=0
    _
  %s18 = ssub.s32 1, %s16
  %s19 = scalar_select 0, %s18, %s16
  $region1: #{swin_block_forward.3} parent=0
    #allocation2 [shape = 'u8[65536]{0}', space=vmem, size = 0x10000, scoped, tag = 'input window, operand 0']
    #allocation3 [shape = 'u8[65536]{0}', space=vmem, size = 0x10000, scoped, tag = 'output window, operand 0']
    loop: start=0, step=1, limit=10
    $region2: #{swin_block_forward.3} parent=1 // loop_pre_header
      _
    $region3: #{swin_block_forward.3} parent=1 // loop_header
      %s21 = sphi 0, %s25
      %p22 = scmp.ge.s32.totalorder %s21, 10
      %s28 = sphi 0, %s47
      %s29 = sphi 0, %s43
      %s30 = sphi 0, %s39
      %s31 = sphi 0, %s28
      %s32 = sphi 0, %s29
      %s33 = sphi 0, %s30
      %s34 = sphi 0, %s31
      %s35 = sphi 0, %s32
      %s36 = sphi 0, %s33
      %s54 = sphi 0, %s56
      %s57 = sphi 0, %s54
      %s58 = sphi 0, %s57
      %s74 = sphi 0, %s58
      %s82 = sphi 0, %s84
      %s85 = sphi 0, %s82
      %s86 = sphi 0, %s85
      %s102 = sphi 0, %s86
      %s106 = sphi 0, %s106
      %s108 = sphi 0, %s106
      %s109 = sphi 0, %s108
      %s123 = sphi 0, %s109
      %s127 = sphi 0, %s127
      %s129 = sphi 0, %s127
      %s130 = sphi 0, %s129
      %s144 = sphi 0, %s130
      %s148 = sphi 0, %s148
      %s150 = sphi 0, %s148
      %s151 = sphi 0, %s150
      %s165 = sphi 0, %s151
      %s169 = sphi 0, %s169
      %s171 = sphi 0, %s169
      %s172 = sphi 0, %s171
      %s186 = sphi 0, %s172
      %s190 = sphi 0, %s190
      %s192 = sphi 0, %s190
      %s193 = sphi 0, %s192
      %s207 = sphi 0, %s193
      %s211 = sphi 0, %s211
      %s213 = sphi 0, %s211
      %s214 = sphi 0, %s213
      %s228 = sphi 0, %s214
      %s232 = sphi 0, %s232
      %s234 = sphi 0, %s232
      %s235 = sphi 0, %s234
      %s249 = sphi 0, %s235
      %s253 = sphi 0, %s253
      %s255 = sphi 0, %s253
      %s256 = sphi 0, %s255
      %s270 = sphi 0, %s256
      %s274 = sphi 0, %s274
      %s276 = sphi 0, %s274
      %s277 = sphi 0, %s276
      %s291 = sphi 0, %s277
      %s295 = sphi 0, %s295
      %s297 = sphi 0, %s295
      %s298 = sphi 0, %s297
      %s312 = sphi 0, %s298
      %s316 = sphi 0, %s316
      %s318 = sphi 0, %s316
      %s319 = sphi 0, %s318
      %s333 = sphi 0, %s319
      %s337 = sphi 0, %s337
      %s339 = sphi 0, %s337
      %s340 = sphi 0, %s339
      %s354 = sphi 0, %s340
      %s358 = sphi 0, %s358
      %s360 = sphi 0, %s358
      %s361 = sphi 0, %s360
      %s375 = sphi 0, %s361
      %s385 = sphi 0, %s387
      %s388 = sphi 0, %s385
      %s389 = sphi 0, %s388
      %s405 = sphi 0, %s389
    $region4: #{swin_block_forward.3} parent=1 // loop_header_branch
      %24 = sbr.rel (%p22) target = $region8
    $region5: #{swin_block_forward.3} parent=1 // loop_body
      %s26 = ssub.s32 %s21, 1
      %s27 = ssub.s32 %s21, 2
      %s37 = sadd.s32 1, %s30
      %p38 = scmp.ge.s32.totalorder %s37, 2
      %s39 = scalar_select %p38, 0, %s37
      %s40 = sadd.s32 1, %s29
      %s41 = scalar_select %p38, %s40, %s29
      %p42 = scmp.ge.s32.totalorder %s41, 2
      %s43 = scalar_select %p42, 0, %s41
      %s44 = sadd.s32 1, %s28
      %s45 = scalar_select %p42, %s44, %s28
      %p46 = scmp.ge.s32.totalorder %s45, 2
      %s47 = scalar_select %p46, 0, %s45
      %s48 = ssub.s32 %s28, %s47
      %s49 = ssub.s32 %s29, %s43
      %s50 = sor.u32 %s48, %s49
      %s51 = ssub.s32 %s30, %s39
      %s52 = sor.u32 %s50, %s51
      %p53 = scmp.eq.s32.totalorder %s52, 0
      %s55 = sadd.s32 %s54, 1
      %s56 = scalar_select %p53, %s54, %s55
      %p59 = pneg %p53
      %p60 = scmp.eq.s32.totalorder %s21, 7
      %p61 = por %p59, %p60
      %p62 = scmp.ne.s32.totalorder %s54, %s57
      %p63 = scmp.eq.s32.totalorder %s21, 0
      %p64 = por %p62, %p63
      %p65 = scmp.ne.s32.totalorder %s54, %s57
      %p66 = scmp.eq.s32.totalorder %s26, 7
      %p67 = por %p65, %p66
      %p68 = scmp.ne.s32.totalorder %s57, %s58
      %p69 = scmp.eq.s32.totalorder %s26, 0
      %p70 = por %p68, %p69
      %p71 = scmp.ne.s32.totalorder %s57, %s58
      %p72 = scmp.eq.s32.totalorder %s27, 7
      %p73 = por %p71, %p72
      %p75 = scmp.ne.s32.totalorder %s58, %s74
      %p76 = scmp.eq.s32.totalorder %s27, 0
      %p77 = por %p75, %p76
      %s78 = ssub.s32 %s29, %s43
      %s79 = ssub.s32 %s30, %s39
      %s80 = sor.u32 %s78, %s79
      %p81 = scmp.eq.s32.totalorder %s80, 0
      %s83 = sadd.s32 %s82, 1
      %s84 = scalar_select %p81, %s82, %s83
      %p87 = pneg %p81
      %p88 = scmp.eq.s32.totalorder %s21, 7
      %p89 = por %p87, %p88
      %p90 = scmp.ne.s32.totalorder %s82, %s85
      %p91 = scmp.eq.s32.totalorder %s21, 0
      %p92 = por %p90, %p91
      %p93 = scmp.ne.s32.totalorder %s82, %s85
      %p94 = scmp.eq.s32.totalorder %s26, 7
      %p95 = por %p93, %p94
      %p96 = scmp.ne.s32.totalorder %s85, %s86
      %p97 = scmp.eq.s32.totalorder %s26, 0
      %p98 = por %p96, %p97
      %p99 = scmp.ne.s32.totalorder %s85, %s86
      %p100 = scmp.eq.s32.totalorder %s27, 7
      %p101 = por %p99, %p100
      %p103 = scmp.ne.s32.totalorder %s86, %s102
      %p104 = scmp.eq.s32.totalorder %s27, 0
      %p105 = por %p103, %p104
      %s107 = sadd.s32 %s106, 1
      %p110 = scmp.eq.s32.totalorder %s21, 7
      %p111 = scmp.ne.s32.totalorder %s106, %s108
      %p112 = scmp.eq.s32.totalorder %s21, 0
      %p113 = por %p111, %p112
      %p114 = scmp.ne.s32.totalorder %s106, %s108
      %p115 = scmp.eq.s32.totalorder %s26, 7
      %p116 = por %p114, %p115
      %p117 = scmp.ne.s32.totalorder %s108, %s109
      %p118 = scmp.eq.s32.totalorder %s26, 0
      %p119 = por %p117, %p118
      %p120 = scmp.ne.s32.totalorder %s108, %s109
      %p121 = scmp.eq.s32.totalorder %s27, 7
      %p122 = por %p120, %p121
      %p124 = scmp.ne.s32.totalorder %s109, %s123
      %p125 = scmp.eq.s32.totalorder %s27, 0
      %p126 = por %p124, %p125
      %s128 = sadd.s32 %s127, 1
      %p131 = scmp.eq.s32.totalorder %s21, 7
      %p132 = scmp.ne.s32.totalorder %s127, %s129
      %p133 = scmp.eq.s32.totalorder %s21, 0
      %p134 = por %p132, %p133
      %p135 = scmp.ne.s32.totalorder %s127, %s129
      %p136 = scmp.eq.s32.totalorder %s26, 7
      %p137 = por %p135, %p136
      %p138 = scmp.ne.s32.totalorder %s129, %s130
      %p139 = scmp.eq.s32.totalorder %s26, 0
      %p140 = por %p138, %p139
      %p141 = scmp.ne.s32.totalorder %s129, %s130
      %p142 = scmp.eq.s32.totalorder %s27, 7
      %p143 = por %p141, %p142
      %p145 = scmp.ne.s32.totalorder %s130, %s144
      %p146 = scmp.eq.s32.totalorder %s27, 0
      %p147 = por %p145, %p146
      %s149 = sadd.s32 %s148, 1
      %p152 = scmp.eq.s32.totalorder %s21, 7
      %p153 = scmp.ne.s32.totalorder %s148, %s150
      %p154 = scmp.eq.s32.totalorder %s21, 0
      %p155 = por %p153, %p154
      %p156 = scmp.ne.s32.totalorder %s148, %s150
      %p157 = scmp.eq.s32.totalorder %s26, 7
      %p158 = por %p156, %p157
      %p159 = scmp.ne.s32.totalorder %s150, %s151
      %p160 = scmp.eq.s32.totalorder %s26, 0
      %p161 = por %p159, %p160
      %p162 = scmp.ne.s32.totalorder %s150, %s151
      %p163 = scmp.eq.s32.totalorder %s27, 7
      %p164 = por %p162, %p163
      %p166 = scmp.ne.s32.totalorder %s151, %s165
      %p167 = scmp.eq.s32.totalorder %s27, 0
      %p168 = por %p166, %p167
      %s170 = sadd.s32 %s169, 1
      %p173 = scmp.eq.s32.totalorder %s21, 7
      %p174 = scmp.ne.s32.totalorder %s169, %s171
      %p175 = scmp.eq.s32.totalorder %s21, 0
      %p176 = por %p174, %p175
      %p177 = scmp.ne.s32.totalorder %s169, %s171
      %p178 = scmp.eq.s32.totalorder %s26, 7
      %p179 = por %p177, %p178
      %p180 = scmp.ne.s32.totalorder %s171, %s172
      %p181 = scmp.eq.s32.totalorder %s26, 0
      %p182 = por %p180, %p181
      %p183 = scmp.ne.s32.totalorder %s171, %s172
      %p184 = scmp.eq.s32.totalorder %s27, 7
      %p185 = por %p183, %p184
      %p187 = scmp.ne.s32.totalorder %s172, %s186
      %p188 = scmp.eq.s32.totalorder %s27, 0
      %p189 = por %p187, %p188
      %s191 = sadd.s32 %s190, 1
      %p194 = scmp.eq.s32.totalorder %s21, 7
      %p195 = scmp.ne.s32.totalorder %s190, %s192
      %p196 = scmp.eq.s32.totalorder %s21, 0
      %p197 = por %p195, %p196
      %p198 = scmp.ne.s32.totalorder %s190, %s192
      %p199 = scmp.eq.s32.totalorder %s26, 7
      %p200 = por %p198, %p199
      %p201 = scmp.ne.s32.totalorder %s192, %s193
      %p202 = scmp.eq.s32.totalorder %s26, 0
      %p203 = por %p201, %p202
      %p204 = scmp.ne.s32.totalorder %s192, %s193
      %p205 = scmp.eq.s32.totalorder %s27, 7
      %p206 = por %p204, %p205
      %p208 = scmp.ne.s32.totalorder %s193, %s207
      %p209 = scmp.eq.s32.totalorder %s27, 0
      %p210 = por %p208, %p209
      %s212 = sadd.s32 %s211, 1
      %p215 = scmp.eq.s32.totalorder %s21, 7
      %p216 = scmp.ne.s32.totalorder %s211, %s213
      %p217 = scmp.eq.s32.totalorder %s21, 0
      %p218 = por %p216, %p217
      %p219 = scmp.ne.s32.totalorder %s211, %s213
      %p220 = scmp.eq.s32.totalorder %s26, 7
      %p221 = por %p219, %p220
      %p222 = scmp.ne.s32.totalorder %s213, %s214
      %p223 = scmp.eq.s32.totalorder %s26, 0
      %p224 = por %p222, %p223
      %p225 = scmp.ne.s32.totalorder %s213, %s214
      %p226 = scmp.eq.s32.totalorder %s27, 7
      %p227 = por %p225, %p226
      %p229 = scmp.ne.s32.totalorder %s214, %s228
      %p230 = scmp.eq.s32.totalorder %s27, 0
      %p231 = por %p229, %p230
      %s233 = sadd.s32 %s232, 1
      %p236 = scmp.eq.s32.totalorder %s21, 7
      %p237 = scmp.ne.s32.totalorder %s232, %s234
      %p238 = scmp.eq.s32.totalorder %s21, 0
      %p239 = por %p237, %p238
      %p240 = scmp.ne.s32.totalorder %s232, %s234
      %p241 = scmp.eq.s32.totalorder %s26, 7
      %p242 = por %p240, %p241
      %p243 = scmp.ne.s32.totalorder %s234, %s235
      %p244 = scmp.eq.s32.totalorder %s26, 0
      %p245 = por %p243, %p244
      %p246 = scmp.ne.s32.totalorder %s234, %s235
      %p247 = scmp.eq.s32.totalorder %s27, 7
      %p248 = por %p246, %p247
      %p250 = scmp.ne.s32.totalorder %s235, %s249
      %p251 = scmp.eq.s32.totalorder %s27, 0
      %p252 = por %p250, %p251
      %s254 = sadd.s32 %s253, 1
      %p257 = scmp.eq.s32.totalorder %s21, 7
      %p258 = scmp.ne.s32.totalorder %s253, %s255
      %p259 = scmp.eq.s32.totalorder %s21, 0
      %p260 = por %p258, %p259
      %p261 = scmp.ne.s32.totalorder %s253, %s255
      %p262 = scmp.eq.s32.totalorder %s26, 7
      %p263 = por %p261, %p262
      %p264 = scmp.ne.s32.totalorder %s255, %s256
      %p265 = scmp.eq.s32.totalorder %s26, 0
      %p266 = por %p264, %p265
      %p267 = scmp.ne.s32.totalorder %s255, %s256
      %p268 = scmp.eq.s32.totalorder %s27, 7
      %p269 = por %p267, %p268
      %p271 = scmp.ne.s32.totalorder %s256, %s270
      %p272 = scmp.eq.s32.totalorder %s27, 0
      %p273 = por %p271, %p272
      %s275 = sadd.s32 %s274, 1
      %p278 = scmp.eq.s32.totalorder %s21, 7
      %p279 = scmp.ne.s32.totalorder %s274, %s276
      %p280 = scmp.eq.s32.totalorder %s21, 0
      %p281 = por %p279, %p280
      %p282 = scmp.ne.s32.totalorder %s274, %s276
      %p283 = scmp.eq.s32.totalorder %s26, 7
      %p284 = por %p282, %p283
      %p285 = scmp.ne.s32.totalorder %s276, %s277
      %p286 = scmp.eq.s32.totalorder %s26, 0
      %p287 = por %p285, %p286
      %p288 = scmp.ne.s32.totalorder %s276, %s277
      %p289 = scmp.eq.s32.totalorder %s27, 7
      %p290 = por %p288, %p289
      %p292 = scmp.ne.s32.totalorder %s277, %s291
      %p293 = scmp.eq.s32.totalorder %s27, 0
      %p294 = por %p292, %p293
      %s296 = sadd.s32 %s295, 1
      %p299 = scmp.eq.s32.totalorder %s21, 7
      %p300 = scmp.ne.s32.totalorder %s295, %s297
      %p301 = scmp.eq.s32.totalorder %s21, 0
      %p302 = por %p300, %p301
      %p303 = scmp.ne.s32.totalorder %s295, %s297
      %p304 = scmp.eq.s32.totalorder %s26, 7
      %p305 = por %p303, %p304
      %p306 = scmp.ne.s32.totalorder %s297, %s298
      %p307 = scmp.eq.s32.totalorder %s26, 0
      %p308 = por %p306, %p307
      %p309 = scmp.ne.s32.totalorder %s297, %s298
      %p310 = scmp.eq.s32.totalorder %s27, 7
      %p311 = por %p309, %p310
      %p313 = scmp.ne.s32.totalorder %s298, %s312
      %p314 = scmp.eq.s32.totalorder %s27, 0
      %p315 = por %p313, %p314
      %s317 = sadd.s32 %s316, 1
      %p320 = scmp.eq.s32.totalorder %s21, 7
      %p321 = scmp.ne.s32.totalorder %s316, %s318
      %p322 = scmp.eq.s32.totalorder %s21, 0
      %p323 = por %p321, %p322
      %p324 = scmp.ne.s32.totalorder %s316, %s318
      %p325 = scmp.eq.s32.totalorder %s26, 7
      %p326 = por %p324, %p325
      %p327 = scmp.ne.s32.totalorder %s318, %s319
      %p328 = scmp.eq.s32.totalorder %s26, 0
      %p329 = por %p327, %p328
      %p330 = scmp.ne.s32.totalorder %s318, %s319
      %p331 = scmp.eq.s32.totalorder %s27, 7
      %p332 = por %p330, %p331
      %p334 = scmp.ne.s32.totalorder %s319, %s333
      %p335 = scmp.eq.s32.totalorder %s27, 0
      %p336 = por %p334, %p335
      %s338 = sadd.s32 %s337, 1
      %p341 = scmp.eq.s32.totalorder %s21, 7
      %p342 = scmp.ne.s32.totalorder %s337, %s339
      %p343 = scmp.eq.s32.totalorder %s21, 0
      %p344 = por %p342, %p343
      %p345 = scmp.ne.s32.totalorder %s337, %s339
      %p346 = scmp.eq.s32.totalorder %s26, 7
      %p347 = por %p345, %p346
      %p348 = scmp.ne.s32.totalorder %s339, %s340
      %p349 = scmp.eq.s32.totalorder %s26, 0
      %p350 = por %p348, %p349
      %p351 = scmp.ne.s32.totalorder %s339, %s340
      %p352 = scmp.eq.s32.totalorder %s27, 7
      %p353 = por %p351, %p352
      %p355 = scmp.ne.s32.totalorder %s340, %s354
      %p356 = scmp.eq.s32.totalorder %s27, 0
      %p357 = por %p355, %p356
      %s359 = sadd.s32 %s358, 1
      %p362 = scmp.eq.s32.totalorder %s21, 7
      %p363 = scmp.ne.s32.totalorder %s358, %s360
      %p364 = scmp.eq.s32.totalorder %s21, 0
      %p365 = por %p363, %p364
      %p366 = scmp.ne.s32.totalorder %s358, %s360
      %p367 = scmp.eq.s32.totalorder %s26, 7
      %p368 = por %p366, %p367
      %p369 = scmp.ne.s32.totalorder %s360, %s361
      %p370 = scmp.eq.s32.totalorder %s26, 0
      %p371 = por %p369, %p370
      %p372 = scmp.ne.s32.totalorder %s360, %s361
      %p373 = scmp.eq.s32.totalorder %s27, 7
      %p374 = por %p372, %p373
      %p376 = scmp.ne.s32.totalorder %s361, %s375
      %p377 = scmp.eq.s32.totalorder %s27, 0
      %p378 = por %p376, %p377
      %s379 = ssub.s32 %s28, %s47
      %s380 = ssub.s32 %s29, %s43
      %s381 = sor.u32 %s379, %s380
      %s382 = ssub.s32 %s30, %s39
      %s383 = sor.u32 %s381, %s382
      %p384 = scmp.eq.s32.totalorder %s383, 0
      %s386 = sadd.s32 %s385, 1
      %s387 = scalar_select %p384, %s385, %s386
      %p390 = pneg %p384
      %p391 = scmp.eq.s32.totalorder %s21, 7
      %p392 = por %p390, %p391
      %p393 = scmp.ne.s32.totalorder %s385, %s388
      %p394 = scmp.eq.s32.totalorder %s21, 0
      %p395 = por %p393, %p394
      %p396 = scmp.ne.s32.totalorder %s385, %s388
      %p397 = scmp.eq.s32.totalorder %s26, 7
      %p398 = por %p396, %p397
      %p399 = scmp.ne.s32.totalorder %s388, %s389
      %p400 = scmp.eq.s32.totalorder %s26, 0
      %p401 = por %p399, %p400
      %p402 = scmp.ne.s32.totalorder %s388, %s389
      %p403 = scmp.eq.s32.totalorder %s27, 7
      %p404 = por %p402, %p403
      %p406 = scmp.ne.s32.totalorder %s389, %s405
      %p407 = scmp.eq.s32.totalorder %s27, 0
      %p408 = por %p406, %p407
      %p409 = scmp.le.s32.totalorder 1, %s21
      %p410 = scmp.lt.s32.totalorder %s21, 9
      %p411 = pnand %p409, %p410
      %p412 = pneg %p411
      // Predicated region
      $region9: #{swin_block_forward.3} parent=5 // pred_check
        _
      $region10: #{swin_block_forward.3} parent=5 // pred_check_branch
        %414 = sbr.rel (%p411) target = $region12
      $region11: #{swin_block_forward.3} parent=5 // pred_region
        %s415 = ssub.s32 %s21, 1
        // Predicated region
        $region13: #{swin_block_forward.3} parent=11 // pred_check
          %p416 = pneg %p119
        $region14: #{swin_block_forward.3} parent=11 // pred_check_branch
          %418 = sbr.rel (%p416) target = $region16
        $region15: #{swin_block_forward.3} parent=11 // pred_region
          _
        $region16: #{swin_block_forward.3} parent=11 // pred_fallthru
          _
        // Predicated region
        $region17: #{swin_block_forward.3} parent=11 // pred_check
          %p419 = pneg %p140
        $region18: #{swin_block_forward.3} parent=11 // pred_check_branch
          %421 = sbr.rel (%p419) target = $region20
        $region19: #{swin_block_forward.3} parent=11 // pred_region
          _
        $region20: #{swin_block_forward.3} parent=11 // pred_fallthru
          _
        // Predicated region
        $region21: #{swin_block_forward.3} parent=11 // pred_check
          %p422 = pneg %p161
        $region22: #{swin_block_forward.3} parent=11 // pred_check_branch
          %424 = sbr.rel (%p422) target = $region24
        $region23: #{swin_block_forward.3} parent=11 // pred_region
          _
        $region24: #{swin_block_forward.3} parent=11 // pred_fallthru
          _
        // Predicated region
        $region25: #{swin_block_forward.3} parent=11 // pred_check
          %p425 = pneg %p182
        $region26: #{swin_block_forward.3} parent=11 // pred_check_branch
          %427 = sbr.rel (%p425) target = $region28
        $region27: #{swin_block_forward.3} parent=11 // pred_region
          _
        $region28: #{swin_block_forward.3} parent=11 // pred_fallthru
          _
        // Predicated region
        $region29: #{swin_block_forward.3} parent=11 // pred_check
          %p428 = pneg %p203
        $region30: #{swin_block_forward.3} parent=11 // pred_check_branch
          %430 = sbr.rel (%p428) target = $region32
        $region31: #{swin_block_forward.3} parent=11 // pred_region
          _
        $region32: #{swin_block_forward.3} parent=11 // pred_fallthru
          _
        // Predicated region
        $region33: #{swin_block_forward.3} parent=11 // pred_check
          %p431 = pneg %p224
        $region34: #{swin_block_forward.3} parent=11 // pred_check_branch
          %433 = sbr.rel (%p431) target = $region36
        $region35: #{swin_block_forward.3} parent=11 // pred_region
          _
        $region36: #{swin_block_forward.3} parent=11 // pred_fallthru
          _
        // Predicated region
        $region37: #{swin_block_forward.3} parent=11 // pred_check
          %p434 = pneg %p245
        $region38: #{swin_block_forward.3} parent=11 // pred_check_branch
          %436 = sbr.rel (%p434) target = $region40
        $region39: #{swin_block_forward.3} parent=11 // pred_region
          _
        $region40: #{swin_block_forward.3} parent=11 // pred_fallthru
          _
        // Predicated region
        $region41: #{swin_block_forward.3} parent=11 // pred_check
          %p437 = pneg %p266
        $region42: #{swin_block_forward.3} parent=11 // pred_check_branch
          %439 = sbr.rel (%p437) target = $region44
        $region43: #{swin_block_forward.3} parent=11 // pred_region
          _
        $region44: #{swin_block_forward.3} parent=11 // pred_fallthru
          _
        // Predicated region
        $region45: #{swin_block_forward.3} parent=11 // pred_check
          %p440 = pneg %p287
        $region46: #{swin_block_forward.3} parent=11 // pred_check_branch
          %442 = sbr.rel (%p440) target = $region48
        $region47: #{swin_block_forward.3} parent=11 // pred_region
          _
        $region48: #{swin_block_forward.3} parent=11 // pred_fallthru
          _
        // Predicated region
        $region49: #{swin_block_forward.3} parent=11 // pred_check
          %p443 = pneg %p308
        $region50: #{swin_block_forward.3} parent=11 // pred_check_branch
          %445 = sbr.rel (%p443) target = $region52
        $region51: #{swin_block_forward.3} parent=11 // pred_region
          _
        $region52: #{swin_block_forward.3} parent=11 // pred_fallthru
          _
        // Predicated region
        $region53: #{swin_block_forward.3} parent=11 // pred_check
          %p446 = pneg %p329
        $region54: #{swin_block_forward.3} parent=11 // pred_check_branch
          %448 = sbr.rel (%p446) target = $region56
        $region55: #{swin_block_forward.3} parent=11 // pred_region
          _
        $region56: #{swin_block_forward.3} parent=11 // pred_fallthru
          _
        // Predicated region
        $region57: #{swin_block_forward.3} parent=11 // pred_check
          %p449 = pneg %p350
        $region58: #{swin_block_forward.3} parent=11 // pred_check_branch
          %451 = sbr.rel (%p449) target = $region60
        $region59: #{swin_block_forward.3} parent=11 // pred_region
          _
        $region60: #{swin_block_forward.3} parent=11 // pred_fallthru
          _
        // Predicated region
        $region61: #{swin_block_forward.3} parent=11 // pred_check
          %p452 = pneg %p371
        $region62: #{swin_block_forward.3} parent=11 // pred_check_branch
          %454 = sbr.rel (%p452) target = $region64
        $region63: #{swin_block_forward.3} parent=11 // pred_region
          _
        $region64: #{swin_block_forward.3} parent=11 // pred_fallthru
          _
      $region12: #{swin_block_forward.3} parent=5 // pred_fallthru
        _
      %p455 = scmp.lt.s32.totalorder %s21, 8
      // Predicated region
      $region65: #{swin_block_forward.3} parent=5 // pred_check
        %p456 = pneg %p455
      $region66: #{swin_block_forward.3} parent=5 // pred_check_branch
        %458 = sbr.rel (%p456) target = $region68
      $region67: #{swin_block_forward.3} parent=5 // pred_region
        // Predicated region
        $region69: #{swin_block_forward.3} parent=67 // pred_check
          %p459 = pneg %p64
        $region70: #{swin_block_forward.3} parent=67 // pred_check_branch
          %461 = sbr.rel (%p459) target = $region72
        $region71: #{swin_block_forward.3} parent=67 // pred_region
          %s462 = sand.u32 %s54, 1
          %s463 = sand.u32 %s54, 1
          %s464 = smul.addr %s463, 64
          %s465 = scalar_lea.vmem [#allocation2], %s464
          %s466 = smul.u32 8, %s29
          %s467 = smul.addr %s466, 2
          %s468 = sadd.s32 %s30, %s467
          %s469 = smul.addr %s28, 32
          %s470 = sadd.s32 %s468, %s469
          %s471 = smul.addr %s470, 8
          %s472 = scalar_lea.vmem %s0, %s471
          // Predicated region
          $region73: #{swin_block_forward.3} parent=71 // pred_check
            _
          $region74: #{swin_block_forward.3} parent=71 // pred_check_branch
            %474 = sbr.rel (0) target = $region76
          $region75: #{swin_block_forward.3} parent=71 // pred_region
            // Predicated region
            $region77: #{swin_block_forward.3} parent=75 // pred_check
              _
            $region78: #{swin_block_forward.3} parent=75 // pred_check_branch
              %476 = sbr.rel (0) target = $region80
            $region79: #{swin_block_forward.3} parent=75 // pred_region
              // Predicated region
              $region92: #{swin_block_forward.3} parent=79 // pred_check
                _
              $region93: #{swin_block_forward.3} parent=79 // pred_check_branch
                %505 = sbr.rel (0) target = $region95
              $region94: #{swin_block_forward.3} parent=79 // pred_region
                loop: start=0, step=1, limit=1
                $region96: #{swin_block_forward.3} parent=94 // loop_pre_header
                  _
                $region97: #{swin_block_forward.3} parent=94 // loop_header
                  %s507 = sphi 0, %s511
                  %p508 = scmp.ge.s32.totalorder %s507, 1
                  %s512 = sphi %s472, %s472
                  %s513 = sphi %s465, %s465
                $region98: #{swin_block_forward.3} parent=94 // loop_header_branch
                  %510 = sbr.rel (%p508) target = $region102
                $region99: #{swin_block_forward.3} parent=94 // loop_body
                  %v514 = vld [vmem:[%s512] sm:$0xff]
                  %515 = vst [vmem:[%s513] sm:$0xff] %v514
                  %v516 = vld [vmem:[%s512 + $0x10] sm:$0xff]
                  %517 = vst [vmem:[%s513 + $0x8] sm:$0xff] %v516
                  %v518 = vld [vmem:[%s512 + $0x20] sm:$0xff]
                  %519 = vst [vmem:[%s513 + $0x10] sm:$0xff] %v518
                  %v520 = vld [vmem:[%s512 + $0x30] sm:$0xff]
                  %521 = vst [vmem:[%s513 + $0x18] sm:$0xff] %v520
                  %v522 = vld [vmem:[%s512 + $0x40] sm:$0xff]
                  %523 = vst [vmem:[%s513 + $0x20] sm:$0xff] %v522
                  %v524 = vld [vmem:[%s512 + $0x50] sm:$0xff]
                  %525 = vst [vmem:[%s513 + $0x28] sm:$0xff] %v524
                  %v526 = vld [vmem:[%s512 + $0x60] sm:$0xff]
                  %527 = vst [vmem:[%s513 + $0x30] sm:$0xff] %v526
                  %v528 = vld [vmem:[%s512 + $0x70] sm:$0xff]
                  %529 = vst [vmem:[%s513 + $0x38] sm:$0xff] %v528
                $region100: #{swin_block_forward.3} parent=94 // loop_footer
                  %s511 = sadd.s32 1, %s507
                $region101: #{swin_block_forward.3} parent=94 // loop_footer_branch
                  %506 = sbr.rel target = $region97
                $region102: #{swin_block_forward.3} parent=94 // loop_exit
                  _
              $region95: #{swin_block_forward.3} parent=79 // pred_fallthru
                _
              // Predicated region
              $region103: #{swin_block_forward.3} parent=79 // pred_check
                _
              $region104: #{swin_block_forward.3} parent=79 // pred_check_branch
                %531 = sbr.rel target = $region106
              $region105: #{swin_block_forward.3} parent=79 // pred_region
                _
              $region106: #{swin_block_forward.3} parent=79 // pred_fallthru
                _
            $region80: #{swin_block_forward.3} parent=75 // pred_fallthru
              _
            // Predicated region
            $region81: #{swin_block_forward.3} parent=75 // pred_check
              _
            $region82: #{swin_block_forward.3} parent=75 // pred_check_branch
              %478 = sbr.rel target = $region84
            $region83: #{swin_block_forward.3} parent=75 // pred_region
              loop: start=0, step=1, limit=1
              $region85: #{swin_block_forward.3} parent=83 // loop_pre_header
                _
              $region86: #{swin_block_forward.3} parent=83 // loop_header
                %s481 = sphi 0, %s485
                %p482 = scmp.ge.s32.totalorder %s481, 1
                %s486 = sphi %s472, %s472
                %s487 = sphi %s465, %s465
              $region87: #{swin_block_forward.3} parent=83 // loop_header_branch
                %484 = sbr.rel (%p482) target = $region91
              $region88: #{swin_block_forward.3} parent=83 // loop_body
                %v488 = vld [vmem:[%s486] sm:$0xff]
                %489 = vst [vmem:[%s487] sm:$0xff] %v488
                %v490 = vld [vmem:[%s486 + $0x10] sm:$0xff]
                %491 = vst [vmem:[%s487 + $0x8] sm:$0xff] %v490
                %v492 = vld [vmem:[%s486 + $0x20] sm:$0xff]
                %493 = vst [vmem:[%s487 + $0x10] sm:$0xff] %v492
                %v494 = vld [vmem:[%s486 + $0x30] sm:$0xff]
                %495 = vst [vmem:[%s487 + $0x18] sm:$0xff] %v494
                %v496 = vld [vmem:[%s486 + $0x40] sm:$0xff]
                %497 = vst [vmem:[%s487 + $0x20] sm:$0xff] %v496
                %v498 = vld [vmem:[%s486 + $0x50] sm:$0xff]
                %499 = vst [vmem:[%s487 + $0x28] sm:$0xff] %v498
                %v500 = vld [vmem:[%s486 + $0x60] sm:$0xff]
                %501 = vst [vmem:[%s487 + $0x30] sm:$0xff] %v500
                %v502 = vld [vmem:[%s486 + $0x70] sm:$0xff]
                %503 = vst [vmem:[%s487 + $0x38] sm:$0xff] %v502
              $region89: #{swin_block_forward.3} parent=83 // loop_footer
                %s485 = sadd.s32 1, %s481
              $region90: #{swin_block_forward.3} parent=83 // loop_footer_branch
                %480 = sbr.rel target = $region86
              $region91: #{swin_block_forward.3} parent=83 // loop_exit
                _
            $region84: #{swin_block_forward.3} parent=75 // pred_fallthru
              _
          $region76: #{swin_block_forward.3} parent=71 // pred_fallthru
            _
          %532 = vnop
        $region72: #{swin_block_forward.3} parent=67 // pred_fallthru
          _
        // Predicated region
        $region107: #{swin_block_forward.3} parent=67 // pred_check
          %p533 = pneg %p92
        $region108: #{swin_block_forward.3} parent=67 // pred_check_branch
          %535 = sbr.rel (%p533) target = $region110
        $region109: #{swin_block_forward.3} parent=67 // pred_region
          %p536 = scmp.lt.s32.totalorder %s29, 1
          %s537 = scalar_select %p536, %s29, 1
          %p538 = scmp.lt.s32.totalorder %s30, 1
          %s539 = scalar_select %p538, %s30, 1
          %s540 = smul.addr %s539, 8
          %s541 = smul.addr %s537, 16
          %s542 = sadd.s32 %s540, %s541
          %s543 = smul.addr %s542, 8
          %s544 = scalar_lea.vmem %s1, %s543
        $region110: #{swin_block_forward.3} parent=67 // pred_fallthru
          _
      $region68: #{swin_block_forward.3} parent=5 // pred_fallthru
        _
      %p545 = scmp.le.s32.totalorder 1, %s21
      %p546 = scmp.lt.s32.totalorder %s21, 9
      %p547 = pnand %p545, %p546
      %p548 = pneg %p547
      // Predicated region
      $region111: #{swin_block_forward.3} parent=5 // pred_check
        _
      $region112: #{swin_block_forward.3} parent=5 // pred_check_branch
        %550 = sbr.rel (%p547) target = $region114
      $region113: #{swin_block_forward.3} parent=5 // pred_region
        %s551 = ssub.s32 %s21, 1
        %s552 = sand.u32 %s57, 1
        %s553 = sand.u32 %s57, 1
        %s554 = smul.addr %s553, 64
        %s555 = scalar_lea.vmem [#allocation2], %s554
        // Predicated region
        $region115: #{swin_block_forward.3} parent=113 // pred_check
          %p556 = pneg %p70
        $region116: #{swin_block_forward.3} parent=113 // pred_check_branch
          %558 = sbr.rel (%p556) target = $region118
        $region117: #{swin_block_forward.3} parent=113 // pred_region
          _
        $region118: #{swin_block_forward.3} parent=113 // pred_fallthru
          _
        %s559 = sand.u32 %s57, 1
        %s560 = sand.u32 %s57, 1
        %s561 = smul.addr %s560, 64
        %s562 = scalar_lea.vmem [#allocation2], %s561
        %p563 = pneg %p70
        %p564 = pneg %p67
        %p565 = scmp.lt.s32.totalorder %s32, 1
        %s566 = scalar_select %p565, %s32, 1
        %p567 = scmp.lt.s32.totalorder %s33, 1
        %s568 = scalar_select %p567, %s33, 1
        %s569 = smul.addr %s568, 8
        %s570 = smul.addr %s566, 16
        %s571 = sadd.s32 %s569, %s570
        %s572 = smul.addr %s571, 8
        %s573 = scalar_lea.vmem %s1, %s572
        %p574 = pneg %p98
        %p575 = pneg %p95
        %p576 = pneg %p119
        %p577 = pneg %p116
        %p578 = pneg %p140
        %p579 = pneg %p137
        %p580 = pneg %p161
        %p581 = pneg %p158
        %p582 = pneg %p182
        %p583 = pneg %p179
        %p584 = pneg %p203
        %p585 = pneg %p200
        %p586 = pneg %p224
        %p587 = pneg %p221
        %p588 = pneg %p245
        %p589 = pneg %p242
        %p590 = pneg %p266
        %p591 = pneg %p263
        %p592 = pneg %p287
        %p593 = pneg %p284
        %p594 = pneg %p308
        %p595 = pneg %p305
        %p596 = pneg %p329
        %p597 = pneg %p326
        %p598 = pneg %p350
        %p599 = pneg %p347
        %p600 = pneg %p371
        %p601 = pneg %p368
        %p602 = pneg %p401
        %p603 = pneg %p398
        %s604 = sand.u32 %s388, 1
        %s605 = sand.u32 %s388, 1
        %s606 = smul.addr %s605, 64
        %s607 = scalar_lea.vmem [#allocation3], %s606
        %s608 = smul.u32 8, %s32
        %p609 = scmp.lt.s32.totalorder %s32, 1
        %s610 = scalar_select %p609, %s32, 1
        %p611 = scmp.lt.s32.totalorder %s33, 1
        %s612 = scalar_select %p611, %s33, 1
        %s613 = smul.addr %s612, 8
        %s614 = smul.addr %s610, 16
        %s615 = sadd.s32 %s613, %s614
        %s616 = smul.addr %s615, 8
        %s617 = scalar_lea.vmem %s1, %s616
        %s618 = smul.u32 8, %s32
        %v620 = vld [vmem:[%s555] sm:$0xff]
        %v621 = vld [vmem:[%s555 + $0x8] sm:$0xff]
        %v622 = vld [vmem:[%s555 + $0x10] sm:$0xff]
        %v623 = vld [vmem:[%s555 + $0x18] sm:$0xff]
        %v624 = vld [vmem:[%s555 + $0x20] sm:$0xff]
        %v625 = vld [vmem:[%s555 + $0x28] sm:$0xff]
        %v626 = vld [vmem:[%s555 + $0x30] sm:$0xff]
        %v627 = vld [vmem:[%s555 + $0x38] sm:$0xff]
        %628 = vadd.xlane.f32.xlu0 %v620
        %v629 = vpop.xlane.xlu0 %628
        %630 = vadd.xlane.f32.xlu0 %v621
        %v631 = vpop.xlane.xlu0 %630
        %632 = vadd.xlane.f32.xlu0 %v622
        %v633 = vpop.xlane.xlu0 %632
        %634 = vadd.xlane.f32.xlu0 %v623
        %v635 = vpop.xlane.xlu0 %634
        %636 = vadd.xlane.f32.xlu0 %v624
        %v637 = vpop.xlane.xlu0 %636
        %638 = vadd.xlane.f32.xlu0 %v625
        %v639 = vpop.xlane.xlu0 %638
        %640 = vadd.xlane.f32.xlu0 %v626
        %v641 = vpop.xlane.xlu0 %640
        %642 = vadd.xlane.f32.xlu0 %v627
        %v643 = vpop.xlane.xlu0 %642
        %v644 = vrcp.pop 128.0
        %v645 = vmul.f32 %v629, %v644
        %v646 = vmul.f32 %v631, %v644
        %v647 = vmul.f32 %v633, %v644
        %v648 = vmul.f32 %v635, %v644
        %v649 = vmul.f32 %v637, %v644
        %v650 = vmul.f32 %v639, %v644
        %v651 = vmul.f32 %v641, %v644
        %v652 = vmul.f32 %v643, %v644
        %v653 = vsub.f32 %v620, %v645
        %v654 = vsub.f32 %v621, %v646
        %v655 = vsub.f32 %v622, %v647
        %v656 = vsub.f32 %v623, %v648
        %v657 = vsub.f32 %v624, %v649
        %v658 = vsub.f32 %v625, %v650
        %v659 = vsub.f32 %v626, %v651
        %v660 = vsub.f32 %v627, %v652
        %v661 = vmul.f32 %v653, %v653
        %v662 = vmul.f32 %v654, %v654
        %v663 = vmul.f32 %v655, %v655
        %v664 = vmul.f32 %v656, %v656
        %v665 = vmul.f32 %v657, %v657
        %v666 = vmul.f32 %v658, %v658
        %v667 = vmul.f32 %v659, %v659
        %v668 = vmul.f32 %v660, %v660
        %669 = vadd.xlane.f32.xlu0 %v661
        %v670 = vpop.xlane.xlu0 %669
        %671 = vadd.xlane.f32.xlu0 %v662
        %v672 = vpop.xlane.xlu0 %671
        %673 = vadd.xlane.f32.xlu0 %v663
        %v674 = vpop.xlane.xlu0 %673
        %675 = vadd.xlane.f32.xlu0 %v664
        %v676 = vpop.xlane.xlu0 %675
        %677 = vadd.xlane.f32.xlu0 %v665
        %v678 = vpop.xlane.xlu0 %677
        %679 = vadd.xlane.f32.xlu0 %v666
        %v680 = vpop.xlane.xlu0 %679
        %681 = vadd.xlane.f32.xlu0 %v667
        %v682 = vpop.xlane.xlu0 %681
        %683 = vadd.xlane.f32.xlu0 %v668
        %v684 = vpop.xlane.xlu0 %683
        %v685 = vmul.f32 %v670, %v644
        %v686 = vmul.f32 %v672, %v644
        %v687 = vmul.f32 %v674, %v644
        %v688 = vmul.f32 %v676, %v644
        %v689 = vmul.f32 %v678, %v644
        %v690 = vmul.f32 %v680, %v644
        %v691 = vmul.f32 %v682, %v644
        %v692 = vmul.f32 %v684, %v644
        %v693 = vadd.f32 %v685, 1e-05
        %v694 = vadd.f32 %v686, 1e-05
        %v695 = vadd.f32 %v687, 1e-05
        %v696 = vadd.f32 %v688, 1e-05
        %v697 = vadd.f32 %v689, 1e-05
        %v698 = vadd.f32 %v690, 1e-05
        %v699 = vadd.f32 %v691, 1e-05
        %v700 = vadd.f32 %v692, 1e-05
        %v701 = vrsqrt.pop %v693
        %v702 = vrsqrt.pop %v694
        %v703 = vrsqrt.pop %v695
        %v704 = vrsqrt.pop %v696
        %v705 = vrsqrt.pop %v697
        %v706 = vrsqrt.pop %v698
        %v707 = vrsqrt.pop %v699
        %v708 = vrsqrt.pop %v700
        %v709 = vmul.f32 %v653, %v701
        %v710 = vmul.f32 %v654, %v702
        %v711 = vmul.f32 %v655, %v703
        %v712 = vmul.f32 %v656, %v704
        %v713 = vmul.f32 %v657, %v705
        %v714 = vmul.f32 %v658, %v706
        %v715 = vmul.f32 %v659, %v707
        %v716 = vmul.f32 %v660, %v708
        %v717 = vld [vmem:[%s3] sm:$0x1]
        %v719 = vlaneseq
        %v720 = vshrl.u32 %v719, 7
        %v721 = vsub.s32 0, %v720
        %v722 = vrot.slane %v717, %v721
        %v724 = vmul.f32 %v709, %v722
        %v725 = vmul.f32 %v710, %v722
        %v726 = vmul.f32 %v711, %v722
        %v727 = vmul.f32 %v712, %v722
        %v728 = vmul.f32 %v713, %v722
        %v729 = vmul.f32 %v714, %v722
        %v730 = vmul.f32 %v715, %v722
        %v731 = vmul.f32 %v716, %v722
        %v732 = vld [vmem:[%s4] sm:$0x1]
        %v734 = vlaneseq
        %v735 = vshrl.u32 %v734, 7
        %v736 = vsub.s32 0, %v735
        %v737 = vrot.slane %v732, %v736
        %v739 = vadd.f32 %v724, %v737
        %v740 = vadd.f32 %v725, %v737
        %v741 = vadd.f32 %v726, %v737
        %v742 = vadd.f32 %v727, %v737
        %v743 = vadd.f32 %v728, %v737
        %v744 = vadd.f32 %v729, %v737
        %v745 = vadd.f32 %v730, %v737
        %v746 = vadd.f32 %v731, %v737
        %v747 = vpack.c.bf16 %v740, %v739
        %v748 = vpack.c.bf16 %v742, %v741
        %v749 = vpack.c.bf16 %v744, %v743
        %v750 = vpack.c.bf16 %v746, %v745
        %v751 = vld [vmem:[%s5] sm:$0xff]
        %v752 = vld [vmem:[%s5 + $0x8] sm:$0xf]
        %v753 = vld [vmem:[%s5 + $0xc] sm:$0xff]
        %v754 = vld [vmem:[%s5 + $0x14] sm:$0xf]
        %v755 = vld [vmem:[%s5 + $0x18] sm:$0xff]
        %v756 = vld [vmem:[%s5 + $0x20] sm:$0xf]
        %v757 = vld [vmem:[%s5 + $0x24] sm:$0xff]
        %v758 = vld [vmem:[%s5 + $0x2c] sm:$0xf]
        %v759 = vld [vmem:[%s5 + $0x30] sm:$0xff]
        %v760 = vld [vmem:[%s5 + $0x38] sm:$0xf]
        %v761 = vld [vmem:[%s5 + $0x3c] sm:$0xff]
        %v762 = vld [vmem:[%s5 + $0x44] sm:$0xf]
        %v763 = vld [vmem:[%s5 + $0x48] sm:$0xff]
        %v764 = vld [vmem:[%s5 + $0x50] sm:$0xf]
        %v765 = vld [vmem:[%s5 + $0x54] sm:$0xff]
        %v766 = vld [vmem:[%s5 + $0x5c] sm:$0xf]
        %v767 = vld [vmem:[%s5 + $0x60] sm:$0xff]
        %v768 = vld [vmem:[%s5 + $0x68] sm:$0xf]
        %v769 = vld [vmem:[%s5 + $0x6c] sm:$0xff]
        %v770 = vld [vmem:[%s5 + $0x74] sm:$0xf]
        %v771 = vld [vmem:[%s5 + $0x78] sm:$0xff]
        %v772 = vld [vmem:[%s5 + $0x80] sm:$0xf]
        %v773 = vld [vmem:[%s5 + $0x84] sm:$0xff]
        %v774 = vld [vmem:[%s5 + $0x8c] sm:$0xf]
        %v775 = vld [vmem:[%s5 + $0x90] sm:$0xff]
        %v776 = vld [vmem:[%s5 + $0x98] sm:$0xf]
        %v777 = vld [vmem:[%s5 + $0x9c] sm:$0xff]
        %v778 = vld [vmem:[%s5 + $0xa4] sm:$0xf]
        %v779 = vld [vmem:[%s5 + $0xa8] sm:$0xff]
        %v780 = vld [vmem:[%s5 + $0xb0] sm:$0xf]
        %v781 = vld [vmem:[%s5 + $0xb4] sm:$0xff]
        %v782 = vld [vmem:[%s5 + $0xbc] sm:$0xf]
        %v783 = vld [vmem:[%s6] sm:$0x7]
        %v785 = vlaneseq
        %v786 = vshrl.u32 %v785, 7
        %v787 = vsub.s32 0, %v786
        %v788 = vrot.slane %v783, %v787
        %v789 = vlaneseq
        %v790 = vshrl.u32 %v789, 7
        %v791 = vsub.s32 1, %v790
        %v792 = vrot.slane %v783, %v791
        %v793 = vlaneseq
        %v794 = vshrl.u32 %v793, 7
        %v795 = vsub.s32 2, %v794
        %v796 = vrot.slane %v783, %v795
        %v832 = vunpack.c.l.b16 %v751
        %v833 = vunpack.c.h.b16 %v751
        %v834 = vunpack.c.l.b16 %v752
        %v835 = vunpack.c.l.b16 %v753
        %v836 = vunpack.c.h.b16 %v753
        %v837 = vunpack.c.l.b16 %v754
        %v838 = vunpack.c.l.b16 %v755
        %v839 = vunpack.c.h.b16 %v755
        %v840 = vunpack.c.l.b16 %v756
        %v841 = vunpack.c.l.b16 %v757
        %v842 = vunpack.c.h.b16 %v757
        %v843 = vunpack.c.l.b16 %v758
        %v844 = vunpack.c.l.b16 %v759
        %v845 = vunpack.c.h.b16 %v759
        %v846 = vunpack.c.l.b16 %v760
        %v847 = vunpack.c.l.b16 %v761
        %v848 = vunpack.c.h.b16 %v761
        %v849 = vunpack.c.l.b16 %v762
        %v850 = vunpack.c.l.b16 %v763
        %v851 = vunpack.c.h.b16 %v763
        %v852 = vunpack.c.l.b16 %v764
        %v853 = vunpack.c.l.b16 %v765
        %v854 = vunpack.c.h.b16 %v765
        %v855 = vunpack.c.l.b16 %v766
        %v856 = vunpack.c.l.b16 %v767
        %v857 = vunpack.c.h.b16 %v767
        %v858 = vunpack.c.l.b16 %v768
        %v859 = vunpack.c.l.b16 %v769
        %v860 = vunpack.c.h.b16 %v769
        %v861 = vunpack.c.l.b16 %v770
        %v862 = vunpack.c.l.b16 %v771
        %v863 = vunpack.c.h.b16 %v771
        %v864 = vunpack.c.l.b16 %v772
        %v865 = vunpack.c.l.b16 %v773
        %v866 = vunpack.c.h.b16 %v773
        %v867 = vunpack.c.l.b16 %v774
        %v868 = vunpack.c.l.b16 %v775
        %v869 = vunpack.c.h.b16 %v775
        %v870 = vunpack.c.l.b16 %v776
        %v871 = vunpack.c.l.b16 %v777
        %v872 = vunpack.c.h.b16 %v777
        %v873 = vunpack.c.l.b16 %v778
        %v874 = vunpack.c.l.b16 %v779
        %v875 = vunpack.c.h.b16 %v779
        %v876 = vunpack.c.l.b16 %v780
        %v877 = vunpack.c.l.b16 %v781
        %v878 = vunpack.c.h.b16 %v781
        %v879 = vunpack.c.l.b16 %v782
        %v880 = vpack.c.b16 %v835, %v832
        %v881 = vpack.c.b16 %v836, %v833
        %v882 = vpack.c.b16 %v837, %v834
        %v883 = vpack.c.b16 %v841, %v838
        %v884 = vpack.c.b16 %v842, %v839
        %v885 = vpack.c.b16 %v843, %v840
        %v886 = vpack.c.b16 %v847, %v844
        %v887 = vpack.c.b16 %v848, %v845
        %v888 = vpack.c.b16 %v849, %v846
        %v889 = vpack.c.b16 %v853, %v850
        %v890 = vpack.c.b16 %v854, %v851
        %v891 = vpack.c.b16 %v855, %v852
        %v892 = vpack.c.b16 %v859, %v856
        %v893 = vpack.c.b16 %v860, %v857
        %v894 = vpack.c.b16 %v861, %v858
        %v895 = vpack.c.b16 %v865, %v862
        %v896 = vpack.c.b16 %v866, %v863
        %v897 = vpack.c.b16 %v867, %v864
        %v898 = vpack.c.b16 %v871, %v868
        %v899 = vpack.c.b16 %v872, %v869
        %v900 = vpack.c.b16 %v873, %v870
        %v901 = vpack.c.b16 %v877, %v874
        %v902 = vpack.c.b16 %v878, %v875
        %v903 = vpack.c.b16 %v879, %v876
        %928 = vmatprep.subr.bf16.mxu0 %v881
        %929 = vmatpush1.bf16.msra.mxu0 %v880
        %930 = vmatprep.subr.bf16.mxu0 %v884
        %931 = vmatpush1.bf16.msra.mxu0 %v883
        %932 = vmatprep.subr.bf16.mxu0 %v887
        %933 = vmatpush1.bf16.msra.mxu0 %v886
        %934 = vmatprep.subr.bf16.mxu0 %v890
        %935 = vmatpush1.bf16.msra.mxu0 %v889
        %936 = vmatprep.subr.bf16.mxu0 %v893
        %937 = vmatpush1.bf16.msra.mxu0 %v892
        %938 = vmatprep.subr.bf16.mxu0 %v896
        %939 = vmatpush1.bf16.msra.mxu0 %v895
        %940 = vmatprep.subr.bf16.mxu0 %v899
        %941 = vmatpush1.bf16.msra.mxu0 %v898
        %942 = vmatprep.subr.bf16.mxu0 %v902
        %943 = vmatpush1.bf16.msra.mxu0 %v901
        %944 = vmatprep.subr.bf16.mxu0 0
        %945 = vmatpush1.bf16.msra.mxu0 0
        %946 = vmatprep.subr.bf16.mxu0 0
        %947 = vmatpush1.bf16.msra.mxu0 0
        %948 = vmatprep.subr.bf16.mxu0 0
        %949 = vmatpush1.bf16.msra.mxu0 0
        %950 = vmatprep.subr.bf16.mxu0 0
        %951 = vmatpush1.bf16.msra.mxu0 0
        %952 = vmatprep.subr.bf16.mxu0 0
        %953 = vmatpush1.bf16.msra.mxu0 0
        %954 = vmatprep.subr.bf16.mxu0 0
        %955 = vmatpush1.bf16.msra.mxu0 0
        %956 = vmatprep.subr.bf16.mxu0 0
        %957 = vmatpush1.bf16.msra.mxu0 0
        %958 = vmatprep.subr.bf16.mxu0 0
        %959 = vmatpush1.bf16.msra.mxu0 0
        %960 = vmatprep.mubr.bf16.mxu0 0
        %961 = vmatmul.mubr.bf16.gmra.mrb[0].mxu0 %v747
        %v962 = vpop.f32.mrb[0].mxu0
        %v963 = vadd.f32 %v788, %v962
        %v964 = vpop.f32.mrb[0].mxu0
        %v965 = vadd.f32 %v792, %v964
        %v966 = vpop.f32.mrb[0].mxu0
        %v967 = vadd.f32 %v788, %v966
        %v968 = vpop.f32.mrb[0].mxu0
        %v969 = vadd.f32 %v792, %v968
        %970 = vmatprep.mubr.bf16.mxu0 0
        %971 = vmatmul.mubr.bf16.gmra.mrb[0].mxu0 %v748
        %v972 = vpop.f32.mrb[0].mxu0
        %v973 = vadd.f32 %v788, %v972
        %v974 = vpop.f32.mrb[0].mxu0
        %v975 = vadd.f32 %v792, %v974
        %v976 = vpop.f32.mrb[0].mxu0
        %v977 = vadd.f32 %v788, %v976
        %v978 = vpop.f32.mrb[0].mxu0
        %v979 = vadd.f32 %v792, %v978
        %980 = vmatprep.mubr.bf16.mxu0 0
        %981 = vmatmul.mubr.bf16.gmra.mrb[0].mxu0 %v749
        %v982 = vpop.f32.mrb[0].mxu0
        %v983 = vadd.f32 %v788, %v982
        %v984 = vpop.f32.mrb[0].mxu0
        %v985 = vadd.f32 %v792, %v984
        %v986 = vpop.f32.mrb[0].mxu0
        %v987 = vadd.f32 %v788, %v986
        %v988 = vpop.f32.mrb[0].mxu0
        %v989 = vadd.f32 %v792, %v988
        %990 = vmatprep.mubr.bf16.mxu0 0
        %991 = vmatmul.mubr.bf16.gmra.mrb[0].mxu0 %v750
        %v992 = vpop.f32.mrb[0].mxu0
        %v993 = vadd.f32 %v788, %v992
        %v994 = vpop.f32.mrb[0].mxu0
        %v995 = vadd.f32 %v792, %v994
        %v996 = vpop.f32.mrb[0].mxu0
        %v997 = vadd.f32 %v788, %v996
        %v998 = vpop.f32.mrb[0].mxu0
        %v999 = vadd.f32 %v792, %v998
        %1000 = vdwg.mxu0
        %1001 = vmatprep.subr.bf16.mxu0 0
        %1002 = vmatpush1.bf16.msra.mxu0 %v882
        %1003 = vmatprep.subr.bf16.mxu0 0
        %1004 = vmatpush1.bf16.msra.mxu0 %v885
        %1005 = vmatprep.subr.bf16.mxu0 0
        %1006 = vmatpush1.bf16.msra.mxu0 %v888
        %1007 = vmatprep.subr.bf16.mxu0 0
        %1008 = vmatpush1.bf16.msra.mxu0 %v891
        %1009 = vmatprep.subr.bf16.mxu0 0
        %1010 = vmatpush1.bf16.msra.mxu0 %v894
        %1011 = vmatprep.subr.bf16.mxu0 0
        %1012 = vmatpush1.bf16.msra.mxu0 %v897
        %1013 = vmatprep.subr.bf16.mxu0 0
        %1014 = vmatpush1.bf16.msra.mxu0 %v900
        %1015 = vmatprep.subr.bf16.mxu0 0
        %1016 = vmatpush1.bf16.msra.mxu0 %v903
        %1017 = vmatprep.subr.bf16.mxu0 0
        %1018 = vmatpush1.bf16.msra.mxu0 0
        %1019 = vmatprep.subr.bf16.mxu0 0
        %1020 = vmatpush1.bf16.msra.mxu0 0
        %1021 = vmatprep.subr.bf16.mxu0 0
        %1022 = vmatpush1.bf16.msra.mxu0 0
        %1023 = vmatprep.subr.bf16.mxu0 0
        %1024 = vmatpush1.bf16.msra.mxu0 0
        %1025 = vmatprep.subr.bf16.mxu0 0
        %1026 = vmatpush1.bf16.msra.mxu0 0
        %1027 = vmatprep.subr.bf16.mxu0 0
        %1028 = vmatpush1.bf16.msra.mxu0 0
        %1029 = vmatprep.subr.bf16.mxu0 0
        %1030 = vmatpush1.bf16.msra.mxu0 0
        %1031 = vmatprep.subr.bf16.mxu0 0
        %1032 = vmatpush1.bf16.msra.mxu0 0
        %1033 = vmatprep.mubr.bf16.mxu0 0
        %1034 = vmatmul.mubr.bf16.gmra.mrb[0].mxu0 %v747
        %v1035 = vpop.f32.mrb[0].mxu0
        %v1036 = vadd.f32 %v796, %v1035
        %v1037 = vpop.f32.mrb[0].mxu0
        %v1038 = vpop.f32.mrb[0].mxu0
        %v1039 = vadd.f32 %v796, %v1038
        %v1040 = vpop.f32.mrb[0].mxu0
        %1041 = vmatprep.mubr.bf16.mxu0 0
        %1042 = vmatmul.mubr.bf16.gmra.mrb[0].mxu0 %v748
        %v1043 = vpop.f32.mrb[0].mxu0
        %v1044 = vadd.f32 %v796, %v1043
        %v1045 = vpop.f32.mrb[0].mxu0
        %v1046 = vpop.f32.mrb[0].mxu0
        %v1047 = vadd.f32 %v796, %v1046
        %v1048 = vpop.f32.mrb[0].mxu0
        %1049 = vmatprep.mubr.bf16.mxu0 0
        %1050 = vmatmul.mubr.bf16.gmra.mrb[0].mxu0 %v749
        %v1051 = vpop.f32.mrb[0].mxu0
        %v1052 = vadd.f32 %v796, %v1051
        %v1053 = vpop.f32.mrb[0].mxu0
        %v1054 = vpop.f32.mrb[0].mxu0
        %v1055 = vadd.f32 %v796, %v1054
        %v1056 = vpop.f32.mrb[0].mxu0
        %1057 = vmatprep.mubr.bf16.mxu0 0
        %1058 = vmatmul.mubr.bf16.gmra.mrb[0].mxu0 %v750
        %v1059 = vpop.f32.mrb[0].mxu0
        %v1060 = vadd.f32 %v796, %v1059
        %v1061 = vpop.f32.mrb[0].mxu0
        %v1062 = vpop.f32.mrb[0].mxu0
        %v1063 = vadd.f32 %v796, %v1062
        %v1064 = vpop.f32.mrb[0].mxu0
        %1065 = vdwg.mxu0
        %v1066 = vld [vmem:[%s2] sm:$0xff]
        %v1067 = vld [vmem:[%s2 + $0x8] sm:$0xff]
        %v1068 = vld [vmem:[%s2 + $0x10] sm:$0xff]
        %v1069 = vld [vmem:[%s2 + $0x18] sm:$0xff]
        %v1070 = vld [vmem:[%s2 + $0x20] sm:$0xff]
        %v1071 = vld [vmem:[%s2 + $0x28] sm:$0xff]
        %v1072 = vld [vmem:[%s2 + $0x30] sm:$0xff]
        %v1073 = vld [vmem:[%s2 + $0x38] sm:$0xff]
        %v1074 = vld [vmem:[%s2 + $0x40] sm:$0xff]
        %v1075 = vld [vmem:[%s2 + $0x48] sm:$0xff]
        %v1076 = vld [vmem:[%s2 + $0x50] sm:$0xff]
        %v1077 = vld [vmem:[%s2 + $0x58] sm:$0xff]
        %v1078 = vld [vmem:[%s2 + $0x60] sm:$0xff]
        %v1079 = vld [vmem:[%s2 + $0x68] sm:$0xff]
        %v1080 = vld [vmem:[%s2 + $0x70] sm:$0xff]
        %v1081 = vld [vmem:[%s2 + $0x78] sm:$0xff]
        %v1082 = vld [vmem:[%s2 + $0x80] sm:$0xff]
        %v1083 = vld [vmem:[%s2 + $0x88] sm:$0xff]
        %v1084 = vld [vmem:[%s2 + $0x90] sm:$0xff]
        %v1085 = vld [vmem:[%s2 + $0x98] sm:$0xff]
        %v1086 = vld [vmem:[%s2 + $0xa0] sm:$0xff]
        %v1087 = vld [vmem:[%s2 + $0xa8] sm:$0xff]
        %v1088 = vld [vmem:[%s2 + $0xb0] sm:$0xff]
        %v1089 = vld [vmem:[%s2 + $0xb8] sm:$0xff]
        %v1090 = vld [vmem:[%s2 + $0xc0] sm:$0xff]
        %v1091 = vld [vmem:[%s2 + $0xc8] sm:$0xff]
        %v1092 = vld [vmem:[%s2 + $0xd0] sm:$0xff]
        %v1093 = vld [vmem:[%s2 + $0xd8] sm:$0xff]
        %v1094 = vld [vmem:[%s2 + $0xe0] sm:$0xff]
        %v1095 = vld [vmem:[%s2 + $0xe8] sm:$0xff]
        %v1096 = vld [vmem:[%s2 + $0xf0] sm:$0xff]
        %v1097 = vld [vmem:[%s2 + $0xf8] sm:$0xff]
        %v1098 = vld [vmem:[%s617] sm:$0xff]
        %v1099 = vld [vmem:[%s617 + $0x8] sm:$0xff]
        %v1100 = vld [vmem:[%s617 + $0x10] sm:$0xff]
        %v1101 = vld [vmem:[%s617 + $0x18] sm:$0xff]
        %v1102 = vld [vmem:[%s617 + $0x20] sm:$0xff]
        %v1103 = vld [vmem:[%s617 + $0x28] sm:$0xff]
        %v1104 = vld [vmem:[%s617 + $0x30] sm:$0xff]
        %v1105 = vld [vmem:[%s617 + $0x38] sm:$0xff]
        %v1106 = vpack.c.bf16 %v967, %v963
        %v1107 = vpack.c.bf16 %v977, %v973
        %v1108 = vpack.c.bf16 %v987, %v983
        %v1109 = vpack.c.bf16 %v997, %v993
        %v1110 = vpack.c.bf16 %v969, %v965
        %v1111 = vpack.c.bf16 %v979, %v975
        %v1112 = vpack.c.bf16 %v989, %v985
        %v1113 = vpack.c.bf16 %v999, %v995
        %vm1114 = vcmask 261120
        %v1116 = vsel %vm1114, %v1106, 0
        %v1119 = vsel %vm1114, %v1107, 0
        %v1122 = vsel %vm1114, %v1108, 0
        %v1125 = vsel %vm1114, %v1109, 0
        %v1128 = vsel %vm1114, %v1110, 0
        %v1131 = vsel %vm1114, %v1111, 0
        %v1134 = vsel %vm1114, %v1112, 0
        %v1137 = vsel %vm1114, %v1113, 0
        %1139 = vmatprep.subr.bf16.mxu0 0
        %1140 = vmatpush1.bf16.xpose.msra.mxu0 %v1128
        %1141 = vmatprep.subr.bf16.mxu0 0
        %1142 = vmatpush1.bf16.xpose.msra.mxu0 %v1131
        %1143 = vmatprep.subr.bf16.mxu0 0
        %1144 = vmatpush1.bf16.xpose.msra.mxu0 %v1134
        %1145 = vmatprep.subr.bf16.mxu0 0
        %1146 = vmatpush1.bf16.xpose.msra.mxu0 %v1137
        %1147 = vmatprep.subr.bf16.mxu0 0
        %1148 = vmatpush1.bf16.xpose.msra.mxu0 0
        %1149 = vmatprep.subr.bf16.mxu0 0
        %1150 = vmatpush1.bf16.xpose.msra.mxu0 0
        %1151 = vmatprep.subr.bf16.mxu0 0
        %1152 = vmatpush1.bf16.xpose.msra.mxu0 0
        %1153 = vmatprep.subr.bf16.mxu0 0
        %1154 = vmatpush1.bf16.xpose.msra.mxu0 0
        %1155 = vmatprep.subr.bf16.mxu0 0
        %1156 = vmatpush1.bf16.xpose.msra.mxu0 0
        %1157 = vmatprep.subr.bf16.mxu0 0
        %1158 = vmatpush1.bf16.xpose.msra.mxu0 0
        %1159 = vmatprep.subr.bf16.mxu0 0
        %1160 = vmatpush1.bf16.xpose.msra.mxu0 0
        %1161 = vmatprep.subr.bf16.mxu0 0
        %1162 = vmatpush1.bf16.xpose.msra.mxu0 0
        %1163 = vmatprep.subr.bf16.mxu0 0
        %1164 = vmatpush1.bf16.xpose.msra.mxu0 0
        %1165 = vmatprep.subr.bf16.mxu0 0
        %1166 = vmatpush1.bf16.xpose.msra.mxu0 0
        %1167 = vmatprep.subr.bf16.mxu0 0
        %1168 = vmatpush1.bf16.xpose.msra.mxu0 0
        %1169 = vmatprep.subr.bf16.mxu0 0
        %1170 = vmatpush1.bf16.xpose.msra.mxu0 0
        %1171 = vmatprep.mubr.bf16.mxu0 0
        %1172 = vmatmul.mubr.bf16.gmra.mrb[0].mxu0 %v1116
        %v1173 = vpop.f32.mrb[0].mxu0
        %v1174 = vadd.f32 %v1066, %v1173
        %v1175 = vpop.f32.mrb[0].mxu0
        %v1176 = vpop.f32.mrb[0].mxu0
        %v1177 = vadd.f32 %v1067, %v1176
        %v1178 = vpop.f32.mrb[0].mxu0
        %1179 = vmatprep.mubr.bf16.mxu0 0
        %1180 = vmatmul.mubr.bf16.gmra.mrb[0].mxu0 %v1119
        %v1181 = vpop.f32.mrb[0].mxu0
        %v1182 = vadd.f32 %v1068, %v1181
        %v1183 = vpop.f32.mrb[0].mxu0
        %v1184 = vpop.f32.mrb[0].mxu0
        %v1185 = vadd.f32 %v1069, %v1184
        %v1186 = vpop.f32.mrb[0].mxu0
        %1187 = vmatprep.mubr.bf16.mxu0 0
        %1188 = vmatmul.mubr.bf16.gmra.mrb[0].mxu0 %v1122
        %v1189 = vpop.f32.mrb[0].mxu0
        %v1190 = vadd.f32 %v1070, %v1189
        %v1191 = vpop.f32.mrb[0].mxu0
        %v1192 = vpop.f32.mrb[0].mxu0
        %v1193 = vadd.f32 %v1071, %v1192
        %v1194 = vpop.f32.mrb[0].mxu0
        %1195 = vmatprep.mubr.bf16.mxu0 0
        %1196 = vmatmul.mubr.bf16.gmra.mrb[0].mxu0 %v1125
        %v1197 = vpop.f32.mrb[0].mxu0
        %v1198 = vadd.f32 %v1072, %v1197
        %v1199 = vpop.f32.mrb[0].mxu0
        %v1200 = vpop.f32.mrb[0].mxu0
        %v1201 = vadd.f32 %v1073, %v1200
        %v1202 = vpop.f32.mrb[0].mxu0
        %1203 = vdwg.mxu0
        %v1204 = vadd.f32 %v1174, %v1098
        %v1205 = vadd.f32 %v1177, %v1099
        %v1206 = vadd.f32 %v1182, %v1100
        %v1207 = vadd.f32 %v1185, %v1101
        %v1208 = vadd.f32 %v1190, %v1102
        %v1209 = vadd.f32 %v1193, %v1103
        %v1210 = vadd.f32 %v1198, %v1104
        %v1211 = vadd.f32 %v1201, %v1105
        %vm1212 = vcmask 523264
        %v1213 = vsel %vm1212, %v1204, -inf
        %1214 = vmax.xlane.f32.xlu0 %v1213
        %v1215 = vpop.xlane.xlu0 %1214
        %v1216 = vsel %vm1212, %v1205, -inf
        %1217 = vmax.xlane.f32.xlu0 %v1216
        %v1218 = vpop.xlane.xlu0 %1217
        %v1219 = vsel %vm1212, %v1206, -inf
        %1220 = vmax.xlane.f32.xlu0 %v1219
        %v1221 = vpop.xlane.xlu0 %1220
        %v1222 = vsel %vm1212, %v1207, -inf
        %1223 = vmax.xlane.f32.xlu0 %v1222
        %v1224 = vpop.xlane.xlu0 %1223
        %v1225 = vsel %vm1212, %v1208, -inf
        %1226 = vmax.xlane.f32.xlu0 %v1225
        %v1227 = vpop.xlane.xlu0 %1226
        %v1228 = vsel %vm1212, %v1209, -inf
        %1229 = vmax.xlane.f32.xlu0 %v1228
        %v1230 = vpop.xlane.xlu0 %1229
        %v1231 = vsel %vm1212, %v1210, -inf
        %1232 = vmax.xlane.f32.xlu0 %v1231
        %v1233 = vpop.xlane.xlu0 %1232
        %v1234 = vsel %vm1212, %v1211, -inf
        %1235 = vmax.xlane.f32.xlu0 %v1234
        %v1236 = vpop.xlane.xlu0 %1235
        %v1237 = vsub.f32 %v1204, %v1215
        %v1238 = vsub.f32 %v1205, %v1218
        %v1239 = vsub.f32 %v1206, %v1221
        %v1240 = vsub.f32 %v1207, %v1224
        %v1241 = vsub.f32 %v1208, %v1227
        %v1242 = vsub.f32 %v1209, %v1230
        %v1243 = vsub.f32 %v1210, %v1233
        %v1244 = vsub.f32 %v1211, %v1236
        %v1245 = vmul.f32 %v1237, 1.442695
        %v1246 = vpow.pop %v1245
        %v1247 = vmul.f32 %v1238, 1.442695
        %v1248 = vpow.pop %v1247
        %v1249 = vmul.f32 %v1239, 1.442695
        %v1250 = vpow.pop %v1249
        %v1251 = vmul.f32 %v1240, 1.442695
        %v1252 = vpow.pop %v1251
        %v1253 = vmul.f32 %v1241, 1.442695
        %v1254 = vpow.pop %v1253
        %v1255 = vmul.f32 %v1242, 1.442695
        %v1256 = vpow.pop %v1255
        %v1257 = vmul.f32 %v1243, 1.442695
        %v1258 = vpow.pop %v1257
        %v1259 = vmul.f32 %v1244, 1.442695
        %v1260 = vpow.pop %v1259
        %v1261 = vsel %vm1212, %v1246, 0.0
        %1262 = vadd.xlane.f32.xlu0 %v1261
        %v1263 = vpop.xlane.xlu0 %1262
        %v1264 = vsel %vm1212, %v1248, 0.0
        %1265 = vadd.xlane.f32.xlu0 %v1264
        %v1266 = vpop.xlane.xlu0 %1265
        %v1267 = vsel %vm1212, %v1250, 0.0
        %1268 = vadd.xlane.f32.xlu0 %v1267
        %v1269 = vpop.xlane.xlu0 %1268
        %v1270 = vsel %vm1212, %v1252, 0.0
        %1271 = vadd.xlane.f32.xlu0 %v1270
        %v1272 = vpop.xlane.xlu0 %1271
        %v1273 = vsel %vm1212, %v1254, 0.0
        %1274 = vadd.xlane.f32.xlu0 %v1273
        %v1275 = vpop.xlane.xlu0 %1274
        %v1276 = vsel %vm1212, %v1256, 0.0
        %1277 = vadd.xlane.f32.xlu0 %v1276
        %v1278 = vpop.xlane.xlu0 %1277
        %v1279 = vsel %vm1212, %v1258, 0.0
        %1280 = vadd.xlane.f32.xlu0 %v1279
        %v1281 = vpop.xlane.xlu0 %1280
        %v1282 = vsel %vm1212, %v1260, 0.0
        %1283 = vadd.xlane.f32.xlu0 %v1282
        %v1284 = vpop.xlane.xlu0 %1283
        %v1285 = vrcp.pop %v1263
        %v1286 = vmul.f32 %v1246, %v1285
        %v1287 = vrcp.pop %v1266
        %v1288 = vmul.f32 %v1248, %v1287
        %v1289 = vrcp.pop %v1269
        %v1290 = vmul.f32 %v1250, %v1289
        %v1291 = vrcp.pop %v1272
        %v1292 = vmul.f32 %v1252, %v1291
        %v1293 = vrcp.pop %v1275
        %v1294 = vmul.f32 %v1254, %v1293
        %v1295 = vrcp.pop %v1278
        %v1296 = vmul.f32 %v1256, %v1295
        %v1297 = vrcp.pop %v1281
        %v1298 = vmul.f32 %v1258, %v1297
        %v1299 = vrcp.pop %v1284
        %v1300 = vmul.f32 %v1260, %v1299
        %v1301 = vpack.c.bf16 %v1288, %v1286
        %v1302 = vpack.c.bf16 %v1292, %v1290
        %v1303 = vpack.c.bf16 %v1296, %v1294
        %v1304 = vpack.c.bf16 %v1300, %v1298
        %v1305 = vpack.c.bf16 %v1039, %v1036
        %v1306 = vpack.c.bf16 %v1047, %v1044
        %v1307 = vpack.c.bf16 %v1055, %v1052
        %v1308 = vpack.c.bf16 %v1063, %v1060
        %v1310 = vsel %vm1212, %v1301, 0
        %v1313 = vsel %vm1212, %v1302, 0
        %v1316 = vsel %vm1212, %v1303, 0
        %v1319 = vsel %vm1212, %v1304, 0
        %1321 = vmatprep.subr.bf16.mxu0 0
        %1322 = vmatpush1.bf16.msra.mxu0 %v1305
        %1323 = vmatprep.subr.bf16.mxu0 0
        %1324 = vmatpush1.bf16.msra.mxu0 %v1306
        %1325 = vmatprep.subr.bf16.mxu0 0
        %1326 = vmatpush1.bf16.msra.mxu0 %v1307
        %1327 = vmatprep.subr.bf16.mxu0 0
        %1328 = vmatpush1.bf16.msra.mxu0 %v1308
        %1329 = vmatprep.subr.bf16.mxu0 0
        %1330 = vmatpush1.bf16.msra.mxu0 0
        %1331 = vmatprep.subr.bf16.mxu0 0
        %1332 = vmatpush1.bf16.msra.mxu0 0
        %1333 = vmatprep.subr.bf16.mxu0 0
        %1334 = vmatpush1.bf16.msra.mxu0 0
        %1335 = vmatprep.subr.bf16.mxu0 0
        %1336 = vmatpush1.bf16.msra.mxu0 0
        %1337 = vmatprep.subr.bf16.mxu0 0
        %1338 = vmatpush1.bf16.msra.mxu0 0
        %1339 = vmatprep.subr.bf16.mxu0 0
        %1340 = vmatpush1.bf16.msra.mxu0 0
        %1341 = vmatprep.subr.bf16.mxu0 0
        %1342 = vmatpush1.bf16.msra.mxu0 0
        %1343 = vmatprep.subr.bf16.mxu0 0
        %1344 = vmatpush1.bf16.msra.mxu0 0
        %1345 = vmatprep.subr.bf16.mxu0 0
        %1346 = vmatpush1.bf16.msra.mxu0 0
        %1347 = vmatprep.subr.bf16.mxu0 0
        %1348 = vmatpush1.bf16.msra.mxu0 0
        %1349 = vmatprep.subr.bf16.mxu0 0
        %1350 = vmatpush1.bf16.msra.mxu0 0
        %1351 = vmatprep.subr.bf16.mxu0 0
        %1352 = vmatpush1.bf16.msra.mxu0 0
        %1353 = vmatprep.mubr.bf16.mxu0 0
        %1354 = vmatmul.mubr.bf16.gmra.mrb[0].mxu0 %v1310
        %v1355 = vpop.f32.mrb[0].mxu0
        %v1356 = vadd.f32 0.0, %v1355
        %v1357 = vpop.f32.mrb[0].mxu0
        %v1358 = vpop.f32.mrb[0].mxu0
        %v1359 = vadd.f32 0.0, %v1358
        %v1360 = vpop.f32.mrb[0].mxu0
        %1361 = vmatprep.mubr.bf16.mxu0 0
        %1362 = vmatmul.mubr.bf16.gmra.mrb[0].mxu0 %v1313
        %v1363 = vpop.f32.mrb[0].mxu0
        %v1364 = vadd.f32 0.0, %v1363
        %v1365 = vpop.f32.mrb[0].mxu0
        %v1366 = vpop.f32.mrb[0].mxu0
        %v1367 = vadd.f32 0.0, %v1366
        %v1368 = vpop.f32.mrb[0].mxu0
        %1369 = vmatprep.mubr.bf16.mxu0 0
        %1370 = vmatmul.mubr.bf16.gmra.mrb[0].mxu0 %v1316
        %v1371 = vpop.f32.mrb[0].mxu0
        %v1372 = vadd.f32 0.0, %v1371
        %v1373 = vpop.f32.mrb[0].mxu0
        %v1374 = vpop.f32.mrb[0].mxu0
        %v1375 = vadd.f32 0.0, %v1374
        %v1376 = vpop.f32.mrb[0].mxu0
        %1377 = vmatprep.mubr.bf16.mxu0 0
        %1378 = vmatmul.mubr.bf16.gmra.mrb[0].mxu0 %v1319
        %v1379 = vpop.f32.mrb[0].mxu0
        %v1380 = vadd.f32 0.0, %v1379
        %v1381 = vpop.f32.mrb[0].mxu0
        %v1382 = vpop.f32.mrb[0].mxu0
        %v1383 = vadd.f32 0.0, %v1382
        %v1384 = vpop.f32.mrb[0].mxu0
        %1385 = vdwg.mxu0
        %1390 = vrot.lane.b32.xlu0 %v1106, 96
        %v1391 = vpop.permute.xlu0 %1390
        %1392 = vrot.lane.b32.xlu0 %v1107, 96
        %v1393 = vpop.permute.xlu0 %1392
        %1394 = vrot.lane.b32.xlu0 %v1108, 96
        %v1395 = vpop.permute.xlu0 %1394
        %1396 = vrot.lane.b32.xlu0 %v1109, 96
        %v1397 = vpop.permute.xlu0 %1396
        %1402 = vrot.lane.b32.xlu0 %v1110, 96
        %v1403 = vpop.permute.xlu0 %1402
        %1404 = vrot.lane.b32.xlu0 %v1111, 96
        %v1405 = vpop.permute.xlu0 %1404
        %1406 = vrot.lane.b32.xlu0 %v1112, 96
        %v1407 = vpop.permute.xlu0 %1406
        %1408 = vrot.lane.b32.xlu0 %v1113, 96
        %v1409 = vpop.permute.xlu0 %1408
        %v1411 = vsel %vm1114, %v1391, 0
        %v1414 = vsel %vm1114, %v1393, 0
        %v1417 = vsel %vm1114, %v1395, 0
        %v1420 = vsel %vm1114, %v1397, 0
        %v1423 = vsel %vm1114, %v1403, 0
        %v1426 = vsel %vm1114, %v1405, 0
        %v1429 = vsel %vm1114, %v1407, 0
        %v1432 = vsel %vm1114, %v1409, 0
        %1434 = vmatprep.subr.bf16.mxu0 0
        %1435 = vmatpush1.bf16.xpose.msra.mxu0 %v1423
        %1436 = vmatprep.subr.bf16.mxu0 0
        %1437 = vmatpush1.bf16.xpose.msra.mxu0 %v1426
        %1438 = vmatprep.subr.bf16.mxu0 0
        %1439 = vmatpush1.bf16.xpose.msra.mxu0 %v1429
        %1440 = vmatprep.subr.bf16.mxu0 0
        %1441 = vmatpush1.bf16.xpose.msra.mxu0 %v1432
        %1442 = vmatprep.subr.bf16.mxu0 0
        %1443 = vmatpush1.bf16.xpose.msra.mxu0 0
        %1444 = vmatprep.subr.bf16.mxu0 0
        %1445 = vmatpush1.bf16.xpose.msra.mxu0 0
        %1446 = vmatprep.subr.bf16.mxu0 0
        %1447 = vmatpush1.bf16.xpose.msra.mxu0 0
        %1448 = vmatprep.subr.bf16.mxu0 0
        %1449 = vmatpush1.bf16.xpose.msra.mxu0 0
        %1450 = vmatprep.subr.bf16.mxu0 0
        %1451 = vmatpush1.bf16.xpose.msra.mxu0 0
        %1452 = vmatprep.subr.bf16.mxu0 0
        %1453 = vmatpush1.bf16.xpose.msra.mxu0 0
        %1454 = vmatprep.subr.bf16.mxu0 0
        %1455 = vmatpush1.bf16.xpose.msra.mxu0 0
        %1456 = vmatprep.subr.bf16.mxu0 0
        %1457 = vmatpush1.bf16.xpose.msra.mxu0 0
        %1458 = vmatprep.subr.bf16.mxu0 0
        %1459 = vmatpush1.bf16.xpose.msra.mxu0 0
        %1460 = vmatprep.subr.bf16.mxu0 0
        %1461 = vmatpush1.bf16.xpose.msra.mxu0 0
        %1462 = vmatprep.subr.bf16.mxu0 0
        %1463 = vmatpush1.bf16.xpose.msra.mxu0 0
        %1464 = vmatprep.subr.bf16.mxu0 0
        %1465 = vmatpush1.bf16.xpose.msra.mxu0 0
        %1466 = vmatprep.mubr.bf16.mxu0 0
        %1467 = vmatmul.mubr.bf16.gmra.mrb[0].mxu0 %v1411
        %v1468 = vpop.f32.mrb[0].mxu0
        %v1469 = vadd.f32 %v1074, %v1468
        %v1470 = vpop.f32.mrb[0].mxu0
        %v1471 = vpop.f32.mrb[0].mxu0
        %v1472 = vadd.f32 %v1075, %v1471
        %v1473 = vpop.f32.mrb[0].mxu0
        %1474 = vmatprep.mubr.bf16.mxu0 0
        %1475 = vmatmul.mubr.bf16.gmra.mrb[0].mxu0 %v1414
        %v1476 = vpop.f32.mrb[0].mxu0
        %v1477 = vadd.f32 %v1076, %v1476
        %v1478 = vpop.f32.mrb[0].mxu0
        %v1479 = vpop.f32.mrb[0].mxu0
        %v1480 = vadd.f32 %v1077, %v1479
        %v1481 = vpop.f32.mrb[0].mxu0
        %1482 = vmatprep.mubr.bf16.mxu0 0
        %1483 = vmatmul.mubr.bf16.gmra.mrb[0].mxu0 %v1417
        %v1484 = vpop.f32.mrb[0].mxu0
        %v1485 = vadd.f32 %v1078, %v1484
        %v1486 = vpop.f32.mrb[0].mxu0
        %v1487 = vpop.f32.mrb[0].mxu0
        %v1488 = vadd.f32 %v1079, %v1487
        %v1489 = vpop.f32.mrb[0].mxu0
        %1490 = vmatprep.mubr.bf16.mxu0 0
        %1491 = vmatmul.mubr.bf16.gmra.mrb[0].mxu0 %v1420
        %v1492 = vpop.f32.mrb[0].mxu0
        %v1493 = vadd.f32 %v1080, %v1492
        %v1494 = vpop.f32.mrb[0].mxu0
        %v1495 = vpop.f32.mrb[0].mxu0
        %v1496 = vadd.f32 %v1081, %v1495
        %v1497 = vpop.f32.mrb[0].mxu0
        %1498 = vdwg.mxu0
        %v1499 = vadd.f32 %v1469, %v1098
        %v1500 = vadd.f32 %v1472, %v1099
        %v1501 = vadd.f32 %v1477, %v1100
        %v1502 = vadd.f32 %v1480, %v1101
        %v1503 = vadd.f32 %v1485, %v1102
        %v1504 = vadd.f32 %v1488, %v1103
        %v1505 = vadd.f32 %v1493, %v1104
        %v1506 = vadd.f32 %v1496, %v1105
        %v1507 = vsel %vm1212, %v1499, -inf
        %1508 = vmax.xlane.f32.xlu0 %v1507
        %v1509 = vpop.xlane.xlu0 %1508
        %v1510 = vsel %vm1212, %v1500, -inf
        %1511 = vmax.xlane.f32.xlu0 %v1510
        %v1512 = vpop.xlane.xlu0 %1511
        %v1513 = vsel %vm1212, %v1501, -inf
        %1514 = vmax.xlane.f32.xlu0 %v1513
        %v1515 = vpop.xlane.xlu0 %1514
        %v1516 = vsel %vm1212, %v1502, -inf
        %1517 = vmax.xlane.f32.xlu0 %v1516
        %v1518 = vpop.xlane.xlu0 %1517
        %v1519 = vsel %vm1212, %v1503, -inf
        %1520 = vmax.xlane.f32.xlu0 %v1519
        %v1521 = vpop.xlane.xlu0 %1520
        %v1522 = vsel %vm1212, %v1504, -inf
        %1523 = vmax.xlane.f32.xlu0 %v1522
        %v1524 = vpop.xlane.xlu0 %1523
        %v1525 = vsel %vm1212, %v1505, -inf
        %1526 = vmax.xlane.f32.xlu0 %v1525
        %v1527 = vpop.xlane.xlu0 %1526
        %v1528 = vsel %vm1212, %v1506, -inf
        %1529 = vmax.xlane.f32.xlu0 %v1528
        %v1530 = vpop.xlane.xlu0 %1529
        %v1531 = vsub.f32 %v1499, %v1509
        %v1532 = vsub.f32 %v1500, %v1512
        %v1533 = vsub.f32 %v1501, %v1515
        %v1534 = vsub.f32 %v1502, %v1518
        %v1535 = vsub.f32 %v1503, %v1521
        %v1536 = vsub.f32 %v1504, %v1524
        %v1537 = vsub.f32 %v1505, %v1527
        %v1538 = vsub.f32 %v1506, %v1530
        %v1539 = vmul.f32 %v1531, 1.442695
        %v1540 = vpow.pop %v1539
        %v1541 = vmul.f32 %v1532, 1.442695
        %v1542 = vpow.pop %v1541
        %v1543 = vmul.f32 %v1533, 1.442695
        %v1544 = vpow.pop %v1543
        %v1545 = vmul.f32 %v1534, 1.442695
        %v1546 = vpow.pop %v1545
        %v1547 = vmul.f32 %v1535, 1.442695
        %v1548 = vpow.pop %v1547
        %v1549 = vmul.f32 %v1536, 1.442695
        %v1550 = vpow.pop %v1549
        %v1551 = vmul.f32 %v1537, 1.442695
        %v1552 = vpow.pop %v1551
        %v1553 = vmul.f32 %v1538, 1.442695
        %v1554 = vpow.pop %v1553
        %v1555 = vsel %vm1212, %v1540, 0.0
        %1556 = vadd.xlane.f32.xlu0 %v1555
        %v1557 = vpop.xlane.xlu0 %1556
        %v1558 = vsel %vm1212, %v1542, 0.0
        %1559 = vadd.xlane.f32.xlu0 %v1558
        %v1560 = vpop.xlane.xlu0 %1559
        %v1561 = vsel %vm1212, %v1544, 0.0
        %1562 = vadd.xlane.f32.xlu0 %v1561
        %v1563 = vpop.xlane.xlu0 %1562
        %v1564 = vsel %vm1212, %v1546, 0.0
        %1565 = vadd.xlane.f32.xlu0 %v1564
        %v1566 = vpop.xlane.xlu0 %1565
        %v1567 = vsel %vm1212, %v1548, 0.0
        %1568 = vadd.xlane.f32.xlu0 %v1567
        %v1569 = vpop.xlane.xlu0 %1568
        %v1570 = vsel %vm1212, %v1550, 0.0
        %1571 = vadd.xlane.f32.xlu0 %v1570
        %v1572 = vpop.xlane.xlu0 %1571
        %v1573 = vsel %vm1212, %v1552, 0.0
        %1574 = vadd.xlane.f32.xlu0 %v1573
        %v1575 = vpop.xlane.xlu0 %1574
        %v1576 = vsel %vm1212, %v1554, 0.0
        %1577 = vadd.xlane.f32.xlu0 %v1576
        %v1578 = vpop.xlane.xlu0 %1577
        %v1579 = vrcp.pop %v1557
        %v1580 = vmul.f32 %v1540, %v1579
        %v1581 = vrcp.pop %v1560
        %v1582 = vmul.f32 %v1542, %v1581
        %v1583 = vrcp.pop %v1563
        %v1584 = vmul.f32 %v1544, %v1583
        %v1585 = vrcp.pop %v1566
        %v1586 = vmul.f32 %v1546, %v1585
        %v1587 = vrcp.pop %v1569
        %v1588 = vmul.f32 %v1548, %v1587
        %v1589 = vrcp.pop %v1572
        %v1590 = vmul.f32 %v1550, %v1589
        %v1591 = vrcp.pop %v1575
        %v1592 = vmul.f32 %v1552, %v1591
        %v1593 = vrcp.pop %v1578
        %v1594 = vmul.f32 %v1554, %v1593
        %v1595 = vpack.c.bf16 %v1582, %v1580
        %v1596 = vpack.c.bf16 %v1586, %v1584
        %v1597 = vpack.c.bf16 %v1590, %v1588
        %v1598 = vpack.c.bf16 %v1594, %v1592
        %1603 = vrot.lane.b32.xlu0 %v1305, 96
        %v1604 = vpop.permute.xlu0 %1603
        %1605 = vrot.lane.b32.xlu0 %v1306, 96
        %v1606 = vpop.permute.xlu0 %1605
        %1607 = vrot.lane.b32.xlu0 %v1307, 96
        %v1608 = vpop.permute.xlu0 %1607
        %1609 = vrot.lane.b32.xlu0 %v1308, 96
        %v1610 = vpop.permute.xlu0 %1609
        %v1616 = vsel %vm1212, %v1595, 0
        %v1619 = vsel %vm1212, %v1596, 0
        %v1622 = vsel %vm1212, %v1597, 0
        %v1625 = vsel %vm1212, %v1598, 0
        %1627 = vmatprep.subr.bf16.mxu0 0
        %1628 = vmatpush1.bf16.msra.mxu0 %v1604
        %1629 = vmatprep.subr.bf16.mxu0 0
        %1630 = vmatpush1.bf16.msra.mxu0 %v1606
        %1631 = vmatprep.subr.bf16.mxu0 0
        %1632 = vmatpush1.bf16.msra.mxu0 %v1608
        %1633 = vmatprep.subr.bf16.mxu0 0
        %1634 = vmatpush1.bf16.msra.mxu0 %v1610
        %1635 = vmatprep.subr.bf16.mxu0 0
        %1636 = vmatpush1.bf16.msra.mxu0 0
        %1637 = vmatprep.subr.bf16.mxu0 0
        %1638 = vmatpush1.bf16.msra.mxu0 0
        %1639 = vmatprep.subr.bf16.mxu0 0
        %1640 = vmatpush1.bf16.msra.mxu0 0
        %1641 = vmatprep.subr.bf16.mxu0 0
        %1642 = vmatpush1.bf16.msra.mxu0 0
        %1643 = vmatprep.subr.bf16.mxu0 0
        %1644 = vmatpush1.bf16.msra.mxu0 0
        %1645 = vmatprep.subr.bf16.mxu0 0
        %1646 = vmatpush1.bf16.msra.mxu0 0
        %1647 = vmatprep.subr.bf16.mxu0 0
        %1648 = vmatpush1.bf16.msra.mxu0 0
        %1649 = vmatprep.subr.bf16.mxu0 0
        %1650 = vmatpush1.bf16.msra.mxu0 0
        %1651 = vmatprep.subr.bf16.mxu0 0
        %1652 = vmatpush1.bf16.msra.mxu0 0
        %1653 = vmatprep.subr.bf16.mxu0 0
        %1654 = vmatpush1.bf16.msra.mxu0 0
        %1655 = vmatprep.subr.bf16.mxu0 0
        %1656 = vmatpush1.bf16.msra.mxu0 0
        %1657 = vmatprep.subr.bf16.mxu0 0
        %1658 = vmatpush1.bf16.msra.mxu0 0
        %1659 = vmatprep.mubr.bf16.mxu0 0
        %1660 = vmatmul.mubr.bf16.gmra.mrb[0].mxu0 %v1616
        %v1661 = vpop.f32.mrb[0].mxu0
        %v1662 = vadd.f32 0.0, %v1661
        %v1663 = vpop.f32.mrb[0].mxu0
        %v1664 = vpop.f32.mrb[0].mxu0
        %v1665 = vadd.f32 0.0, %v1664
        %v1666 = vpop.f32.mrb[0].mxu0
        %1667 = vmatprep.mubr.bf16.mxu0 0
        %1668 = vmatmul.mubr.bf16.gmra.mrb[0].mxu0 %v1619
        %v1669 = vpop.f32.mrb[0].mxu0
        %v1670 = vadd.f32 0.0, %v1669
        %v1671 = vpop.f32.mrb[0].mxu0
        %v1672 = vpop.f32.mrb[0].mxu0
        %v1673 = vadd.f32 0.0, %v1672
        %v1674 = vpop.f32.mrb[0].mxu0
        %1675 = vmatprep.mubr.bf16.mxu0 0
        %1676 = vmatmul.mubr.bf16.gmra.mrb[0].mxu0 %v1622
        %v1677 = vpop.f32.mrb[0].mxu0
        %v1678 = vadd.f32 0.0, %v1677
        %v1679 = vpop.f32.mrb[0].mxu0
        %v1680 = vpop.f32.mrb[0].mxu0
        %v1681 = vadd.f32 0.0, %v1680
        %v1682 = vpop.f32.mrb[0].mxu0
        %1683 = vmatprep.mubr.bf16.mxu0 0
        %1684 = vmatmul.mubr.bf16.gmra.mrb[0].mxu0 %v1625
        %v1685 = vpop.f32.mrb[0].mxu0
        %v1686 = vadd.f32 0.0, %v1685
        %v1687 = vpop.f32.mrb[0].mxu0
        %v1688 = vpop.f32.mrb[0].mxu0
        %v1689 = vadd.f32 0.0, %v1688
        %v1690 = vpop.f32.mrb[0].mxu0
        %1691 = vdwg.mxu0
        %1692 = vrot.lane.b32.xlu0 %v1106, 64
        %v1693 = vpop.permute.xlu0 %1692
        %1694 = vrot.lane.b32.xlu0 %v1107, 64
        %v1695 = vpop.permute.xlu0 %1694
        %1696 = vrot.lane.b32.xlu0 %v1108, 64
        %v1697 = vpop.permute.xlu0 %1696
        %1698 = vrot.lane.b32.xlu0 %v1109, 64
        %v1699 = vpop.permute.xlu0 %1698
        %1700 = vrot.lane.b32.xlu0 %v1110, 64
        %v1701 = vpop.permute.xlu0 %1700
        %1702 = vrot.lane.b32.xlu0 %v1111, 64
        %v1703 = vpop.permute.xlu0 %1702
        %1704 = vrot.lane.b32.xlu0 %v1112, 64
        %v1705 = vpop.permute.xlu0 %1704
        %1706 = vrot.lane.b32.xlu0 %v1113, 64
        %v1707 = vpop.permute.xlu0 %1706
        %v1709 = vsel %vm1114, %v1693, 0
        %v1712 = vsel %vm1114, %v1695, 0
        %v1715 = vsel %vm1114, %v1697, 0
        %v1718 = vsel %vm1114, %v1699, 0
        %v1721 = vsel %vm1114, %v1701, 0
        %v1724 = vsel %vm1114, %v1703, 0
        %v1727 = vsel %vm1114, %v1705, 0
        %v1730 = vsel %vm1114, %v1707, 0
        %1732 = vmatprep.subr.bf16.mxu0 0
        %1733 = vmatpush1.bf16.xpose.msra.mxu0 %v1721
        %1734 = vmatprep.subr.bf16.mxu0 0
        %1735 = vmatpush1.bf16.xpose.msra.mxu0 %v1724
        %1736 = vmatprep.subr.bf16.mxu0 0
        %1737 = vmatpush1.bf16.xpose.msra.mxu0 %v1727
        %1738 = vmatprep.subr.bf16.mxu0 0
        %1739 = vmatpush1.bf16.xpose.msra.mxu0 %v1730
        %1740 = vmatprep.subr.bf16.mxu0 0
        %1741 = vmatpush1.bf16.xpose.msra.mxu0 0
        %1742 = vmatprep.subr.bf16.mxu0 0
        %1743 = vmatpush1.bf16.xpose.msra.mxu0 0
        %1744 = vmatprep.subr.bf16.mxu0 0
        %1745 = vmatpush1.bf16.xpose.msra.mxu0 0
        %1746 = vmatprep.subr.bf16.mxu0 0
        %1747 = vmatpush1.bf16.xpose.msra.mxu0 0
        %1748 = vmatprep.subr.bf16.mxu0 0
        %1749 = vmatpush1.bf16.xpose.msra.mxu0 0
        %1750 = vmatprep.subr.bf16.mxu0 0
        %1751 = vmatpush1.bf16.xpose.msra.mxu0 0
        %1752 = vmatprep.subr.bf16.mxu0 0
        %1753 = vmatpush1.bf16.xpose.msra.mxu0 0
        %1754 = vmatprep.subr.bf16.mxu0 0
        %1755 = vmatpush1.bf16.xpose.msra.mxu0 0
        %1756 = vmatprep.subr.bf16.mxu0 0
        %1757 = vmatpush1.bf16.xpose.msra.mxu0 0
        %1758 = vmatprep.subr.bf16.mxu0 0
        %1759 = vmatpush1.bf16.xpose.msra.mxu0 0
        %1760 = vmatprep.subr.bf16.mxu0 0
        %1761 = vmatpush1.bf16.xpose.msra.mxu0 0
        %1762 = vmatprep.subr.bf16.mxu0 0
        %1763 = vmatpush1.bf16.xpose.msra.mxu0 0
        %1764 = vmatprep.mubr.bf16.mxu0 0
        %1765 = vmatmul.mubr.bf16.gmra.mrb[0].mxu0 %v1709
        %v1766 = vpop.f32.mrb[0].mxu0
        %v1767 = vadd.f32 %v1082, %v1766
        %v1768 = vpop.f32.mrb[0].mxu0
        %v1769 = vpop.f32.mrb[0].mxu0
        %v1770 = vadd.f32 %v1083, %v1769
        %v1771 = vpop.f32.mrb[0].mxu0
        %1772 = vmatprep.mubr.bf16.mxu0 0
        %1773 = vmatmul.mubr.bf16.gmra.mrb[0].mxu0 %v1712
        %v1774 = vpop.f32.mrb[0].mxu0
        %v1775 = vadd.f32 %v1084, %v1774
        %v1776 = vpop.f32.mrb[0].mxu0
        %v1777 = vpop.f32.mrb[0].mxu0
        %v1778 = vadd.f32 %v1085, %v1777
        %v1779 = vpop.f32.mrb[0].mxu0
        %1780 = vmatprep.mubr.bf16.mxu0 0
        %1781 = vmatmul.mubr.bf16.gmra.mrb[0].mxu0 %v1715
        %v1782 = vpop.f32.mrb[0].mxu0
        %v1783 = vadd.f32 %v1086, %v1782
        %v1784 = vpop.f32.mrb[0].mxu0
        %v1785 = vpop.f32.mrb[0].mxu0
        %v1786 = vadd.f32 %v1087, %v1785
        %v1787 = vpop.f32.mrb[0].mxu0
        %1788 = vmatprep.mubr.bf16.mxu0 0
        %1789 = vmatmul.mubr.bf16.gmra.mrb[0].mxu0 %v1718
        %v1790 = vpop.f32.mrb[0].mxu0
        %v1791 = vadd.f32 %v1088, %v1790
        %v1792 = vpop.f32.mrb[0].mxu0
        %v1793 = vpop.f32.mrb[0].mxu0
        %v1794 = vadd.f32 %v1089, %v1793
        %v1795 = vpop.f32.mrb[0].mxu0
        %1796 = vdwg.mxu0
        %v1797 = vadd.f32 %v1767, %v1098
        %v1798 = vadd.f32 %v1770, %v1099
        %v1799 = vadd.f32 %v1775, %v1100
        %v1800 = vadd.f32 %v1778, %v1101
        %v1801 = vadd.f32 %v1783, %v1102
        %v1802 = vadd.f32 %v1786, %v1103
        %v1803 = vadd.f32 %v1791, %v1104
        %v1804 = vadd.f32 %v1794, %v1105
        %v1805 = vsel %vm1212, %v1797, -inf
        %1806 = vmax.xlane.f32.xlu0 %v1805
        %v1807 = vpop.xlane.xlu0 %1806
        %v1808 = vsel %vm1212, %v1798, -inf
        %1809 = vmax.xlane.f32.xlu0 %v1808
        %v1810 = vpop.xlane.xlu0 %1809
        %v1811 = vsel %vm1212, %v1799, -inf
        %1812 = vmax.xlane.f32.xlu0 %v1811
        %v1813 = vpop.xlane.xlu0 %1812
        %v1814 = vsel %vm1212, %v1800, -inf
        %1815 = vmax.xlane.f32.xlu0 %v1814
        %v1816 = vpop.xlane.xlu0 %1815
        %v1817 = vsel %vm1212, %v1801, -inf
        %1818 = vmax.xlane.f32.xlu0 %v1817
        %v1819 = vpop.xlane.xlu0 %1818
        %v1820 = vsel %vm1212, %v1802, -inf
        %1821 = vmax.xlane.f32.xlu0 %v1820
        %v1822 = vpop.xlane.xlu0 %1821
        %v1823 = vsel %vm1212, %v1803, -inf
        %1824 = vmax.xlane.f32.xlu0 %v1823
        %v1825 = vpop.xlane.xlu0 %1824
        %v1826 = vsel %vm1212, %v1804, -inf
        %1827 = vmax.xlane.f32.xlu0 %v1826
        %v1828 = vpop.xlane.xlu0 %1827
        %v1829 = vsub.f32 %v1797, %v1807
        %v1830 = vsub.f32 %v1798, %v1810
        %v1831 = vsub.f32 %v1799, %v1813
        %v1832 = vsub.f32 %v1800, %v1816
        %v1833 = vsub.f32 %v1801, %v1819
        %v1834 = vsub.f32 %v1802, %v1822
        %v1835 = vsub.f32 %v1803, %v1825
        %v1836 = vsub.f32 %v1804, %v1828
        %v1837 = vmul.f32 %v1829, 1.442695
        %v1838 = vpow.pop %v1837
        %v1839 = vmul.f32 %v1830, 1.442695
        %v1840 = vpow.pop %v1839
        %v1841 = vmul.f32 %v1831, 1.442695
        %v1842 = vpow.pop %v1841
        %v1843 = vmul.f32 %v1832, 1.442695
        %v1844 = vpow.pop %v1843
        %v1845 = vmul.f32 %v1833, 1.442695
        %v1846 = vpow.pop %v1845
        %v1847 = vmul.f32 %v1834, 1.442695
        %v1848 = vpow.pop %v1847
        %v1849 = vmul.f32 %v1835, 1.442695
        %v1850 = vpow.pop %v1849
        %v1851 = vmul.f32 %v1836, 1.442695
        %v1852 = vpow.pop %v1851
        %v1853 = vsel %vm1212, %v1838, 0.0
        %1854 = vadd.xlane.f32.xlu0 %v1853
        %v1855 = vpop.xlane.xlu0 %1854
        %v1856 = vsel %vm1212, %v1840, 0.0
        %1857 = vadd.xlane.f32.xlu0 %v1856
        %v1858 = vpop.xlane.xlu0 %1857
        %v1859 = vsel %vm1212, %v1842, 0.0
        %1860 = vadd.xlane.f32.xlu0 %v1859
        %v1861 = vpop.xlane.xlu0 %1860
        %v1862 = vsel %vm1212, %v1844, 0.0
        %1863 = vadd.xlane.f32.xlu0 %v1862
        %v1864 = vpop.xlane.xlu0 %1863
        %v1865 = vsel %vm1212, %v1846, 0.0
        %1866 = vadd.xlane.f32.xlu0 %v1865
        %v1867 = vpop.xlane.xlu0 %1866
        %v1868 = vsel %vm1212, %v1848, 0.0
        %1869 = vadd.xlane.f32.xlu0 %v1868
        %v1870 = vpop.xlane.xlu0 %1869
        %v1871 = vsel %vm1212, %v1850, 0.0
        %1872 = vadd.xlane.f32.xlu0 %v1871
        %v1873 = vpop.xlane.xlu0 %1872
        %v1874 = vsel %vm1212, %v1852, 0.0
        %1875 = vadd.xlane.f32.xlu0 %v1874
        %v1876 = vpop.xlane.xlu0 %1875
        %v1877 = vrcp.pop %v1855
        %v1878 = vmul.f32 %v1838, %v1877
        %v1879 = vrcp.pop %v1858
        %v1880 = vmul.f32 %v1840, %v1879
        %v1881 = vrcp.pop %v1861
        %v1882 = vmul.f32 %v1842, %v1881
        %v1883 = vrcp.pop %v1864
        %v1884 = vmul.f32 %v1844, %v1883
        %v1885 = vrcp.pop %v1867
        %v1886 = vmul.f32 %v1846, %v1885
        %v1887 = vrcp.pop %v1870
        %v1888 = vmul.f32 %v1848, %v1887
        %v1889 = vrcp.pop %v1873
        %v1890 = vmul.f32 %v1850, %v1889
        %v1891 = vrcp.pop %v1876
        %v1892 = vmul.f32 %v1852, %v1891
        %v1893 = vpack.c.bf16 %v1880, %v1878
        %v1894 = vpack.c.bf16 %v1884, %v1882
        %v1895 = vpack.c.bf16 %v1888, %v1886
        %v1896 = vpack.c.bf16 %v1892, %v1890
        %1897 = vrot.lane.b32.xlu0 %v1305, 64
        %v1898 = vpop.permute.xlu0 %1897
        %1899 = vrot.lane.b32.xlu0 %v1306, 64
        %v1900 = vpop.permute.xlu0 %1899
        %1901 = vrot.lane.b32.xlu0 %v1307, 64
        %v1902 = vpop.permute.xlu0 %1901
        %1903 = vrot.lane.b32.xlu0 %v1308, 64
        %v1904 = vpop.permute.xlu0 %1903
        %v1910 = vsel %vm1212, %v1893, 0
        %v1913 = vsel %vm1212, %v1894, 0
        %v1916 = vsel %vm1212, %v1895, 0
        %v1919 = vsel %vm1212, %v1896, 0
        %1921 = vmatprep.subr.bf16.mxu0 0
        %1922 = vmatpush1.bf16.msra.mxu0 %v1898
        %1923 = vmatprep.subr.bf16.mxu0 0
        %1924 = vmatpush1.bf16.msra.mxu0 %v1900
        %1925 = vmatprep.subr.bf16.mxu0 0
        %1926 = vmatpush1.bf16.msra.mxu0 %v1902
        %1927 = vmatprep.subr.bf16.mxu0 0
        %1928 = vmatpush1.bf16.msra.mxu0 %v1904
        %1929 = vmatprep.subr.bf16.mxu0 0
        %1930 = vmatpush1.bf16.msra.mxu0 0
        %1931 = vmatprep.subr.bf16.mxu0 0
        %1932 = vmatpush1.bf16.msra.mxu0 0
        %1933 = vmatprep.subr.bf16.mxu0 0
        %1934 = vmatpush1.bf16.msra.mxu0 0
        %1935 = vmatprep.subr.bf16.mxu0 0
        %1936 = vmatpush1.bf16.msra.mxu0 0
        %1937 = vmatprep.subr.bf16.mxu0 0
        %1938 = vmatpush1.bf16.msra.mxu0 0
        %1939 = vmatprep.subr.bf16.mxu0 0
        %1940 = vmatpush1.bf16.msra.mxu0 0
        %1941 = vmatprep.subr.bf16.mxu0 0
        %1942 = vmatpush1.bf16.msra.mxu0 0
        %1943 = vmatprep.subr.bf16.mxu0 0
        %1944 = vmatpush1.bf16.msra.mxu0 0
        %1945 = vmatprep.subr.bf16.mxu0 0
        %1946 = vmatpush1.bf16.msra.mxu0 0
        %1947 = vmatprep.subr.bf16.mxu0 0
        %1948 = vmatpush1.bf16.msra.mxu0 0
        %1949 = vmatprep.subr.bf16.mxu0 0
        %1950 = vmatpush1.bf16.msra.mxu0 0
        %1951 = vmatprep.subr.bf16.mxu0 0
        %1952 = vmatpush1.bf16.msra.mxu0 0
        %1953 = vmatprep.mubr.bf16.mxu0 0
        %1954 = vmatmul.mubr.bf16.gmra.mrb[0].mxu0 %v1910
        %v1955 = vpop.f32.mrb[0].mxu0
        %v1956 = vadd.f32 0.0, %v1955
        %v1957 = vpop.f32.mrb[0].mxu0
        %v1958 = vpop.f32.mrb[0].mxu0
        %v1959 = vadd.f32 0.0, %v1958
        %v1960 = vpop.f32.mrb[0].mxu0
        %1961 = vmatprep.mubr.bf16.mxu0 0
        %1962 = vmatmul.mubr.bf16.gmra.mrb[0].mxu0 %v1913
        %v1963 = vpop.f32.mrb[0].mxu0
        %v1964 = vadd.f32 0.0, %v1963
        %v1965 = vpop.f32.mrb[0].mxu0
        %v1966 = vpop.f32.mrb[0].mxu0
        %v1967 = vadd.f32 0.0, %v1966
        %v1968 = vpop.f32.mrb[0].mxu0
        %1969 = vmatprep.mubr.bf16.mxu0 0
        %1970 = vmatmul.mubr.bf16.gmra.mrb[0].mxu0 %v1916
        %v1971 = vpop.f32.mrb[0].mxu0
        %v1972 = vadd.f32 0.0, %v1971
        %v1973 = vpop.f32.mrb[0].mxu0
        %v1974 = vpop.f32.mrb[0].mxu0
        %v1975 = vadd.f32 0.0, %v1974
        %v1976 = vpop.f32.mrb[0].mxu0
        %1977 = vmatprep.mubr.bf16.mxu0 0
        %1978 = vmatmul.mubr.bf16.gmra.mrb[0].mxu0 %v1919
        %v1979 = vpop.f32.mrb[0].mxu0
        %v1980 = vadd.f32 0.0, %v1979
        %v1981 = vpop.f32.mrb[0].mxu0
        %v1982 = vpop.f32.mrb[0].mxu0
        %v1983 = vadd.f32 0.0, %v1982
        %v1984 = vpop.f32.mrb[0].mxu0
        %1985 = vdwg.mxu0
        %1986 = vrot.lane.b32.xlu0 %v1106, 32
        %v1987 = vpop.permute.xlu0 %1986
        %1988 = vrot.lane.b32.xlu0 %v1107, 32
        %v1989 = vpop.permute.xlu0 %1988
        %1990 = vrot.lane.b32.xlu0 %v1108, 32
        %v1991 = vpop.permute.xlu0 %1990
        %1992 = vrot.lane.b32.xlu0 %v1109, 32
        %v1993 = vpop.permute.xlu0 %1992
        %1994 = vrot.lane.b32.xlu0 %v1110, 32
        %v1995 = vpop.permute.xlu0 %1994
        %1996 = vrot.lane.b32.xlu0 %v1111, 32
        %v1997 = vpop.permute.xlu0 %1996
        %1998 = vrot.lane.b32.xlu0 %v1112, 32
        %v1999 = vpop.permute.xlu0 %1998
        %2000 = vrot.lane.b32.xlu0 %v1113, 32
        %v2001 = vpop.permute.xlu0 %2000
        %v2003 = vsel %vm1114, %v1987, 0
        %v2006 = vsel %vm1114, %v1989, 0
        %v2009 = vsel %vm1114, %v1991, 0
        %v2012 = vsel %vm1114, %v1993, 0
        %v2015 = vsel %vm1114, %v1995, 0
        %v2018 = vsel %vm1114, %v1997, 0
        %v2021 = vsel %vm1114, %v1999, 0
        %v2024 = vsel %vm1114, %v2001, 0
        %2026 = vmatprep.subr.bf16.mxu0 0
        %2027 = vmatpush1.bf16.xpose.msra.mxu0 %v2015
        %2028 = vmatprep.subr.bf16.mxu0 0
        %2029 = vmatpush1.bf16.xpose.msra.mxu0 %v2018
        %2030 = vmatprep.subr.bf16.mxu0 0
        %2031 = vmatpush1.bf16.xpose.msra.mxu0 %v2021
        %2032 = vmatprep.subr.bf16.mxu0 0
        %2033 = vmatpush1.bf16.xpose.msra.mxu0 %v2024
        %2034 = vmatprep.subr.bf16.mxu0 0
        %2035 = vmatpush1.bf16.xpose.msra.mxu0 0
        %2036 = vmatprep.subr.bf16.mxu0 0
        %2037 = vmatpush1.bf16.xpose.msra.mxu0 0
        %2038 = vmatprep.subr.bf16.mxu0 0
        %2039 = vmatpush1.bf16.xpose.msra.mxu0 0
        %2040 = vmatprep.subr.bf16.mxu0 0
        %2041 = vmatpush1.bf16.xpose.msra.mxu0 0
        %2042 = vmatprep.subr.bf16.mxu0 0
        %2043 = vmatpush1.bf16.xpose.msra.mxu0 0
        %2044 = vmatprep.subr.bf16.mxu0 0
        %2045 = vmatpush1.bf16.xpose.msra.mxu0 0
        %2046 = vmatprep.subr.bf16.mxu0 0
        %2047 = vmatpush1.bf16.xpose.msra.mxu0 0
        %2048 = vmatprep.subr.bf16.mxu0 0
        %2049 = vmatpush1.bf16.xpose.msra.mxu0 0
        %2050 = vmatprep.subr.bf16.mxu0 0
        %2051 = vmatpush1.bf16.xpose.msra.mxu0 0
        %2052 = vmatprep.subr.bf16.mxu0 0
        %2053 = vmatpush1.bf16.xpose.msra.mxu0 0
        %2054 = vmatprep.subr.bf16.mxu0 0
        %2055 = vmatpush1.bf16.xpose.msra.mxu0 0
        %2056 = vmatprep.subr.bf16.mxu0 0
        %2057 = vmatpush1.bf16.xpose.msra.mxu0 0
        %2058 = vmatprep.mubr.bf16.mxu0 0
        %2059 = vmatmul.mubr.bf16.gmra.mrb[0].mxu0 %v2003
        %v2060 = vpop.f32.mrb[0].mxu0
        %v2061 = vadd.f32 %v1090, %v2060
        %v2062 = vpop.f32.mrb[0].mxu0
        %v2063 = vpop.f32.mrb[0].mxu0
        %v2064 = vadd.f32 %v1091, %v2063
        %v2065 = vpop.f32.mrb[0].mxu0
        %2066 = vmatprep.mubr.bf16.mxu0 0
        %2067 = vmatmul.mubr.bf16.gmra.mrb[0].mxu0 %v2006
        %v2068 = vpop.f32.mrb[0].mxu0
        %v2069 = vadd.f32 %v1092, %v2068
        %v2070 = vpop.f32.mrb[0].mxu0
        %v2071 = vpop.f32.mrb[0].mxu0
        %v2072 = vadd.f32 %v1093, %v2071
        %v2073 = vpop.f32.mrb[0].mxu0
        %2074 = vmatprep.mubr.bf16.mxu0 0
        %2075 = vmatmul.mubr.bf16.gmra.mrb[0].mxu0 %v2009
        %v2076 = vpop.f32.mrb[0].mxu0
        %v2077 = vadd.f32 %v1094, %v2076
        %v2078 = vpop.f32.mrb[0].mxu0
        %v2079 = vpop.f32.mrb[0].mxu0
        %v2080 = vadd.f32 %v1095, %v2079
        %v2081 = vpop.f32.mrb[0].mxu0
        %2082 = vmatprep.mubr.bf16.mxu0 0
        %2083 = vmatmul.mubr.bf16.gmra.mrb[0].mxu0 %v2012
        %v2084 = vpop.f32.mrb[0].mxu0
        %v2085 = vadd.f32 %v1096, %v2084
        %v2086 = vpop.f32.mrb[0].mxu0
        %v2087 = vpop.f32.mrb[0].mxu0
        %v2088 = vadd.f32 %v1097, %v2087
        %v2089 = vpop.f32.mrb[0].mxu0
        %2090 = vdwg.mxu0
        %v2091 = vadd.f32 %v2061, %v1098
        %v2092 = vadd.f32 %v2064, %v1099
        %v2093 = vadd.f32 %v2069, %v1100
        %v2094 = vadd.f32 %v2072, %v1101
        %v2095 = vadd.f32 %v2077, %v1102
        %v2096 = vadd.f32 %v2080, %v1103
        %v2097 = vadd.f32 %v2085, %v1104
        %v2098 = vadd.f32 %v2088, %v1105
        %v2099 = vsel %vm1212, %v2091, -inf
        %2100 = vmax.xlane.f32.xlu0 %v2099
        %v2101 = vpop.xlane.xlu0 %2100
        %v2102 = vsel %vm1212, %v2092, -inf
        %2103 = vmax.xlane.f32.xlu0 %v2102
        %v2104 = vpop.xlane.xlu0 %2103
        %v2105 = vsel %vm1212, %v2093, -inf
        %2106 = vmax.xlane.f32.xlu0 %v2105
        %v2107 = vpop.xlane.xlu0 %2106
        %v2108 = vsel %vm1212, %v2094, -inf
        %2109 = vmax.xlane.f32.xlu0 %v2108
        %v2110 = vpop.xlane.xlu0 %2109
        %v2111 = vsel %vm1212, %v2095, -inf
        %2112 = vmax.xlane.f32.xlu0 %v2111
        %v2113 = vpop.xlane.xlu0 %2112
        %v2114 = vsel %vm1212, %v2096, -inf
        %2115 = vmax.xlane.f32.xlu0 %v2114
        %v2116 = vpop.xlane.xlu0 %2115
        %v2117 = vsel %vm1212, %v2097, -inf
        %2118 = vmax.xlane.f32.xlu0 %v2117
        %v2119 = vpop.xlane.xlu0 %2118
        %v2120 = vsel %vm1212, %v2098, -inf
        %2121 = vmax.xlane.f32.xlu0 %v2120
        %v2122 = vpop.xlane.xlu0 %2121
        %v2123 = vsub.f32 %v2091, %v2101
        %v2124 = vsub.f32 %v2092, %v2104
        %v2125 = vsub.f32 %v2093, %v2107
        %v2126 = vsub.f32 %v2094, %v2110
        %v2127 = vsub.f32 %v2095, %v2113
        %v2128 = vsub.f32 %v2096, %v2116
        %v2129 = vsub.f32 %v2097, %v2119
        %v2130 = vsub.f32 %v2098, %v2122
        %v2131 = vmul.f32 %v2123, 1.442695
        %v2132 = vpow.pop %v2131
        %v2133 = vmul.f32 %v2124, 1.442695
        %v2134 = vpow.pop %v2133
        %v2135 = vmul.f32 %v2125, 1.442695
        %v2136 = vpow.pop %v2135
        %v2137 = vmul.f32 %v2126, 1.442695
        %v2138 = vpow.pop %v2137
        %v2139 = vmul.f32 %v2127, 1.442695
        %v2140 = vpow.pop %v2139
        %v2141 = vmul.f32 %v2128, 1.442695
        %v2142 = vpow.pop %v2141
        %v2143 = vmul.f32 %v2129, 1.442695
        %v2144 = vpow.pop %v2143
        %v2145 = vmul.f32 %v2130, 1.442695
        %v2146 = vpow.pop %v2145
        %v2147 = vsel %vm1212, %v2132, 0.0
        %2148 = vadd.xlane.f32.xlu0 %v2147
        %v2149 = vpop.xlane.xlu0 %2148
        %v2150 = vsel %vm1212, %v2134, 0.0
        %2151 = vadd.xlane.f32.xlu0 %v2150
        %v2152 = vpop.xlane.xlu0 %2151
        %v2153 = vsel %vm1212, %v2136, 0.0
        %2154 = vadd.xlane.f32.xlu0 %v2153
        %v2155 = vpop.xlane.xlu0 %2154
        %v2156 = vsel %vm1212, %v2138, 0.0
        %2157 = vadd.xlane.f32.xlu0 %v2156
        %v2158 = vpop.xlane.xlu0 %2157
        %v2159 = vsel %vm1212, %v2140, 0.0
        %2160 = vadd.xlane.f32.xlu0 %v2159
        %v2161 = vpop.xlane.xlu0 %2160
        %v2162 = vsel %vm1212, %v2142, 0.0
        %2163 = vadd.xlane.f32.xlu0 %v2162
        %v2164 = vpop.xlane.xlu0 %2163
        %v2165 = vsel %vm1212, %v2144, 0.0
        %2166 = vadd.xlane.f32.xlu0 %v2165
        %v2167 = vpop.xlane.xlu0 %2166
        %v2168 = vsel %vm1212, %v2146, 0.0
        %2169 = vadd.xlane.f32.xlu0 %v2168
        %v2170 = vpop.xlane.xlu0 %2169
        %v2171 = vrcp.pop %v2149
        %v2172 = vmul.f32 %v2132, %v2171
        %v2173 = vrcp.pop %v2152
        %v2174 = vmul.f32 %v2134, %v2173
        %v2175 = vrcp.pop %v2155
        %v2176 = vmul.f32 %v2136, %v2175
        %v2177 = vrcp.pop %v2158
        %v2178 = vmul.f32 %v2138, %v2177
        %v2179 = vrcp.pop %v2161
        %v2180 = vmul.f32 %v2140, %v2179
        %v2181 = vrcp.pop %v2164
        %v2182 = vmul.f32 %v2142, %v2181
        %v2183 = vrcp.pop %v2167
        %v2184 = vmul.f32 %v2144, %v2183
        %v2185 = vrcp.pop %v2170
        %v2186 = vmul.f32 %v2146, %v2185
        %v2187 = vpack.c.bf16 %v2174, %v2172
        %v2188 = vpack.c.bf16 %v2178, %v2176
        %v2189 = vpack.c.bf16 %v2182, %v2180
        %v2190 = vpack.c.bf16 %v2186, %v2184
        %2191 = vrot.lane.b32.xlu0 %v1305, 32
        %v2192 = vpop.permute.xlu0 %2191
        %2193 = vrot.lane.b32.xlu0 %v1306, 32
        %v2194 = vpop.permute.xlu0 %2193
        %2195 = vrot.lane.b32.xlu0 %v1307, 32
        %v2196 = vpop.permute.xlu0 %2195
        %2197 = vrot.lane.b32.xlu0 %v1308, 32
        %v2198 = vpop.permute.xlu0 %2197
        %v2204 = vsel %vm1212, %v2187, 0
        %v2207 = vsel %vm1212, %v2188, 0
        %v2210 = vsel %vm1212, %v2189, 0
        %v2213 = vsel %vm1212, %v2190, 0
        %2215 = vmatprep.subr.bf16.mxu0 0
        %2216 = vmatpush1.bf16.msra.mxu0 %v2192
        %2217 = vmatprep.subr.bf16.mxu0 0
        %2218 = vmatpush1.bf16.msra.mxu0 %v2194
        %2219 = vmatprep.subr.bf16.mxu0 0
        %2220 = vmatpush1.bf16.msra.mxu0 %v2196
        %2221 = vmatprep.subr.bf16.mxu0 0
        %2222 = vmatpush1.bf16.msra.mxu0 %v2198
        %2223 = vmatprep.subr.bf16.mxu0 0
        %2224 = vmatpush1.bf16.msra.mxu0 0
        %2225 = vmatprep.subr.bf16.mxu0 0
        %2226 = vmatpush1.bf16.msra.mxu0 0
        %2227 = vmatprep.subr.bf16.mxu0 0
        %2228 = vmatpush1.bf16.msra.mxu0 0
        %2229 = vmatprep.subr.bf16.mxu0 0
        %2230 = vmatpush1.bf16.msra.mxu0 0
        %2231 = vmatprep.subr.bf16.mxu0 0
        %2232 = vmatpush1.bf16.msra.mxu0 0
        %2233 = vmatprep.subr.bf16.mxu0 0
        %2234 = vmatpush1.bf16.msra.mxu0 0
        %2235 = vmatprep.subr.bf16.mxu0 0
        %2236 = vmatpush1.bf16.msra.mxu0 0
        %2237 = vmatprep.subr.bf16.mxu0 0
        %2238 = vmatpush1.bf16.msra.mxu0 0
        %2239 = vmatprep.subr.bf16.mxu0 0
        %2240 = vmatpush1.bf16.msra.mxu0 0
        %2241 = vmatprep.subr.bf16.mxu0 0
        %2242 = vmatpush1.bf16.msra.mxu0 0
        %2243 = vmatprep.subr.bf16.mxu0 0
        %2244 = vmatpush1.bf16.msra.mxu0 0
        %2245 = vmatprep.subr.bf16.mxu0 0
        %2246 = vmatpush1.bf16.msra.mxu0 0
        %2247 = vmatprep.mubr.bf16.mxu0 0
        %2248 = vmatmul.mubr.bf16.gmra.mrb[0].mxu0 %v2204
        %v2249 = vpop.f32.mrb[0].mxu0
        %v2250 = vadd.f32 0.0, %v2249
        %v2251 = vpop.f32.mrb[0].mxu0
        %v2252 = vpop.f32.mrb[0].mxu0
        %v2253 = vadd.f32 0.0, %v2252
        %v2254 = vpop.f32.mrb[0].mxu0
        %2255 = vmatprep.mubr.bf16.mxu0 0
        %2256 = vmatmul.mubr.bf16.gmra.mrb[0].mxu0 %v2207
        %v2257 = vpop.f32.mrb[0].mxu0
        %v2258 = vadd.f32 0.0, %v2257
        %v2259 = vpop.f32.mrb[0].mxu0
        %v2260 = vpop.f32.mrb[0].mxu0
        %v2261 = vadd.f32 0.0, %v2260
        %v2262 = vpop.f32.mrb[0].mxu0
        %2263 = vmatprep.mubr.bf16.mxu0 0
        %2264 = vmatmul.mubr.bf16.gmra.mrb[0].mxu0 %v2210
        %v2265 = vpop.f32.mrb[0].mxu0
        %v2266 = vadd.f32 0.0, %v2265
        %v2267 = vpop.f32.mrb[0].mxu0
        %v2268 = vpop.f32.mrb[0].mxu0
        %v2269 = vadd.f32 0.0, %v2268
        %v2270 = vpop.f32.mrb[0].mxu0
        %2271 = vmatprep.mubr.bf16.mxu0 0
        %2272 = vmatmul.mubr.bf16.gmra.mrb[0].mxu0 %v2213
        %v2273 = vpop.f32.mrb[0].mxu0
        %v2274 = vadd.f32 0.0, %v2273
        %v2275 = vpop.f32.mrb[0].mxu0
        %v2276 = vpop.f32.mrb[0].mxu0
        %v2277 = vadd.f32 0.0, %v2276
        %v2278 = vpop.f32.mrb[0].mxu0
        %2279 = vdwg.mxu0
        %2288 = vrot.lane.b32.xlu0 %v1662, 32
        %v2289 = vpop.permute.xlu0 %2288
        %2290 = vrot.lane.b32.xlu0 %v1665, 32
        %v2291 = vpop.permute.xlu0 %2290
        %2292 = vrot.lane.b32.xlu0 %v1670, 32
        %v2293 = vpop.permute.xlu0 %2292
        %2294 = vrot.lane.b32.xlu0 %v1673, 32
        %v2295 = vpop.permute.xlu0 %2294
        %2296 = vrot.lane.b32.xlu0 %v1678, 32
        %v2297 = vpop.permute.xlu0 %2296
        %2298 = vrot.lane.b32.xlu0 %v1681, 32
        %v2299 = vpop.permute.xlu0 %2298
        %2300 = vrot.lane.b32.xlu0 %v1686, 32
        %v2301 = vpop.permute.xlu0 %2300
        %2302 = vrot.lane.b32.xlu0 %v1689, 32
        %v2303 = vpop.permute.xlu0 %2302
        %2320 = vrot.lane.b32.xlu0 %v1956, 64
        %v2321 = vpop.permute.xlu0 %2320
        %2322 = vrot.lane.b32.xlu0 %v1959, 64
        %v2323 = vpop.permute.xlu0 %2322
        %2324 = vrot.lane.b32.xlu0 %v1964, 64
        %v2325 = vpop.permute.xlu0 %2324
        %2326 = vrot.lane.b32.xlu0 %v1967, 64
        %v2327 = vpop.permute.xlu0 %2326
        %2328 = vrot.lane.b32.xlu0 %v1972, 64
        %v2329 = vpop.permute.xlu0 %2328
        %2330 = vrot.lane.b32.xlu0 %v1975, 64
        %v2331 = vpop.permute.xlu0 %2330
        %2332 = vrot.lane.b32.xlu0 %v1980, 64
        %v2333 = vpop.permute.xlu0 %2332
        %2334 = vrot.lane.b32.xlu0 %v1983, 64
        %v2335 = vpop.permute.xlu0 %2334
        %2352 = vrot.lane.b32.xlu0 %v2250, 96
        %v2353 = vpop.permute.xlu0 %2352
        %2354 = vrot.lane.b32.xlu0 %v2253, 96
        %v2355 = vpop.permute.xlu0 %2354
        %2356 = vrot.lane.b32.xlu0 %v2258, 96
        %v2357 = vpop.permute.xlu0 %2356
        %2358 = vrot.lane.b32.xlu0 %v2261, 96
        %v2359 = vpop.permute.xlu0 %2358
        %2360 = vrot.lane.b32.xlu0 %v2266, 96
        %v2361 = vpop.permute.xlu0 %2360
        %2362 = vrot.lane.b32.xlu0 %v2269, 96
        %v2363 = vpop.permute.xlu0 %2362
        %2364 = vrot.lane.b32.xlu0 %v2274, 96
        %v2365 = vpop.permute.xlu0 %2364
        %2366 = vrot.lane.b32.xlu0 %v2277, 96
        %v2367 = vpop.permute.xlu0 %2366
        %v2376 = vsel %vm1114, %v1356, %v2289
        %v2377 = vsel %vm1114, %v1359, %v2291
        %v2378 = vsel %vm1114, %v1364, %v2293
        %v2379 = vsel %vm1114, %v1367, %v2295
        %v2380 = vsel %vm1114, %v1372, %v2297
        %v2381 = vsel %vm1114, %v1375, %v2299
        %v2382 = vsel %vm1114, %v1380, %v2301
        %v2383 = vsel %vm1114, %v1383, %v2303
        %v2384 = vsel %vm1212, %v2376, %v2321
        %v2385 = vsel %vm1212, %v2377, %v2323
        %v2386 = vsel %vm1212, %v2378, %v2325
        %v2387 = vsel %vm1212, %v2379, %v2327
        %v2388 = vsel %vm1212, %v2380, %v2329
        %v2389 = vsel %vm1212, %v2381, %v2331
        %v2390 = vsel %vm1212, %v2382, %v2333
        %v2391 = vsel %vm1212, %v2383, %v2335
        %vm2392 = vcmask 785408
        %v2393 = vsel %vm2392, %v2384, %v2353
        %v2394 = vsel %vm2392, %v2385, %v2355
        %v2395 = vsel %vm2392, %v2386, %v2357
        %v2396 = vsel %vm2392, %v2387, %v2359
        %v2397 = vsel %vm2392, %v2388, %v2361
        %v2398 = vsel %vm2392, %v2389, %v2363
        %v2399 = vsel %vm2392, %v2390, %v2365
        %v2400 = vsel %vm2392, %v2391, %v2367
        %v2401 = vpack.c.bf16 %v2394, %v2393
        %v2402 = vpack.c.bf16 %v2396, %v2395
        %v2403 = vpack.c.bf16 %v2398, %v2397
        %v2404 = vpack.c.bf16 %v2400, %v2399
        %v2405 = vld [vmem:[%s7] sm:$0xf]
        %v2406 = vld [vmem:[%s7 + $0x4] sm:$0xf]
        %v2407 = vld [vmem:[%s7 + $0x8] sm:$0xf]
        %v2408 = vld [vmem:[%s7 + $0xc] sm:$0xf]
        %v2409 = vld [vmem:[%s7 + $0x10] sm:$0xf]
        %v2410 = vld [vmem:[%s7 + $0x14] sm:$0xf]
        %v2411 = vld [vmem:[%s7 + $0x18] sm:$0xf]
        %v2412 = vld [vmem:[%s7 + $0x1c] sm:$0xf]
        %v2413 = vld [vmem:[%s7 + $0x20] sm:$0xf]
        %v2414 = vld [vmem:[%s7 + $0x24] sm:$0xf]
        %v2415 = vld [vmem:[%s7 + $0x28] sm:$0xf]
        %v2416 = vld [vmem:[%s7 + $0x2c] sm:$0xf]
        %v2417 = vld [vmem:[%s7 + $0x30] sm:$0xf]
        %v2418 = vld [vmem:[%s7 + $0x34] sm:$0xf]
        %v2419 = vld [vmem:[%s7 + $0x38] sm:$0xf]
        %v2420 = vld [vmem:[%s7 + $0x3c] sm:$0xf]
        %v2421 = vld [vmem:[%s8] sm:$0x1]
        %v2423 = vlaneseq
        %v2424 = vshrl.u32 %v2423, 7
        %v2425 = vsub.s32 0, %v2424
        %v2426 = vrot.slane %v2421, %v2425
        %v2444 = vunpack.c.l.b16 %v2405
        %v2445 = vunpack.c.l.b16 %v2406
        %v2446 = vunpack.c.l.b16 %v2407
        %v2447 = vunpack.c.l.b16 %v2408
        %v2448 = vunpack.c.l.b16 %v2409
        %v2449 = vunpack.c.l.b16 %v2410
        %v2450 = vunpack.c.l.b16 %v2411
        %v2451 = vunpack.c.l.b16 %v2412
        %v2452 = vunpack.c.l.b16 %v2413
        %v2453 = vunpack.c.l.b16 %v2414
        %v2454 = vunpack.c.l.b16 %v2415
        %v2455 = vunpack.c.l.b16 %v2416
        %v2456 = vunpack.c.l.b16 %v2417
        %v2457 = vunpack.c.l.b16 %v2418
        %v2458 = vunpack.c.l.b16 %v2419
        %v2459 = vunpack.c.l.b16 %v2420
        %v2460 = vpack.c.b16 %v2445, %v2444
        %v2461 = vpack.c.b16 %v2447, %v2446
        %v2462 = vpack.c.b16 %v2449, %v2448
        %v2463 = vpack.c.b16 %v2451, %v2450
        %v2464 = vpack.c.b16 %v2453, %v2452
        %v2465 = vpack.c.b16 %v2455, %v2454
        %v2466 = vpack.c.b16 %v2457, %v2456
        %v2467 = vpack.c.b16 %v2459, %v2458
        %2476 = vmatprep.subr.bf16.mxu0 0
        %2477 = vmatpush1.bf16.msra.mxu0 %v2460
        %2478 = vmatprep.subr.bf16.mxu0 0
        %2479 = vmatpush1.bf16.msra.mxu0 %v2461
        %2480 = vmatprep.subr.bf16.mxu0 0
        %2481 = vmatpush1.bf16.msra.mxu0 %v2462
        %2482 = vmatprep.subr.bf16.mxu0 0
        %2483 = vmatpush1.bf16.msra.mxu0 %v2463
        %2484 = vmatprep.subr.bf16.mxu0 0
        %2485 = vmatpush1.bf16.msra.mxu0 %v2464
        %2486 = vmatprep.subr.bf16.mxu0 0
        %2487 = vmatpush1.bf16.msra.mxu0 %v2465
        %2488 = vmatprep.subr.bf16.mxu0 0
        %2489 = vmatpush1.bf16.msra.mxu0 %v2466
        %2490 = vmatprep.subr.bf16.mxu0 0
        %2491 = vmatpush1.bf16.msra.mxu0 %v2467
        %2492 = vmatprep.subr.bf16.mxu0 0
        %2493 = vmatpush1.bf16.msra.mxu0 0
        %2494 = vmatprep.subr.bf16.mxu0 0
        %2495 = vmatpush1.bf16.msra.mxu0 0
        %2496 = vmatprep.subr.bf16.mxu0 0
        %2497 = vmatpush1.bf16.msra.mxu0 0
        %2498 = vmatprep.subr.bf16.mxu0 0
        %2499 = vmatpush1.bf16.msra.mxu0 0
        %2500 = vmatprep.subr.bf16.mxu0 0
        %2501 = vmatpush1.bf16.msra.mxu0 0
        %2502 = vmatprep.subr.bf16.mxu0 0
        %2503 = vmatpush1.bf16.msra.mxu0 0
        %2504 = vmatprep.subr.bf16.mxu0 0
        %2505 = vmatpush1.bf16.msra.mxu0 0
        %2506 = vmatprep.subr.bf16.mxu0 0
        %2507 = vmatpush1.bf16.msra.mxu0 0
        %2508 = vmatprep.mubr.bf16.mxu0 0
        %2509 = vmatmul.mubr.bf16.gmra.mrb[0].mxu0 %v2401
        %v2510 = vpop.f32.mrb[0].mxu0
        %v2511 = vadd.f32 %v2426, %v2510
        %v2512 = vpop.f32.mrb[0].mxu0
        %v2513 = vpop.f32.mrb[0].mxu0
        %v2514 = vadd.f32 %v2426, %v2513
        %v2515 = vpop.f32.mrb[0].mxu0
        %2516 = vmatprep.mubr.bf16.mxu0 0
        %2517 = vmatmul.mubr.bf16.gmra.mrb[0].mxu0 %v2402
        %v2518 = vpop.f32.mrb[0].mxu0
        %v2519 = vadd.f32 %v2426, %v2518
        %v2520 = vpop.f32.mrb[0].mxu0
        %v2521 = vpop.f32.mrb[0].mxu0
        %v2522 = vadd.f32 %v2426, %v2521
        %v2523 = vpop.f32.mrb[0].mxu0
        %2524 = vmatprep.mubr.bf16.mxu0 0
        %2525 = vmatmul.mubr.bf16.gmra.mrb[0].mxu0 %v2403
        %v2526 = vpop.f32.mrb[0].mxu0
        %v2527 = vadd.f32 %v2426, %v2526
        %v2528 = vpop.f32.mrb[0].mxu0
        %v2529 = vpop.f32.mrb[0].mxu0
        %v2530 = vadd.f32 %v2426, %v2529
        %v2531 = vpop.f32.mrb[0].mxu0
        %2532 = vmatprep.mubr.bf16.mxu0 0
        %2533 = vmatmul.mubr.bf16.gmra.mrb[0].mxu0 %v2404
        %v2534 = vpop.f32.mrb[0].mxu0
        %v2535 = vadd.f32 %v2426, %v2534
        %v2536 = vpop.f32.mrb[0].mxu0
        %v2537 = vpop.f32.mrb[0].mxu0
        %v2538 = vadd.f32 %v2426, %v2537
        %v2539 = vpop.f32.mrb[0].mxu0
        %2540 = vdwg.mxu0
        %v2541 = vadd.f32 %v620, %v2511
        %v2542 = vadd.f32 %v621, %v2514
        %v2543 = vadd.f32 %v622, %v2519
        %v2544 = vadd.f32 %v623, %v2522
        %v2545 = vadd.f32 %v624, %v2527
        %v2546 = vadd.f32 %v625, %v2530
        %v2547 = vadd.f32 %v626, %v2535
        %v2548 = vadd.f32 %v627, %v2538
        %2549 = vadd.xlane.f32.xlu0 %v2541
        %v2550 = vpop.xlane.xlu0 %2549
        %2551 = vadd.xlane.f32.xlu0 %v2542
        %v2552 = vpop.xlane.xlu0 %2551
        %2553 = vadd.xlane.f32.xlu0 %v2543
        %v2554 = vpop.xlane.xlu0 %2553
        %2555 = vadd.xlane.f32.xlu0 %v2544
        %v2556 = vpop.xlane.xlu0 %2555
        %2557 = vadd.xlane.f32.xlu0 %v2545
        %v2558 = vpop.xlane.xlu0 %2557
        %2559 = vadd.xlane.f32.xlu0 %v2546
        %v2560 = vpop.xlane.xlu0 %2559
        %2561 = vadd.xlane.f32.xlu0 %v2547
        %v2562 = vpop.xlane.xlu0 %2561
        %2563 = vadd.xlane.f32.xlu0 %v2548
        %v2564 = vpop.xlane.xlu0 %2563
        %v2565 = vmul.f32 %v2550, %v644
        %v2566 = vmul.f32 %v2552, %v644
        %v2567 = vmul.f32 %v2554, %v644
        %v2568 = vmul.f32 %v2556, %v644
        %v2569 = vmul.f32 %v2558, %v644
        %v2570 = vmul.f32 %v2560, %v644
        %v2571 = vmul.f32 %v2562, %v644
        %v2572 = vmul.f32 %v2564, %v644
        %v2573 = vsub.f32 %v2541, %v2565
        %v2574 = vsub.f32 %v2542, %v2566
        %v2575 = vsub.f32 %v2543, %v2567
        %v2576 = vsub.f32 %v2544, %v2568
        %v2577 = vsub.f32 %v2545, %v2569
        %v2578 = vsub.f32 %v2546, %v2570
        %v2579 = vsub.f32 %v2547, %v2571
        %v2580 = vsub.f32 %v2548, %v2572
        %v2581 = vmul.f32 %v2573, %v2573
        %v2582 = vmul.f32 %v2574, %v2574
        %v2583 = vmul.f32 %v2575, %v2575
        %v2584 = vmul.f32 %v2576, %v2576
        %v2585 = vmul.f32 %v2577, %v2577
        %v2586 = vmul.f32 %v2578, %v2578
        %v2587 = vmul.f32 %v2579, %v2579
        %v2588 = vmul.f32 %v2580, %v2580
        %2589 = vadd.xlane.f32.xlu0 %v2581
        %v2590 = vpop.xlane.xlu0 %2589
        %2591 = vadd.xlane.f32.xlu0 %v2582
        %v2592 = vpop.xlane.xlu0 %2591
        %2593 = vadd.xlane.f32.xlu0 %v2583
        %v2594 = vpop.xlane.xlu0 %2593
        %2595 = vadd.xlane.f32.xlu0 %v2584
        %v2596 = vpop.xlane.xlu0 %2595
        %2597 = vadd.xlane.f32.xlu0 %v2585
        %v2598 = vpop.xlane.xlu0 %2597
        %2599 = vadd.xlane.f32.xlu0 %v2586
        %v2600 = vpop.xlane.xlu0 %2599
        %2601 = vadd.xlane.f32.xlu0 %v2587
        %v2602 = vpop.xlane.xlu0 %2601
        %2603 = vadd.xlane.f32.xlu0 %v2588
        %v2604 = vpop.xlane.xlu0 %2603
        %v2605 = vmul.f32 %v2590, %v644
        %v2606 = vmul.f32 %v2592, %v644
        %v2607 = vmul.f32 %v2594, %v644
        %v2608 = vmul.f32 %v2596, %v644
        %v2609 = vmul.f32 %v2598, %v644
        %v2610 = vmul.f32 %v2600, %v644
        %v2611 = vmul.f32 %v2602, %v644
        %v2612 = vmul.f32 %v2604, %v644
        %v2613 = vadd.f32 %v2605, 1e-05
        %v2614 = vadd.f32 %v2606, 1e-05
        %v2615 = vadd.f32 %v2607, 1e-05
        %v2616 = vadd.f32 %v2608, 1e-05
        %v2617 = vadd.f32 %v2609, 1e-05
        %v2618 = vadd.f32 %v2610, 1e-05
        %v2619 = vadd.f32 %v2611, 1e-05
        %v2620 = vadd.f32 %v2612, 1e-05
        %v2621 = vrsqrt.pop %v2613
        %v2622 = vrsqrt.pop %v2614
        %v2623 = vrsqrt.pop %v2615
        %v2624 = vrsqrt.pop %v2616
        %v2625 = vrsqrt.pop %v2617
        %v2626 = vrsqrt.pop %v2618
        %v2627 = vrsqrt.pop %v2619
        %v2628 = vrsqrt.pop %v2620
        %v2629 = vmul.f32 %v2573, %v2621
        %v2630 = vmul.f32 %v2574, %v2622
        %v2631 = vmul.f32 %v2575, %v2623
        %v2632 = vmul.f32 %v2576, %v2624
        %v2633 = vmul.f32 %v2577, %v2625
        %v2634 = vmul.f32 %v2578, %v2626
        %v2635 = vmul.f32 %v2579, %v2627
        %v2636 = vmul.f32 %v2580, %v2628
        %v2637 = vld [vmem:[%s9] sm:$0x1]
        %v2639 = vlaneseq
        %v2640 = vshrl.u32 %v2639, 7
        %v2641 = vsub.s32 0, %v2640
        %v2642 = vrot.slane %v2637, %v2641
        %v2644 = vmul.f32 %v2629, %v2642
        %v2645 = vmul.f32 %v2630, %v2642
        %v2646 = vmul.f32 %v2631, %v2642
        %v2647 = vmul.f32 %v2632, %v2642
        %v2648 = vmul.f32 %v2633, %v2642
        %v2649 = vmul.f32 %v2634, %v2642
        %v2650 = vmul.f32 %v2635, %v2642
        %v2651 = vmul.f32 %v2636, %v2642
        %v2652 = vld [vmem:[%s10] sm:$0x1]
        %v2654 = vlaneseq
        %v2655 = vshrl.u32 %v2654, 7
        %v2656 = vsub.s32 0, %v2655
        %v2657 = vrot.slane %v2652, %v2656
        %v2659 = vadd.f32 %v2644, %v2657
        %v2660 = vadd.f32 %v2645, %v2657
        %v2661 = vadd.f32 %v2646, %v2657
        %v2662 = vadd.f32 %v2647, %v2657
        %v2663 = vadd.f32 %v2648, %v2657
        %v2664 = vadd.f32 %v2649, %v2657
        %v2665 = vadd.f32 %v2650, %v2657
        %v2666 = vadd.f32 %v2651, %v2657
        %v2667 = vpack.c.bf16 %v2660, %v2659
        %v2668 = vpack.c.bf16 %v2662, %v2661
        %v2669 = vpack.c.bf16 %v2664, %v2663
        %v2670 = vpack.c.bf16 %v2666, %v2665
        %v2671 = vld [vmem:[%s11] sm:$0xff]
        %v2672 = vld [vmem:[%s11 + $0x8] sm:$0xff]
        %v2673 = vld [vmem:[%s11 + $0x10] sm:$0xff]
        %v2674 = vld [vmem:[%s11 + $0x18] sm:$0xff]
        %v2675 = vld [vmem:[%s11 + $0x20] sm:$0xff]
        %v2676 = vld [vmem:[%s11 + $0x28] sm:$0xff]
        %v2677 = vld [vmem:[%s11 + $0x30] sm:$0xff]
        %v2678 = vld [vmem:[%s11 + $0x38] sm:$0xff]
        %v2679 = vld [vmem:[%s11 + $0x40] sm:$0xff]
        %v2680 = vld [vmem:[%s11 + $0x48] sm:$0xff]
        %v2681 = vld [vmem:[%s11 + $0x50] sm:$0xff]
        %v2682 = vld [vmem:[%s11 + $0x58] sm:$0xff]
        %v2683 = vld [vmem:[%s11 + $0x60] sm:$0xff]
        %v2684 = vld [vmem:[%s11 + $0x68] sm:$0xff]
        %v2685 = vld [vmem:[%s11 + $0x70] sm:$0xff]
        %v2686 = vld [vmem:[%s11 + $0x78] sm:$0xff]
        %v2687 = vld [vmem:[%s11 + $0x80] sm:$0xff]
        %v2688 = vld [vmem:[%s11 + $0x88] sm:$0xff]
        %v2689 = vld [vmem:[%s11 + $0x90] sm:$0xff]
        %v2690 = vld [vmem:[%s11 + $0x98] sm:$0xff]
        %v2691 = vld [vmem:[%s11 + $0xa0] sm:$0xff]
        %v2692 = vld [vmem:[%s11 + $0xa8] sm:$0xff]
        %v2693 = vld [vmem:[%s11 + $0xb0] sm:$0xff]
        %v2694 = vld [vmem:[%s11 + $0xb8] sm:$0xff]
        %v2695 = vld [vmem:[%s11 + $0xc0] sm:$0xff]
        %v2696 = vld [vmem:[%s11 + $0xc8] sm:$0xff]
        %v2697 = vld [vmem:[%s11 + $0xd0] sm:$0xff]
        %v2698 = vld [vmem:[%s11 + $0xd8] sm:$0xff]
        %v2699 = vld [vmem:[%s11 + $0xe0] sm:$0xff]
        %v2700 = vld [vmem:[%s11 + $0xe8] sm:$0xff]
        %v2701 = vld [vmem:[%s11 + $0xf0] sm:$0xff]
        %v2702 = vld [vmem:[%s11 + $0xf8] sm:$0xff]
        %v2703 = vld [vmem:[%s12] sm:$0xf]
        %v2705 = vlaneseq
        %v2706 = vshrl.u32 %v2705, 7
        %v2707 = vsub.s32 0, %v2706
        %v2708 = vrot.slane %v2703, %v2707
        %v2709 = vlaneseq
        %v2710 = vshrl.u32 %v2709, 7
        %v2711 = vsub.s32 1, %v2710
        %v2712 = vrot.slane %v2703, %v2711
        %v2713 = vlaneseq
        %v2714 = vshrl.u32 %v2713, 7
        %v2715 = vsub.s32 2, %v2714
        %v2716 = vrot.slane %v2703, %v2715
        %v2717 = vlaneseq
        %v2718 = vshrl.u32 %v2717, 7
        %v2719 = vsub.s32 3, %v2718
        %v2720 = vrot.slane %v2703, %v2719
        %v2757 = vunpack.c.l.b16 %v2671
        %v2758 = vunpack.c.h.b16 %v2671
        %v2759 = vunpack.c.l.b16 %v2672
        %v2760 = vunpack.c.h.b16 %v2672
        %v2761 = vunpack.c.l.b16 %v2673
        %v2762 = vunpack.c.h.b16 %v2673
        %v2763 = vunpack.c.l.b16 %v2674
        %v2764 = vunpack.c.h.b16 %v2674
        %v2765 = vunpack.c.l.b16 %v2675
        %v2766 = vunpack.c.h.b16 %v2675
        %v2767 = vunpack.c.l.b16 %v2676
        %v2768 = vunpack.c.h.b16 %v2676
        %v2769 = vunpack.c.l.b16 %v2677
        %v2770 = vunpack.c.h.b16 %v2677
        %v2771 = vunpack.c.l.b16 %v2678
        %v2772 = vunpack.c.h.b16 %v2678
        %v2773 = vunpack.c.l.b16 %v2679
        %v2774 = vunpack.c.h.b16 %v2679
        %v2775 = vunpack.c.l.b16 %v2680
        %v2776 = vunpack.c.h.b16 %v2680
        %v2777 = vunpack.c.l.b16 %v2681
        %v2778 = vunpack.c.h.b16 %v2681
        %v2779 = vunpack.c.l.b16 %v2682
        %v2780 = vunpack.c.h.b16 %v2682
        %v2781 = vunpack.c.l.b16 %v2683
        %v2782 = vunpack.c.h.b16 %v2683
        %v2783 = vunpack.c.l.b16 %v2684
        %v2784 = vunpack.c.h.b16 %v2684
        %v2785 = vunpack.c.l.b16 %v2685
        %v2786 = vunpack.c.h.b16 %v2685
        %v2787 = vunpack.c.l.b16 %v2686
        %v2788 = vunpack.c.h.b16 %v2686
        %v2789 = vunpack.c.l.b16 %v2687
        %v2790 = vunpack.c.h.b16 %v2687
        %v2791 = vunpack.c.l.b16 %v2688
        %v2792 = vunpack.c.h.b16 %v2688
        %v2793 = vunpack.c.l.b16 %v2689
        %v2794 = vunpack.c.h.b16 %v2689
        %v2795 = vunpack.c.l.b16 %v2690
        %v2796 = vunpack.c.h.b16 %v2690
        %v2797 = vunpack.c.l.b16 %v2691
        %v2798 = vunpack.c.h.b16 %v2691
        %v2799 = vunpack.c.l.b16 %v2692
        %v2800 = vunpack.c.h.b16 %v2692
        %v2801 = vunpack.c.l.b16 %v2693
        %v2802 = vunpack.c.h.b16 %v2693
        %v2803 = vunpack.c.l.b16 %v2694
        %v2804 = vunpack.c.h.b16 %v2694
        %v2805 = vunpack.c.l.b16 %v2695
        %v2806 = vunpack.c.h.b16 %v2695
        %v2807 = vunpack.c.l.b16 %v2696
        %v2808 = vunpack.c.h.b16 %v2696
        %v2809 = vunpack.c.l.b16 %v2697
        %v2810 = vunpack.c.h.b16 %v2697
        %v2811 = vunpack.c.l.b16 %v2698
        %v2812 = vunpack.c.h.b16 %v2698
        %v2813 = vunpack.c.l.b16 %v2699
        %v2814 = vunpack.c.h.b16 %v2699
        %v2815 = vunpack.c.l.b16 %v2700
        %v2816 = vunpack.c.h.b16 %v2700
        %v2817 = vunpack.c.l.b16 %v2701
        %v2818 = vunpack.c.h.b16 %v2701
        %v2819 = vunpack.c.l.b16 %v2702
        %v2820 = vunpack.c.h.b16 %v2702
        %v2821 = vpack.c.b16 %v2761, %v2757
        %v2822 = vpack.c.b16 %v2762, %v2758
        %v2823 = vpack.c.b16 %v2763, %v2759
        %v2824 = vpack.c.b16 %v2764, %v2760
        %v2825 = vpack.c.b16 %v2769, %v2765
        %v2826 = vpack.c.b16 %v2770, %v2766
        %v2827 = vpack.c.b16 %v2771, %v2767
        %v2828 = vpack.c.b16 %v2772, %v2768
        %v2829 = vpack.c.b16 %v2777, %v2773
        %v2830 = vpack.c.b16 %v2778, %v2774
        %v2831 = vpack.c.b16 %v2779, %v2775
        %v2832 = vpack.c.b16 %v2780, %v2776
        %v2833 = vpack.c.b16 %v2785, %v2781
        %v2834 = vpack.c.b16 %v2786, %v2782
        %v2835 = vpack.c.b16 %v2787, %v2783
        %v2836 = vpack.c.b16 %v2788, %v2784
        %v2837 = vpack.c.b16 %v2793, %v2789
        %v2838 = vpack.c.b16 %v2794, %v2790
        %v2839 = vpack.c.b16 %v2795, %v2791
        %v2840 = vpack.c.b16 %v2796, %v2792
        %v2841 = vpack.c.b16 %v2801, %v2797
        %v2842 = vpack.c.b16 %v2802, %v2798
        %v2843 = vpack.c.b16 %v2803, %v2799
        %v2844 = vpack.c.b16 %v2804, %v2800
        %v2845 = vpack.c.b16 %v2809, %v2805
        %v2846 = vpack.c.b16 %v2810, %v2806
        %v2847 = vpack.c.b16 %v2811, %v2807
        %v2848 = vpack.c.b16 %v2812, %v2808
        %v2849 = vpack.c.b16 %v2817, %v2813
        %v2850 = vpack.c.b16 %v2818, %v2814
        %v2851 = vpack.c.b16 %v2819, %v2815
        %v2852 = vpack.c.b16 %v2820, %v2816
        %2885 = vmatprep.subr.bf16.mxu0 %v2822
        %2886 = vmatpush1.bf16.msra.mxu0 %v2821
        %2887 = vmatprep.subr.bf16.mxu0 %v2826
        %2888 = vmatpush1.bf16.msra.mxu0 %v2825
        %2889 = vmatprep.subr.bf16.mxu0 %v2830
        %2890 = vmatpush1.bf16.msra.mxu0 %v2829
        %2891 = vmatprep.subr.bf16.mxu0 %v2834
        %2892 = vmatpush1.bf16.msra.mxu0 %v2833
        %2893 = vmatprep.subr.bf16.mxu0 %v2838
        %2894 = vmatpush1.bf16.msra.mxu0 %v2837
        %2895 = vmatprep.subr.bf16.mxu0 %v2842
        %2896 = vmatpush1.bf16.msra.mxu0 %v2841
        %2897 = vmatprep.subr.bf16.mxu0 %v2846
        %2898 = vmatpush1.bf16.msra.mxu0 %v2845
        %2899 = vmatprep.subr.bf16.mxu0 %v2850
        %2900 = vmatpush1.bf16.msra.mxu0 %v2849
        %2901 = vmatprep.subr.bf16.mxu0 0
        %2902 = vmatpush1.bf16.msra.mxu0 0
        %2903 = vmatprep.subr.bf16.mxu0 0
        %2904 = vmatpush1.bf16.msra.mxu0 0
        %2905 = vmatprep.subr.bf16.mxu0 0
        %2906 = vmatpush1.bf16.msra.mxu0 0
        %2907 = vmatprep.subr.bf16.mxu0 0
        %2908 = vmatpush1.bf16.msra.mxu0 0
        %2909 = vmatprep.subr.bf16.mxu0 0
        %2910 = vmatpush1.bf16.msra.mxu0 0
        %2911 = vmatprep.subr.bf16.mxu0 0
        %2912 = vmatpush1.bf16.msra.mxu0 0
        %2913 = vmatprep.subr.bf16.mxu0 0
        %2914 = vmatpush1.bf16.msra.mxu0 0
        %2915 = vmatprep.subr.bf16.mxu0 0
        %2916 = vmatpush1.bf16.msra.mxu0 0
        %2917 = vmatprep.mubr.bf16.mxu0 0
        %2918 = vmatmul.mubr.bf16.gmra.mrb[0].mxu0 %v2667
        %v2919 = vpop.f32.mrb[0].mxu0
        %v2920 = vadd.f32 %v2708, %v2919
        %v2921 = vpop.f32.mrb[0].mxu0
        %v2922 = vadd.f32 %v2712, %v2921
        %v2923 = vpop.f32.mrb[0].mxu0
        %v2924 = vadd.f32 %v2708, %v2923
        %v2925 = vpop.f32.mrb[0].mxu0
        %v2926 = vadd.f32 %v2712, %v2925
        %2927 = vmatprep.mubr.bf16.mxu0 0
        %2928 = vmatmul.mubr.bf16.gmra.mrb[0].mxu0 %v2668
        %v2929 = vpop.f32.mrb[0].mxu0
        %v2930 = vadd.f32 %v2708, %v2929
        %v2931 = vpop.f32.mrb[0].mxu0
        %v2932 = vadd.f32 %v2712, %v2931
        %v2933 = vpop.f32.mrb[0].mxu0
        %v2934 = vadd.f32 %v2708, %v2933
        %v2935 = vpop.f32.mrb[0].mxu0
        %v2936 = vadd.f32 %v2712, %v2935
        %2937 = vmatprep.mubr.bf16.mxu0 0
        %2938 = vmatmul.mubr.bf16.gmra.mrb[0].mxu0 %v2669
        %v2939 = vpop.f32.mrb[0].mxu0
        %v2940 = vadd.f32 %v2708, %v2939
        %v2941 = vpop.f32.mrb[0].mxu0
        %v2942 = vadd.f32 %v2712, %v2941
        %v2943 = vpop.f32.mrb[0].mxu0
        %v2944 = vadd.f32 %v2708, %v2943
        %v2945 = vpop.f32.mrb[0].mxu0
        %v2946 = vadd.f32 %v2712, %v2945
        %2947 = vmatprep.mubr.bf16.mxu0 0
        %2948 = vmatmul.mubr.bf16.gmra.mrb[0].mxu0 %v2670
        %v2949 = vpop.f32.mrb[0].mxu0
        %v2950 = vadd.f32 %v2708, %v2949
        %v2951 = vpop.f32.mrb[0].mxu0
        %v2952 = vadd.f32 %v2712, %v2951
        %v2953 = vpop.f32.mrb[0].mxu0
        %v2954 = vadd.f32 %v2708, %v2953
        %v2955 = vpop.f32.mrb[0].mxu0
        %v2956 = vadd.f32 %v2712, %v2955
        %2957 = vdwg.mxu0
        %2958 = vmatprep.subr.bf16.mxu0 %v2824
        %2959 = vmatpush1.bf16.msra.mxu0 %v2823
        %2960 = vmatprep.subr.bf16.mxu0 %v2828
        %2961 = vmatpush1.bf16.msra.mxu0 %v2827
        %2962 = vmatprep.subr.bf16.mxu0 %v2832
        %2963 = vmatpush1.bf16.msra.mxu0 %v2831
        %2964 = vmatprep.subr.bf16.mxu0 %v2836
        %2965 = vmatpush1.bf16.msra.mxu0 %v2835
        %2966 = vmatprep.subr.bf16.mxu0 %v2840
        %2967 = vmatpush1.bf16.msra.mxu0 %v2839
        %2968 = vmatprep.subr.bf16.mxu0 %v2844
        %2969 = vmatpush1.bf16.msra.mxu0 %v2843
        %2970 = vmatprep.subr.bf16.mxu0 %v2848
        %2971 = vmatpush1.bf16.msra.mxu0 %v2847
        %2972 = vmatprep.subr.bf16.mxu0 %v2852
        %2973 = vmatpush1.bf16.msra.mxu0 %v2851
        %2974 = vmatprep.subr.bf16.mxu0 0
        %2975 = vmatpush1.bf16.msra.mxu0 0
        %2976 = vmatprep.subr.bf16.mxu0 0
        %2977 = vmatpush1.bf16.msra.mxu0 0
        %2978 = vmatprep.subr.bf16.mxu0 0
        %2979 = vmatpush1.bf16.msra.mxu0 0
        %2980 = vmatprep.subr.bf16.mxu0 0
        %2981 = vmatpush1.bf16.msra.mxu0 0
        %2982 = vmatprep.subr.bf16.mxu0 0
        %2983 = vmatpush1.bf16.msra.mxu0 0
        %2984 = vmatprep.subr.bf16.mxu0 0
        %2985 = vmatpush1.bf16.msra.mxu0 0
        %2986 = vmatprep.subr.bf16.mxu0 0
        %2987 = vmatpush1.bf16.msra.mxu0 0
        %2988 = vmatprep.subr.bf16.mxu0 0
        %2989 = vmatpush1.bf16.msra.mxu0 0
        %2990 = vmatprep.mubr.bf16.mxu0 0
        %2991 = vmatmul.mubr.bf16.gmra.mrb[0].mxu0 %v2667
        %v2992 = vpop.f32.mrb[0].mxu0
        %v2993 = vadd.f32 %v2716, %v2992
        %v2994 = vpop.f32.mrb[0].mxu0
        %v2995 = vadd.f32 %v2720, %v2994
        %v2996 = vpop.f32.mrb[0].mxu0
        %v2997 = vadd.f32 %v2716, %v2996
        %v2998 = vpop.f32.mrb[0].mxu0
        %v2999 = vadd.f32 %v2720, %v2998
        %3000 = vmatprep.mubr.bf16.mxu0 0
        %3001 = vmatmul.mubr.bf16.gmra.mrb[0].mxu0 %v2668
        %v3002 = vpop.f32.mrb[0].mxu0
        %v3003 = vadd.f32 %v2716, %v3002
        %v3004 = vpop.f32.mrb[0].mxu0
        %v3005 = vadd.f32 %v2720, %v3004
        %v3006 = vpop.f32.mrb[0].mxu0
        %v3007 = vadd.f32 %v2716, %v3006
        %v3008 = vpop.f32.mrb[0].mxu0
        %v3009 = vadd.f32 %v2720, %v3008
        %3010 = vmatprep.mubr.bf16.mxu0 0
        %3011 = vmatmul.mubr.bf16.gmra.mrb[0].mxu0 %v2669
        %v3012 = vpop.f32.mrb[0].mxu0
        %v3013 = vadd.f32 %v2716, %v3012
        %v3014 = vpop.f32.mrb[0].mxu0
        %v3015 = vadd.f32 %v2720, %v3014
        %v3016 = vpop.f32.mrb[0].mxu0
        %v3017 = vadd.f32 %v2716, %v3016
        %v3018 = vpop.f32.mrb[0].mxu0
        %v3019 = vadd.f32 %v2720, %v3018
        %3020 = vmatprep.mubr.bf16.mxu0 0
        %3021 = vmatmul.mubr.bf16.gmra.mrb[0].mxu0 %v2670
        %v3022 = vpop.f32.mrb[0].mxu0
        %v3023 = vadd.f32 %v2716, %v3022
        %v3024 = vpop.f32.mrb[0].mxu0
        %v3025 = vadd.f32 %v2720, %v3024
        %v3026 = vpop.f32.mrb[0].mxu0
        %v3027 = vadd.f32 %v2716, %v3026
        %v3028 = vpop.f32.mrb[0].mxu0
        %v3029 = vadd.f32 %v2720, %v3028
        %3030 = vdwg.mxu0
        %v3031 = vmul.f32 %v2920, 0.5
        %v3032 = vmul.f32 %v2922, 0.5
        %v3033 = vmul.f32 %v2993, 0.5
        %v3034 = vmul.f32 %v2995, 0.5
        %v3035 = vmul.f32 %v2924, 0.5
        %v3036 = vmul.f32 %v2926, 0.5
        %v3037 = vmul.f32 %v2997, 0.5
        %v3038 = vmul.f32 %v2999, 0.5
        %v3039 = vmul.f32 %v2930, 0.5
        %v3040 = vmul.f32 %v2932, 0.5
        %v3041 = vmul.f32 %v3003, 0.5
        %v3042 = vmul.f32 %v3005, 0.5
        %v3043 = vmul.f32 %v2934, 0.5
        %v3044 = vmul.f32 %v2936, 0.5
        %v3045 = vmul.f32 %v3007, 0.5
        %v3046 = vmul.f32 %v3009, 0.5
        %v3047 = vmul.f32 %v2940, 0.5
        %v3048 = vmul.f32 %v2942, 0.5
        %v3049 = vmul.f32 %v3013, 0.5
        %v3050 = vmul.f32 %v3015, 0.5
        %v3051 = vmul.f32 %v2944, 0.5
        %v3052 = vmul.f32 %v2946, 0.5
        %v3053 = vmul.f32 %v3017, 0.5
        %v3054 = vmul.f32 %v3019, 0.5
        %v3055 = vmul.f32 %v2950, 0.5
        %v3056 = vmul.f32 %v2952, 0.5
        %v3057 = vmul.f32 %v3023, 0.5
        %v3058 = vmul.f32 %v3025, 0.5
        %v3059 = vmul.f32 %v2954, 0.5
        %v3060 = vmul.f32 %v2956, 0.5
        %v3061 = vmul.f32 %v3027, 0.5
        %v3062 = vmul.f32 %v3029, 0.5
        %v3063 = vmul.f32 %v2920, 0.70710677
        %v3064 = vmul.f32 %v2922, 0.70710677
        %v3065 = vmul.f32 %v2993, 0.70710677
        %v3066 = vmul.f32 %v2995, 0.70710677
        %v3067 = vmul.f32 %v2924, 0.70710677
        %v3068 = vmul.f32 %v2926, 0.70710677
        %v3069 = vmul.f32 %v2997, 0.70710677
        %v3070 = vmul.f32 %v2999, 0.70710677
        %v3071 = vmul.f32 %v2930, 0.70710677
        %v3072 = vmul.f32 %v2932, 0.70710677
        %v3073 = vmul.f32 %v3003, 0.70710677
        %v3074 = vmul.f32 %v3005, 0.70710677
        %v3075 = vmul.f32 %v2934, 0.70710677
        %v3076 = vmul.f32 %v2936, 0.70710677
        %v3077 = vmul.f32 %v3007, 0.70710677
        %v3078 = vmul.f32 %v3009, 0.70710677
        %v3079 = vmul.f32 %v2940, 0.70710677
        %v3080 = vmul.f32 %v2942, 0.70710677
        %v3081 = vmul.f32 %v3013, 0.70710677
        %v3082 = vmul.f32 %v3015, 0.70710677
        %v3083 = vmul.f32 %v2944, 0.70710677
        %v3084 = vmul.f32 %v2946, 0.70710677
        %v3085 = vmul.f32 %v3017, 0.70710677
        %v3086 = vmul.f32 %v3019, 0.70710677
        %v3087 = vmul.f32 %v2950, 0.70710677
        %v3088 = vmul.f32 %v2952, 0.70710677
        %v3089 = vmul.f32 %v3023, 0.70710677
        %v3090 = vmul.f32 %v3025, 0.70710677
        %v3091 = vmul.f32 %v2954, 0.70710677
        %v3092 = vmul.f32 %v2956, 0.70710677
        %v3093 = vmul.f32 %v3027, 0.70710677
        %v3094 = vmul.f32 %v3029, 0.70710677
        %v3095 = verf.f32.pop %v3063
        %v3096 = verf.f32.pop %v3064
        %v3097 = verf.f32.pop %v3065
        %v3098 = verf.f32.pop %v3066
        %v3099 = verf.f32.pop %v3067
        %v3100 = verf.f32.pop %v3068
        %v3101 = verf.f32.pop %v3069
        %v3102 = verf.f32.pop %v3070
        %v3103 = verf.f32.pop %v3071
        %v3104 = verf.f32.pop %v3072
        %v3105 = verf.f32.pop %v3073
        %v3106 = verf.f32.pop %v3074
        %v3107 = verf.f32.pop %v3075
        %v3108 = verf.f32.pop %v3076
        %v3109 = verf.f32.pop %v3077
        %v3110 = verf.f32.pop %v3078
        %v3111 = verf.f32.pop %v3079
        %v3112 = verf.f32.pop %v3080
        %v3113 = verf.f32.pop %v3081
        %v3114 = verf.f32.pop %v3082
        %v3115 = verf.f32.pop %v3083
        %v3116 = verf.f32.pop %v3084
        %v3117 = verf.f32.pop %v3085
        %v3118 = verf.f32.pop %v3086
        %v3119 = verf.f32.pop %v3087
        %v3120 = verf.f32.pop %v3088
        %v3121 = verf.f32.pop %v3089
        %v3122 = verf.f32.pop %v3090
        %v3123 = verf.f32.pop %v3091
        %v3124 = verf.f32.pop %v3092
        %v3125 = verf.f32.pop %v3093
        %v3126 = verf.f32.pop %v3094
        %v3127 = vadd.f32 %v3095, 1.0
        %v3128 = vadd.f32 %v3096, 1.0
        %v3129 = vadd.f32 %v3097, 1.0
        %v3130 = vadd.f32 %v3098, 1.0
        %v3131 = vadd.f32 %v3099, 1.0
        %v3132 = vadd.f32 %v3100, 1.0
        %v3133 = vadd.f32 %v3101, 1.0
        %v3134 = vadd.f32 %v3102, 1.0
        %v3135 = vadd.f32 %v3103, 1.0
        %v3136 = vadd.f32 %v3104, 1.0
        %v3137 = vadd.f32 %v3105, 1.0
        %v3138 = vadd.f32 %v3106, 1.0
        %v3139 = vadd.f32 %v3107, 1.0
        %v3140 = vadd.f32 %v3108, 1.0
        %v3141 = vadd.f32 %v3109, 1.0
        %v3142 = vadd.f32 %v3110, 1.0
        %v3143 = vadd.f32 %v3111, 1.0
        %v3144 = vadd.f32 %v3112, 1.0
        %v3145 = vadd.f32 %v3113, 1.0
        %v3146 = vadd.f32 %v3114, 1.0
        %v3147 = vadd.f32 %v3115, 1.0
        %v3148 = vadd.f32 %v3116, 1.0
        %v3149 = vadd.f32 %v3117, 1.0
        %v3150 = vadd.f32 %v3118, 1.0
        %v3151 = vadd.f32 %v3119, 1.0
        %v3152 = vadd.f32 %v3120, 1.0
        %v3153 = vadd.f32 %v3121, 1.0
        %v3154 = vadd.f32 %v3122, 1.0
        %v3155 = vadd.f32 %v3123, 1.0
        %v3156 = vadd.f32 %v3124, 1.0
        %v3157 = vadd.f32 %v3125, 1.0
        %v3158 = vadd.f32 %v3126, 1.0
        %v3159 = vmul.f32 %v3031, %v3127
        %v3160 = vmul.f32 %v3032, %v3128
        %v3161 = vmul.f32 %v3033, %v3129
        %v3162 = vmul.f32 %v3034, %v3130
        %v3163 = vmul.f32 %v3035, %v3131
        %v3164 = vmul.f32 %v3036, %v3132
        %v3165 = vmul.f32 %v3037, %v3133
        %v3166 = vmul.f32 %v3038, %v3134
        %v3167 = vmul.f32 %v3039, %v3135
        %v3168 = vmul.f32 %v3040, %v3136
        %v3169 = vmul.f32 %v3041, %v3137
        %v3170 = vmul.f32 %v3042, %v3138
        %v3171 = vmul.f32 %v3043, %v3139
        %v3172 = vmul.f32 %v3044, %v3140
        %v3173 = vmul.f32 %v3045, %v3141
        %v3174 = vmul.f32 %v3046, %v3142
        %v3175 = vmul.f32 %v3047, %v3143
        %v3176 = vmul.f32 %v3048, %v3144
        %v3177 = vmul.f32 %v3049, %v3145
        %v3178 = vmul.f32 %v3050, %v3146
        %v3179 = vmul.f32 %v3051, %v3147
        %v3180 = vmul.f32 %v3052, %v3148
        %v3181 = vmul.f32 %v3053, %v3149
        %v3182 = vmul.f32 %v3054, %v3150
        %v3183 = vmul.f32 %v3055, %v3151
        %v3184 = vmul.f32 %v3056, %v3152
        %v3185 = vmul.f32 %v3057, %v3153
        %v3186 = vmul.f32 %v3058, %v3154
        %v3187 = vmul.f32 %v3059, %v3155
        %v3188 = vmul.f32 %v3060, %v3156
        %v3189 = vmul.f32 %v3061, %v3157
        %v3190 = vmul.f32 %v3062, %v3158
        %v3191 = vpack.c.bf16 %v3163, %v3159
        %v3192 = vpack.c.bf16 %v3164, %v3160
        %v3193 = vpack.c.bf16 %v3165, %v3161
        %v3194 = vpack.c.bf16 %v3166, %v3162
        %v3195 = vpack.c.bf16 %v3171, %v3167
        %v3196 = vpack.c.bf16 %v3172, %v3168
        %v3197 = vpack.c.bf16 %v3173, %v3169
        %v3198 = vpack.c.bf16 %v3174, %v3170
        %v3199 = vpack.c.bf16 %v3179, %v3175
        %v3200 = vpack.c.bf16 %v3180, %v3176
        %v3201 = vpack.c.bf16 %v3181, %v3177
        %v3202 = vpack.c.bf16 %v3182, %v3178
        %v3203 = vpack.c.bf16 %v3187, %v3183
        %v3204 = vpack.c.bf16 %v3188, %v3184
        %v3205 = vpack.c.bf16 %v3189, %v3185
        %v3206 = vpack.c.bf16 %v3190, %v3186
        %v3207 = vld [vmem:[%s13] sm:$0xf]
        %v3208 = vld [vmem:[%s13 + $0x4] sm:$0xf]
        %v3209 = vld [vmem:[%s13 + $0x8] sm:$0xf]
        %v3210 = vld [vmem:[%s13 + $0xc] sm:$0xf]
        %v3211 = vld [vmem:[%s13 + $0x10] sm:$0xf]
        %v3212 = vld [vmem:[%s13 + $0x14] sm:$0xf]
        %v3213 = vld [vmem:[%s13 + $0x18] sm:$0xf]
        %v3214 = vld [vmem:[%s13 + $0x1c] sm:$0xf]
        %v3215 = vld [vmem:[%s13 + $0x20] sm:$0xf]
        %v3216 = vld [vmem:[%s13 + $0x24] sm:$0xf]
        %v3217 = vld [vmem:[%s13 + $0x28] sm:$0xf]
        %v3218 = vld [vmem:[%s13 + $0x2c] sm:$0xf]
        %v3219 = vld [vmem:[%s13 + $0x30] sm:$0xf]
        %v3220 = vld [vmem:[%s13 + $0x34] sm:$0xf]
        %v3221 = vld [vmem:[%s13 + $0x38] sm:$0xf]
        %v3222 = vld [vmem:[%s13 + $0x3c] sm:$0xf]
        %v3223 = vld [vmem:[%s13 + $0x40] sm:$0xf]
        %v3224 = vld [vmem:[%s13 + $0x44] sm:$0xf]
        %v3225 = vld [vmem:[%s13 + $0x48] sm:$0xf]
        %v3226 = vld [vmem:[%s13 + $0x4c] sm:$0xf]
        %v3227 = vld [vmem:[%s13 + $0x50] sm:$0xf]
        %v3228 = vld [vmem:[%s13 + $0x54] sm:$0xf]
        %v3229 = vld [vmem:[%s13 + $0x58] sm:$0xf]
        %v3230 = vld [vmem:[%s13 + $0x5c] sm:$0xf]
        %v3231 = vld [vmem:[%s13 + $0x60] sm:$0xf]
        %v3232 = vld [vmem:[%s13 + $0x64] sm:$0xf]
        %v3233 = vld [vmem:[%s13 + $0x68] sm:$0xf]
        %v3234 = vld [vmem:[%s13 + $0x6c] sm:$0xf]
        %v3235 = vld [vmem:[%s13 + $0x70] sm:$0xf]
        %v3236 = vld [vmem:[%s13 + $0x74] sm:$0xf]
        %v3237 = vld [vmem:[%s13 + $0x78] sm:$0xf]
        %v3238 = vld [vmem:[%s13 + $0x7c] sm:$0xf]
        %v3239 = vld [vmem:[%s13 + $0x80] sm:$0xf]
        %v3240 = vld [vmem:[%s13 + $0x84] sm:$0xf]
        %v3241 = vld [vmem:[%s13 + $0x88] sm:$0xf]
        %v3242 = vld [vmem:[%s13 + $0x8c] sm:$0xf]
        %v3243 = vld [vmem:[%s13 + $0x90] sm:$0xf]
        %v3244 = vld [vmem:[%s13 + $0x94] sm:$0xf]
        %v3245 = vld [vmem:[%s13 + $0x98] sm:$0xf]
        %v3246 = vld [vmem:[%s13 + $0x9c] sm:$0xf]
        %v3247 = vld [vmem:[%s13 + $0xa0] sm:$0xf]
        %v3248 = vld [vmem:[%s13 + $0xa4] sm:$0xf]
        %v3249 = vld [vmem:[%s13 + $0xa8] sm:$0xf]
        %v3250 = vld [vmem:[%s13 + $0xac] sm:$0xf]
        %v3251 = vld [vmem:[%s13 + $0xb0] sm:$0xf]
        %v3252 = vld [vmem:[%s13 + $0xb4] sm:$0xf]
        %v3253 = vld [vmem:[%s13 + $0xb8] sm:$0xf]
        %v3254 = vld [vmem:[%s13 + $0xbc] sm:$0xf]
        %v3255 = vld [vmem:[%s13 + $0xc0] sm:$0xf]
        %v3256 = vld [vmem:[%s13 + $0xc4] sm:$0xf]
        %v3257 = vld [vmem:[%s13 + $0xc8] sm:$0xf]
        %v3258 = vld [vmem:[%s13 + $0xcc] sm:$0xf]
        %v3259 = vld [vmem:[%s13 + $0xd0] sm:$0xf]
        %v3260 = vld [vmem:[%s13 + $0xd4] sm:$0xf]
        %v3261 = vld [vmem:[%s13 + $0xd8] sm:$0xf]
        %v3262 = vld [vmem:[%s13 + $0xdc] sm:$0xf]
        %v3263 = vld [vmem:[%s13 + $0xe0] sm:$0xf]
        %v3264 = vld [vmem:[%s13 + $0xe4] sm:$0xf]
        %v3265 = vld [vmem:[%s13 + $0xe8] sm:$0xf]
        %v3266 = vld [vmem:[%s13 + $0xec] sm:$0xf]
        %v3267 = vld [vmem:[%s13 + $0xf0] sm:$0xf]
        %v3268 = vld [vmem:[%s13 + $0xf4] sm:$0xf]
        %v3269 = vld [vmem:[%s13 + $0xf8] sm:$0xf]
        %v3270 = vld [vmem:[%s13 + $0xfc] sm:$0xf]
        %v3271 = vld [vmem:[%s14] sm:$0x1]
        %v3273 = vlaneseq
        %v3274 = vshrl.u32 %v3273, 7
        %v3275 = vsub.s32 0, %v3274
        %v3276 = vrot.slane %v3271, %v3275
        %v3342 = vunpack.c.l.b16 %v3207
        %v3343 = vunpack.c.l.b16 %v3208
        %v3344 = vunpack.c.l.b16 %v3209
        %v3345 = vunpack.c.l.b16 %v3210
        %v3346 = vunpack.c.l.b16 %v3211
        %v3347 = vunpack.c.l.b16 %v3212
        %v3348 = vunpack.c.l.b16 %v3213
        %v3349 = vunpack.c.l.b16 %v3214
        %v3350 = vunpack.c.l.b16 %v3215
        %v3351 = vunpack.c.l.b16 %v3216
        %v3352 = vunpack.c.l.b16 %v3217
        %v3353 = vunpack.c.l.b16 %v3218
        %v3354 = vunpack.c.l.b16 %v3219
        %v3355 = vunpack.c.l.b16 %v3220
        %v3356 = vunpack.c.l.b16 %v3221
        %v3357 = vunpack.c.l.b16 %v3222
        %v3358 = vunpack.c.l.b16 %v3223
        %v3359 = vunpack.c.l.b16 %v3224
        %v3360 = vunpack.c.l.b16 %v3225
        %v3361 = vunpack.c.l.b16 %v3226
        %v3362 = vunpack.c.l.b16 %v3227
        %v3363 = vunpack.c.l.b16 %v3228
        %v3364 = vunpack.c.l.b16 %v3229
        %v3365 = vunpack.c.l.b16 %v3230
        %v3366 = vunpack.c.l.b16 %v3231
        %v3367 = vunpack.c.l.b16 %v3232
        %v3368 = vunpack.c.l.b16 %v3233
        %v3369 = vunpack.c.l.b16 %v3234
        %v3370 = vunpack.c.l.b16 %v3235
        %v3371 = vunpack.c.l.b16 %v3236
        %v3372 = vunpack.c.l.b16 %v3237
        %v3373 = vunpack.c.l.b16 %v3238
        %v3374 = vunpack.c.l.b16 %v3239
        %v3375 = vunpack.c.l.b16 %v3240
        %v3376 = vunpack.c.l.b16 %v3241
        %v3377 = vunpack.c.l.b16 %v3242
        %v3378 = vunpack.c.l.b16 %v3243
        %v3379 = vunpack.c.l.b16 %v3244
        %v3380 = vunpack.c.l.b16 %v3245
        %v3381 = vunpack.c.l.b16 %v3246
        %v3382 = vunpack.c.l.b16 %v3247
        %v3383 = vunpack.c.l.b16 %v3248
        %v3384 = vunpack.c.l.b16 %v3249
        %v3385 = vunpack.c.l.b16 %v3250
        %v3386 = vunpack.c.l.b16 %v3251
        %v3387 = vunpack.c.l.b16 %v3252
        %v3388 = vunpack.c.l.b16 %v3253
        %v3389 = vunpack.c.l.b16 %v3254
        %v3390 = vunpack.c.l.b16 %v3255
        %v3391 = vunpack.c.l.b16 %v3256
        %v3392 = vunpack.c.l.b16 %v3257
        %v3393 = vunpack.c.l.b16 %v3258
        %v3394 = vunpack.c.l.b16 %v3259
        %v3395 = vunpack.c.l.b16 %v3260
        %v3396 = vunpack.c.l.b16 %v3261
        %v3397 = vunpack.c.l.b16 %v3262
        %v3398 = vunpack.c.l.b16 %v3263
        %v3399 = vunpack.c.l.b16 %v3264
        %v3400 = vunpack.c.l.b16 %v3265
        %v3401 = vunpack.c.l.b16 %v3266
        %v3402 = vunpack.c.l.b16 %v3267
        %v3403 = vunpack.c.l.b16 %v3268
        %v3404 = vunpack.c.l.b16 %v3269
        %v3405 = vunpack.c.l.b16 %v3270
        %v3406 = vpack.c.b16 %v3343, %v3342
        %v3407 = vpack.c.b16 %v3345, %v3344
        %v3408 = vpack.c.b16 %v3347, %v3346
        %v3409 = vpack.c.b16 %v3349, %v3348
        %v3410 = vpack.c.b16 %v3351, %v3350
        %v3411 = vpack.c.b16 %v3353, %v3352
        %v3412 = vpack.c.b16 %v3355, %v3354
        %v3413 = vpack.c.b16 %v3357, %v3356
        %v3414 = vpack.c.b16 %v3359, %v3358
        %v3415 = vpack.c.b16 %v3361, %v3360
        %v3416 = vpack.c.b16 %v3363, %v3362
        %v3417 = vpack.c.b16 %v3365, %v3364
        %v3418 = vpack.c.b16 %v3367, %v3366
        %v3419 = vpack.c.b16 %v3369, %v3368
        %v3420 = vpack.c.b16 %v3371, %v3370
        %v3421 = vpack.c.b16 %v3373, %v3372
        %v3422 = vpack.c.b16 %v3375, %v3374
        %v3423 = vpack.c.b16 %v3377, %v3376
        %v3424 = vpack.c.b16 %v3379, %v3378
        %v3425 = vpack.c.b16 %v3381, %v3380
        %v3426 = vpack.c.b16 %v3383, %v3382
        %v3427 = vpack.c.b16 %v3385, %v3384
        %v3428 = vpack.c.b16 %v3387, %v3386
        %v3429 = vpack.c.b16 %v3389, %v3388
        %v3430 = vpack.c.b16 %v3391, %v3390
        %v3431 = vpack.c.b16 %v3393, %v3392
        %v3432 = vpack.c.b16 %v3395, %v3394
        %v3433 = vpack.c.b16 %v3397, %v3396
        %v3434 = vpack.c.b16 %v3399, %v3398
        %v3435 = vpack.c.b16 %v3401, %v3400
        %v3436 = vpack.c.b16 %v3403, %v3402
        %v3437 = vpack.c.b16 %v3405, %v3404
        %3470 = vmatprep.subr.bf16.mxu0 0
        %3471 = vmatpush1.bf16.msra.mxu0 %v3406
        %3472 = vmatprep.subr.bf16.mxu0 0
        %3473 = vmatpush1.bf16.msra.mxu0 %v3407
        %3474 = vmatprep.subr.bf16.mxu0 0
        %3475 = vmatpush1.bf16.msra.mxu0 %v3408
        %3476 = vmatprep.subr.bf16.mxu0 0
        %3477 = vmatpush1.bf16.msra.mxu0 %v3409
        %3478 = vmatprep.subr.bf16.mxu0 0
        %3479 = vmatpush1.bf16.msra.mxu0 %v3410
        %3480 = vmatprep.subr.bf16.mxu0 0
        %3481 = vmatpush1.bf16.msra.mxu0 %v3411
        %3482 = vmatprep.subr.bf16.mxu0 0
        %3483 = vmatpush1.bf16.msra.mxu0 %v3412
        %3484 = vmatprep.subr.bf16.mxu0 0
        %3485 = vmatpush1.bf16.msra.mxu0 %v3413
        %3486 = vmatprep.subr.bf16.mxu0 0
        %3487 = vmatpush1.bf16.msra.mxu0 %v3414
        %3488 = vmatprep.subr.bf16.mxu0 0
        %3489 = vmatpush1.bf16.msra.mxu0 %v3415
        %3490 = vmatprep.subr.bf16.mxu0 0
        %3491 = vmatpush1.bf16.msra.mxu0 %v3416
        %3492 = vmatprep.subr.bf16.mxu0 0
        %3493 = vmatpush1.bf16.msra.mxu0 %v3417
        %3494 = vmatprep.subr.bf16.mxu0 0
        %3495 = vmatpush1.bf16.msra.mxu0 %v3418
        %3496 = vmatprep.subr.bf16.mxu0 0
        %3497 = vmatpush1.bf16.msra.mxu0 %v3419
        %3498 = vmatprep.subr.bf16.mxu0 0
        %3499 = vmatpush1.bf16.msra.mxu0 %v3420
        %3500 = vmatprep.subr.bf16.mxu0 0
        %3501 = vmatpush1.bf16.msra.mxu0 %v3421
        %3502 = vmatprep.mubr.bf16.mxu0 %v3192
        %3503 = vmatmul.mubr.bf16.gmra.mrb[0].mxu0 %v3191
        %v3504 = vpop.f32.mrb[0].mxu0
        %v3505 = vadd.f32 %v3276, %v3504
        %v3506 = vpop.f32.mrb[0].mxu0
        %v3507 = vpop.f32.mrb[0].mxu0
        %v3508 = vadd.f32 %v3276, %v3507
        %v3509 = vpop.f32.mrb[0].mxu0
        %3510 = vmatprep.mubr.bf16.mxu0 %v3196
        %3511 = vmatmul.mubr.bf16.gmra.mrb[0].mxu0 %v3195
        %v3512 = vpop.f32.mrb[0].mxu0
        %v3513 = vadd.f32 %v3276, %v3512
        %v3514 = vpop.f32.mrb[0].mxu0
        %v3515 = vpop.f32.mrb[0].mxu0
        %v3516 = vadd.f32 %v3276, %v3515
        %v3517 = vpop.f32.mrb[0].mxu0
        %3518 = vmatprep.mubr.bf16.mxu0 %v3200
        %3519 = vmatmul.mubr.bf16.gmra.mrb[0].mxu0 %v3199
        %v3520 = vpop.f32.mrb[0].mxu0
        %v3521 = vadd.f32 %v3276, %v3520
        %v3522 = vpop.f32.mrb[0].mxu0
        %v3523 = vpop.f32.mrb[0].mxu0
        %v3524 = vadd.f32 %v3276, %v3523
        %v3525 = vpop.f32.mrb[0].mxu0
        %3526 = vmatprep.mubr.bf16.mxu0 %v3204
        %3527 = vmatmul.mubr.bf16.gmra.mrb[0].mxu0 %v3203
        %v3528 = vpop.f32.mrb[0].mxu0
        %v3529 = vadd.f32 %v3276, %v3528
        %v3530 = vpop.f32.mrb[0].mxu0
        %v3531 = vpop.f32.mrb[0].mxu0
        %v3532 = vadd.f32 %v3276, %v3531
        %v3533 = vpop.f32.mrb[0].mxu0
        %3534 = vdwg.mxu0
        %3535 = vmatprep.subr.bf16.mxu0 0
        %3536 = vmatpush1.bf16.msra.mxu0 %v3422
        %3537 = vmatprep.subr.bf16.mxu0 0
        %3538 = vmatpush1.bf16.msra.mxu0 %v3423
        %3539 = vmatprep.subr.bf16.mxu0 0
        %3540 = vmatpush1.bf16.msra.mxu0 %v3424
        %3541 = vmatprep.subr.bf16.mxu0 0
        %3542 = vmatpush1.bf16.msra.mxu0 %v3425
        %3543 = vmatprep.subr.bf16.mxu0 0
        %3544 = vmatpush1.bf16.msra.mxu0 %v3426
        %3545 = vmatprep.subr.bf16.mxu0 0
        %3546 = vmatpush1.bf16.msra.mxu0 %v3427
        %3547 = vmatprep.subr.bf16.mxu0 0
        %3548 = vmatpush1.bf16.msra.mxu0 %v3428
        %3549 = vmatprep.subr.bf16.mxu0 0
        %3550 = vmatpush1.bf16.msra.mxu0 %v3429
        %3551 = vmatprep.subr.bf16.mxu0 0
        %3552 = vmatpush1.bf16.msra.mxu0 %v3430
        %3553 = vmatprep.subr.bf16.mxu0 0
        %3554 = vmatpush1.bf16.msra.mxu0 %v3431
        %3555 = vmatprep.subr.bf16.mxu0 0
        %3556 = vmatpush1.bf16.msra.mxu0 %v3432
        %3557 = vmatprep.subr.bf16.mxu0 0
        %3558 = vmatpush1.bf16.msra.mxu0 %v3433
        %3559 = vmatprep.subr.bf16.mxu0 0
        %3560 = vmatpush1.bf16.msra.mxu0 %v3434
        %3561 = vmatprep.subr.bf16.mxu0 0
        %3562 = vmatpush1.bf16.msra.mxu0 %v3435
        %3563 = vmatprep.subr.bf16.mxu0 0
        %3564 = vmatpush1.bf16.msra.mxu0 %v3436
        %3565 = vmatprep.subr.bf16.mxu0 0
        %3566 = vmatpush1.bf16.msra.mxu0 %v3437
        %3567 = vmatprep.mubr.bf16.mxu0 %v3194
        %3568 = vmatmul.mubr.bf16.gmra.mrb[0].mxu0 %v3193
        %v3569 = vpop.f32.mrb[0].mxu0
        %v3570 = vadd.f32 %v3505, %v3569
        %v3571 = vpop.f32.mrb[0].mxu0
        %v3572 = vpop.f32.mrb[0].mxu0
        %v3573 = vadd.f32 %v3508, %v3572
        %v3574 = vpop.f32.mrb[0].mxu0
        %3575 = vmatprep.mubr.bf16.mxu0 %v3198
        %3576 = vmatmul.mubr.bf16.gmra.mrb[0].mxu0 %v3197
        %v3577 = vpop.f32.mrb[0].mxu0
        %v3578 = vadd.f32 %v3513, %v3577
        %v3579 = vpop.f32.mrb[0].mxu0
        %v3580 = vpop.f32.mrb[0].mxu0
        %v3581 = vadd.f32 %v3516, %v3580
        %v3582 = vpop.f32.mrb[0].mxu0
        %3583 = vmatprep.mubr.bf16.mxu0 %v3202
        %3584 = vmatmul.mubr.bf16.gmra.mrb[0].mxu0 %v3201
        %v3585 = vpop.f32.mrb[0].mxu0
        %v3586 = vadd.f32 %v3521, %v3585
        %v3587 = vpop.f32.mrb[0].mxu0
        %v3588 = vpop.f32.mrb[0].mxu0
        %v3589 = vadd.f32 %v3524, %v3588
        %v3590 = vpop.f32.mrb[0].mxu0
        %3591 = vmatprep.mubr.bf16.mxu0 %v3206
        %3592 = vmatmul.mubr.bf16.gmra.mrb[0].mxu0 %v3205
        %v3593 = vpop.f32.mrb[0].mxu0
        %v3594 = vadd.f32 %v3529, %v3593
        %v3595 = vpop.f32.mrb[0].mxu0
        %v3596 = vpop.f32.mrb[0].mxu0
        %v3597 = vadd.f32 %v3532, %v3596
        %v3598 = vpop.f32.mrb[0].mxu0
        %3599 = vdwg.mxu0
        %v3600 = vadd.f32 %v2541, %v3570
        %v3601 = vadd.f32 %v2542, %v3573
        %v3602 = vadd.f32 %v2543, %v3578
        %v3603 = vadd.f32 %v2544, %v3581
        %v3604 = vadd.f32 %v2545, %v3586
        %v3605 = vadd.f32 %v2546, %v3589
        %v3606 = vadd.f32 %v2547, %v3594
        %v3607 = vadd.f32 %v2548, %v3597
        %3608 = vst [vmem:[%s607] sm:$0xff] %v3600
        %3609 = vst [vmem:[%s607 + $0x8] sm:$0xff] %v3601
        %3610 = vst [vmem:[%s607 + $0x10] sm:$0xff] %v3602
        %3611 = vst [vmem:[%s607 + $0x18] sm:$0xff] %v3603
        %3612 = vst [vmem:[%s607 + $0x20] sm:$0xff] %v3604
        %3613 = vst [vmem:[%s607 + $0x28] sm:$0xff] %v3605
        %3614 = vst [vmem:[%s607 + $0x30] sm:$0xff] %v3606
        %3615 = vst [vmem:[%s607 + $0x38] sm:$0xff] %v3607
        %s3616 = sand.u32 %s388, 1
        %s3617 = sand.u32 %s388, 1
        %s3618 = smul.addr %s3617, 64
        %s3619 = scalar_lea.vmem [#allocation3], %s3618
        // Predicated region
        $region119: #{swin_block_forward.3} parent=113 // pred_check
          %p3620 = pneg %p398
        $region120: #{swin_block_forward.3} parent=113 // pred_check_branch
          %3622 = sbr.rel (%p3620) target = $region122
        $region121: #{swin_block_forward.3} parent=113 // pred_region
          %s3623 = smul.u32 8, %s32
          %s3624 = smul.addr %s3623, 2
          %s3625 = sadd.s32 %s33, %s3624
          %s3626 = smul.addr %s31, 32
          %s3627 = sadd.s32 %s3625, %s3626
          %s3628 = smul.addr %s3627, 8
          %s3629 = scalar_lea.vmem %s15, %s3628
          // Predicated region
          $region123: #{swin_block_forward.3} parent=121 // pred_check
            _
          $region124: #{swin_block_forward.3} parent=121 // pred_check_branch
            %3631 = sbr.rel (0) target = $region126
          $region125: #{swin_block_forward.3} parent=121 // pred_region
            // Predicated region
            $region127: #{swin_block_forward.3} parent=125 // pred_check
              _
            $region128: #{swin_block_forward.3} parent=125 // pred_check_branch
              %3633 = sbr.rel (0) target = $region130
            $region129: #{swin_block_forward.3} parent=125 // pred_region
              // Predicated region
              $region142: #{swin_block_forward.3} parent=129 // pred_check
                _
              $region143: #{swin_block_forward.3} parent=129 // pred_check_branch
                %3662 = sbr.rel (0) target = $region145
              $region144: #{swin_block_forward.3} parent=129 // pred_region
                loop: start=0, step=1, limit=1
                $region146: #{swin_block_forward.3} parent=144 // loop_pre_header
                  _
                $region147: #{swin_block_forward.3} parent=144 // loop_header
                  %s3664 = sphi 0, %s3668
                  %p3665 = scmp.ge.s32.totalorder %s3664, 1
                  %s3669 = sphi %s3619, %s3619
                  %s3670 = sphi %s3629, %s3629
                $region148: #{swin_block_forward.3} parent=144 // loop_header_branch
                  %3667 = sbr.rel (%p3665) target = $region152
                $region149: #{swin_block_forward.3} parent=144 // loop_body
                  %v3671 = vld [vmem:[%s3669] sm:$0xff]
                  %3672 = vst [vmem:[%s3670] sm:$0xff] %v3671
                  %v3673 = vld [vmem:[%s3669 + $0x8] sm:$0xff]
                  %3674 = vst [vmem:[%s3670 + $0x10] sm:$0xff] %v3673
                  %v3675 = vld [vmem:[%s3669 + $0x10] sm:$0xff]
                  %3676 = vst [vmem:[%s3670 + $0x20] sm:$0xff] %v3675
                  %v3677 = vld [vmem:[%s3669 + $0x18] sm:$0xff]
                  %3678 = vst [vmem:[%s3670 + $0x30] sm:$0xff] %v3677
                  %v3679 = vld [vmem:[%s3669 + $0x20] sm:$0xff]
                  %3680 = vst [vmem:[%s3670 + $0x40] sm:$0xff] %v3679
                  %v3681 = vld [vmem:[%s3669 + $0x28] sm:$0xff]
                  %3682 = vst [vmem:[%s3670 + $0x50] sm:$0xff] %v3681
                  %v3683 = vld [vmem:[%s3669 + $0x30] sm:$0xff]
                  %3684 = vst [vmem:[%s3670 + $0x60] sm:$0xff] %v3683
                  %v3685 = vld [vmem:[%s3669 + $0x38] sm:$0xff]
                  %3686 = vst [vmem:[%s3670 + $0x70] sm:$0xff] %v3685
                $region150: #{swin_block_forward.3} parent=144 // loop_footer
                  %s3668 = sadd.s32 1, %s3664
                $region151: #{swin_block_forward.3} parent=144 // loop_footer_branch
                  %3663 = sbr.rel target = $region147
                $region152: #{swin_block_forward.3} parent=144 // loop_exit
                  _
              $region145: #{swin_block_forward.3} parent=129 // pred_fallthru
                _
              // Predicated region
              $region153: #{swin_block_forward.3} parent=129 // pred_check
                _
              $region154: #{swin_block_forward.3} parent=129 // pred_check_branch
                %3688 = sbr.rel target = $region156
              $region155: #{swin_block_forward.3} parent=129 // pred_region
                _
              $region156: #{swin_block_forward.3} parent=129 // pred_fallthru
                _
            $region130: #{swin_block_forward.3} parent=125 // pred_fallthru
              _
            // Predicated region
            $region131: #{swin_block_forward.3} parent=125 // pred_check
              _
            $region132: #{swin_block_forward.3} parent=125 // pred_check_branch
              %3635 = sbr.rel target = $region134
            $region133: #{swin_block_forward.3} parent=125 // pred_region
              loop: start=0, step=1, limit=1
              $region135: #{swin_block_forward.3} parent=133 // loop_pre_header
                _
              $region136: #{swin_block_forward.3} parent=133 // loop_header
                %s3638 = sphi 0, %s3642
                %p3639 = scmp.ge.s32.totalorder %s3638, 1
                %s3643 = sphi %s3619, %s3619
                %s3644 = sphi %s3629, %s3629
              $region137: #{swin_block_forward.3} parent=133 // loop_header_branch
                %3641 = sbr.rel (%p3639) target = $region141
              $region138: #{swin_block_forward.3} parent=133 // loop_body
                %v3645 = vld [vmem:[%s3643] sm:$0xff]
                %3646 = vst [vmem:[%s3644] sm:$0xff] %v3645
                %v3647 = vld [vmem:[%s3643 + $0x8] sm:$0xff]
                %3648 = vst [vmem:[%s3644 + $0x10] sm:$0xff] %v3647
                %v3649 = vld [vmem:[%s3643 + $0x10] sm:$0xff]
                %3650 = vst [vmem:[%s3644 + $0x20] sm:$0xff] %v3649
                %v3651 = vld [vmem:[%s3643 + $0x18] sm:$0xff]
                %3652 = vst [vmem:[%s3644 + $0x30] sm:$0xff] %v3651
                %v3653 = vld [vmem:[%s3643 + $0x20] sm:$0xff]
                %3654 = vst [vmem:[%s3644 + $0x40] sm:$0xff] %v3653
                %v3655 = vld [vmem:[%s3643 + $0x28] sm:$0xff]
                %3656 = vst [vmem:[%s3644 + $0x50] sm:$0xff] %v3655
                %v3657 = vld [vmem:[%s3643 + $0x30] sm:$0xff]
                %3658 = vst [vmem:[%s3644 + $0x60] sm:$0xff] %v3657
                %v3659 = vld [vmem:[%s3643 + $0x38] sm:$0xff]
                %3660 = vst [vmem:[%s3644 + $0x70] sm:$0xff] %v3659
              $region139: #{swin_block_forward.3} parent=133 // loop_footer
                %s3642 = sadd.s32 1, %s3638
              $region140: #{swin_block_forward.3} parent=133 // loop_footer_branch
                %3637 = sbr.rel target = $region136
              $region141: #{swin_block_forward.3} parent=133 // loop_exit
                _
            $region134: #{swin_block_forward.3} parent=125 // pred_fallthru
              _
          $region126: #{swin_block_forward.3} parent=121 // pred_fallthru
            _
          %3689 = vnop
        $region122: #{swin_block_forward.3} parent=113 // pred_fallthru
          _
      $region114: #{swin_block_forward.3} parent=5 // pred_fallthru
        _
      %p3690 = scmp.le.s32.totalorder 2, %s21
      // Predicated region
      $region157: #{swin_block_forward.3} parent=5 // pred_check
        %p3691 = pneg %p3690
      $region158: #{swin_block_forward.3} parent=5 // pred_check_branch
        %3693 = sbr.rel (%p3691) target = $region160
      $region159: #{swin_block_forward.3} parent=5 // pred_region
        %s3694 = ssub.s32 %s21, 2
        // Predicated region
        $region161: #{swin_block_forward.3} parent=159 // pred_check
          %p3695 = pneg %p404
        $region162: #{swin_block_forward.3} parent=159 // pred_check_branch
          %3697 = sbr.rel (%p3695) target = $region164
        $region163: #{swin_block_forward.3} parent=159 // pred_region
          %s3698 = sand.u32 %s389, 1
          %s3699 = sand.u32 %s389, 1
          %s3700 = smul.addr %s3699, 64
          %s3701 = scalar_lea.vmem [#allocation3], %s3700
        $region164: #{swin_block_forward.3} parent=159 // pred_fallthru
          _
      $region160: #{swin_block_forward.3} parent=5 // pred_fallthru
        _
    $region6: #{swin_block_forward.3} parent=1 // loop_footer
      %s25 = sadd.s32 1, %s21
    $region7: #{swin_block_forward.3} parent=1 // loop_footer_branch
      %20 = sbr.rel target = $region3
    $region8: #{swin_block_forward.3} parent=1 // loop_exit
      _

// kernel: swin_block_forward.2
$region0: #{swin_block_forward.2}
  #allocation0 [shape = 'u32[]', space=smem, size = 0x4, offset = 0x4, fixed_abs, tag = 'smem constant byte address 0x4 - core index']
  #allocation1 [shape = 'u32[144,128]{1,0:T(1,128)}', space=vmem, size = 0x12000, scoped, tag = 'internal scratch']
  %s0 = inlined_call_operand.hbm [shape: f32[2,16,16,128], index: 0, kind: input, shape index: {}]
  %s1 = inlined_call_operand.hbm [shape: f32[1,1,64,64], index: 1, kind: input, shape index: {}]
  %s2 = inlined_call_operand.hbm [shape: f32[4,64,64], index: 2, kind: input, shape index: {}]
  %s3 = inlined_call_operand.vmem [shape: f32[1,128], index: 3, kind: input, shape index: {}]
  %s4 = inlined_call_operand.vmem [shape: f32[1,128], index: 4, kind: input, shape index: {}]
  %s5 = inlined_call_operand.hbm [shape: bf16[128,384], index: 5, kind: input, shape index: {}]
  %s6 = inlined_call_operand.vmem [shape: f32[1,384], index: 6, kind: input, shape index: {}]
  %s7 = inlined_call_operand.hbm [shape: bf16[128,128], index: 7, kind: input, shape index: {}]
  %s8 = inlined_call_operand.vmem [shape: f32[1,128], index: 8, kind: input, shape index: {}]
  %s9 = inlined_call_operand.vmem [shape: f32[1,128], index: 9, kind: input, shape index: {}]
  %s10 = inlined_call_operand.vmem [shape: f32[1,128], index: 10, kind: input, shape index: {}]
  %s11 = inlined_call_operand.hbm [shape: bf16[128,512], index: 11, kind: input, shape index: {}]
  %s12 = inlined_call_operand.vmem [shape: f32[1,512], index: 12, kind: input, shape index: {}]
  %s13 = inlined_call_operand.hbm [shape: bf16[512,128], index: 13, kind: input, shape index: {}]
  %s14 = inlined_call_operand.hbm [shape: f32[1,128], index: 14, kind: input, shape index: {}]
  %s15 = inlined_call_operand.vmem [shape: f32[2,16,16,128], index: 15, kind: output, shape index: {}]
  %s16 = sld [smem:[#allocation0]]
  $region159: #{swin_block_forward.2} parent=0
    _
  %s18 = ssub.s32 1, %s16
  %s19 = scalar_select 0, %s18, %s16
  $region1: #{swin_block_forward.2} parent=0
    #allocation2 [shape = 'u8[65536]{0}', space=vmem, size = 0x10000, scoped, tag = 'input window, operand 0']
    #allocation3 [shape = 's32[2]{0}', space=sflag, size = 0x8, scoped, tag = 'scoped memory for swin_block_forward.2']
    #allocation4 [shape = 'u8[32768]{0}', space=vmem, size = 0x8000, scoped, tag = 'input window, operand 1, single buffered']
    #allocation5 [shape = 's32[1]{0}', space=sflag, size = 0x4, scoped, tag = 'scoped memory for swin_block_forward.2']
    #allocation6 [shape = 'u8[131072]{0}', space=vmem, size = 0x20000, scoped, tag = 'input window, operand 2, single buffered']
    #allocation7 [shape = 'u8[98304]{0}', space=vmem, size = 0x18000, scoped, tag = 'input window, operand 5, single buffered']
    #allocation8 [shape = 's32[1]{0}', space=sflag, size = 0x4, scoped, tag = 'scoped memory for swin_block_forward.2']
    #allocation9 [shape = 'u8[32768]{0}', space=vmem, size = 0x8000, scoped, tag = 'input window, operand 7, single buffered']
    #allocation10 [shape = 'u8[131072]{0}', space=vmem, size = 0x20000, scoped, tag = 'input window, operand 11, single buffered']
    #allocation11 [shape = 's32[1]{0}', space=sflag, size = 0x4, scoped, tag = 'scoped memory for swin_block_forward.2']
    #allocation12 [shape = 'u8[131072]{0}', space=vmem, size = 0x20000, scoped, tag = 'input window, operand 13, single buffered']
    #allocation13 [shape = 'u8[512]{0}', space=vmem, size = 0x400, scoped, tag = 'input window, operand 14, single buffered']
    #allocation14 [shape = 's32[1]{0}', space=sflag, size = 0x4, scoped, tag = 'scoped memory for swin_block_forward.2']
    #allocation15 [shape = 'u8[65536]{0}', space=vmem, size = 0x10000, scoped, tag = 'output window, operand 0']
    %20 = vsyncpa [#allocation3], 0
    %s21 = scalar_lea.sflag [#allocation3], 1
    %22 = vsyncpa %s21, 0
    %23 = vsyncpa [#allocation5], 0
    %24 = vsyncpa [#allocation8], 0
    %25 = vsyncpa [#allocation11], 0
    %26 = vsyncpa [#allocation14], 0
    loop: start=0, step=1, limit=10
    $region2: #{swin_block_forward.2} parent=1 // loop_pre_header
      _
    $region3: #{swin_block_forward.2} parent=1 // loop_header
      %s28 = sphi 0, %s32
      %p29 = scmp.ge.s32.totalorder %s28, 10
      %s35 = sphi 0, %s54
      %s36 = sphi 0, %s50
      %s37 = sphi 0, %s46
      %s38 = sphi 0, %s35
      %s39 = sphi 0, %s36
      %s40 = sphi 0, %s37
      %s41 = sphi 0, %s38
      %s42 = sphi 0, %s39
      %s43 = sphi 0, %s40
      %s61 = sphi 0, %s63
      %s64 = sphi 0, %s61
      %s65 = sphi 0, %s64
      %s81 = sphi 0, %s65
      %s85 = sphi 0, %s85
      %s87 = sphi 0, %s85
      %s88 = sphi 0, %s87
      %s102 = sphi 0, %s88
      %s106 = sphi 0, %s106
      %s108 = sphi 0, %s106
      %s109 = sphi 0, %s108
      %s123 = sphi 0, %s109
      %s127 = sphi 0, %s127
      %s129 = sphi 0, %s127
      %s130 = sphi 0, %s129
      %s144 = sphi 0, %s130
      %s148 = sphi 0, %s148
      %s150 = sphi 0, %s148
      %s151 = sphi 0, %s150
      %s165 = sphi 0, %s151
      %s169 = sphi 0, %s169
      %s171 = sphi 0, %s169
      %s172 = sphi 0, %s171
      %s186 = sphi 0, %s172
      %s190 = sphi 0, %s190
      %s192 = sphi 0, %s190
      %s193 = sphi 0, %s192
      %s207 = sphi 0, %s193
      %s211 = sphi 0, %s211
      %s213 = sphi 0, %s211
      %s214 = sphi 0, %s213
      %s228 = sphi 0, %s214
      %s232 = sphi 0, %s232
      %s234 = sphi 0, %s232
      %s235 = sphi 0, %s234
      %s249 = sphi 0, %s235
      %s253 = sphi 0, %s253
      %s255 = sphi 0, %s253
      %s256 = sphi 0, %s255
      %s270 = sphi 0, %s256
      %s274 = sphi 0, %s274
      %s276 = sphi 0, %s274
      %s277 = sphi 0, %s276
      %s291 = sphi 0, %s277
      %s295 = sphi 0, %s295
      %s297 = sphi 0, %s295
      %s298 = sphi 0, %s297
      %s312 = sphi 0, %s298
      %s316 = sphi 0, %s316
      %s318 = sphi 0, %s316
      %s319 = sphi 0, %s318
      %s333 = sphi 0, %s319
      %s337 = sphi 0, %s337
      %s339 = sphi 0, %s337
      %s340 = sphi 0, %s339
      %s354 = sphi 0, %s340
      %s358 = sphi 0, %s358
      %s360 = sphi 0, %s358
      %s361 = sphi 0, %s360
      %s375 = sphi 0, %s361
      %s385 = sphi 0, %s387
      %s388 = sphi 0, %s385
      %s389 = sphi 0, %s388
      %s405 = sphi 0, %s389
    $region4: #{swin_block_forward.2} parent=1 // loop_header_branch
      %31 = sbr.rel (%p29) target = $region8
    $region5: #{swin_block_forward.2} parent=1 // loop_body
      %s33 = ssub.s32 %s28, 1
      %s34 = ssub.s32 %s28, 2
      %s44 = sadd.s32 1, %s37
      %p45 = scmp.ge.s32.totalorder %s44, 2
      %s46 = scalar_select %p45, 0, %s44
      %s47 = sadd.s32 1, %s36
      %s48 = scalar_select %p45, %s47, %s36
      %p49 = scmp.ge.s32.totalorder %s48, 2
      %s50 = scalar_select %p49, 0, %s48
      %s51 = sadd.s32 1, %s35
      %s52 = scalar_select %p49, %s51, %s35
      %p53 = scmp.ge.s32.totalorder %s52, 2
      %s54 = scalar_select %p53, 0, %s52
      %s55 = ssub.s32 %s35, %s54
      %s56 = ssub.s32 %s36, %s50
      %s57 = sor.u32 %s55, %s56
      %s58 = ssub.s32 %s37, %s46
      %s59 = sor.u32 %s57, %s58
      %p60 = scmp.eq.s32.totalorder %s59, 0
      %s62 = sadd.s32 %s61, 1
      %s63 = scalar_select %p60, %s61, %s62
      %p66 = pneg %p60
      %p67 = scmp.eq.s32.totalorder %s28, 7
      %p68 = por %p66, %p67
      %p69 = scmp.ne.s32.totalorder %s61, %s64
      %p70 = scmp.eq.s32.totalorder %s28, 0
      %p71 = por %p69, %p70
      %p72 = scmp.ne.s32.totalorder %s61, %s64
      %p73 = scmp.eq.s32.totalorder %s33, 7
      %p74 = por %p72, %p73
      %p75 = scmp.ne.s32.totalorder %s64, %s65
      %p76 = scmp.eq.s32.totalorder %s33, 0
      %p77 = por %p75, %p76
      %p78 = scmp.ne.s32.totalorder %s64, %s65
      %p79 = scmp.eq.s32.totalorder %s34, 7
      %p80 = por %p78, %p79
      %p82 = scmp.ne.s32.totalorder %s65, %s81
      %p83 = scmp.eq.s32.totalorder %s34, 0
      %p84 = por %p82, %p83
      %s86 = sadd.s32 %s85, 1
      %p89 = scmp.eq.s32.totalorder %s28, 7
      %p90 = scmp.ne.s32.totalorder %s85, %s87
      %p91 = scmp.eq.s32.totalorder %s28, 0
      %p92 = por %p90, %p91
      %p93 = scmp.ne.s32.totalorder %s85, %s87
      %p94 = scmp.eq.s32.totalorder %s33, 7
      %p95 = por %p93, %p94
      %p96 = scmp.ne.s32.totalorder %s87, %s88
      %p97 = scmp.eq.s32.totalorder %s33, 0
      %p98 = por %p96, %p97
      %p99 = scmp.ne.s32.totalorder %s87, %s88
      %p100 = scmp.eq.s32.totalorder %s34, 7
      %p101 = por %p99, %p100
      %p103 = scmp.ne.s32.totalorder %s88, %s102
      %p104 = scmp.eq.s32.totalorder %s34, 0
      %p105 = por %p103, %p104
      %s107 = sadd.s32 %s106, 1
      %p110 = scmp.eq.s32.totalorder %s28, 7
      %p111 = scmp.ne.s32.totalorder %s106, %s108
      %p112 = scmp.eq.s32.totalorder %s28, 0
      %p113 = por %p111, %p112
      %p114 = scmp.ne.s32.totalorder %s106, %s108
      %p115 = scmp.eq.s32.totalorder %s33, 7
      %p116 = por %p114, %p115
      %p117 = scmp.ne.s32.totalorder %s108, %s109
      %p118 = scmp.eq.s32.totalorder %s33, 0
      %p119 = por %p117, %p118
      %p120 = scmp.ne.s32.totalorder %s108, %s109
      %p121 = scmp.eq.s32.totalorder %s34, 7
      %p122 = por %p120, %p121
      %p124 = scmp.ne.s32.totalorder %s109, %s123
      %p125 = scmp.eq.s32.totalorder %s34, 0
      %p126 = por %p124, %p125
      %s128 = sadd.s32 %s127, 1
      %p131 = scmp.eq.s32.totalorder %s28, 7
      %p132 = scmp.ne.s32.totalorder %s127, %s129
      %p133 = scmp.eq.s32.totalorder %s28, 0
      %p134 = por %p132, %p133
      %p135 = scmp.ne.s32.totalorder %s127, %s129
      %p136 = scmp.eq.s32.totalorder %s33, 7
      %p137 = por %p135, %p136
      %p138 = scmp.ne.s32.totalorder %s129, %s130
      %p139 = scmp.eq.s32.totalorder %s33, 0
      %p140 = por %p138, %p139
      %p141 = scmp.ne.s32.totalorder %s129, %s130
      %p142 = scmp.eq.s32.totalorder %s34, 7
      %p143 = por %p141, %p142
      %p145 = scmp.ne.s32.totalorder %s130, %s144
      %p146 = scmp.eq.s32.totalorder %s34, 0
      %p147 = por %p145, %p146
      %s149 = sadd.s32 %s148, 1
      %p152 = scmp.eq.s32.totalorder %s28, 7
      %p153 = scmp.ne.s32.totalorder %s148, %s150
      %p154 = scmp.eq.s32.totalorder %s28, 0
      %p155 = por %p153, %p154
      %p156 = scmp.ne.s32.totalorder %s148, %s150
      %p157 = scmp.eq.s32.totalorder %s33, 7
      %p158 = por %p156, %p157
      %p159 = scmp.ne.s32.totalorder %s150, %s151
      %p160 = scmp.eq.s32.totalorder %s33, 0
      %p161 = por %p159, %p160
      %p162 = scmp.ne.s32.totalorder %s150, %s151
      %p163 = scmp.eq.s32.totalorder %s34, 7
      %p164 = por %p162, %p163
      %p166 = scmp.ne.s32.totalorder %s151, %s165
      %p167 = scmp.eq.s32.totalorder %s34, 0
      %p168 = por %p166, %p167
      %s170 = sadd.s32 %s169, 1
      %p173 = scmp.eq.s32.totalorder %s28, 7
      %p174 = scmp.ne.s32.totalorder %s169, %s171
      %p175 = scmp.eq.s32.totalorder %s28, 0
      %p176 = por %p174, %p175
      %p177 = scmp.ne.s32.totalorder %s169, %s171
      %p178 = scmp.eq.s32.totalorder %s33, 7
      %p179 = por %p177, %p178
      %p180 = scmp.ne.s32.totalorder %s171, %s172
      %p181 = scmp.eq.s32.totalorder %s33, 0
      %p182 = por %p180, %p181
      %p183 = scmp.ne.s32.totalorder %s171, %s172
      %p184 = scmp.eq.s32.totalorder %s34, 7
      %p185 = por %p183, %p184
      %p187 = scmp.ne.s32.totalorder %s172, %s186
      %p188 = scmp.eq.s32.totalorder %s34, 0
      %p189 = por %p187, %p188
      %s191 = sadd.s32 %s190, 1
      %p194 = scmp.eq.s32.totalorder %s28, 7
      %p195 = scmp.ne.s32.totalorder %s190, %s192
      %p196 = scmp.eq.s32.totalorder %s28, 0
      %p197 = por %p195, %p196
      %p198 = scmp.ne.s32.totalorder %s190, %s192
      %p199 = scmp.eq.s32.totalorder %s33, 7
      %p200 = por %p198, %p199
      %p201 = scmp.ne.s32.totalorder %s192, %s193
      %p202 = scmp.eq.s32.totalorder %s33, 0
      %p203 = por %p201, %p202
      %p204 = scmp.ne.s32.totalorder %s192, %s193
      %p205 = scmp.eq.s32.totalorder %s34, 7
      %p206 = por %p204, %p205
      %p208 = scmp.ne.s32.totalorder %s193, %s207
      %p209 = scmp.eq.s32.totalorder %s34, 0
      %p210 = por %p208, %p209
      %s212 = sadd.s32 %s211, 1
      %p215 = scmp.eq.s32.totalorder %s28, 7
      %p216 = scmp.ne.s32.totalorder %s211, %s213
      %p217 = scmp.eq.s32.totalorder %s28, 0
      %p218 = por %p216, %p217
      %p219 = scmp.ne.s32.totalorder %s211, %s213
      %p220 = scmp.eq.s32.totalorder %s33, 7
      %p221 = por %p219, %p220
      %p222 = scmp.ne.s32.totalorder %s213, %s214
      %p223 = scmp.eq.s32.totalorder %s33, 0
      %p224 = por %p222, %p223
      %p225 = scmp.ne.s32.totalorder %s213, %s214
      %p226 = scmp.eq.s32.totalorder %s34, 7
      %p227 = por %p225, %p226
      %p229 = scmp.ne.s32.totalorder %s214, %s228
      %p230 = scmp.eq.s32.totalorder %s34, 0
      %p231 = por %p229, %p230
      %s233 = sadd.s32 %s232, 1
      %p236 = scmp.eq.s32.totalorder %s28, 7
      %p237 = scmp.ne.s32.totalorder %s232, %s234
      %p238 = scmp.eq.s32.totalorder %s28, 0
      %p239 = por %p237, %p238
      %p240 = scmp.ne.s32.totalorder %s232, %s234
      %p241 = scmp.eq.s32.totalorder %s33, 7
      %p242 = por %p240, %p241
      %p243 = scmp.ne.s32.totalorder %s234, %s235
      %p244 = scmp.eq.s32.totalorder %s33, 0
      %p245 = por %p243, %p244
      %p246 = scmp.ne.s32.totalorder %s234, %s235
      %p247 = scmp.eq.s32.totalorder %s34, 7
      %p248 = por %p246, %p247
      %p250 = scmp.ne.s32.totalorder %s235, %s249
      %p251 = scmp.eq.s32.totalorder %s34, 0
      %p252 = por %p250, %p251
      %s254 = sadd.s32 %s253, 1
      %p257 = scmp.eq.s32.totalorder %s28, 7
      %p258 = scmp.ne.s32.totalorder %s253, %s255
      %p259 = scmp.eq.s32.totalorder %s28, 0
      %p260 = por %p258, %p259
      %p261 = scmp.ne.s32.totalorder %s253, %s255
      %p262 = scmp.eq.s32.totalorder %s33, 7
      %p263 = por %p261, %p262
      %p264 = scmp.ne.s32.totalorder %s255, %s256
      %p265 = scmp.eq.s32.totalorder %s33, 0
      %p266 = por %p264, %p265
      %p267 = scmp.ne.s32.totalorder %s255, %s256
      %p268 = scmp.eq.s32.totalorder %s34, 7
      %p269 = por %p267, %p268
      %p271 = scmp.ne.s32.totalorder %s256, %s270
      %p272 = scmp.eq.s32.totalorder %s34, 0
      %p273 = por %p271, %p272
      %s275 = sadd.s32 %s274, 1
      %p278 = scmp.eq.s32.totalorder %s28, 7
      %p279 = scmp.ne.s32.totalorder %s274, %s276
      %p280 = scmp.eq.s32.totalorder %s28, 0
      %p281 = por %p279, %p280
      %p282 = scmp.ne.s32.totalorder %s274, %s276
      %p283 = scmp.eq.s32.totalorder %s33, 7
      %p284 = por %p282, %p283
      %p285 = scmp.ne.s32.totalorder %s276, %s277
      %p286 = scmp.eq.s32.totalorder %s33, 0
      %p287 = por %p285, %p286
      %p288 = scmp.ne.s32.totalorder %s276, %s277
      %p289 = scmp.eq.s32.totalorder %s34, 7
      %p290 = por %p288, %p289
      %p292 = scmp.ne.s32.totalorder %s277, %s291
      %p293 = scmp.eq.s32.totalorder %s34, 0
      %p294 = por %p292, %p293
      %s296 = sadd.s32 %s295, 1
      %p299 = scmp.eq.s32.totalorder %s28, 7
      %p300 = scmp.ne.s32.totalorder %s295, %s297
      %p301 = scmp.eq.s32.totalorder %s28, 0
      %p302 = por %p300, %p301
      %p303 = scmp.ne.s32.totalorder %s295, %s297
      %p304 = scmp.eq.s32.totalorder %s33, 7
      %p305 = por %p303, %p304
      %p306 = scmp.ne.s32.totalorder %s297, %s298
      %p307 = scmp.eq.s32.totalorder %s33, 0
      %p308 = por %p306, %p307
      %p309 = scmp.ne.s32.totalorder %s297, %s298
      %p310 = scmp.eq.s32.totalorder %s34, 7
      %p311 = por %p309, %p310
      %p313 = scmp.ne.s32.totalorder %s298, %s312
      %p314 = scmp.eq.s32.totalorder %s34, 0
      %p315 = por %p313, %p314
      %s317 = sadd.s32 %s316, 1
      %p320 = scmp.eq.s32.totalorder %s28, 7
      %p321 = scmp.ne.s32.totalorder %s316, %s318
      %p322 = scmp.eq.s32.totalorder %s28, 0
      %p323 = por %p321, %p322
      %p324 = scmp.ne.s32.totalorder %s316, %s318
      %p325 = scmp.eq.s32.totalorder %s33, 7
      %p326 = por %p324, %p325
      %p327 = scmp.ne.s32.totalorder %s318, %s319
      %p328 = scmp.eq.s32.totalorder %s33, 0
      %p329 = por %p327, %p328
      %p330 = scmp.ne.s32.totalorder %s318, %s319
      %p331 = scmp.eq.s32.totalorder %s34, 7
      %p332 = por %p330, %p331
      %p334 = scmp.ne.s32.totalorder %s319, %s333
      %p335 = scmp.eq.s32.totalorder %s34, 0
      %p336 = por %p334, %p335
      %s338 = sadd.s32 %s337, 1
      %p341 = scmp.eq.s32.totalorder %s28, 7
      %p342 = scmp.ne.s32.totalorder %s337, %s339
      %p343 = scmp.eq.s32.totalorder %s28, 0
      %p344 = por %p342, %p343
      %p345 = scmp.ne.s32.totalorder %s337, %s339
      %p346 = scmp.eq.s32.totalorder %s33, 7
      %p347 = por %p345, %p346
      %p348 = scmp.ne.s32.totalorder %s339, %s340
      %p349 = scmp.eq.s32.totalorder %s33, 0
      %p350 = por %p348, %p349
      %p351 = scmp.ne.s32.totalorder %s339, %s340
      %p352 = scmp.eq.s32.totalorder %s34, 7
      %p353 = por %p351, %p352
      %p355 = scmp.ne.s32.totalorder %s340, %s354
      %p356 = scmp.eq.s32.totalorder %s34, 0
      %p357 = por %p355, %p356
      %s359 = sadd.s32 %s358, 1
      %p362 = scmp.eq.s32.totalorder %s28, 7
      %p363 = scmp.ne.s32.totalorder %s358, %s360
      %p364 = scmp.eq.s32.totalorder %s28, 0
      %p365 = por %p363, %p364
      %p366 = scmp.ne.s32.totalorder %s358, %s360
      %p367 = scmp.eq.s32.totalorder %s33, 7
      %p368 = por %p366, %p367
      %p369 = scmp.ne.s32.totalorder %s360, %s361
      %p370 = scmp.eq.s32.totalorder %s33, 0
      %p371 = por %p369, %p370
      %p372 = scmp.ne.s32.totalorder %s360, %s361
      %p373 = scmp.eq.s32.totalorder %s34, 7
      %p374 = por %p372, %p373
      %p376 = scmp.ne.s32.totalorder %s361, %s375
      %p377 = scmp.eq.s32.totalorder %s34, 0
      %p378 = por %p376, %p377
      %s379 = ssub.s32 %s35, %s54
      %s380 = ssub.s32 %s36, %s50
      %s381 = sor.u32 %s379, %s380
      %s382 = ssub.s32 %s37, %s46
      %s383 = sor.u32 %s381, %s382
      %p384 = scmp.eq.s32.totalorder %s383, 0
      %s386 = sadd.s32 %s385, 1
      %s387 = scalar_select %p384, %s385, %s386
      %p390 = pneg %p384
      %p391 = scmp.eq.s32.totalorder %s28, 7
      %p392 = por %p390, %p391
      %p393 = scmp.ne.s32.totalorder %s385, %s388
      %p394 = scmp.eq.s32.totalorder %s28, 0
      %p395 = por %p393, %p394
      %p396 = scmp.ne.s32.totalorder %s385, %s388
      %p397 = scmp.eq.s32.totalorder %s33, 7
      %p398 = por %p396, %p397
      %p399 = scmp.ne.s32.totalorder %s388, %s389
      %p400 = scmp.eq.s32.totalorder %s33, 0
      %p401 = por %p399, %p400
      %p402 = scmp.ne.s32.totalorder %s388, %s389
      %p403 = scmp.eq.s32.totalorder %s34, 7
      %p404 = por %p402, %p403
      %p406 = scmp.ne.s32.totalorder %s389, %s405
      %p407 = scmp.eq.s32.totalorder %s34, 0
      %p408 = por %p406, %p407
      %p409 = scmp.le.s32.totalorder 1, %s28
      %p410 = scmp.lt.s32.totalorder %s28, 9
      %p411 = pnand %p409, %p410
      %p412 = pneg %p411
      // Predicated region
      $region9: #{swin_block_forward.2} parent=5 // pred_check
        _
      $region10: #{swin_block_forward.2} parent=5 // pred_check_branch
        %414 = sbr.rel (%p411) target = $region12
      $region11: #{swin_block_forward.2} parent=5 // pred_region
        %s415 = ssub.s32 %s28, 1
        // Predicated region
        $region13: #{swin_block_forward.2} parent=11 // pred_check
          %p416 = pneg %p98
        $region14: #{swin_block_forward.2} parent=11 // pred_check_branch
          %418 = sbr.rel (%p416) target = $region16
        $region15: #{swin_block_forward.2} parent=11 // pred_region
          %s420 = ssub.s32 1024, 1024
          %421 = vsyncadd [#allocation5], %s420
          %s422 = sshll.u32 [#allocation4], 4
          %s423 = int_to_ptr.vmem [resolvable:$true] %s422
          %428 = dma.hbm_to_vmem [thread:$0]  %s1, 1024, %s423, [#allocation5], 128, 128, 8
        $region16: #{swin_block_forward.2} parent=11 // pred_fallthru
          _
        // Predicated region
        $region17: #{swin_block_forward.2} parent=11 // pred_check
          %p429 = pneg %p119
        $region18: #{swin_block_forward.2} parent=11 // pred_check_branch
          %431 = sbr.rel (%p429) target = $region20
        $region19: #{swin_block_forward.2} parent=11 // pred_region
          %s433 = ssub.s32 4096, 4096
          %434 = vsyncadd [#allocation5], %s433
          %s435 = sshll.u32 [#allocation6], 4
          %s436 = int_to_ptr.vmem [resolvable:$true] %s435
          %441 = dma.hbm_to_vmem [thread:$0]  %s2, 4096, %s436, [#allocation5], 128, 128, 8
        $region20: #{swin_block_forward.2} parent=11 // pred_fallthru
          _
        // Predicated region
        $region21: #{swin_block_forward.2} parent=11 // pred_check
          %p442 = pneg %p140
        $region22: #{swin_block_forward.2} parent=11 // pred_check_branch
          %444 = sbr.rel (%p442) target = $region24
        $region23: #{swin_block_forward.2} parent=11 // pred_region
          _
        $region24: #{swin_block_forward.2} parent=11 // pred_fallthru
          _
        // Predicated region
        $region25: #{swin_block_forward.2} parent=11 // pred_check
          %p445 = pneg %p161
        $region26: #{swin_block_forward.2} parent=11 // pred_check_branch
          %447 = sbr.rel (%p445) target = $region28
        $region27: #{swin_block_forward.2} parent=11 // pred_region
          _
        $region28: #{swin_block_forward.2} parent=11 // pred_fallthru
          _
        // Predicated region
        $region29: #{swin_block_forward.2} parent=11 // pred_check
          %p448 = pneg %p182
        $region30: #{swin_block_forward.2} parent=11 // pred_check_branch
          %450 = sbr.rel (%p448) target = $region32
        $region31: #{swin_block_forward.2} parent=11 // pred_region
          %s452 = ssub.s32 3072, 3072
          %453 = vsyncadd [#allocation8], %s452
          %s454 = sshll.u32 [#allocation7], 4
          %s455 = int_to_ptr.vmem [resolvable:$true] %s454
          %460 = dma.hbm_to_vmem [thread:$0]  %s5, 3072, %s455, [#allocation8], 192, 192, 12
        $region32: #{swin_block_forward.2} parent=11 // pred_fallthru
          _
        // Predicated region
        $region33: #{swin_block_forward.2} parent=11 // pred_check
          %p461 = pneg %p203
        $region34: #{swin_block_forward.2} parent=11 // pred_check_branch
          %463 = sbr.rel (%p461) target = $region36
        $region35: #{swin_block_forward.2} parent=11 // pred_region
          _
        $region36: #{swin_block_forward.2} parent=11 // pred_fallthru
          _
        // Predicated region
        $region37: #{swin_block_forward.2} parent=11 // pred_check
          %p464 = pneg %p224
        $region38: #{swin_block_forward.2} parent=11 // pred_check_branch
          %466 = sbr.rel (%p464) target = $region40
        $region39: #{swin_block_forward.2} parent=11 // pred_region
          %s468 = ssub.s32 1024, 1024
          %469 = vsyncadd [#allocation8], %s468
          %s470 = sshll.u32 [#allocation9], 4
          %s471 = int_to_ptr.vmem [resolvable:$true] %s470
          %476 = dma.hbm_to_vmem [thread:$0]  %s7, 1024, %s471, [#allocation8], 64, 64, 4
        $region40: #{swin_block_forward.2} parent=11 // pred_fallthru
          _
        // Predicated region
        $region41: #{swin_block_forward.2} parent=11 // pred_check
          %p477 = pneg %p245
        $region42: #{swin_block_forward.2} parent=11 // pred_check_branch
          %479 = sbr.rel (%p477) target = $region44
        $region43: #{swin_block_forward.2} parent=11 // pred_region
          _
        $region44: #{swin_block_forward.2} parent=11 // pred_fallthru
          _
        // Predicated region
        $region45: #{swin_block_forward.2} parent=11 // pred_check
          %p480 = pneg %p266
        $region46: #{swin_block_forward.2} parent=11 // pred_check_branch
          %482 = sbr.rel (%p480) target = $region48
        $region47: #{swin_block_forward.2} parent=11 // pred_region
          _
        $region48: #{swin_block_forward.2} parent=11 // pred_fallthru
          _
        // Predicated region
        $region49: #{swin_block_forward.2} parent=11 // pred_check
          %p483 = pneg %p287
        $region50: #{swin_block_forward.2} parent=11 // pred_check_branch
          %485 = sbr.rel (%p483) target = $region52
        $region51: #{swin_block_forward.2} parent=11 // pred_region
          _
        $region52: #{swin_block_forward.2} parent=11 // pred_fallthru
          _
        // Predicated region
        $region53: #{swin_block_forward.2} parent=11 // pred_check
          %p486 = pneg %p308
        $region54: #{swin_block_forward.2} parent=11 // pred_check_branch
          %488 = sbr.rel (%p486) target = $region56
        $region55: #{swin_block_forward.2} parent=11 // pred_region
          %s490 = ssub.s32 4096, 4096
          %491 = vsyncadd [#allocation11], %s490
          %s492 = sshll.u32 [#allocation10], 4
          %s493 = int_to_ptr.vmem [resolvable:$true] %s492
          %498 = dma.hbm_to_vmem [thread:$0]  %s11, 4096, %s493, [#allocation11], 256, 256, 16
        $region56: #{swin_block_forward.2} parent=11 // pred_fallthru
          _
        // Predicated region
        $region57: #{swin_block_forward.2} parent=11 // pred_check
          %p499 = pneg %p329
        $region58: #{swin_block_forward.2} parent=11 // pred_check_branch
          %501 = sbr.rel (%p499) target = $region60
        $region59: #{swin_block_forward.2} parent=11 // pred_region
          _
        $region60: #{swin_block_forward.2} parent=11 // pred_fallthru
          _
        // Predicated region
        $region61: #{swin_block_forward.2} parent=11 // pred_check
          %p502 = pneg %p350
        $region62: #{swin_block_forward.2} parent=11 // pred_check_branch
          %504 = sbr.rel (%p502) target = $region64
        $region63: #{swin_block_forward.2} parent=11 // pred_region
          %s506 = ssub.s32 4096, 4096
          %507 = vsyncadd [#allocation11], %s506
          %s508 = sshll.u32 [#allocation12], 4
          %s509 = int_to_ptr.vmem [resolvable:$true] %s508
          %514 = dma.hbm_to_vmem [thread:$0]  %s13, 4096, %s509, [#allocation11], 64, 64, 4
        $region64: #{swin_block_forward.2} parent=11 // pred_fallthru
          _
        // Predicated region
        $region65: #{swin_block_forward.2} parent=11 // pred_check
          %p515 = pneg %p371
        $region66: #{swin_block_forward.2} parent=11 // pred_check_branch
          %517 = sbr.rel (%p515) target = $region68
        $region67: #{swin_block_forward.2} parent=11 // pred_region
          %s519 = ssub.s32 16, 16
          %520 = vsyncadd [#allocation14], %s519
          %s522 = sshll.u32 [#allocation13], 4
          %s523 = int_to_ptr.vmem [resolvable:$true] %s522
          %525 = dma.hbm_to_vmem [thread:$0]  %s14, 16, %s523, [#allocation14]
        $region68: #{swin_block_forward.2} parent=11 // pred_fallthru
          _
      $region12: #{swin_block_forward.2} parent=5 // pred_fallthru
        _
      %p526 = scmp.lt.s32.totalorder %s28, 8
      // Predicated region
      $region69: #{swin_block_forward.2} parent=5 // pred_check
        %p527 = pneg %p526
      $region70: #{swin_block_forward.2} parent=5 // pred_check_branch
        %529 = sbr.rel (%p527) target = $region72
      $region71: #{swin_block_forward.2} parent=5 // pred_region
        // Predicated region
        $region73: #{swin_block_forward.2} parent=71 // pred_check
          %p530 = pneg %p71
        $region74: #{swin_block_forward.2} parent=71 // pred_check_branch
          %532 = sbr.rel (%p530) target = $region76
        $region75: #{swin_block_forward.2} parent=71 // pred_region
          %s533 = sand.u32 %s61, 1
          %s534 = scalar_lea.sflag [#allocation3], %s533
          %s535 = sand.u32 %s61, 1
          %s536 = smul.addr %s535, 64
          %s537 = scalar_lea.vmem [#allocation2], %s536
          %s538 = smul.u32 8, %s36
          %s540 = ssub.s32 1024, 1024
          %541 = vsyncadd %s534, %s540
          %s542 = smul.addr %s538, 2
          %s543 = sadd.s32 %s37, %s542
          %s544 = smul.addr %s35, 32
          %s545 = sadd.s32 %s543, %s544
          %s546 = smul.addr %s545, 128
          %s547 = scalar_lea.hbm %s0, %s546
          %s548 = sshll.u32 %s537, 4
          %s549 = int_to_ptr.vmem [resolvable:$true] %s548
          %554 = dma.hbm_to_vmem [thread:$0]  %s547, 1024, %s549, %s534, 256, 128, 8
        $region76: #{swin_block_forward.2} parent=71 // pred_fallthru
          _
      $region72: #{swin_block_forward.2} parent=5 // pred_fallthru
        _
      %p555 = scmp.le.s32.totalorder 1, %s28
      %p556 = scmp.lt.s32.totalorder %s28, 9
      %p557 = pnand %p555, %p556
      %p558 = pneg %p557
      // Predicated region
      $region77: #{swin_block_forward.2} parent=5 // pred_check
        _
      $region78: #{swin_block_forward.2} parent=5 // pred_check_branch
        %560 = sbr.rel (%p557) target = $region80
      $region79: #{swin_block_forward.2} parent=5 // pred_region
        %s561 = ssub.s32 %s28, 1
        %s562 = sand.u32 %s64, 1
        %s563 = scalar_lea.sflag [#allocation3], %s562
        %s564 = sand.u32 %s64, 1
        %s565 = smul.addr %s564, 64
        %s566 = scalar_lea.vmem [#allocation2], %s565
        // Predicated region
        $region81: #{swin_block_forward.2} parent=79 // pred_check
          %p567 = pneg %p77
        $region82: #{swin_block_forward.2} parent=79 // pred_check_branch
          %569 = sbr.rel (%p567) target = $region84
        $region83: #{swin_block_forward.2} parent=79 // pred_region
          %570 = dma.done %s563, 1024
        $region84: #{swin_block_forward.2} parent=79 // pred_fallthru
          _
        // Predicated region
        $region85: #{swin_block_forward.2} parent=79 // pred_check
          %p571 = pneg %p98
        $region86: #{swin_block_forward.2} parent=79 // pred_check_branch
          %573 = sbr.rel (%p571) target = $region88
        $region87: #{swin_block_forward.2} parent=79 // pred_region
          %574 = dma.done [#allocation5], 1024
        $region88: #{swin_block_forward.2} parent=79 // pred_fallthru
          _
        // Predicated region
        $region89: #{swin_block_forward.2} parent=79 // pred_check
          %p575 = pneg %p119
        $region90: #{swin_block_forward.2} parent=79 // pred_check_branch
          %577 = sbr.rel (%p575) target = $region92
        $region91: #{swin_block_forward.2} parent=79 // pred_region
          %578 = dma.done [#allocation5], 4096
        $region92: #{swin_block_forward.2} parent=79 // pred_fallthru
          _
        // Predicated region
        $region93: #{swin_block_forward.2} parent=79 // pred_check
          %p579 = pneg %p182
        $region94: #{swin_block_forward.2} parent=79 // pred_check_branch
          %581 = sbr.rel (%p579) target = $region96
        $region95: #{swin_block_forward.2} parent=79 // pred_region
          %582 = dma.done [#allocation8], 3072
        $region96: #{swin_block_forward.2} parent=79 // pred_fallthru
          _
        // Predicated region
        $region97: #{swin_block_forward.2} parent=79 // pred_check
          %p583 = pneg %p224
        $region98: #{swin_block_forward.2} parent=79 // pred_check_branch
          %585 = sbr.rel (%p583) target = $region100
        $region99: #{swin_block_forward.2} parent=79 // pred_region
          %586 = dma.done [#allocation8], 1024
        $region100: #{swin_block_forward.2} parent=79 // pred_fallthru
          _
        // Predicated region
        $region101: #{swin_block_forward.2} parent=79 // pred_check
          %p587 = pneg %p308
        $region102: #{swin_block_forward.2} parent=79 // pred_check_branch
          %589 = sbr.rel (%p587) target = $region104
        $region103: #{swin_block_forward.2} parent=79 // pred_region
          %590 = dma.done [#allocation11], 4096
        $region104: #{swin_block_forward.2} parent=79 // pred_fallthru
          _
        // Predicated region
        $region105: #{swin_block_forward.2} parent=79 // pred_check
          %p591 = pneg %p350
        $region106: #{swin_block_forward.2} parent=79 // pred_check_branch
          %593 = sbr.rel (%p591) target = $region108
        $region107: #{swin_block_forward.2} parent=79 // pred_region
          %594 = dma.done [#allocation11], 4096
        $region108: #{swin_block_forward.2} parent=79 // pred_fallthru
          _
        // Predicated region
        $region109: #{swin_block_forward.2} parent=79 // pred_check
          %p595 = pneg %p371
        $region110: #{swin_block_forward.2} parent=79 // pred_check_branch
          %597 = sbr.rel (%p595) target = $region112
        $region111: #{swin_block_forward.2} parent=79 // pred_region
          %598 = dma.done [#allocation14], 16
        $region112: #{swin_block_forward.2} parent=79 // pred_fallthru
          _
        %s599 = sand.u32 %s64, 1
        %s600 = scalar_lea.sflag [#allocation3], %s599
        %s601 = sand.u32 %s64, 1
        %s602 = smul.addr %s601, 64
        %s603 = scalar_lea.vmem [#allocation2], %s602
        %p604 = pneg %p77
        %p605 = pneg %p74
        %p606 = pneg %p98
        %p607 = pneg %p95
        %p608 = pneg %p119
        %p609 = pneg %p116
        %p610 = pneg %p140
        %p611 = pneg %p137
        %p612 = pneg %p161
        %p613 = pneg %p158
        %p614 = pneg %p182
        %p615 = pneg %p179
        %p616 = pneg %p203
        %p617 = pneg %p200
        %p618 = pneg %p224
        %p619 = pneg %p221
        %p620 = pneg %p245
        %p621 = pneg %p242
        %p622 = pneg %p266
        %p623 = pneg %p263
        %p624 = pneg %p287
        %p625 = pneg %p284
        %p626 = pneg %p308
        %p627 = pneg %p305
        %p628 = pneg %p329
        %p629 = pneg %p326
        %p630 = pneg %p350
        %p631 = pneg %p347
        %p632 = pneg %p371
        %p633 = pneg %p368
        %p634 = pneg %p401
        %p635 = pneg %p398
        %s636 = sand.u32 %s388, 1
        %s637 = sand.u32 %s388, 1
        %s638 = smul.addr %s637, 64
        %s639 = scalar_lea.vmem [#allocation15], %s638
        %s640 = smul.u32 8, %s39
        %s641 = smul.u32 8, %s39
        %v643 = vld [vmem:[%s566] sm:$0xff]
        %v644 = vld [vmem:[%s566 + $0x8] sm:$0xff]
        %v645 = vld [vmem:[%s566 + $0x10] sm:$0xff]
        %v646 = vld [vmem:[%s566 + $0x18] sm:$0xff]
        %v647 = vld [vmem:[%s566 + $0x20] sm:$0xff]
        %v648 = vld [vmem:[%s566 + $0x28] sm:$0xff]
        %v649 = vld [vmem:[%s566 + $0x30] sm:$0xff]
        %v650 = vld [vmem:[%s566 + $0x38] sm:$0xff]
        %651 = vadd.xlane.f32.xlu0 %v643
        %v652 = vpop.xlane.xlu0 %651
        %653 = vadd.xlane.f32.xlu0 %v644
        %v654 = vpop.xlane.xlu0 %653
        %655 = vadd.xlane.f32.xlu0 %v645
        %v656 = vpop.xlane.xlu0 %655
        %657 = vadd.xlane.f32.xlu0 %v646
        %v658 = vpop.xlane.xlu0 %657
        %659 = vadd.xlane.f32.xlu0 %v647
        %v660 = vpop.xlane.xlu0 %659
        %661 = vadd.xlane.f32.xlu0 %v648
        %v662 = vpop.xlane.xlu0 %661
        %663 = vadd.xlane.f32.xlu0 %v649
        %v664 = vpop.xlane.xlu0 %663
        %665 = vadd.xlane.f32.xlu0 %v650
        %v666 = vpop.xlane.xlu0 %665
        %v667 = vrcp.pop 128.0
        %v668 = vmul.f32 %v652, %v667
        %v669 = vmul.f32 %v654, %v667
        %v670 = vmul.f32 %v656, %v667
        %v671 = vmul.f32 %v658, %v667
        %v672 = vmul.f32 %v660, %v667
        %v673 = vmul.f32 %v662, %v667
        %v674 = vmul.f32 %v664, %v667
        %v675 = vmul.f32 %v666, %v667
        %v676 = vsub.f32 %v643, %v668
        %v677 = vsub.f32 %v644, %v669
        %v678 = vsub.f32 %v645, %v670
        %v679 = vsub.f32 %v646, %v671
        %v680 = vsub.f32 %v647, %v672
        %v681 = vsub.f32 %v648, %v673
        %v682 = vsub.f32 %v649, %v674
        %v683 = vsub.f32 %v650, %v675
        %v684 = vmul.f32 %v676, %v676
        %v685 = vmul.f32 %v677, %v677
        %v686 = vmul.f32 %v678, %v678
        %v687 = vmul.f32 %v679, %v679
        %v688 = vmul.f32 %v680, %v680
        %v689 = vmul.f32 %v681, %v681
        %v690 = vmul.f32 %v682, %v682
        %v691 = vmul.f32 %v683, %v683
        %692 = vadd.xlane.f32.xlu0 %v684
        %v693 = vpop.xlane.xlu0 %692
        %694 = vadd.xlane.f32.xlu0 %v685
        %v695 = vpop.xlane.xlu0 %694
        %696 = vadd.xlane.f32.xlu0 %v686
        %v697 = vpop.xlane.xlu0 %696
        %698 = vadd.xlane.f32.xlu0 %v687
        %v699 = vpop.xlane.xlu0 %698
        %700 = vadd.xlane.f32.xlu0 %v688
        %v701 = vpop.xlane.xlu0 %700
        %702 = vadd.xlane.f32.xlu0 %v689
        %v703 = vpop.xlane.xlu0 %702
        %704 = vadd.xlane.f32.xlu0 %v690
        %v705 = vpop.xlane.xlu0 %704
        %706 = vadd.xlane.f32.xlu0 %v691
        %v707 = vpop.xlane.xlu0 %706
        %v708 = vmul.f32 %v693, %v667
        %v709 = vmul.f32 %v695, %v667
        %v710 = vmul.f32 %v697, %v667
        %v711 = vmul.f32 %v699, %v667
        %v712 = vmul.f32 %v701, %v667
        %v713 = vmul.f32 %v703, %v667
        %v714 = vmul.f32 %v705, %v667
        %v715 = vmul.f32 %v707, %v667
        %v716 = vadd.f32 %v708, 1e-05
        %v717 = vadd.f32 %v709, 1e-05
        %v718 = vadd.f32 %v710, 1e-05
        %v719 = vadd.f32 %v711, 1e-05
        %v720 = vadd.f32 %v712, 1e-05
        %v721 = vadd.f32 %v713, 1e-05
        %v722 = vadd.f32 %v714, 1e-05
        %v723 = vadd.f32 %v715, 1e-05
        %v724 = vrsqrt.pop %v716
        %v725 = vrsqrt.pop %v717
        %v726 = vrsqrt.pop %v718
        %v727 = vrsqrt.pop %v719
        %v728 = vrsqrt.pop %v720
        %v729 = vrsqrt.pop %v721
        %v730 = vrsqrt.pop %v722
        %v731 = vrsqrt.pop %v723
        %v732 = vmul.f32 %v676, %v724
        %v733 = vmul.f32 %v677, %v725
        %v734 = vmul.f32 %v678, %v726
        %v735 = vmul.f32 %v679, %v727
        %v736 = vmul.f32 %v680, %v728
        %v737 = vmul.f32 %v681, %v729
        %v738 = vmul.f32 %v682, %v730
        %v739 = vmul.f32 %v683, %v731
        %v740 = vld [vmem:[%s3] sm:$0x1]
        %v742 = vlaneseq
        %v743 = vshrl.u32 %v742, 7
        %v744 = vsub.s32 0, %v743
        %v745 = vrot.slane %v740, %v744
        %v747 = vmul.f32 %v732, %v745
        %v748 = vmul.f32 %v733, %v745
        %v749 = vmul.f32 %v734, %v745
        %v750 = vmul.f32 %v735, %v745
        %v751 = vmul.f32 %v736, %v745
        %v752 = vmul.f32 %v737, %v745
        %v753 = vmul.f32 %v738, %v745
        %v754 = vmul.f32 %v739, %v745
        %v755 = vld [vmem:[%s4] sm:$0x1]
        %v757 = vlaneseq
        %v758 = vshrl.u32 %v757, 7
        %v759 = vsub.s32 0, %v758
        %v760 = vrot.slane %v755, %v759
        %v762 = vadd.f32 %v747, %v760
        %v763 = vadd.f32 %v748, %v760
        %v764 = vadd.f32 %v749, %v760
        %v765 = vadd.f32 %v750, %v760
        %v766 = vadd.f32 %v751, %v760
        %v767 = vadd.f32 %v752, %v760
        %v768 = vadd.f32 %v753, %v760
        %v769 = vadd.f32 %v754, %v760
        %v770 = vpack.c.bf16 %v763, %v762
        %v771 = vpack.c.bf16 %v765, %v764
        %v772 = vpack.c.bf16 %v767, %v766
        %v773 = vpack.c.bf16 %v769, %v768
        %v774 = vld [vmem:[#allocation7] sm:$0xff]
        %v775 = vld [vmem:[#allocation7 + $0x8] sm:$0xf]
        %v776 = vld [vmem:[#allocation7 + $0xc] sm:$0xff]
        %v777 = vld [vmem:[#allocation7 + $0x14] sm:$0xf]
        %v778 = vld [vmem:[#allocation7 + $0x18] sm:$0xff]
        %v779 = vld [vmem:[#allocation7 + $0x20] sm:$0xf]
        %v780 = vld [vmem:[#allocation7 + $0x24] sm:$0xff]
        %v781 = vld [vmem:[#allocation7 + $0x2c] sm:$0xf]
        %v782 = vld [vmem:[#allocation7 + $0x30] sm:$0xff]
        %v783 = vld [vmem:[#allocation7 + $0x38] sm:$0xf]
        %v784 = vld [vmem:[#allocation7 + $0x3c] sm:$0xff]
        %v785 = vld [vmem:[#allocation7 + $0x44] sm:$0xf]
        %v786 = vld [vmem:[#allocation7 + $0x48] sm:$0xff]
        %v787 = vld [vmem:[#allocation7 + $0x50] sm:$0xf]
        %v788 = vld [vmem:[#allocation7 + $0x54] sm:$0xff]
        %v789 = vld [vmem:[#allocation7 + $0x5c] sm:$0xf]
        %v790 = vld [vmem:[#allocation7 + $0x60] sm:$0xff]
        %v791 = vld [vmem:[#allocation7 + $0x68] sm:$0xf]
        %v792 = vld [vmem:[#allocation7 + $0x6c] sm:$0xff]
        %v793 = vld [vmem:[#allocation7 + $0x74] sm:$0xf]
        %v794 = vld [vmem:[#allocation7 + $0x78] sm:$0xff]
        %v795 = vld [vmem:[#allocation7 + $0x80] sm:$0xf]
        %v796 = vld [vmem:[#allocation7 + $0x84] sm:$0xff]
        %v797 = vld [vmem:[#allocation7 + $0x8c] sm:$0xf]
        %v798 = vld [vmem:[#allocation7 + $0x90] sm:$0xff]
        %v799 = vld [vmem:[#allocation7 + $0x98] sm:$0xf]
        %v800 = vld [vmem:[#allocation7 + $0x9c] sm:$0xff]
        %v801 = vld [vmem:[#allocation7 + $0xa4] sm:$0xf]
        %v802 = vld [vmem:[#allocation7 + $0xa8] sm:$0xff]
        %v803 = vld [vmem:[#allocation7 + $0xb0] sm:$0xf]
        %v804 = vld [vmem:[#allocation7 + $0xb4] sm:$0xff]
        %v805 = vld [vmem:[#allocation7 + $0xbc] sm:$0xf]
        %v806 = vld [vmem:[%s6] sm:$0x7]
        %v808 = vlaneseq
        %v809 = vshrl.u32 %v808, 7
        %v810 = vsub.s32 0, %v809
        %v811 = vrot.slane %v806, %v810
        %v812 = vlaneseq
        %v813 = vshrl.u32 %v812, 7
        %v814 = vsub.s32 1, %v813
        %v815 = vrot.slane %v806, %v814
        %v816 = vlaneseq
        %v817 = vshrl.u32 %v816, 7
        %v818 = vsub.s32 2, %v817
        %v819 = vrot.slane %v806, %v818
        %v855 = vunpack.c.l.b16 %v774
        %v856 = vunpack.c.h.b16 %v774
        %v857 = vunpack.c.l.b16 %v775
        %v858 = vunpack.c.l.b16 %v776
        %v859 = vunpack.c.h.b16 %v776
        %v860 = vunpack.c.l.b16 %v777
        %v861 = vunpack.c.l.b16 %v778
        %v862 = vunpack.c.h.b16 %v778
        %v863 = vunpack.c.l.b16 %v779
        %v864 = vunpack.c.l.b16 %v780
        %v865 = vunpack.c.h.b16 %v780
        %v866 = vunpack.c.l.b16 %v781
        %v867 = vunpack.c.l.b16 %v782
        %v868 = vunpack.c.h.b16 %v782
        %v869 = vunpack.c.l.b16 %v783
        %v870 = vunpack.c.l.b16 %v784
        %v871 = vunpack.c.h.b16 %v784
        %v872 = vunpack.c.l.b16 %v785
        %v873 = vunpack.c.l.b16 %v786
        %v874 = vunpack.c.h.b16 %v786
        %v875 = vunpack.c.l.b16 %v787
        %v876 = vunpack.c.l.b16 %v788
        %v877 = vunpack.c.h.b16 %v788
        %v878 = vunpack.c.l.b16 %v789
        %v879 = vunpack.c.l.b16 %v790
        %v880 = vunpack.c.h.b16 %v790
        %v881 = vunpack.c.l.b16 %v791
        %v882 = vunpack.c.l.b16 %v792
        %v883 = vunpack.c.h.b16 %v792
        %v884 = vunpack.c.l.b16 %v793
        %v885 = vunpack.c.l.b16 %v794
        %v886 = vunpack.c.h.b16 %v794
        %v887 = vunpack.c.l.b16 %v795
        %v888 = vunpack.c.l.b16 %v796
        %v889 = vunpack.c.h.b16 %v796
        %v890 = vunpack.c.l.b16 %v797
        %v891 = vunpack.c.l.b16 %v798
        %v892 = vunpack.c.h.b16 %v798
        %v893 = vunpack.c.l.b16 %v799
        %v894 = vunpack.c.l.b16 %v800
        %v895 = vunpack.c.h.b16 %v800
        %v896 = vunpack.c.l.b16 %v801
        %v897 = vunpack.c.l.b16 %v802
        %v898 = vunpack.c.h.b16 %v802
        %v899 = vunpack.c.l.b16 %v803
        %v900 = vunpack.c.l.b16 %v804
        %v901 = vunpack.c.h.b16 %v804
        %v902 = vunpack.c.l.b16 %v805
        %v903 = vpack.c.b16 %v858, %v855
        %v904 = vpack.c.b16 %v859, %v856
        %v905 = vpack.c.b16 %v860, %v857
        %v906 = vpack.c.b16 %v864, %v861
        %v907 = vpack.c.b16 %v865, %v862
        %v908 = vpack.c.b16 %v866, %v863
        %v909 = vpack.c.b16 %v870, %v867
        %v910 = vpack.c.b16 %v871, %v868
        %v911 = vpack.c.b16 %v872, %v869
        %v912 = vpack.c.b16 %v876, %v873
        %v913 = vpack.c.b16 %v877, %v874
        %v914 = vpack.c.b16 %v878, %v875
        %v915 = vpack.c.b16 %v882, %v879
        %v916 = vpack.c.b16 %v883, %v880
        %v917 = vpack.c.b16 %v884, %v881
        %v918 = vpack.c.b16 %v888, %v885
        %v919 = vpack.c.b16 %v889, %v886
        %v920 = vpack.c.b16 %v890, %v887
        %v921 = vpack.c.b16 %v894, %v891
        %v922 = vpack.c.b16 %v895, %v892
        %v923 = vpack.c.b16 %v896, %v893
        %v924 = vpack.c.b16 %v900, %v897
        %v925 = vpack.c.b16 %v901, %v898
        %v926 = vpack.c.b16 %v902, %v899
        %951 = vmatprep.subr.bf16.mxu0 %v904
        %952 = vmatpush1.bf16.msra.mxu0 %v903
        %953 = vmatprep.subr.bf16.mxu0 %v907
        %954 = vmatpush1.bf16.msra.mxu0 %v906
        %955 = vmatprep.subr.bf16.mxu0 %v910
        %956 = vmatpush1.bf16.msra.mxu0 %v909
        %957 = vmatprep.subr.bf16.mxu0 %v913
        %958 = vmatpush1.bf16.msra.mxu0 %v912
        %959 = vmatprep.subr.bf16.mxu0 %v916
        %960 = vmatpush1.bf16.msra.mxu0 %v915
        %961 = vmatprep.subr.bf16.mxu0 %v919
        %962 = vmatpush1.bf16.msra.mxu0 %v918
        %963 = vmatprep.subr.bf16.mxu0 %v922
        %964 = vmatpush1.bf16.msra.mxu0 %v921
        %965 = vmatprep.subr.bf16.mxu0 %v925
        %966 = vmatpush1.bf16.msra.mxu0 %v924
        %967 = vmatprep.subr.bf16.mxu0 0
        %968 = vmatpush1.bf16.msra.mxu0 0
        %969 = vmatprep.subr.bf16.mxu0 0
        %970 = vmatpush1.bf16.msra.mxu0 0
        %971 = vmatprep.subr.bf16.mxu0 0
        %972 = vmatpush1.bf16.msra.mxu0 0
        %973 = vmatprep.subr.bf16.mxu0 0
        %974 = vmatpush1.bf16.msra.mxu0 0
        %975 = vmatprep.subr.bf16.mxu0 0
        %976 = vmatpush1.bf16.msra.mxu0 0
        %977 = vmatprep.subr.bf16.mxu0 0
        %978 = vmatpush1.bf16.msra.mxu0 0
        %979 = vmatprep.subr.bf16.mxu0 0
        %980 = vmatpush1.bf16.msra.mxu0 0
        %981 = vmatprep.subr.bf16.mxu0 0
        %982 = vmatpush1.bf16.msra.mxu0 0
        %983 = vmatprep.mubr.bf16.mxu0 0
        %984 = vmatmul.mubr.bf16.gmra.mrb[0].mxu0 %v770
        %v985 = vpop.f32.mrb[0].mxu0
        %v986 = vadd.f32 %v811, %v985
        %v987 = vpop.f32.mrb[0].mxu0
        %v988 = vadd.f32 %v815, %v987
        %v989 = vpop.f32.mrb[0].mxu0
        %v990 = vadd.f32 %v811, %v989
        %v991 = vpop.f32.mrb[0].mxu0
        %v992 = vadd.f32 %v815, %v991
        %993 = vmatprep.mubr.bf16.mxu0 0
        %994 = vmatmul.mubr.bf16.gmra.mrb[0].mxu0 %v771
        %v995 = vpop.f32.mrb[0].mxu0
        %v996 = vadd.f32 %v811, %v995
        %v997 = vpop.f32.mrb[0].mxu0
        %v998 = vadd.f32 %v815, %v997
        %v999 = vpop.f32.mrb[0].mxu0
        %v1000 = vadd.f32 %v811, %v999
        %v1001 = vpop.f32.mrb[0].mxu0
        %v1002 = vadd.f32 %v815, %v1001
        %1003 = vmatprep.mubr.bf16.mxu0 0
        %1004 = vmatmul.mubr.bf16.gmra.mrb[0].mxu0 %v772
        %v1005 = vpop.f32.mrb[0].mxu0
        %v1006 = vadd.f32 %v811, %v1005
        %v1007 = vpop.f32.mrb[0].mxu0
        %v1008 = vadd.f32 %v815, %v1007
        %v1009 = vpop.f32.mrb[0].mxu0
        %v1010 = vadd.f32 %v811, %v1009
        %v1011 = vpop.f32.mrb[0].mxu0
        %v1012 = vadd.f32 %v815, %v1011
        %1013 = vmatprep.mubr.bf16.mxu0 0
        %1014 = vmatmul.mubr.bf16.gmra.mrb[0].mxu0 %v773
        %v1015 = vpop.f32.mrb[0].mxu0
        %v1016 = vadd.f32 %v811, %v1015
        %v1017 = vpop.f32.mrb[0].mxu0
        %v1018 = vadd.f32 %v815, %v1017
        %v1019 = vpop.f32.mrb[0].mxu0
        %v1020 = vadd.f32 %v811, %v1019
        %v1021 = vpop.f32.mrb[0].mxu0
        %v1022 = vadd.f32 %v815, %v1021
        %1023 = vdwg.mxu0
        %1024 = vmatprep.subr.bf16.mxu0 0
        %1025 = vmatpush1.bf16.msra.mxu0 %v905
        %1026 = vmatprep.subr.bf16.mxu0 0
        %1027 = vmatpush1.bf16.msra.mxu0 %v908
        %1028 = vmatprep.subr.bf16.mxu0 0
        %1029 = vmatpush1.bf16.msra.mxu0 %v911
        %1030 = vmatprep.subr.bf16.mxu0 0
        %1031 = vmatpush1.bf16.msra.mxu0 %v914
        %1032 = vmatprep.subr.bf16.mxu0 0
        %1033 = vmatpush1.bf16.msra.mxu0 %v917
        %1034 = vmatprep.subr.bf16.mxu0 0
        %1035 = vmatpush1.bf16.msra.mxu0 %v920
        %1036 = vmatprep.subr.bf16.mxu0 0
        %1037 = vmatpush1.bf16.msra.mxu0 %v923
        %1038 = vmatprep.subr.bf16.mxu0 0
        %1039 = vmatpush1.bf16.msra.mxu0 %v926
        %1040 = vmatprep.subr.bf16.mxu0 0
        %1041 = vmatpush1.bf16.msra.mxu0 0
        %1042 = vmatprep.subr.bf16.mxu0 0
        %1043 = vmatpush1.bf16.msra.mxu0 0
        %1044 = vmatprep.subr.bf16.mxu0 0
        %1045 = vmatpush1.bf16.msra.mxu0 0
        %1046 = vmatprep.subr.bf16.mxu0 0
        %1047 = vmatpush1.bf16.msra.mxu0 0
        %1048 = vmatprep.subr.bf16.mxu0 0
        %1049 = vmatpush1.bf16.msra.mxu0 0
        %1050 = vmatprep.subr.bf16.mxu0 0
        %1051 = vmatpush1.bf16.msra.mxu0 0
        %1052 = vmatprep.subr.bf16.mxu0 0
        %1053 = vmatpush1.bf16.msra.mxu0 0
        %1054 = vmatprep.subr.bf16.mxu0 0
        %1055 = vmatpush1.bf16.msra.mxu0 0
        %1056 = vmatprep.mubr.bf16.mxu0 0
        %1057 = vmatmul.mubr.bf16.gmra.mrb[0].mxu0 %v770
        %v1058 = vpop.f32.mrb[0].mxu0
        %v1059 = vadd.f32 %v819, %v1058
        %v1060 = vpop.f32.mrb[0].mxu0
        %v1061 = vpop.f32.mrb[0].mxu0
        %v1062 = vadd.f32 %v819, %v1061
        %v1063 = vpop.f32.mrb[0].mxu0
        %1064 = vmatprep.mubr.bf16.mxu0 0
        %1065 = vmatmul.mubr.bf16.gmra.mrb[0].mxu0 %v771
        %v1066 = vpop.f32.mrb[0].mxu0
        %v1067 = vadd.f32 %v819, %v1066
        %v1068 = vpop.f32.mrb[0].mxu0
        %v1069 = vpop.f32.mrb[0].mxu0
        %v1070 = vadd.f32 %v819, %v1069
        %v1071 = vpop.f32.mrb[0].mxu0
        %1072 = vmatprep.mubr.bf16.mxu0 0
        %1073 = vmatmul.mubr.bf16.gmra.mrb[0].mxu0 %v772
        %v1074 = vpop.f32.mrb[0].mxu0
        %v1075 = vadd.f32 %v819, %v1074
        %v1076 = vpop.f32.mrb[0].mxu0
        %v1077 = vpop.f32.mrb[0].mxu0
        %v1078 = vadd.f32 %v819, %v1077
        %v1079 = vpop.f32.mrb[0].mxu0
        %1080 = vmatprep.mubr.bf16.mxu0 0
        %1081 = vmatmul.mubr.bf16.gmra.mrb[0].mxu0 %v773
        %v1082 = vpop.f32.mrb[0].mxu0
        %v1083 = vadd.f32 %v819, %v1082
        %v1084 = vpop.f32.mrb[0].mxu0
        %v1085 = vpop.f32.mrb[0].mxu0
        %v1086 = vadd.f32 %v819, %v1085
        %v1087 = vpop.f32.mrb[0].mxu0
        %1088 = vdwg.mxu0
        %v1089 = vld [vmem:[#allocation6] sm:$0xff]
        %v1090 = vld [vmem:[#allocation6 + $0x8] sm:$0xff]
        %v1091 = vld [vmem:[#allocation6 + $0x10] sm:$0xff]
        %v1092 = vld [vmem:[#allocation6 + $0x18] sm:$0xff]
        %v1093 = vld [vmem:[#allocation6 + $0x20] sm:$0xff]
        %v1094 = vld [vmem:[#allocation6 + $0x28] sm:$0xff]
        %v1095 = vld [vmem:[#allocation6 + $0x30] sm:$0xff]
        %v1096 = vld [vmem:[#allocation6 + $0x38] sm:$0xff]
        %v1097 = vld [vmem:[#allocation6 + $0x40] sm:$0xff]
        %v1098 = vld [vmem:[#allocation6 + $0x48] sm:$0xff]
        %v1099 = vld [vmem:[#allocation6 + $0x50] sm:$0xff]
        %v1100 = vld [vmem:[#allocation6 + $0x58] sm:$0xff]
        %v1101 = vld [vmem:[#allocation6 + $0x60] sm:$0xff]
        %v1102 = vld [vmem:[#allocation6 + $0x68] sm:$0xff]
        %v1103 = vld [vmem:[#allocation6 + $0x70] sm:$0xff]
        %v1104 = vld [vmem:[#allocation6 + $0x78] sm:$0xff]
        %v1105 = vld [vmem:[#allocation6 + $0x80] sm:$0xff]
        %v1106 = vld [vmem:[#allocation6 + $0x88] sm:$0xff]
        %v1107 = vld [vmem:[#allocation6 + $0x90] sm:$0xff]
        %v1108 = vld [vmem:[#allocation6 + $0x98] sm:$0xff]
        %v1109 = vld [vmem:[#allocation6 + $0xa0] sm:$0xff]
        %v1110 = vld [vmem:[#allocation6 + $0xa8] sm:$0xff]
        %v1111 = vld [vmem:[#allocation6 + $0xb0] sm:$0xff]
        %v1112 = vld [vmem:[#allocation6 + $0xb8] sm:$0xff]
        %v1113 = vld [vmem:[#allocation6 + $0xc0] sm:$0xff]
        %v1114 = vld [vmem:[#allocation6 + $0xc8] sm:$0xff]
        %v1115 = vld [vmem:[#allocation6 + $0xd0] sm:$0xff]
        %v1116 = vld [vmem:[#allocation6 + $0xd8] sm:$0xff]
        %v1117 = vld [vmem:[#allocation6 + $0xe0] sm:$0xff]
        %v1118 = vld [vmem:[#allocation6 + $0xe8] sm:$0xff]
        %v1119 = vld [vmem:[#allocation6 + $0xf0] sm:$0xff]
        %v1120 = vld [vmem:[#allocation6 + $0xf8] sm:$0xff]
        %v1121 = vld [vmem:[#allocation4] sm:$0xff]
        %v1122 = vld [vmem:[#allocation4 + $0x8] sm:$0xff]
        %v1123 = vld [vmem:[#allocation4 + $0x10] sm:$0xff]
        %v1124 = vld [vmem:[#allocation4 + $0x18] sm:$0xff]
        %v1125 = vld [vmem:[#allocation4 + $0x20] sm:$0xff]
        %v1126 = vld [vmem:[#allocation4 + $0x28] sm:$0xff]
        %v1127 = vld [vmem:[#allocation4 + $0x30] sm:$0xff]
        %v1128 = vld [vmem:[#allocation4 + $0x38] sm:$0xff]
        %v1129 = vpack.c.bf16 %v990, %v986
        %v1130 = vpack.c.bf16 %v1000, %v996
        %v1131 = vpack.c.bf16 %v1010, %v1006
        %v1132 = vpack.c.bf16 %v1020, %v1016
        %v1133 = vpack.c.bf16 %v992, %v988
        %v1134 = vpack.c.bf16 %v1002, %v998
        %v1135 = vpack.c.bf16 %v1012, %v1008
        %v1136 = vpack.c.bf16 %v1022, %v1018
        %vm1137 = vcmask 261120
        %v1139 = vsel %vm1137, %v1129, 0
        %v1142 = vsel %vm1137, %v1130, 0
        %v1145 = vsel %vm1137, %v1131, 0
        %v1148 = vsel %vm1137, %v1132, 0
        %v1151 = vsel %vm1137, %v1133, 0
        %v1154 = vsel %vm1137, %v1134, 0
        %v1157 = vsel %vm1137, %v1135, 0
        %v1160 = vsel %vm1137, %v1136, 0
        %1162 = vmatprep.subr.bf16.mxu0 0
        %1163 = vmatpush1.bf16.xpose.msra.mxu0 %v1151
        %1164 = vmatprep.subr.bf16.mxu0 0
        %1165 = vmatpush1.bf16.xpose.msra.mxu0 %v1154
        %1166 = vmatprep.subr.bf16.mxu0 0
        %1167 = vmatpush1.bf16.xpose.msra.mxu0 %v1157
        %1168 = vmatprep.subr.bf16.mxu0 0
        %1169 = vmatpush1.bf16.xpose.msra.mxu0 %v1160
        %1170 = vmatprep.subr.bf16.mxu0 0
        %1171 = vmatpush1.bf16.xpose.msra.mxu0 0
        %1172 = vmatprep.subr.bf16.mxu0 0
        %1173 = vmatpush1.bf16.xpose.msra.mxu0 0
        %1174 = vmatprep.subr.bf16.mxu0 0
        %1175 = vmatpush1.bf16.xpose.msra.mxu0 0
        %1176 = vmatprep.subr.bf16.mxu0 0
        %1177 = vmatpush1.bf16.xpose.msra.mxu0 0
        %1178 = vmatprep.subr.bf16.mxu0 0
        %1179 = vmatpush1.bf16.xpose.msra.mxu0 0
        %1180 = vmatprep.subr.bf16.mxu0 0
        %1181 = vmatpush1.bf16.xpose.msra.mxu0 0
        %1182 = vmatprep.subr.bf16.mxu0 0
        %1183 = vmatpush1.bf16.xpose.msra.mxu0 0
        %1184 = vmatprep.subr.bf16.mxu0 0
        %1185 = vmatpush1.bf16.xpose.msra.mxu0 0
        %1186 = vmatprep.subr.bf16.mxu0 0
        %1187 = vmatpush1.bf16.xpose.msra.mxu0 0
        %1188 = vmatprep.subr.bf16.mxu0 0
        %1189 = vmatpush1.bf16.xpose.msra.mxu0 0
        %1190 = vmatprep.subr.bf16.mxu0 0
        %1191 = vmatpush1.bf16.xpose.msra.mxu0 0
        %1192 = vmatprep.subr.bf16.mxu0 0
        %1193 = vmatpush1.bf16.xpose.msra.mxu0 0
        %1194 = vmatprep.mubr.bf16.mxu0 0
        %1195 = vmatmul.mubr.bf16.gmra.mrb[0].mxu0 %v1139
        %v1196 = vpop.f32.mrb[0].mxu0
        %v1197 = vadd.f32 %v1089, %v1196
        %v1198 = vpop.f32.mrb[0].mxu0
        %v1199 = vpop.f32.mrb[0].mxu0
        %v1200 = vadd.f32 %v1090, %v1199
        %v1201 = vpop.f32.mrb[0].mxu0
        %1202 = vmatprep.mubr.bf16.mxu0 0
        %1203 = vmatmul.mubr.bf16.gmra.mrb[0].mxu0 %v1142
        %v1204 = vpop.f32.mrb[0].mxu0
        %v1205 = vadd.f32 %v1091, %v1204
        %v1206 = vpop.f32.mrb[0].mxu0
        %v1207 = vpop.f32.mrb[0].mxu0
        %v1208 = vadd.f32 %v1092, %v1207
        %v1209 = vpop.f32.mrb[0].mxu0
        %1210 = vmatprep.mubr.bf16.mxu0 0
        %1211 = vmatmul.mubr.bf16.gmra.mrb[0].mxu0 %v1145
        %v1212 = vpop.f32.mrb[0].mxu0
        %v1213 = vadd.f32 %v1093, %v1212
        %v1214 = vpop.f32.mrb[0].mxu0
        %v1215 = vpop.f32.mrb[0].mxu0
        %v1216 = vadd.f32 %v1094, %v1215
        %v1217 = vpop.f32.mrb[0].mxu0
        %1218 = vmatprep.mubr.bf16.mxu0 0
        %1219 = vmatmul.mubr.bf16.gmra.mrb[0].mxu0 %v1148
        %v1220 = vpop.f32.mrb[0].mxu0
        %v1221 = vadd.f32 %v1095, %v1220
        %v1222 = vpop.f32.mrb[0].mxu0
        %v1223 = vpop.f32.mrb[0].mxu0
        %v1224 = vadd.f32 %v1096, %v1223
        %v1225 = vpop.f32.mrb[0].mxu0
        %1226 = vdwg.mxu0
        %v1227 = vadd.f32 %v1197, %v1121
        %v1228 = vadd.f32 %v1200, %v1122
        %v1229 = vadd.f32 %v1205, %v1123
        %v1230 = vadd.f32 %v1208, %v1124
        %v1231 = vadd.f32 %v1213, %v1125
        %v1232 = vadd.f32 %v1216, %v1126
        %v1233 = vadd.f32 %v1221, %v1127
        %v1234 = vadd.f32 %v1224, %v1128
        %vm1235 = vcmask 523264
        %v1236 = vsel %vm1235, %v1227, -inf
        %1237 = vmax.xlane.f32.xlu0 %v1236
        %v1238 = vpop.xlane.xlu0 %1237
        %v1239 = vsel %vm1235, %v1228, -inf
        %1240 = vmax.xlane.f32.xlu0 %v1239
        %v1241 = vpop.xlane.xlu0 %1240
        %v1242 = vsel %vm1235, %v1229, -inf
        %1243 = vmax.xlane.f32.xlu0 %v1242
        %v1244 = vpop.xlane.xlu0 %1243
        %v1245 = vsel %vm1235, %v1230, -inf
        %1246 = vmax.xlane.f32.xlu0 %v1245
        %v1247 = vpop.xlane.xlu0 %1246
        %v1248 = vsel %vm1235, %v1231, -inf
        %1249 = vmax.xlane.f32.xlu0 %v1248
        %v1250 = vpop.xlane.xlu0 %1249
        %v1251 = vsel %vm1235, %v1232, -inf
        %1252 = vmax.xlane.f32.xlu0 %v1251
        %v1253 = vpop.xlane.xlu0 %1252
        %v1254 = vsel %vm1235, %v1233, -inf
        %1255 = vmax.xlane.f32.xlu0 %v1254
        %v1256 = vpop.xlane.xlu0 %1255
        %v1257 = vsel %vm1235, %v1234, -inf
        %1258 = vmax.xlane.f32.xlu0 %v1257
        %v1259 = vpop.xlane.xlu0 %1258
        %v1260 = vsub.f32 %v1227, %v1238
        %v1261 = vsub.f32 %v1228, %v1241
        %v1262 = vsub.f32 %v1229, %v1244
        %v1263 = vsub.f32 %v1230, %v1247
        %v1264 = vsub.f32 %v1231, %v1250
        %v1265 = vsub.f32 %v1232, %v1253
        %v1266 = vsub.f32 %v1233, %v1256
        %v1267 = vsub.f32 %v1234, %v1259
        %v1268 = vmul.f32 %v1260, 1.442695
        %v1269 = vpow.pop %v1268
        %v1270 = vmul.f32 %v1261, 1.442695
        %v1271 = vpow.pop %v1270
        %v1272 = vmul.f32 %v1262, 1.442695
        %v1273 = vpow.pop %v1272
        %v1274 = vmul.f32 %v1263, 1.442695
        %v1275 = vpow.pop %v1274
        %v1276 = vmul.f32 %v1264, 1.442695
        %v1277 = vpow.pop %v1276
        %v1278 = vmul.f32 %v1265, 1.442695
        %v1279 = vpow.pop %v1278
        %v1280 = vmul.f32 %v1266, 1.442695
        %v1281 = vpow.pop %v1280
        %v1282 = vmul.f32 %v1267, 1.442695
        %v1283 = vpow.pop %v1282
        %v1284 = vsel %vm1235, %v1269, 0.0
        %1285 = vadd.xlane.f32.xlu0 %v1284
        %v1286 = vpop.xlane.xlu0 %1285
        %v1287 = vsel %vm1235, %v1271, 0.0
        %1288 = vadd.xlane.f32.xlu0 %v1287
        %v1289 = vpop.xlane.xlu0 %1288
        %v1290 = vsel %vm1235, %v1273, 0.0
        %1291 = vadd.xlane.f32.xlu0 %v1290
        %v1292 = vpop.xlane.xlu0 %1291
        %v1293 = vsel %vm1235, %v1275, 0.0
        %1294 = vadd.xlane.f32.xlu0 %v1293
        %v1295 = vpop.xlane.xlu0 %1294
        %v1296 = vsel %vm1235, %v1277, 0.0
        %1297 = vadd.xlane.f32.xlu0 %v1296
        %v1298 = vpop.xlane.xlu0 %1297
        %v1299 = vsel %vm1235, %v1279, 0.0
        %1300 = vadd.xlane.f32.xlu0 %v1299
        %v1301 = vpop.xlane.xlu0 %1300
        %v1302 = vsel %vm1235, %v1281, 0.0
        %1303 = vadd.xlane.f32.xlu0 %v1302
        %v1304 = vpop.xlane.xlu0 %1303
        %v1305 = vsel %vm1235, %v1283, 0.0
        %1306 = vadd.xlane.f32.xlu0 %v1305
        %v1307 = vpop.xlane.xlu0 %1306
        %v1308 = vrcp.pop %v1286
        %v1309 = vmul.f32 %v1269, %v1308
        %v1310 = vrcp.pop %v1289
        %v1311 = vmul.f32 %v1271, %v1310
        %v1312 = vrcp.pop %v1292
        %v1313 = vmul.f32 %v1273, %v1312
        %v1314 = vrcp.pop %v1295
        %v1315 = vmul.f32 %v1275, %v1314
        %v1316 = vrcp.pop %v1298
        %v1317 = vmul.f32 %v1277, %v1316
        %v1318 = vrcp.pop %v1301
        %v1319 = vmul.f32 %v1279, %v1318
        %v1320 = vrcp.pop %v1304
        %v1321 = vmul.f32 %v1281, %v1320
        %v1322 = vrcp.pop %v1307
        %v1323 = vmul.f32 %v1283, %v1322
        %v1324 = vpack.c.bf16 %v1311, %v1309
        %v1325 = vpack.c.bf16 %v1315, %v1313
        %v1326 = vpack.c.bf16 %v1319, %v1317
        %v1327 = vpack.c.bf16 %v1323, %v1321
        %v1328 = vpack.c.bf16 %v1062, %v1059
        %v1329 = vpack.c.bf16 %v1070, %v1067
        %v1330 = vpack.c.bf16 %v1078, %v1075
        %v1331 = vpack.c.bf16 %v1086, %v1083
        %v1333 = vsel %vm1235, %v1324, 0
        %v1336 = vsel %vm1235, %v1325, 0
        %v1339 = vsel %vm1235, %v1326, 0
        %v1342 = vsel %vm1235, %v1327, 0
        %1344 = vmatprep.subr.bf16.mxu0 0
        %1345 = vmatpush1.bf16.msra.mxu0 %v1328
        %1346 = vmatprep.subr.bf16.mxu0 0
        %1347 = vmatpush1.bf16.msra.mxu0 %v1329
        %1348 = vmatprep.subr.bf16.mxu0 0
        %1349 = vmatpush1.bf16.msra.mxu0 %v1330
        %1350 = vmatprep.subr.bf16.mxu0 0
        %1351 = vmatpush1.bf16.msra.mxu0 %v1331
        %1352 = vmatprep.subr.bf16.mxu0 0
        %1353 = vmatpush1.bf16.msra.mxu0 0
        %1354 = vmatprep.subr.bf16.mxu0 0
        %1355 = vmatpush1.bf16.msra.mxu0 0
        %1356 = vmatprep.subr.bf16.mxu0 0
        %1357 = vmatpush1.bf16.msra.mxu0 0
        %1358 = vmatprep.subr.bf16.mxu0 0
        %1359 = vmatpush1.bf16.msra.mxu0 0
        %1360 = vmatprep.subr.bf16.mxu0 0
        %1361 = vmatpush1.bf16.msra.mxu0 0
        %1362 = vmatprep.subr.bf16.mxu0 0
        %1363 = vmatpush1.bf16.msra.mxu0 0
        %1364 = vmatprep.subr.bf16.mxu0 0
        %1365 = vmatpush1.bf16.msra.mxu0 0
        %1366 = vmatprep.subr.bf16.mxu0 0
        %1367 = vmatpush1.bf16.msra.mxu0 0
        %1368 = vmatprep.subr.bf16.mxu0 0
        %1369 = vmatpush1.bf16.msra.mxu0 0
        %1370 = vmatprep.subr.bf16.mxu0 0
        %1371 = vmatpush1.bf16.msra.mxu0 0
        %1372 = vmatprep.subr.bf16.mxu0 0
        %1373 = vmatpush1.bf16.msra.mxu0 0
        %1374 = vmatprep.subr.bf16.mxu0 0
        %1375 = vmatpush1.bf16.msra.mxu0 0
        %1376 = vmatprep.mubr.bf16.mxu0 0
        %1377 = vmatmul.mubr.bf16.gmra.mrb[0].mxu0 %v1333
        %v1378 = vpop.f32.mrb[0].mxu0
        %v1379 = vadd.f32 0.0, %v1378
        %v1380 = vpop.f32.mrb[0].mxu0
        %v1381 = vpop.f32.mrb[0].mxu0
        %v1382 = vadd.f32 0.0, %v1381
        %v1383 = vpop.f32.mrb[0].mxu0
        %1384 = vmatprep.mubr.bf16.mxu0 0
        %1385 = vmatmul.mubr.bf16.gmra.mrb[0].mxu0 %v1336
        %v1386 = vpop.f32.mrb[0].mxu0
        %v1387 = vadd.f32 0.0, %v1386
        %v1388 = vpop.f32.mrb[0].mxu0
        %v1389 = vpop.f32.mrb[0].mxu0
        %v1390 = vadd.f32 0.0, %v1389
        %v1391 = vpop.f32.mrb[0].mxu0
        %1392 = vmatprep.mubr.bf16.mxu0 0
        %1393 = vmatmul.mubr.bf16.gmra.mrb[0].mxu0 %v1339
        %v1394 = vpop.f32.mrb[0].mxu0
        %v1395 = vadd.f32 0.0, %v1394
        %v1396 = vpop.f32.mrb[0].mxu0
        %v1397 = vpop.f32.mrb[0].mxu0
        %v1398 = vadd.f32 0.0, %v1397
        %v1399 = vpop.f32.mrb[0].mxu0
        %1400 = vmatprep.mubr.bf16.mxu0 0
        %1401 = vmatmul.mubr.bf16.gmra.mrb[0].mxu0 %v1342
        %v1402 = vpop.f32.mrb[0].mxu0
        %v1403 = vadd.f32 0.0, %v1402
        %v1404 = vpop.f32.mrb[0].mxu0
        %v1405 = vpop.f32.mrb[0].mxu0
        %v1406 = vadd.f32 0.0, %v1405
        %v1407 = vpop.f32.mrb[0].mxu0
        %1408 = vdwg.mxu0
        %1413 = vrot.lane.b32.xlu0 %v1129, 96
        %v1414 = vpop.permute.xlu0 %1413
        %1415 = vrot.lane.b32.xlu0 %v1130, 96
        %v1416 = vpop.permute.xlu0 %1415
        %1417 = vrot.lane.b32.xlu0 %v1131, 96
        %v1418 = vpop.permute.xlu0 %1417
        %1419 = vrot.lane.b32.xlu0 %v1132, 96
        %v1420 = vpop.permute.xlu0 %1419
        %1425 = vrot.lane.b32.xlu0 %v1133, 96
        %v1426 = vpop.permute.xlu0 %1425
        %1427 = vrot.lane.b32.xlu0 %v1134, 96
        %v1428 = vpop.permute.xlu0 %1427
        %1429 = vrot.lane.b32.xlu0 %v1135, 96
        %v1430 = vpop.permute.xlu0 %1429
        %1431 = vrot.lane.b32.xlu0 %v1136, 96
        %v1432 = vpop.permute.xlu0 %1431
        %v1434 = vsel %vm1137, %v1414, 0
        %v1437 = vsel %vm1137, %v1416, 0
        %v1440 = vsel %vm1137, %v1418, 0
        %v1443 = vsel %vm1137, %v1420, 0
        %v1446 = vsel %vm1137, %v1426, 0
        %v1449 = vsel %vm1137, %v1428, 0
        %v1452 = vsel %vm1137, %v1430, 0
        %v1455 = vsel %vm1137, %v1432, 0
        %1457 = vmatprep.subr.bf16.mxu0 0
        %1458 = vmatpush1.bf16.xpose.msra.mxu0 %v1446
        %1459 = vmatprep.subr.bf16.mxu0 0
        %1460 = vmatpush1.bf16.xpose.msra.mxu0 %v1449
        %1461 = vmatprep.subr.bf16.mxu0 0
        %1462 = vmatpush1.bf16.xpose.msra.mxu0 %v1452
        %1463 = vmatprep.subr.bf16.mxu0 0
        %1464 = vmatpush1.bf16.xpose.msra.mxu0 %v1455
        %1465 = vmatprep.subr.bf16.mxu0 0
        %1466 = vmatpush1.bf16.xpose.msra.mxu0 0
        %1467 = vmatprep.subr.bf16.mxu0 0
        %1468 = vmatpush1.bf16.xpose.msra.mxu0 0
        %1469 = vmatprep.subr.bf16.mxu0 0
        %1470 = vmatpush1.bf16.xpose.msra.mxu0 0
        %1471 = vmatprep.subr.bf16.mxu0 0
        %1472 = vmatpush1.bf16.xpose.msra.mxu0 0
        %1473 = vmatprep.subr.bf16.mxu0 0
        %1474 = vmatpush1.bf16.xpose.msra.mxu0 0
        %1475 = vmatprep.subr.bf16.mxu0 0
        %1476 = vmatpush1.bf16.xpose.msra.mxu0 0
        %1477 = vmatprep.subr.bf16.mxu0 0
        %1478 = vmatpush1.bf16.xpose.msra.mxu0 0
        %1479 = vmatprep.subr.bf16.mxu0 0
        %1480 = vmatpush1.bf16.xpose.msra.mxu0 0
        %1481 = vmatprep.subr.bf16.mxu0 0
        %1482 = vmatpush1.bf16.xpose.msra.mxu0 0
        %1483 = vmatprep.subr.bf16.mxu0 0
        %1484 = vmatpush1.bf16.xpose.msra.mxu0 0
        %1485 = vmatprep.subr.bf16.mxu0 0
        %1486 = vmatpush1.bf16.xpose.msra.mxu0 0
        %1487 = vmatprep.subr.bf16.mxu0 0
        %1488 = vmatpush1.bf16.xpose.msra.mxu0 0
        %1489 = vmatprep.mubr.bf16.mxu0 0
        %1490 = vmatmul.mubr.bf16.gmra.mrb[0].mxu0 %v1434
        %v1491 = vpop.f32.mrb[0].mxu0
        %v1492 = vadd.f32 %v1097, %v1491
        %v1493 = vpop.f32.mrb[0].mxu0
        %v1494 = vpop.f32.mrb[0].mxu0
        %v1495 = vadd.f32 %v1098, %v1494
        %v1496 = vpop.f32.mrb[0].mxu0
        %1497 = vmatprep.mubr.bf16.mxu0 0
        %1498 = vmatmul.mubr.bf16.gmra.mrb[0].mxu0 %v1437
        %v1499 = vpop.f32.mrb[0].mxu0
        %v1500 = vadd.f32 %v1099, %v1499
        %v1501 = vpop.f32.mrb[0].mxu0
        %v1502 = vpop.f32.mrb[0].mxu0
        %v1503 = vadd.f32 %v1100, %v1502
        %v1504 = vpop.f32.mrb[0].mxu0
        %1505 = vmatprep.mubr.bf16.mxu0 0
        %1506 = vmatmul.mubr.bf16.gmra.mrb[0].mxu0 %v1440
        %v1507 = vpop.f32.mrb[0].mxu0
        %v1508 = vadd.f32 %v1101, %v1507
        %v1509 = vpop.f32.mrb[0].mxu0
        %v1510 = vpop.f32.mrb[0].mxu0
        %v1511 = vadd.f32 %v1102, %v1510
        %v1512 = vpop.f32.mrb[0].mxu0
        %1513 = vmatprep.mubr.bf16.mxu0 0
        %1514 = vmatmul.mubr.bf16.gmra.mrb[0].mxu0 %v1443
        %v1515 = vpop.f32.mrb[0].mxu0
        %v1516 = vadd.f32 %v1103, %v1515
        %v1517 = vpop.f32.mrb[0].mxu0
        %v1518 = vpop.f32.mrb[0].mxu0
        %v1519 = vadd.f32 %v1104, %v1518
        %v1520 = vpop.f32.mrb[0].mxu0
        %1521 = vdwg.mxu0
        %v1522 = vadd.f32 %v1492, %v1121
        %v1523 = vadd.f32 %v1495, %v1122
        %v1524 = vadd.f32 %v1500, %v1123
        %v1525 = vadd.f32 %v1503, %v1124
        %v1526 = vadd.f32 %v1508, %v1125
        %v1527 = vadd.f32 %v1511, %v1126
        %v1528 = vadd.f32 %v1516, %v1127
        %v1529 = vadd.f32 %v1519, %v1128
        %v1530 = vsel %vm1235, %v1522, -inf
        %1531 = vmax.xlane.f32.xlu0 %v1530
        %v1532 = vpop.xlane.xlu0 %1531
        %v1533 = vsel %vm1235, %v1523, -inf
        %1534 = vmax.xlane.f32.xlu0 %v1533
        %v1535 = vpop.xlane.xlu0 %1534
        %v1536 = vsel %vm1235, %v1524, -inf
        %1537 = vmax.xlane.f32.xlu0 %v1536
        %v1538 = vpop.xlane.xlu0 %1537
        %v1539 = vsel %vm1235, %v1525, -inf
        %1540 = vmax.xlane.f32.xlu0 %v1539
        %v1541 = vpop.xlane.xlu0 %1540
        %v1542 = vsel %vm1235, %v1526, -inf
        %1543 = vmax.xlane.f32.xlu0 %v1542
        %v1544 = vpop.xlane.xlu0 %1543
        %v1545 = vsel %vm1235, %v1527, -inf
        %1546 = vmax.xlane.f32.xlu0 %v1545
        %v1547 = vpop.xlane.xlu0 %1546
        %v1548 = vsel %vm1235, %v1528, -inf
        %1549 = vmax.xlane.f32.xlu0 %v1548
        %v1550 = vpop.xlane.xlu0 %1549
        %v1551 = vsel %vm1235, %v1529, -inf
        %1552 = vmax.xlane.f32.xlu0 %v1551
        %v1553 = vpop.xlane.xlu0 %1552
        %v1554 = vsub.f32 %v1522, %v1532
        %v1555 = vsub.f32 %v1523, %v1535
        %v1556 = vsub.f32 %v1524, %v1538
        %v1557 = vsub.f32 %v1525, %v1541
        %v1558 = vsub.f32 %v1526, %v1544
        %v1559 = vsub.f32 %v1527, %v1547
        %v1560 = vsub.f32 %v1528, %v1550
        %v1561 = vsub.f32 %v1529, %v1553
        %v1562 = vmul.f32 %v1554, 1.442695
        %v1563 = vpow.pop %v1562
        %v1564 = vmul.f32 %v1555, 1.442695
        %v1565 = vpow.pop %v1564
        %v1566 = vmul.f32 %v1556, 1.442695
        %v1567 = vpow.pop %v1566
        %v1568 = vmul.f32 %v1557, 1.442695
        %v1569 = vpow.pop %v1568
        %v1570 = vmul.f32 %v1558, 1.442695
        %v1571 = vpow.pop %v1570
        %v1572 = vmul.f32 %v1559, 1.442695
        %v1573 = vpow.pop %v1572
        %v1574 = vmul.f32 %v1560, 1.442695
        %v1575 = vpow.pop %v1574
        %v1576 = vmul.f32 %v1561, 1.442695
        %v1577 = vpow.pop %v1576
        %v1578 = vsel %vm1235, %v1563, 0.0
        %1579 = vadd.xlane.f32.xlu0 %v1578
        %v1580 = vpop.xlane.xlu0 %1579
        %v1581 = vsel %vm1235, %v1565, 0.0
        %1582 = vadd.xlane.f32.xlu0 %v1581
        %v1583 = vpop.xlane.xlu0 %1582
        %v1584 = vsel %vm1235, %v1567, 0.0
        %1585 = vadd.xlane.f32.xlu0 %v1584
        %v1586 = vpop.xlane.xlu0 %1585
        %v1587 = vsel %vm1235, %v1569, 0.0
        %1588 = vadd.xlane.f32.xlu0 %v1587
        %v1589 = vpop.xlane.xlu0 %1588
        %v1590 = vsel %vm1235, %v1571, 0.0
        %1591 = vadd.xlane.f32.xlu0 %v1590
        %v1592 = vpop.xlane.xlu0 %1591
        %v1593 = vsel %vm1235, %v1573, 0.0
        %1594 = vadd.xlane.f32.xlu0 %v1593
        %v1595 = vpop.xlane.xlu0 %1594
        %v1596 = vsel %vm1235, %v1575, 0.0
        %1597 = vadd.xlane.f32.xlu0 %v1596
        %v1598 = vpop.xlane.xlu0 %1597
        %v1599 = vsel %vm1235, %v1577, 0.0
        %1600 = vadd.xlane.f32.xlu0 %v1599
        %v1601 = vpop.xlane.xlu0 %1600
        %v1602 = vrcp.pop %v1580
        %v1603 = vmul.f32 %v1563, %v1602
        %v1604 = vrcp.pop %v1583
        %v1605 = vmul.f32 %v1565, %v1604
        %v1606 = vrcp.pop %v1586
        %v1607 = vmul.f32 %v1567, %v1606
        %v1608 = vrcp.pop %v1589
        %v1609 = vmul.f32 %v1569, %v1608
        %v1610 = vrcp.pop %v1592
        %v1611 = vmul.f32 %v1571, %v1610
        %v1612 = vrcp.pop %v1595
        %v1613 = vmul.f32 %v1573, %v1612
        %v1614 = vrcp.pop %v1598
        %v1615 = vmul.f32 %v1575, %v1614
        %v1616 = vrcp.pop %v1601
        %v1617 = vmul.f32 %v1577, %v1616
        %v1618 = vpack.c.bf16 %v1605, %v1603
        %v1619 = vpack.c.bf16 %v1609, %v1607
        %v1620 = vpack.c.bf16 %v1613, %v1611
        %v1621 = vpack.c.bf16 %v1617, %v1615
        %1626 = vrot.lane.b32.xlu0 %v1328, 96
        %v1627 = vpop.permute.xlu0 %1626
        %1628 = vrot.lane.b32.xlu0 %v1329, 96
        %v1629 = vpop.permute.xlu0 %1628
        %1630 = vrot.lane.b32.xlu0 %v1330, 96
        %v1631 = vpop.permute.xlu0 %1630
        %1632 = vrot.lane.b32.xlu0 %v1331, 96
        %v1633 = vpop.permute.xlu0 %1632
        %v1639 = vsel %vm1235, %v1618, 0
        %v1642 = vsel %vm1235, %v1619, 0
        %v1645 = vsel %vm1235, %v1620, 0
        %v1648 = vsel %vm1235, %v1621, 0
        %1650 = vmatprep.subr.bf16.mxu0 0
        %1651 = vmatpush1.bf16.msra.mxu0 %v1627
        %1652 = vmatprep.subr.bf16.mxu0 0
        %1653 = vmatpush1.bf16.msra.mxu0 %v1629
        %1654 = vmatprep.subr.bf16.mxu0 0
        %1655 = vmatpush1.bf16.msra.mxu0 %v1631
        %1656 = vmatprep.subr.bf16.mxu0 0
        %1657 = vmatpush1.bf16.msra.mxu0 %v1633
        %1658 = vmatprep.subr.bf16.mxu0 0
        %1659 = vmatpush1.bf16.msra.mxu0 0
        %1660 = vmatprep.subr.bf16.mxu0 0
        %1661 = vmatpush1.bf16.msra.mxu0 0
        %1662 = vmatprep.subr.bf16.mxu0 0
        %1663 = vmatpush1.bf16.msra.mxu0 0
        %1664 = vmatprep.subr.bf16.mxu0 0
        %1665 = vmatpush1.bf16.msra.mxu0 0
        %1666 = vmatprep.subr.bf16.mxu0 0
        %1667 = vmatpush1.bf16.msra.mxu0 0
        %1668 = vmatprep.subr.bf16.mxu0 0
        %1669 = vmatpush1.bf16.msra.mxu0 0
        %1670 = vmatprep.subr.bf16.mxu0 0
        %1671 = vmatpush1.bf16.msra.mxu0 0
        %1672 = vmatprep.subr.bf16.mxu0 0
        %1673 = vmatpush1.bf16.msra.mxu0 0
        %1674 = vmatprep.subr.bf16.mxu0 0
        %1675 = vmatpush1.bf16.msra.mxu0 0
        %1676 = vmatprep.subr.bf16.mxu0 0
        %1677 = vmatpush1.bf16.msra.mxu0 0
        %1678 = vmatprep.subr.bf16.mxu0 0
        %1679 = vmatpush1.bf16.msra.mxu0 0
        %1680 = vmatprep.subr.bf16.mxu0 0
        %1681 = vmatpush1.bf16.msra.mxu0 0
        %1682 = vmatprep.mubr.bf16.mxu0 0
        %1683 = vmatmul.mubr.bf16.gmra.mrb[0].mxu0 %v1639
        %v1684 = vpop.f32.mrb[0].mxu0
        %v1685 = vadd.f32 0.0, %v1684
        %v1686 = vpop.f32.mrb[0].mxu0
        %v1687 = vpop.f32.mrb[0].mxu0
        %v1688 = vadd.f32 0.0, %v1687
        %v1689 = vpop.f32.mrb[0].mxu0
        %1690 = vmatprep.mubr.bf16.mxu0 0
        %1691 = vmatmul.mubr.bf16.gmra.mrb[0].mxu0 %v1642
        %v1692 = vpop.f32.mrb[0].mxu0
        %v1693 = vadd.f32 0.0, %v1692
        %v1694 = vpop.f32.mrb[0].mxu0
        %v1695 = vpop.f32.mrb[0].mxu0
        %v1696 = vadd.f32 0.0, %v1695
        %v1697 = vpop.f32.mrb[0].mxu0
        %1698 = vmatprep.mubr.bf16.mxu0 0
        %1699 = vmatmul.mubr.bf16.gmra.mrb[0].mxu0 %v1645
        %v1700 = vpop.f32.mrb[0].mxu0
        %v1701 = vadd.f32 0.0, %v1700
        %v1702 = vpop.f32.mrb[0].mxu0
        %v1703 = vpop.f32.mrb[0].mxu0
        %v1704 = vadd.f32 0.0, %v1703
        %v1705 = vpop.f32.mrb[0].mxu0
        %1706 = vmatprep.mubr.bf16.mxu0 0
        %1707 = vmatmul.mubr.bf16.gmra.mrb[0].mxu0 %v1648
        %v1708 = vpop.f32.mrb[0].mxu0
        %v1709 = vadd.f32 0.0, %v1708
        %v1710 = vpop.f32.mrb[0].mxu0
        %v1711 = vpop.f32.mrb[0].mxu0
        %v1712 = vadd.f32 0.0, %v1711
        %v1713 = vpop.f32.mrb[0].mxu0
        %1714 = vdwg.mxu0
        %1715 = vrot.lane.b32.xlu0 %v1129, 64
        %v1716 = vpop.permute.xlu0 %1715
        %1717 = vrot.lane.b32.xlu0 %v1130, 64
        %v1718 = vpop.permute.xlu0 %1717
        %1719 = vrot.lane.b32.xlu0 %v1131, 64
        %v1720 = vpop.permute.xlu0 %1719
        %1721 = vrot.lane.b32.xlu0 %v1132, 64
        %v1722 = vpop.permute.xlu0 %1721
        %1723 = vrot.lane.b32.xlu0 %v1133, 64
        %v1724 = vpop.permute.xlu0 %1723
        %1725 = vrot.lane.b32.xlu0 %v1134, 64
        %v1726 = vpop.permute.xlu0 %1725
        %1727 = vrot.lane.b32.xlu0 %v1135, 64
        %v1728 = vpop.permute.xlu0 %1727
        %1729 = vrot.lane.b32.xlu0 %v1136, 64
        %v1730 = vpop.permute.xlu0 %1729
        %v1732 = vsel %vm1137, %v1716, 0
        %v1735 = vsel %vm1137, %v1718, 0
        %v1738 = vsel %vm1137, %v1720, 0
        %v1741 = vsel %vm1137, %v1722, 0
        %v1744 = vsel %vm1137, %v1724, 0
        %v1747 = vsel %vm1137, %v1726, 0
        %v1750 = vsel %vm1137, %v1728, 0
        %v1753 = vsel %vm1137, %v1730, 0
        %1755 = vmatprep.subr.bf16.mxu0 0
        %1756 = vmatpush1.bf16.xpose.msra.mxu0 %v1744
        %1757 = vmatprep.subr.bf16.mxu0 0
        %1758 = vmatpush1.bf16.xpose.msra.mxu0 %v1747
        %1759 = vmatprep.subr.bf16.mxu0 0
        %1760 = vmatpush1.bf16.xpose.msra.mxu0 %v1750
        %1761 = vmatprep.subr.bf16.mxu0 0
        %1762 = vmatpush1.bf16.xpose.msra.mxu0 %v1753
        %1763 = vmatprep.subr.bf16.mxu0 0
        %1764 = vmatpush1.bf16.xpose.msra.mxu0 0
        %1765 = vmatprep.subr.bf16.mxu0 0
        %1766 = vmatpush1.bf16.xpose.msra.mxu0 0
        %1767 = vmatprep.subr.bf16.mxu0 0
        %1768 = vmatpush1.bf16.xpose.msra.mxu0 0
        %1769 = vmatprep.subr.bf16.mxu0 0
        %1770 = vmatpush1.bf16.xpose.msra.mxu0 0
        %1771 = vmatprep.subr.bf16.mxu0 0
        %1772 = vmatpush1.bf16.xpose.msra.mxu0 0
        %1773 = vmatprep.subr.bf16.mxu0 0
        %1774 = vmatpush1.bf16.xpose.msra.mxu0 0
        %1775 = vmatprep.subr.bf16.mxu0 0
        %1776 = vmatpush1.bf16.xpose.msra.mxu0 0
        %1777 = vmatprep.subr.bf16.mxu0 0
        %1778 = vmatpush1.bf16.xpose.msra.mxu0 0
        %1779 = vmatprep.subr.bf16.mxu0 0
        %1780 = vmatpush1.bf16.xpose.msra.mxu0 0
        %1781 = vmatprep.subr.bf16.mxu0 0
        %1782 = vmatpush1.bf16.xpose.msra.mxu0 0
        %1783 = vmatprep.subr.bf16.mxu0 0
        %1784 = vmatpush1.bf16.xpose.msra.mxu0 0
        %1785 = vmatprep.subr.bf16.mxu0 0
        %1786 = vmatpush1.bf16.xpose.msra.mxu0 0
        %1787 = vmatprep.mubr.bf16.mxu0 0
        %1788 = vmatmul.mubr.bf16.gmra.mrb[0].mxu0 %v1732
        %v1789 = vpop.f32.mrb[0].mxu0
        %v1790 = vadd.f32 %v1105, %v1789
        %v1791 = vpop.f32.mrb[0].mxu0
        %v1792 = vpop.f32.mrb[0].mxu0
        %v1793 = vadd.f32 %v1106, %v1792
        %v1794 = vpop.f32.mrb[0].mxu0
        %1795 = vmatprep.mubr.bf16.mxu0 0
        %1796 = vmatmul.mubr.bf16.gmra.mrb[0].mxu0 %v1735
        %v1797 = vpop.f32.mrb[0].mxu0
        %v1798 = vadd.f32 %v1107, %v1797
        %v1799 = vpop.f32.mrb[0].mxu0
        %v1800 = vpop.f32.mrb[0].mxu0
        %v1801 = vadd.f32 %v1108, %v1800
        %v1802 = vpop.f32.mrb[0].mxu0
        %1803 = vmatprep.mubr.bf16.mxu0 0
        %1804 = vmatmul.mubr.bf16.gmra.mrb[0].mxu0 %v1738
        %v1805 = vpop.f32.mrb[0].mxu0
        %v1806 = vadd.f32 %v1109, %v1805
        %v1807 = vpop.f32.mrb[0].mxu0
        %v1808 = vpop.f32.mrb[0].mxu0
        %v1809 = vadd.f32 %v1110, %v1808
        %v1810 = vpop.f32.mrb[0].mxu0
        %1811 = vmatprep.mubr.bf16.mxu0 0
        %1812 = vmatmul.mubr.bf16.gmra.mrb[0].mxu0 %v1741
        %v1813 = vpop.f32.mrb[0].mxu0
        %v1814 = vadd.f32 %v1111, %v1813
        %v1815 = vpop.f32.mrb[0].mxu0
        %v1816 = vpop.f32.mrb[0].mxu0
        %v1817 = vadd.f32 %v1112, %v1816
        %v1818 = vpop.f32.mrb[0].mxu0
        %1819 = vdwg.mxu0
        %v1820 = vadd.f32 %v1790, %v1121
        %v1821 = vadd.f32 %v1793, %v1122
        %v1822 = vadd.f32 %v1798, %v1123
        %v1823 = vadd.f32 %v1801, %v1124
        %v1824 = vadd.f32 %v1806, %v1125
        %v1825 = vadd.f32 %v1809, %v1126
        %v1826 = vadd.f32 %v1814, %v1127
        %v1827 = vadd.f32 %v1817, %v1128
        %v1828 = vsel %vm1235, %v1820, -inf
        %1829 = vmax.xlane.f32.xlu0 %v1828
        %v1830 = vpop.xlane.xlu0 %1829
        %v1831 = vsel %vm1235, %v1821, -inf
        %1832 = vmax.xlane.f32.xlu0 %v1831
        %v1833 = vpop.xlane.xlu0 %1832
        %v1834 = vsel %vm1235, %v1822, -inf
        %1835 = vmax.xlane.f32.xlu0 %v1834
        %v1836 = vpop.xlane.xlu0 %1835
        %v1837 = vsel %vm1235, %v1823, -inf
        %1838 = vmax.xlane.f32.xlu0 %v1837
        %v1839 = vpop.xlane.xlu0 %1838
        %v1840 = vsel %vm1235, %v1824, -inf
        %1841 = vmax.xlane.f32.xlu0 %v1840
        %v1842 = vpop.xlane.xlu0 %1841
        %v1843 = vsel %vm1235, %v1825, -inf
        %1844 = vmax.xlane.f32.xlu0 %v1843
        %v1845 = vpop.xlane.xlu0 %1844
        %v1846 = vsel %vm1235, %v1826, -inf
        %1847 = vmax.xlane.f32.xlu0 %v1846
        %v1848 = vpop.xlane.xlu0 %1847
        %v1849 = vsel %vm1235, %v1827, -inf
        %1850 = vmax.xlane.f32.xlu0 %v1849
        %v1851 = vpop.xlane.xlu0 %1850
        %v1852 = vsub.f32 %v1820, %v1830
        %v1853 = vsub.f32 %v1821, %v1833
        %v1854 = vsub.f32 %v1822, %v1836
        %v1855 = vsub.f32 %v1823, %v1839
        %v1856 = vsub.f32 %v1824, %v1842
        %v1857 = vsub.f32 %v1825, %v1845
        %v1858 = vsub.f32 %v1826, %v1848
        %v1859 = vsub.f32 %v1827, %v1851
        %v1860 = vmul.f32 %v1852, 1.442695
        %v1861 = vpow.pop %v1860
        %v1862 = vmul.f32 %v1853, 1.442695
        %v1863 = vpow.pop %v1862
        %v1864 = vmul.f32 %v1854, 1.442695
        %v1865 = vpow.pop %v1864
        %v1866 = vmul.f32 %v1855, 1.442695
        %v1867 = vpow.pop %v1866
        %v1868 = vmul.f32 %v1856, 1.442695
        %v1869 = vpow.pop %v1868
        %v1870 = vmul.f32 %v1857, 1.442695
        %v1871 = vpow.pop %v1870
        %v1872 = vmul.f32 %v1858, 1.442695
        %v1873 = vpow.pop %v1872
        %v1874 = vmul.f32 %v1859, 1.442695
        %v1875 = vpow.pop %v1874
        %v1876 = vsel %vm1235, %v1861, 0.0
        %1877 = vadd.xlane.f32.xlu0 %v1876
        %v1878 = vpop.xlane.xlu0 %1877
        %v1879 = vsel %vm1235, %v1863, 0.0
        %1880 = vadd.xlane.f32.xlu0 %v1879
        %v1881 = vpop.xlane.xlu0 %1880
        %v1882 = vsel %vm1235, %v1865, 0.0
        %1883 = vadd.xlane.f32.xlu0 %v1882
        %v1884 = vpop.xlane.xlu0 %1883
        %v1885 = vsel %vm1235, %v1867, 0.0
        %1886 = vadd.xlane.f32.xlu0 %v1885
        %v1887 = vpop.xlane.xlu0 %1886
        %v1888 = vsel %vm1235, %v1869, 0.0
        %1889 = vadd.xlane.f32.xlu0 %v1888
        %v1890 = vpop.xlane.xlu0 %1889
        %v1891 = vsel %vm1235, %v1871, 0.0
        %1892 = vadd.xlane.f32.xlu0 %v1891
        %v1893 = vpop.xlane.xlu0 %1892
        %v1894 = vsel %vm1235, %v1873, 0.0
        %1895 = vadd.xlane.f32.xlu0 %v1894
        %v1896 = vpop.xlane.xlu0 %1895
        %v1897 = vsel %vm1235, %v1875, 0.0
        %1898 = vadd.xlane.f32.xlu0 %v1897
        %v1899 = vpop.xlane.xlu0 %1898
        %v1900 = vrcp.pop %v1878
        %v1901 = vmul.f32 %v1861, %v1900
        %v1902 = vrcp.pop %v1881
        %v1903 = vmul.f32 %v1863, %v1902
        %v1904 = vrcp.pop %v1884
        %v1905 = vmul.f32 %v1865, %v1904
        %v1906 = vrcp.pop %v1887
        %v1907 = vmul.f32 %v1867, %v1906
        %v1908 = vrcp.pop %v1890
        %v1909 = vmul.f32 %v1869, %v1908
        %v1910 = vrcp.pop %v1893
        %v1911 = vmul.f32 %v1871, %v1910
        %v1912 = vrcp.pop %v1896
        %v1913 = vmul.f32 %v1873, %v1912
        %v1914 = vrcp.pop %v1899
        %v1915 = vmul.f32 %v1875, %v1914
        %v1916 = vpack.c.bf16 %v1903, %v1901
        %v1917 = vpack.c.bf16 %v1907, %v1905
        %v1918 = vpack.c.bf16 %v1911, %v1909
        %v1919 = vpack.c.bf16 %v1915, %v1913
        %1920 = vrot.lane.b32.xlu0 %v1328, 64
        %v1921 = vpop.permute.xlu0 %1920
        %1922 = vrot.lane.b32.xlu0 %v1329, 64
        %v1923 = vpop.permute.xlu0 %1922
        %1924 = vrot.lane.b32.xlu0 %v1330, 64
        %v1925 = vpop.permute.xlu0 %1924
        %1926 = vrot.lane.b32.xlu0 %v1331, 64
        %v1927 = vpop.permute.xlu0 %1926
        %v1933 = vsel %vm1235, %v1916, 0
        %v1936 = vsel %vm1235, %v1917, 0
        %v1939 = vsel %vm1235, %v1918, 0
        %v1942 = vsel %vm1235, %v1919, 0
        %1944 = vmatprep.subr.bf16.mxu0 0
        %1945 = vmatpush1.bf16.msra.mxu0 %v1921
        %1946 = vmatprep.subr.bf16.mxu0 0
        %1947 = vmatpush1.bf16.msra.mxu0 %v1923
        %1948 = vmatprep.subr.bf16.mxu0 0
        %1949 = vmatpush1.bf16.msra.mxu0 %v1925
        %1950 = vmatprep.subr.bf16.mxu0 0
        %1951 = vmatpush1.bf16.msra.mxu0 %v1927
        %1952 = vmatprep.subr.bf16.mxu0 0
        %1953 = vmatpush1.bf16.msra.mxu0 0
        %1954 = vmatprep.subr.bf16.mxu0 0
        %1955 = vmatpush1.bf16.msra.mxu0 0
        %1956 = vmatprep.subr.bf16.mxu0 0
        %1957 = vmatpush1.bf16.msra.mxu0 0
        %1958 = vmatprep.subr.bf16.mxu0 0
        %1959 = vmatpush1.bf16.msra.mxu0 0
        %1960 = vmatprep.subr.bf16.mxu0 0
        %1961 = vmatpush1.bf16.msra.mxu0 0
        %1962 = vmatprep.subr.bf16.mxu0 0
        %1963 = vmatpush1.bf16.msra.mxu0 0
        %1964 = vmatprep.subr.bf16.mxu0 0
        %1965 = vmatpush1.bf16.msra.mxu0 0
        %1966 = vmatprep.subr.bf16.mxu0 0
        %1967 = vmatpush1.bf16.msra.mxu0 0
        %1968 = vmatprep.subr.bf16.mxu0 0
        %1969 = vmatpush1.bf16.msra.mxu0 0
        %1970 = vmatprep.subr.bf16.mxu0 0
        %1971 = vmatpush1.bf16.msra.mxu0 0
        %1972 = vmatprep.subr.bf16.mxu0 0
        %1973 = vmatpush1.bf16.msra.mxu0 0
        %1974 = vmatprep.subr.bf16.mxu0 0
        %1975 = vmatpush1.bf16.msra.mxu0 0
        %1976 = vmatprep.mubr.bf16.mxu0 0
        %1977 = vmatmul.mubr.bf16.gmra.mrb[0].mxu0 %v1933
        %v1978 = vpop.f32.mrb[0].mxu0
        %v1979 = vadd.f32 0.0, %v1978
        %v1980 = vpop.f32.mrb[0].mxu0
        %v1981 = vpop.f32.mrb[0].mxu0
        %v1982 = vadd.f32 0.0, %v1981
        %v1983 = vpop.f32.mrb[0].mxu0
        %1984 = vmatprep.mubr.bf16.mxu0 0
        %1985 = vmatmul.mubr.bf16.gmra.mrb[0].mxu0 %v1936
        %v1986 = vpop.f32.mrb[0].mxu0
        %v1987 = vadd.f32 0.0, %v1986
        %v1988 = vpop.f32.mrb[0].mxu0
        %v1989 = vpop.f32.mrb[0].mxu0
        %v1990 = vadd.f32 0.0, %v1989
        %v1991 = vpop.f32.mrb[0].mxu0
        %1992 = vmatprep.mubr.bf16.mxu0 0
        %1993 = vmatmul.mubr.bf16.gmra.mrb[0].mxu0 %v1939
        %v1994 = vpop.f32.mrb[0].mxu0
        %v1995 = vadd.f32 0.0, %v1994
        %v1996 = vpop.f32.mrb[0].mxu0
        %v1997 = vpop.f32.mrb[0].mxu0
        %v1998 = vadd.f32 0.0, %v1997
        %v1999 = vpop.f32.mrb[0].mxu0
        %2000 = vmatprep.mubr.bf16.mxu0 0
        %2001 = vmatmul.mubr.bf16.gmra.mrb[0].mxu0 %v1942
        %v2002 = vpop.f32.mrb[0].mxu0
        %v2003 = vadd.f32 0.0, %v2002
        %v2004 = vpop.f32.mrb[0].mxu0
        %v2005 = vpop.f32.mrb[0].mxu0
        %v2006 = vadd.f32 0.0, %v2005
        %v2007 = vpop.f32.mrb[0].mxu0
        %2008 = vdwg.mxu0
        %2009 = vrot.lane.b32.xlu0 %v1129, 32
        %v2010 = vpop.permute.xlu0 %2009
        %2011 = vrot.lane.b32.xlu0 %v1130, 32
        %v2012 = vpop.permute.xlu0 %2011
        %2013 = vrot.lane.b32.xlu0 %v1131, 32
        %v2014 = vpop.permute.xlu0 %2013
        %2015 = vrot.lane.b32.xlu0 %v1132, 32
        %v2016 = vpop.permute.xlu0 %2015
        %2017 = vrot.lane.b32.xlu0 %v1133, 32
        %v2018 = vpop.permute.xlu0 %2017
        %2019 = vrot.lane.b32.xlu0 %v1134, 32
        %v2020 = vpop.permute.xlu0 %2019
        %2021 = vrot.lane.b32.xlu0 %v1135, 32
        %v2022 = vpop.permute.xlu0 %2021
        %2023 = vrot.lane.b32.xlu0 %v1136, 32
        %v2024 = vpop.permute.xlu0 %2023
        %v2026 = vsel %vm1137, %v2010, 0
        %v2029 = vsel %vm1137, %v2012, 0
        %v2032 = vsel %vm1137, %v2014, 0
        %v2035 = vsel %vm1137, %v2016, 0
        %v2038 = vsel %vm1137, %v2018, 0
        %v2041 = vsel %vm1137, %v2020, 0
        %v2044 = vsel %vm1137, %v2022, 0
        %v2047 = vsel %vm1137, %v2024, 0
        %2049 = vmatprep.subr.bf16.mxu0 0
        %2050 = vmatpush1.bf16.xpose.msra.mxu0 %v2038
        %2051 = vmatprep.subr.bf16.mxu0 0
        %2052 = vmatpush1.bf16.xpose.msra.mxu0 %v2041
        %2053 = vmatprep.subr.bf16.mxu0 0
        %2054 = vmatpush1.bf16.xpose.msra.mxu0 %v2044
        %2055 = vmatprep.subr.bf16.mxu0 0
        %2056 = vmatpush1.bf16.xpose.msra.mxu0 %v2047
        %2057 = vmatprep.subr.bf16.mxu0 0
        %2058 = vmatpush1.bf16.xpose.msra.mxu0 0
        %2059 = vmatprep.subr.bf16.mxu0 0
        %2060 = vmatpush1.bf16.xpose.msra.mxu0 0
        %2061 = vmatprep.subr.bf16.mxu0 0
        %2062 = vmatpush1.bf16.xpose.msra.mxu0 0
        %2063 = vmatprep.subr.bf16.mxu0 0
        %2064 = vmatpush1.bf16.xpose.msra.mxu0 0
        %2065 = vmatprep.subr.bf16.mxu0 0
        %2066 = vmatpush1.bf16.xpose.msra.mxu0 0
        %2067 = vmatprep.subr.bf16.mxu0 0
        %2068 = vmatpush1.bf16.xpose.msra.mxu0 0
        %2069 = vmatprep.subr.bf16.mxu0 0
        %2070 = vmatpush1.bf16.xpose.msra.mxu0 0
        %2071 = vmatprep.subr.bf16.mxu0 0
        %2072 = vmatpush1.bf16.xpose.msra.mxu0 0
        %2073 = vmatprep.subr.bf16.mxu0 0
        %2074 = vmatpush1.bf16.xpose.msra.mxu0 0
        %2075 = vmatprep.subr.bf16.mxu0 0
        %2076 = vmatpush1.bf16.xpose.msra.mxu0 0
        %2077 = vmatprep.subr.bf16.mxu0 0
        %2078 = vmatpush1.bf16.xpose.msra.mxu0 0
        %2079 = vmatprep.subr.bf16.mxu0 0
        %2080 = vmatpush1.bf16.xpose.msra.mxu0 0
        %2081 = vmatprep.mubr.bf16.mxu0 0
        %2082 = vmatmul.mubr.bf16.gmra.mrb[0].mxu0 %v2026
        %v2083 = vpop.f32.mrb[0].mxu0
        %v2084 = vadd.f32 %v1113, %v2083
        %v2085 = vpop.f32.mrb[0].mxu0
        %v2086 = vpop.f32.mrb[0].mxu0
        %v2087 = vadd.f32 %v1114, %v2086
        %v2088 = vpop.f32.mrb[0].mxu0
        %2089 = vmatprep.mubr.bf16.mxu0 0
        %2090 = vmatmul.mubr.bf16.gmra.mrb[0].mxu0 %v2029
        %v2091 = vpop.f32.mrb[0].mxu0
        %v2092 = vadd.f32 %v1115, %v2091
        %v2093 = vpop.f32.mrb[0].mxu0
        %v2094 = vpop.f32.mrb[0].mxu0
        %v2095 = vadd.f32 %v1116, %v2094
        %v2096 = vpop.f32.mrb[0].mxu0
        %2097 = vmatprep.mubr.bf16.mxu0 0
        %2098 = vmatmul.mubr.bf16.gmra.mrb[0].mxu0 %v2032
        %v2099 = vpop.f32.mrb[0].mxu0
        %v2100 = vadd.f32 %v1117, %v2099
        %v2101 = vpop.f32.mrb[0].mxu0
        %v2102 = vpop.f32.mrb[0].mxu0
        %v2103 = vadd.f32 %v1118, %v2102
        %v2104 = vpop.f32.mrb[0].mxu0
        %2105 = vmatprep.mubr.bf16.mxu0 0
        %2106 = vmatmul.mubr.bf16.gmra.mrb[0].mxu0 %v2035
        %v2107 = vpop.f32.mrb[0].mxu0
        %v2108 = vadd.f32 %v1119, %v2107
        %v2109 = vpop.f32.mrb[0].mxu0
        %v2110 = vpop.f32.mrb[0].mxu0
        %v2111 = vadd.f32 %v1120, %v2110
        %v2112 = vpop.f32.mrb[0].mxu0
        %2113 = vdwg.mxu0
        %v2114 = vadd.f32 %v2084, %v1121
        %v2115 = vadd.f32 %v2087, %v1122
        %v2116 = vadd.f32 %v2092, %v1123
        %v2117 = vadd.f32 %v2095, %v1124
        %v2118 = vadd.f32 %v2100, %v1125
        %v2119 = vadd.f32 %v2103, %v1126
        %v2120 = vadd.f32 %v2108, %v1127
        %v2121 = vadd.f32 %v2111, %v1128
        %v2122 = vsel %vm1235, %v2114, -inf
        %2123 = vmax.xlane.f32.xlu0 %v2122
        %v2124 = vpop.xlane.xlu0 %2123
        %v2125 = vsel %vm1235, %v2115, -inf
        %2126 = vmax.xlane.f32.xlu0 %v2125
        %v2127 = vpop.xlane.xlu0 %2126
        %v2128 = vsel %vm1235, %v2116, -inf
        %2129 = vmax.xlane.f32.xlu0 %v2128
        %v2130 = vpop.xlane.xlu0 %2129
        %v2131 = vsel %vm1235, %v2117, -inf
        %2132 = vmax.xlane.f32.xlu0 %v2131
        %v2133 = vpop.xlane.xlu0 %2132
        %v2134 = vsel %vm1235, %v2118, -inf
        %2135 = vmax.xlane.f32.xlu0 %v2134
        %v2136 = vpop.xlane.xlu0 %2135
        %v2137 = vsel %vm1235, %v2119, -inf
        %2138 = vmax.xlane.f32.xlu0 %v2137
        %v2139 = vpop.xlane.xlu0 %2138
        %v2140 = vsel %vm1235, %v2120, -inf
        %2141 = vmax.xlane.f32.xlu0 %v2140
        %v2142 = vpop.xlane.xlu0 %2141
        %v2143 = vsel %vm1235, %v2121, -inf
        %2144 = vmax.xlane.f32.xlu0 %v2143
        %v2145 = vpop.xlane.xlu0 %2144
        %v2146 = vsub.f32 %v2114, %v2124
        %v2147 = vsub.f32 %v2115, %v2127
        %v2148 = vsub.f32 %v2116, %v2130
        %v2149 = vsub.f32 %v2117, %v2133
        %v2150 = vsub.f32 %v2118, %v2136
        %v2151 = vsub.f32 %v2119, %v2139
        %v2152 = vsub.f32 %v2120, %v2142
        %v2153 = vsub.f32 %v2121, %v2145
        %v2154 = vmul.f32 %v2146, 1.442695
        %v2155 = vpow.pop %v2154
        %v2156 = vmul.f32 %v2147, 1.442695
        %v2157 = vpow.pop %v2156
        %v2158 = vmul.f32 %v2148, 1.442695
        %v2159 = vpow.pop %v2158
        %v2160 = vmul.f32 %v2149, 1.442695
        %v2161 = vpow.pop %v2160
        %v2162 = vmul.f32 %v2150, 1.442695
        %v2163 = vpow.pop %v2162
        %v2164 = vmul.f32 %v2151, 1.442695
        %v2165 = vpow.pop %v2164
        %v2166 = vmul.f32 %v2152, 1.442695
        %v2167 = vpow.pop %v2166
        %v2168 = vmul.f32 %v2153, 1.442695
        %v2169 = vpow.pop %v2168
        %v2170 = vsel %vm1235, %v2155, 0.0
        %2171 = vadd.xlane.f32.xlu0 %v2170
        %v2172 = vpop.xlane.xlu0 %2171
        %v2173 = vsel %vm1235, %v2157, 0.0
        %2174 = vadd.xlane.f32.xlu0 %v2173
        %v2175 = vpop.xlane.xlu0 %2174
        %v2176 = vsel %vm1235, %v2159, 0.0
        %2177 = vadd.xlane.f32.xlu0 %v2176
        %v2178 = vpop.xlane.xlu0 %2177
        %v2179 = vsel %vm1235, %v2161, 0.0
        %2180 = vadd.xlane.f32.xlu0 %v2179
        %v2181 = vpop.xlane.xlu0 %2180
        %v2182 = vsel %vm1235, %v2163, 0.0
        %2183 = vadd.xlane.f32.xlu0 %v2182
        %v2184 = vpop.xlane.xlu0 %2183
        %v2185 = vsel %vm1235, %v2165, 0.0
        %2186 = vadd.xlane.f32.xlu0 %v2185
        %v2187 = vpop.xlane.xlu0 %2186
        %v2188 = vsel %vm1235, %v2167, 0.0
        %2189 = vadd.xlane.f32.xlu0 %v2188
        %v2190 = vpop.xlane.xlu0 %2189
        %v2191 = vsel %vm1235, %v2169, 0.0
        %2192 = vadd.xlane.f32.xlu0 %v2191
        %v2193 = vpop.xlane.xlu0 %2192
        %v2194 = vrcp.pop %v2172
        %v2195 = vmul.f32 %v2155, %v2194
        %v2196 = vrcp.pop %v2175
        %v2197 = vmul.f32 %v2157, %v2196
        %v2198 = vrcp.pop %v2178
        %v2199 = vmul.f32 %v2159, %v2198
        %v2200 = vrcp.pop %v2181
        %v2201 = vmul.f32 %v2161, %v2200
        %v2202 = vrcp.pop %v2184
        %v2203 = vmul.f32 %v2163, %v2202
        %v2204 = vrcp.pop %v2187
        %v2205 = vmul.f32 %v2165, %v2204
        %v2206 = vrcp.pop %v2190
        %v2207 = vmul.f32 %v2167, %v2206
        %v2208 = vrcp.pop %v2193
        %v2209 = vmul.f32 %v2169, %v2208
        %v2210 = vpack.c.bf16 %v2197, %v2195
        %v2211 = vpack.c.bf16 %v2201, %v2199
        %v2212 = vpack.c.bf16 %v2205, %v2203
        %v2213 = vpack.c.bf16 %v2209, %v2207
        %2214 = vrot.lane.b32.xlu0 %v1328, 32
        %v2215 = vpop.permute.xlu0 %2214
        %2216 = vrot.lane.b32.xlu0 %v1329, 32
        %v2217 = vpop.permute.xlu0 %2216
        %2218 = vrot.lane.b32.xlu0 %v1330, 32
        %v2219 = vpop.permute.xlu0 %2218
        %2220 = vrot.lane.b32.xlu0 %v1331, 32
        %v2221 = vpop.permute.xlu0 %2220
        %v2227 = vsel %vm1235, %v2210, 0
        %v2230 = vsel %vm1235, %v2211, 0
        %v2233 = vsel %vm1235, %v2212, 0
        %v2236 = vsel %vm1235, %v2213, 0
        %2238 = vmatprep.subr.bf16.mxu0 0
        %2239 = vmatpush1.bf16.msra.mxu0 %v2215
        %2240 = vmatprep.subr.bf16.mxu0 0
        %2241 = vmatpush1.bf16.msra.mxu0 %v2217
        %2242 = vmatprep.subr.bf16.mxu0 0
        %2243 = vmatpush1.bf16.msra.mxu0 %v2219
        %2244 = vmatprep.subr.bf16.mxu0 0
        %2245 = vmatpush1.bf16.msra.mxu0 %v2221
        %2246 = vmatprep.subr.bf16.mxu0 0
        %2247 = vmatpush1.bf16.msra.mxu0 0
        %2248 = vmatprep.subr.bf16.mxu0 0
        %2249 = vmatpush1.bf16.msra.mxu0 0
        %2250 = vmatprep.subr.bf16.mxu0 0
        %2251 = vmatpush1.bf16.msra.mxu0 0
        %2252 = vmatprep.subr.bf16.mxu0 0
        %2253 = vmatpush1.bf16.msra.mxu0 0
        %2254 = vmatprep.subr.bf16.mxu0 0
        %2255 = vmatpush1.bf16.msra.mxu0 0
        %2256 = vmatprep.subr.bf16.mxu0 0
        %2257 = vmatpush1.bf16.msra.mxu0 0
        %2258 = vmatprep.subr.bf16.mxu0 0
        %2259 = vmatpush1.bf16.msra.mxu0 0
        %2260 = vmatprep.subr.bf16.mxu0 0
        %2261 = vmatpush1.bf16.msra.mxu0 0
        %2262 = vmatprep.subr.bf16.mxu0 0
        %2263 = vmatpush1.bf16.msra.mxu0 0
        %2264 = vmatprep.subr.bf16.mxu0 0
        %2265 = vmatpush1.bf16.msra.mxu0 0
        %2266 = vmatprep.subr.bf16.mxu0 0
        %2267 = vmatpush1.bf16.msra.mxu0 0
        %2268 = vmatprep.subr.bf16.mxu0 0
        %2269 = vmatpush1.bf16.msra.mxu0 0
        %2270 = vmatprep.mubr.bf16.mxu0 0
        %2271 = vmatmul.mubr.bf16.gmra.mrb[0].mxu0 %v2227
        %v2272 = vpop.f32.mrb[0].mxu0
        %v2273 = vadd.f32 0.0, %v2272
        %v2274 = vpop.f32.mrb[0].mxu0
        %v2275 = vpop.f32.mrb[0].mxu0
        %v2276 = vadd.f32 0.0, %v2275
        %v2277 = vpop.f32.mrb[0].mxu0
        %2278 = vmatprep.mubr.bf16.mxu0 0
        %2279 = vmatmul.mubr.bf16.gmra.mrb[0].mxu0 %v2230
        %v2280 = vpop.f32.mrb[0].mxu0
        %v2281 = vadd.f32 0.0, %v2280
        %v2282 = vpop.f32.mrb[0].mxu0
        %v2283 = vpop.f32.mrb[0].mxu0
        %v2284 = vadd.f32 0.0, %v2283
        %v2285 = vpop.f32.mrb[0].mxu0
        %2286 = vmatprep.mubr.bf16.mxu0 0
        %2287 = vmatmul.mubr.bf16.gmra.mrb[0].mxu0 %v2233
        %v2288 = vpop.f32.mrb[0].mxu0
        %v2289 = vadd.f32 0.0, %v2288
        %v2290 = vpop.f32.mrb[0].mxu0
        %v2291 = vpop.f32.mrb[0].mxu0
        %v2292 = vadd.f32 0.0, %v2291
        %v2293 = vpop.f32.mrb[0].mxu0
        %2294 = vmatprep.mubr.bf16.mxu0 0
        %2295 = vmatmul.mubr.bf16.gmra.mrb[0].mxu0 %v2236
        %v2296 = vpop.f32.mrb[0].mxu0
        %v2297 = vadd.f32 0.0, %v2296
        %v2298 = vpop.f32.mrb[0].mxu0
        %v2299 = vpop.f32.mrb[0].mxu0
        %v2300 = vadd.f32 0.0, %v2299
        %v2301 = vpop.f32.mrb[0].mxu0
        %2302 = vdwg.mxu0
        %2311 = vrot.lane.b32.xlu0 %v1685, 32
        %v2312 = vpop.permute.xlu0 %2311
        %2313 = vrot.lane.b32.xlu0 %v1688, 32
        %v2314 = vpop.permute.xlu0 %2313
        %2315 = vrot.lane.b32.xlu0 %v1693, 32
        %v2316 = vpop.permute.xlu0 %2315
        %2317 = vrot.lane.b32.xlu0 %v1696, 32
        %v2318 = vpop.permute.xlu0 %2317
        %2319 = vrot.lane.b32.xlu0 %v1701, 32
        %v2320 = vpop.permute.xlu0 %2319
        %2321 = vrot.lane.b32.xlu0 %v1704, 32
        %v2322 = vpop.permute.xlu0 %2321
        %2323 = vrot.lane.b32.xlu0 %v1709, 32
        %v2324 = vpop.permute.xlu0 %2323
        %2325 = vrot.lane.b32.xlu0 %v1712, 32
        %v2326 = vpop.permute.xlu0 %2325
        %2343 = vrot.lane.b32.xlu0 %v1979, 64
        %v2344 = vpop.permute.xlu0 %2343
        %2345 = vrot.lane.b32.xlu0 %v1982, 64
        %v2346 = vpop.permute.xlu0 %2345
        %2347 = vrot.lane.b32.xlu0 %v1987, 64
        %v2348 = vpop.permute.xlu0 %2347
        %2349 = vrot.lane.b32.xlu0 %v1990, 64
        %v2350 = vpop.permute.xlu0 %2349
        %2351 = vrot.lane.b32.xlu0 %v1995, 64
        %v2352 = vpop.permute.xlu0 %2351
        %2353 = vrot.lane.b32.xlu0 %v1998, 64
        %v2354 = vpop.permute.xlu0 %2353
        %2355 = vrot.lane.b32.xlu0 %v2003, 64
        %v2356 = vpop.permute.xlu0 %2355
        %2357 = vrot.lane.b32.xlu0 %v2006, 64
        %v2358 = vpop.permute.xlu0 %2357
        %2375 = vrot.lane.b32.xlu0 %v2273, 96
        %v2376 = vpop.permute.xlu0 %2375
        %2377 = vrot.lane.b32.xlu0 %v2276, 96
        %v2378 = vpop.permute.xlu0 %2377
        %2379 = vrot.lane.b32.xlu0 %v2281, 96
        %v2380 = vpop.permute.xlu0 %2379
        %2381 = vrot.lane.b32.xlu0 %v2284, 96
        %v2382 = vpop.permute.xlu0 %2381
        %2383 = vrot.lane.b32.xlu0 %v2289, 96
        %v2384 = vpop.permute.xlu0 %2383
        %2385 = vrot.lane.b32.xlu0 %v2292, 96
        %v2386 = vpop.permute.xlu0 %2385
        %2387 = vrot.lane.b32.xlu0 %v2297, 96
        %v2388 = vpop.permute.xlu0 %2387
        %2389 = vrot.lane.b32.xlu0 %v2300, 96
        %v2390 = vpop.permute.xlu0 %2389
        %v2399 = vsel %vm1137, %v1379, %v2312
        %v2400 = vsel %vm1137, %v1382, %v2314
        %v2401 = vsel %vm1137, %v1387, %v2316
        %v2402 = vsel %vm1137, %v1390, %v2318
        %v2403 = vsel %vm1137, %v1395, %v2320
        %v2404 = vsel %vm1137, %v1398, %v2322
        %v2405 = vsel %vm1137, %v1403, %v2324
        %v2406 = vsel %vm1137, %v1406, %v2326
        %v2407 = vsel %vm1235, %v2399, %v2344
        %v2408 = vsel %vm1235, %v2400, %v2346
        %v2409 = vsel %vm1235, %v2401, %v2348
        %v2410 = vsel %vm1235, %v2402, %v2350
        %v2411 = vsel %vm1235, %v2403, %v2352
        %v2412 = vsel %vm1235, %v2404, %v2354
        %v2413 = vsel %vm1235, %v2405, %v2356
        %v2414 = vsel %vm1235, %v2406, %v2358
        %vm2415 = vcmask 785408
        %v2416 = vsel %vm2415, %v2407, %v2376
        %v2417 = vsel %vm2415, %v2408, %v2378
        %v2418 = vsel %vm2415, %v2409, %v2380
        %v2419 = vsel %vm2415, %v2410, %v2382
        %v2420 = vsel %vm2415, %v2411, %v2384
        %v2421 = vsel %vm2415, %v2412, %v2386
        %v2422 = vsel %vm2415, %v2413, %v2388
        %v2423 = vsel %vm2415, %v2414, %v2390
        %v2424 = vpack.c.bf16 %v2417, %v2416
        %v2425 = vpack.c.bf16 %v2419, %v2418
        %v2426 = vpack.c.bf16 %v2421, %v2420
        %v2427 = vpack.c.bf16 %v2423, %v2422
        %v2428 = vld [vmem:[#allocation9] sm:$0xf]
        %v2429 = vld [vmem:[#allocation9 + $0x4] sm:$0xf]
        %v2430 = vld [vmem:[#allocation9 + $0x8] sm:$0xf]
        %v2431 = vld [vmem:[#allocation9 + $0xc] sm:$0xf]
        %v2432 = vld [vmem:[#allocation9 + $0x10] sm:$0xf]
        %v2433 = vld [vmem:[#allocation9 + $0x14] sm:$0xf]
        %v2434 = vld [vmem:[#allocation9 + $0x18] sm:$0xf]
        %v2435 = vld [vmem:[#allocation9 + $0x1c] sm:$0xf]
        %v2436 = vld [vmem:[#allocation9 + $0x20] sm:$0xf]
        %v2437 = vld [vmem:[#allocation9 + $0x24] sm:$0xf]
        %v2438 = vld [vmem:[#allocation9 + $0x28] sm:$0xf]
        %v2439 = vld [vmem:[#allocation9 + $0x2c] sm:$0xf]
        %v2440 = vld [vmem:[#allocation9 + $0x30] sm:$0xf]
        %v2441 = vld [vmem:[#allocation9 + $0x34] sm:$0xf]
        %v2442 = vld [vmem:[#allocation9 + $0x38] sm:$0xf]
        %v2443 = vld [vmem:[#allocation9 + $0x3c] sm:$0xf]
        %v2444 = vld [vmem:[%s8] sm:$0x1]
        %v2446 = vlaneseq
        %v2447 = vshrl.u32 %v2446, 7
        %v2448 = vsub.s32 0, %v2447
        %v2449 = vrot.slane %v2444, %v2448
        %v2467 = vunpack.c.l.b16 %v2428
        %v2468 = vunpack.c.l.b16 %v2429
        %v2469 = vunpack.c.l.b16 %v2430
        %v2470 = vunpack.c.l.b16 %v2431
        %v2471 = vunpack.c.l.b16 %v2432
        %v2472 = vunpack.c.l.b16 %v2433
        %v2473 = vunpack.c.l.b16 %v2434
        %v2474 = vunpack.c.l.b16 %v2435
        %v2475 = vunpack.c.l.b16 %v2436
        %v2476 = vunpack.c.l.b16 %v2437
        %v2477 = vunpack.c.l.b16 %v2438
        %v2478 = vunpack.c.l.b16 %v2439
        %v2479 = vunpack.c.l.b16 %v2440
        %v2480 = vunpack.c.l.b16 %v2441
        %v2481 = vunpack.c.l.b16 %v2442
        %v2482 = vunpack.c.l.b16 %v2443
        %v2483 = vpack.c.b16 %v2468, %v2467
        %v2484 = vpack.c.b16 %v2470, %v2469
        %v2485 = vpack.c.b16 %v2472, %v2471
        %v2486 = vpack.c.b16 %v2474, %v2473
        %v2487 = vpack.c.b16 %v2476, %v2475
        %v2488 = vpack.c.b16 %v2478, %v2477
        %v2489 = vpack.c.b16 %v2480, %v2479
        %v2490 = vpack.c.b16 %v2482, %v2481
        %2499 = vmatprep.subr.bf16.mxu0 0
        %2500 = vmatpush1.bf16.msra.mxu0 %v2483
        %2501 = vmatprep.subr.bf16.mxu0 0
        %2502 = vmatpush1.bf16.msra.mxu0 %v2484
        %2503 = vmatprep.subr.bf16.mxu0 0
        %2504 = vmatpush1.bf16.msra.mxu0 %v2485
        %2505 = vmatprep.subr.bf16.mxu0 0
        %2506 = vmatpush1.bf16.msra.mxu0 %v2486
        %2507 = vmatprep.subr.bf16.mxu0 0
        %2508 = vmatpush1.bf16.msra.mxu0 %v2487
        %2509 = vmatprep.subr.bf16.mxu0 0
        %2510 = vmatpush1.bf16.msra.mxu0 %v2488
        %2511 = vmatprep.subr.bf16.mxu0 0
        %2512 = vmatpush1.bf16.msra.mxu0 %v2489
        %2513 = vmatprep.subr.bf16.mxu0 0
        %2514 = vmatpush1.bf16.msra.mxu0 %v2490
        %2515 = vmatprep.subr.bf16.mxu0 0
        %2516 = vmatpush1.bf16.msra.mxu0 0
        %2517 = vmatprep.subr.bf16.mxu0 0
        %2518 = vmatpush1.bf16.msra.mxu0 0
        %2519 = vmatprep.subr.bf16.mxu0 0
        %2520 = vmatpush1.bf16.msra.mxu0 0
        %2521 = vmatprep.subr.bf16.mxu0 0
        %2522 = vmatpush1.bf16.msra.mxu0 0
        %2523 = vmatprep.subr.bf16.mxu0 0
        %2524 = vmatpush1.bf16.msra.mxu0 0
        %2525 = vmatprep.subr.bf16.mxu0 0
        %2526 = vmatpush1.bf16.msra.mxu0 0
        %2527 = vmatprep.subr.bf16.mxu0 0
        %2528 = vmatpush1.bf16.msra.mxu0 0
        %2529 = vmatprep.subr.bf16.mxu0 0
        %2530 = vmatpush1.bf16.msra.mxu0 0
        %2531 = vmatprep.mubr.bf16.mxu0 0
        %2532 = vmatmul.mubr.bf16.gmra.mrb[0].mxu0 %v2424
        %v2533 = vpop.f32.mrb[0].mxu0
        %v2534 = vadd.f32 %v2449, %v2533
        %v2535 = vpop.f32.mrb[0].mxu0
        %v2536 = vpop.f32.mrb[0].mxu0
        %v2537 = vadd.f32 %v2449, %v2536
        %v2538 = vpop.f32.mrb[0].mxu0
        %2539 = vmatprep.mubr.bf16.mxu0 0
        %2540 = vmatmul.mubr.bf16.gmra.mrb[0].mxu0 %v2425
        %v2541 = vpop.f32.mrb[0].mxu0
        %v2542 = vadd.f32 %v2449, %v2541
        %v2543 = vpop.f32.mrb[0].mxu0
        %v2544 = vpop.f32.mrb[0].mxu0
        %v2545 = vadd.f32 %v2449, %v2544
        %v2546 = vpop.f32.mrb[0].mxu0
        %2547 = vmatprep.mubr.bf16.mxu0 0
        %2548 = vmatmul.mubr.bf16.gmra.mrb[0].mxu0 %v2426
        %v2549 = vpop.f32.mrb[0].mxu0
        %v2550 = vadd.f32 %v2449, %v2549
        %v2551 = vpop.f32.mrb[0].mxu0
        %v2552 = vpop.f32.mrb[0].mxu0
        %v2553 = vadd.f32 %v2449, %v2552
        %v2554 = vpop.f32.mrb[0].mxu0
        %2555 = vmatprep.mubr.bf16.mxu0 0
        %2556 = vmatmul.mubr.bf16.gmra.mrb[0].mxu0 %v2427
        %v2557 = vpop.f32.mrb[0].mxu0
        %v2558 = vadd.f32 %v2449, %v2557
        %v2559 = vpop.f32.mrb[0].mxu0
        %v2560 = vpop.f32.mrb[0].mxu0
        %v2561 = vadd.f32 %v2449, %v2560
        %v2562 = vpop.f32.mrb[0].mxu0
        %2563 = vdwg.mxu0
        %v2564 = vadd.f32 %v643, %v2534
        %v2565 = vadd.f32 %v644, %v2537
        %v2566 = vadd.f32 %v645, %v2542
        %v2567 = vadd.f32 %v646, %v2545
        %v2568 = vadd.f32 %v647, %v2550
        %v2569 = vadd.f32 %v648, %v2553
        %v2570 = vadd.f32 %v649, %v2558
        %v2571 = vadd.f32 %v650, %v2561
        %2572 = vadd.xlane.f32.xlu0 %v2564
        %v2573 = vpop.xlane.xlu0 %2572
        %2574 = vadd.xlane.f32.xlu0 %v2565
        %v2575 = vpop.xlane.xlu0 %2574
        %2576 = vadd.xlane.f32.xlu0 %v2566
        %v2577 = vpop.xlane.xlu0 %2576
        %2578 = vadd.xlane.f32.xlu0 %v2567
        %v2579 = vpop.xlane.xlu0 %2578
        %2580 = vadd.xlane.f32.xlu0 %v2568
        %v2581 = vpop.xlane.xlu0 %2580
        %2582 = vadd.xlane.f32.xlu0 %v2569
        %v2583 = vpop.xlane.xlu0 %2582
        %2584 = vadd.xlane.f32.xlu0 %v2570
        %v2585 = vpop.xlane.xlu0 %2584
        %2586 = vadd.xlane.f32.xlu0 %v2571
        %v2587 = vpop.xlane.xlu0 %2586
        %v2588 = vmul.f32 %v2573, %v667
        %v2589 = vmul.f32 %v2575, %v667
        %v2590 = vmul.f32 %v2577, %v667
        %v2591 = vmul.f32 %v2579, %v667
        %v2592 = vmul.f32 %v2581, %v667
        %v2593 = vmul.f32 %v2583, %v667
        %v2594 = vmul.f32 %v2585, %v667
        %v2595 = vmul.f32 %v2587, %v667
        %v2596 = vsub.f32 %v2564, %v2588
        %v2597 = vsub.f32 %v2565, %v2589
        %v2598 = vsub.f32 %v2566, %v2590
        %v2599 = vsub.f32 %v2567, %v2591
        %v2600 = vsub.f32 %v2568, %v2592
        %v2601 = vsub.f32 %v2569, %v2593
        %v2602 = vsub.f32 %v2570, %v2594
        %v2603 = vsub.f32 %v2571, %v2595
        %v2604 = vmul.f32 %v2596, %v2596
        %v2605 = vmul.f32 %v2597, %v2597
        %v2606 = vmul.f32 %v2598, %v2598
        %v2607 = vmul.f32 %v2599, %v2599
        %v2608 = vmul.f32 %v2600, %v2600
        %v2609 = vmul.f32 %v2601, %v2601
        %v2610 = vmul.f32 %v2602, %v2602
        %v2611 = vmul.f32 %v2603, %v2603
        %2612 = vadd.xlane.f32.xlu0 %v2604
        %v2613 = vpop.xlane.xlu0 %2612
        %2614 = vadd.xlane.f32.xlu0 %v2605
        %v2615 = vpop.xlane.xlu0 %2614
        %2616 = vadd.xlane.f32.xlu0 %v2606
        %v2617 = vpop.xlane.xlu0 %2616
        %2618 = vadd.xlane.f32.xlu0 %v2607
        %v2619 = vpop.xlane.xlu0 %2618
        %2620 = vadd.xlane.f32.xlu0 %v2608
        %v2621 = vpop.xlane.xlu0 %2620
        %2622 = vadd.xlane.f32.xlu0 %v2609
        %v2623 = vpop.xlane.xlu0 %2622
        %2624 = vadd.xlane.f32.xlu0 %v2610
        %v2625 = vpop.xlane.xlu0 %2624
        %2626 = vadd.xlane.f32.xlu0 %v2611
        %v2627 = vpop.xlane.xlu0 %2626
        %v2628 = vmul.f32 %v2613, %v667
        %v2629 = vmul.f32 %v2615, %v667
        %v2630 = vmul.f32 %v2617, %v667
        %v2631 = vmul.f32 %v2619, %v667
        %v2632 = vmul.f32 %v2621, %v667
        %v2633 = vmul.f32 %v2623, %v667
        %v2634 = vmul.f32 %v2625, %v667
        %v2635 = vmul.f32 %v2627, %v667
        %v2636 = vadd.f32 %v2628, 1e-05
        %v2637 = vadd.f32 %v2629, 1e-05
        %v2638 = vadd.f32 %v2630, 1e-05
        %v2639 = vadd.f32 %v2631, 1e-05
        %v2640 = vadd.f32 %v2632, 1e-05
        %v2641 = vadd.f32 %v2633, 1e-05
        %v2642 = vadd.f32 %v2634, 1e-05
        %v2643 = vadd.f32 %v2635, 1e-05
        %v2644 = vrsqrt.pop %v2636
        %v2645 = vrsqrt.pop %v2637
        %v2646 = vrsqrt.pop %v2638
        %v2647 = vrsqrt.pop %v2639
        %v2648 = vrsqrt.pop %v2640
        %v2649 = vrsqrt.pop %v2641
        %v2650 = vrsqrt.pop %v2642
        %v2651 = vrsqrt.pop %v2643
        %v2652 = vmul.f32 %v2596, %v2644
        %v2653 = vmul.f32 %v2597, %v2645
        %v2654 = vmul.f32 %v2598, %v2646
        %v2655 = vmul.f32 %v2599, %v2647
        %v2656 = vmul.f32 %v2600, %v2648
        %v2657 = vmul.f32 %v2601, %v2649
        %v2658 = vmul.f32 %v2602, %v2650
        %v2659 = vmul.f32 %v2603, %v2651
        %v2660 = vld [vmem:[%s9] sm:$0x1]
        %v2662 = vlaneseq
        %v2663 = vshrl.u32 %v2662, 7
        %v2664 = vsub.s32 0, %v2663
        %v2665 = vrot.slane %v2660, %v2664
        %v2667 = vmul.f32 %v2652, %v2665
        %v2668 = vmul.f32 %v2653, %v2665
        %v2669 = vmul.f32 %v2654, %v2665
        %v2670 = vmul.f32 %v2655, %v2665
        %v2671 = vmul.f32 %v2656, %v2665
        %v2672 = vmul.f32 %v2657, %v2665
        %v2673 = vmul.f32 %v2658, %v2665
        %v2674 = vmul.f32 %v2659, %v2665
        %v2675 = vld [vmem:[%s10] sm:$0x1]
        %v2677 = vlaneseq
        %v2678 = vshrl.u32 %v2677, 7
        %v2679 = vsub.s32 0, %v2678
        %v2680 = vrot.slane %v2675, %v2679
        %v2682 = vadd.f32 %v2667, %v2680
        %v2683 = vadd.f32 %v2668, %v2680
        %v2684 = vadd.f32 %v2669, %v2680
        %v2685 = vadd.f32 %v2670, %v2680
        %v2686 = vadd.f32 %v2671, %v2680
        %v2687 = vadd.f32 %v2672, %v2680
        %v2688 = vadd.f32 %v2673, %v2680
        %v2689 = vadd.f32 %v2674, %v2680
        %v2690 = vpack.c.bf16 %v2683, %v2682
        %v2691 = vpack.c.bf16 %v2685, %v2684
        %v2692 = vpack.c.bf16 %v2687, %v2686
        %v2693 = vpack.c.bf16 %v2689, %v2688
        %v2694 = vld [vmem:[#allocation10] sm:$0xff]
        %v2695 = vld [vmem:[#allocation10 + $0x8] sm:$0xff]
        %v2696 = vld [vmem:[#allocation10 + $0x10] sm:$0xff]
        %v2697 = vld [vmem:[#allocation10 + $0x18] sm:$0xff]
        %v2698 = vld [vmem:[#allocation10 + $0x20] sm:$0xff]
        %v2699 = vld [vmem:[#allocation10 + $0x28] sm:$0xff]
        %v2700 = vld [vmem:[#allocation10 + $0x30] sm:$0xff]
        %v2701 = vld [vmem:[#allocation10 + $0x38] sm:$0xff]
        %v2702 = vld [vmem:[#allocation10 + $0x40] sm:$0xff]
        %v2703 = vld [vmem:[#allocation10 + $0x48] sm:$0xff]
        %v2704 = vld [vmem:[#allocation10 + $0x50] sm:$0xff]
        %v2705 = vld [vmem:[#allocation10 + $0x58] sm:$0xff]
        %v2706 = vld [vmem:[#allocation10 + $0x60] sm:$0xff]
        %v2707 = vld [vmem:[#allocation10 + $0x68] sm:$0xff]
        %v2708 = vld [vmem:[#allocation10 + $0x70] sm:$0xff]
        %v2709 = vld [vmem:[#allocation10 + $0x78] sm:$0xff]
        %v2710 = vld [vmem:[#allocation10 + $0x80] sm:$0xff]
        %v2711 = vld [vmem:[#allocation10 + $0x88] sm:$0xff]
        %v2712 = vld [vmem:[#allocation10 + $0x90] sm:$0xff]
        %v2713 = vld [vmem:[#allocation10 + $0x98] sm:$0xff]
        %v2714 = vld [vmem:[#allocation10 + $0xa0] sm:$0xff]
        %v2715 = vld [vmem:[#allocation10 + $0xa8] sm:$0xff]
        %v2716 = vld [vmem:[#allocation10 + $0xb0] sm:$0xff]
        %v2717 = vld [vmem:[#allocation10 + $0xb8] sm:$0xff]
        %v2718 = vld [vmem:[#allocation10 + $0xc0] sm:$0xff]
        %v2719 = vld [vmem:[#allocation10 + $0xc8] sm:$0xff]
        %v2720 = vld [vmem:[#allocation10 + $0xd0] sm:$0xff]
        %v2721 = vld [vmem:[#allocation10 + $0xd8] sm:$0xff]
        %v2722 = vld [vmem:[#allocation10 + $0xe0] sm:$0xff]
        %v2723 = vld [vmem:[#allocation10 + $0xe8] sm:$0xff]
        %v2724 = vld [vmem:[#allocation10 + $0xf0] sm:$0xff]
        %v2725 = vld [vmem:[#allocation10 + $0xf8] sm:$0xff]
        %v2726 = vld [vmem:[%s12] sm:$0xf]
        %v2728 = vlaneseq
        %v2729 = vshrl.u32 %v2728, 7
        %v2730 = vsub.s32 0, %v2729
        %v2731 = vrot.slane %v2726, %v2730
        %v2732 = vlaneseq
        %v2733 = vshrl.u32 %v2732, 7
        %v2734 = vsub.s32 1, %v2733
        %v2735 = vrot.slane %v2726, %v2734
        %v2736 = vlaneseq
        %v2737 = vshrl.u32 %v2736, 7
        %v2738 = vsub.s32 2, %v2737
        %v2739 = vrot.slane %v2726, %v2738
        %v2740 = vlaneseq
        %v2741 = vshrl.u32 %v2740, 7
        %v2742 = vsub.s32 3, %v2741
        %v2743 = vrot.slane %v2726, %v2742
        %v2780 = vunpack.c.l.b16 %v2694
        %v2781 = vunpack.c.h.b16 %v2694
        %v2782 = vunpack.c.l.b16 %v2695
        %v2783 = vunpack.c.h.b16 %v2695
        %v2784 = vunpack.c.l.b16 %v2696
        %v2785 = vunpack.c.h.b16 %v2696
        %v2786 = vunpack.c.l.b16 %v2697
        %v2787 = vunpack.c.h.b16 %v2697
        %v2788 = vunpack.c.l.b16 %v2698
        %v2789 = vunpack.c.h.b16 %v2698
        %v2790 = vunpack.c.l.b16 %v2699
        %v2791 = vunpack.c.h.b16 %v2699
        %v2792 = vunpack.c.l.b16 %v2700
        %v2793 = vunpack.c.h.b16 %v2700
        %v2794 = vunpack.c.l.b16 %v2701
        %v2795 = vunpack.c.h.b16 %v2701
        %v2796 = vunpack.c.l.b16 %v2702
        %v2797 = vunpack.c.h.b16 %v2702
        %v2798 = vunpack.c.l.b16 %v2703
        %v2799 = vunpack.c.h.b16 %v2703
        %v2800 = vunpack.c.l.b16 %v2704
        %v2801 = vunpack.c.h.b16 %v2704
        %v2802 = vunpack.c.l.b16 %v2705
        %v2803 = vunpack.c.h.b16 %v2705
        %v2804 = vunpack.c.l.b16 %v2706
        %v2805 = vunpack.c.h.b16 %v2706
        %v2806 = vunpack.c.l.b16 %v2707
        %v2807 = vunpack.c.h.b16 %v2707
        %v2808 = vunpack.c.l.b16 %v2708
        %v2809 = vunpack.c.h.b16 %v2708
        %v2810 = vunpack.c.l.b16 %v2709
        %v2811 = vunpack.c.h.b16 %v2709
        %v2812 = vunpack.c.l.b16 %v2710
        %v2813 = vunpack.c.h.b16 %v2710
        %v2814 = vunpack.c.l.b16 %v2711
        %v2815 = vunpack.c.h.b16 %v2711
        %v2816 = vunpack.c.l.b16 %v2712
        %v2817 = vunpack.c.h.b16 %v2712
        %v2818 = vunpack.c.l.b16 %v2713
        %v2819 = vunpack.c.h.b16 %v2713
        %v2820 = vunpack.c.l.b16 %v2714
        %v2821 = vunpack.c.h.b16 %v2714
        %v2822 = vunpack.c.l.b16 %v2715
        %v2823 = vunpack.c.h.b16 %v2715
        %v2824 = vunpack.c.l.b16 %v2716
        %v2825 = vunpack.c.h.b16 %v2716
        %v2826 = vunpack.c.l.b16 %v2717
        %v2827 = vunpack.c.h.b16 %v2717
        %v2828 = vunpack.c.l.b16 %v2718
        %v2829 = vunpack.c.h.b16 %v2718
        %v2830 = vunpack.c.l.b16 %v2719
        %v2831 = vunpack.c.h.b16 %v2719
        %v2832 = vunpack.c.l.b16 %v2720
        %v2833 = vunpack.c.h.b16 %v2720
        %v2834 = vunpack.c.l.b16 %v2721
        %v2835 = vunpack.c.h.b16 %v2721
        %v2836 = vunpack.c.l.b16 %v2722
        %v2837 = vunpack.c.h.b16 %v2722
        %v2838 = vunpack.c.l.b16 %v2723
        %v2839 = vunpack.c.h.b16 %v2723
        %v2840 = vunpack.c.l.b16 %v2724
        %v2841 = vunpack.c.h.b16 %v2724
        %v2842 = vunpack.c.l.b16 %v2725
        %v2843 = vunpack.c.h.b16 %v2725
        %v2844 = vpack.c.b16 %v2784, %v2780
        %v2845 = vpack.c.b16 %v2785, %v2781
        %v2846 = vpack.c.b16 %v2786, %v2782
        %v2847 = vpack.c.b16 %v2787, %v2783
        %v2848 = vpack.c.b16 %v2792, %v2788
        %v2849 = vpack.c.b16 %v2793, %v2789
        %v2850 = vpack.c.b16 %v2794, %v2790
        %v2851 = vpack.c.b16 %v2795, %v2791
        %v2852 = vpack.c.b16 %v2800, %v2796
        %v2853 = vpack.c.b16 %v2801, %v2797
        %v2854 = vpack.c.b16 %v2802, %v2798
        %v2855 = vpack.c.b16 %v2803, %v2799
        %v2856 = vpack.c.b16 %v2808, %v2804
        %v2857 = vpack.c.b16 %v2809, %v2805
        %v2858 = vpack.c.b16 %v2810, %v2806
        %v2859 = vpack.c.b16 %v2811, %v2807
        %v2860 = vpack.c.b16 %v2816, %v2812
        %v2861 = vpack.c.b16 %v2817, %v2813
        %v2862 = vpack.c.b16 %v2818, %v2814
        %v2863 = vpack.c.b16 %v2819, %v2815
        %v2864 = vpack.c.b16 %v2824, %v2820
        %v2865 = vpack.c.b16 %v2825, %v2821
        %v2866 = vpack.c.b16 %v2826, %v2822
        %v2867 = vpack.c.b16 %v2827, %v2823
        %v2868 = vpack.c.b16 %v2832, %v2828
        %v2869 = vpack.c.b16 %v2833, %v2829
        %v2870 = vpack.c.b16 %v2834, %v2830
        %v2871 = vpack.c.b16 %v2835, %v2831
        %v2872 = vpack.c.b16 %v2840, %v2836
        %v2873 = vpack.c.b16 %v2841, %v2837
        %v2874 = vpack.c.b16 %v2842, %v2838
        %v2875 = vpack.c.b16 %v2843, %v2839
        %2908 = vmatprep.subr.bf16.mxu0 %v2845
        %2909 = vmatpush1.bf16.msra.mxu0 %v2844
        %2910 = vmatprep.subr.bf16.mxu0 %v2849
        %2911 = vmatpush1.bf16.msra.mxu0 %v2848
        %2912 = vmatprep.subr.bf16.mxu0 %v2853
        %2913 = vmatpush1.bf16.msra.mxu0 %v2852
        %2914 = vmatprep.subr.bf16.mxu0 %v2857
        %2915 = vmatpush1.bf16.msra.mxu0 %v2856
        %2916 = vmatprep.subr.bf16.mxu0 %v2861
        %2917 = vmatpush1.bf16.msra.mxu0 %v2860
        %2918 = vmatprep.subr.bf16.mxu0 %v2865
        %2919 = vmatpush1.bf16.msra.mxu0 %v2864
        %2920 = vmatprep.subr.bf16.mxu0 %v2869
        %2921 = vmatpush1.bf16.msra.mxu0 %v2868
        %2922 = vmatprep.subr.bf16.mxu0 %v2873
        %2923 = vmatpush1.bf16.msra.mxu0 %v2872
        %2924 = vmatprep.subr.bf16.mxu0 0
        %2925 = vmatpush1.bf16.msra.mxu0 0
        %2926 = vmatprep.subr.bf16.mxu0 0
        %2927 = vmatpush1.bf16.msra.mxu0 0
        %2928 = vmatprep.subr.bf16.mxu0 0
        %2929 = vmatpush1.bf16.msra.mxu0 0
        %2930 = vmatprep.subr.bf16.mxu0 0
        %2931 = vmatpush1.bf16.msra.mxu0 0
        %2932 = vmatprep.subr.bf16.mxu0 0
        %2933 = vmatpush1.bf16.msra.mxu0 0
        %2934 = vmatprep.subr.bf16.mxu0 0
        %2935 = vmatpush1.bf16.msra.mxu0 0
        %2936 = vmatprep.subr.bf16.mxu0 0
        %2937 = vmatpush1.bf16.msra.mxu0 0
        %2938 = vmatprep.subr.bf16.mxu0 0
        %2939 = vmatpush1.bf16.msra.mxu0 0
        %2940 = vmatprep.mubr.bf16.mxu0 0
        %2941 = vmatmul.mubr.bf16.gmra.mrb[0].mxu0 %v2690
        %v2942 = vpop.f32.mrb[0].mxu0
        %v2943 = vadd.f32 %v2731, %v2942
        %v2944 = vpop.f32.mrb[0].mxu0
        %v2945 = vadd.f32 %v2735, %v2944
        %v2946 = vpop.f32.mrb[0].mxu0
        %v2947 = vadd.f32 %v2731, %v2946
        %v2948 = vpop.f32.mrb[0].mxu0
        %v2949 = vadd.f32 %v2735, %v2948
        %2950 = vmatprep.mubr.bf16.mxu0 0
        %2951 = vmatmul.mubr.bf16.gmra.mrb[0].mxu0 %v2691
        %v2952 = vpop.f32.mrb[0].mxu0
        %v2953 = vadd.f32 %v2731, %v2952
        %v2954 = vpop.f32.mrb[0].mxu0
        %v2955 = vadd.f32 %v2735, %v2954
        %v2956 = vpop.f32.mrb[0].mxu0
        %v2957 = vadd.f32 %v2731, %v2956
        %v2958 = vpop.f32.mrb[0].mxu0
        %v2959 = vadd.f32 %v2735, %v2958
        %2960 = vmatprep.mubr.bf16.mxu0 0
        %2961 = vmatmul.mubr.bf16.gmra.mrb[0].mxu0 %v2692
        %v2962 = vpop.f32.mrb[0].mxu0
        %v2963 = vadd.f32 %v2731, %v2962
        %v2964 = vpop.f32.mrb[0].mxu0
        %v2965 = vadd.f32 %v2735, %v2964
        %v2966 = vpop.f32.mrb[0].mxu0
        %v2967 = vadd.f32 %v2731, %v2966
        %v2968 = vpop.f32.mrb[0].mxu0
        %v2969 = vadd.f32 %v2735, %v2968
        %2970 = vmatprep.mubr.bf16.mxu0 0
        %2971 = vmatmul.mubr.bf16.gmra.mrb[0].mxu0 %v2693
        %v2972 = vpop.f32.mrb[0].mxu0
        %v2973 = vadd.f32 %v2731, %v2972
        %v2974 = vpop.f32.mrb[0].mxu0
        %v2975 = vadd.f32 %v2735, %v2974
        %v2976 = vpop.f32.mrb[0].mxu0
        %v2977 = vadd.f32 %v2731, %v2976
        %v2978 = vpop.f32.mrb[0].mxu0
        %v2979 = vadd.f32 %v2735, %v2978
        %2980 = vdwg.mxu0
        %2981 = vmatprep.subr.bf16.mxu0 %v2847
        %2982 = vmatpush1.bf16.msra.mxu0 %v2846
        %2983 = vmatprep.subr.bf16.mxu0 %v2851
        %2984 = vmatpush1.bf16.msra.mxu0 %v2850
        %2985 = vmatprep.subr.bf16.mxu0 %v2855
        %2986 = vmatpush1.bf16.msra.mxu0 %v2854
        %2987 = vmatprep.subr.bf16.mxu0 %v2859
        %2988 = vmatpush1.bf16.msra.mxu0 %v2858
        %2989 = vmatprep.subr.bf16.mxu0 %v2863
        %2990 = vmatpush1.bf16.msra.mxu0 %v2862
        %2991 = vmatprep.subr.bf16.mxu0 %v2867
        %2992 = vmatpush1.bf16.msra.mxu0 %v2866
        %2993 = vmatprep.subr.bf16.mxu0 %v2871
        %2994 = vmatpush1.bf16.msra.mxu0 %v2870
        %2995 = vmatprep.subr.bf16.mxu0 %v2875
        %2996 = vmatpush1.bf16.msra.mxu0 %v2874
        %2997 = vmatprep.subr.bf16.mxu0 0
        %2998 = vmatpush1.bf16.msra.mxu0 0
        %2999 = vmatprep.subr.bf16.mxu0 0
        %3000 = vmatpush1.bf16.msra.mxu0 0
        %3001 = vmatprep.subr.bf16.mxu0 0
        %3002 = vmatpush1.bf16.msra.mxu0 0
        %3003 = vmatprep.subr.bf16.mxu0 0
        %3004 = vmatpush1.bf16.msra.mxu0 0
        %3005 = vmatprep.subr.bf16.mxu0 0
        %3006 = vmatpush1.bf16.msra.mxu0 0
        %3007 = vmatprep.subr.bf16.mxu0 0
        %3008 = vmatpush1.bf16.msra.mxu0 0
        %3009 = vmatprep.subr.bf16.mxu0 0
        %3010 = vmatpush1.bf16.msra.mxu0 0
        %3011 = vmatprep.subr.bf16.mxu0 0
        %3012 = vmatpush1.bf16.msra.mxu0 0
        %3013 = vmatprep.mubr.bf16.mxu0 0
        %3014 = vmatmul.mubr.bf16.gmra.mrb[0].mxu0 %v2690
        %v3015 = vpop.f32.mrb[0].mxu0
        %v3016 = vadd.f32 %v2739, %v3015
        %v3017 = vpop.f32.mrb[0].mxu0
        %v3018 = vadd.f32 %v2743, %v3017
        %v3019 = vpop.f32.mrb[0].mxu0
        %v3020 = vadd.f32 %v2739, %v3019
        %v3021 = vpop.f32.mrb[0].mxu0
        %v3022 = vadd.f32 %v2743, %v3021
        %3023 = vmatprep.mubr.bf16.mxu0 0
        %3024 = vmatmul.mubr.bf16.gmra.mrb[0].mxu0 %v2691
        %v3025 = vpop.f32.mrb[0].mxu0
        %v3026 = vadd.f32 %v2739, %v3025
        %v3027 = vpop.f32.mrb[0].mxu0
        %v3028 = vadd.f32 %v2743, %v3027
        %v3029 = vpop.f32.mrb[0].mxu0
        %v3030 = vadd.f32 %v2739, %v3029
        %v3031 = vpop.f32.mrb[0].mxu0
        %v3032 = vadd.f32 %v2743, %v3031
        %3033 = vmatprep.mubr.bf16.mxu0 0
        %3034 = vmatmul.mubr.bf16.gmra.mrb[0].mxu0 %v2692
        %v3035 = vpop.f32.mrb[0].mxu0
        %v3036 = vadd.f32 %v2739, %v3035
        %v3037 = vpop.f32.mrb[0].mxu0
        %v3038 = vadd.f32 %v2743, %v3037
        %v3039 = vpop.f32.mrb[0].mxu0
        %v3040 = vadd.f32 %v2739, %v3039
        %v3041 = vpop.f32.mrb[0].mxu0
        %v3042 = vadd.f32 %v2743, %v3041
        %3043 = vmatprep.mubr.bf16.mxu0 0
        %3044 = vmatmul.mubr.bf16.gmra.mrb[0].mxu0 %v2693
        %v3045 = vpop.f32.mrb[0].mxu0
        %v3046 = vadd.f32 %v2739, %v3045
        %v3047 = vpop.f32.mrb[0].mxu0
        %v3048 = vadd.f32 %v2743, %v3047
        %v3049 = vpop.f32.mrb[0].mxu0
        %v3050 = vadd.f32 %v2739, %v3049
        %v3051 = vpop.f32.mrb[0].mxu0
        %v3052 = vadd.f32 %v2743, %v3051
        %3053 = vdwg.mxu0
        %v3054 = vmul.f32 %v2943, 0.5
        %v3055 = vmul.f32 %v2945, 0.5
        %v3056 = vmul.f32 %v3016, 0.5
        %v3057 = vmul.f32 %v3018, 0.5
        %v3058 = vmul.f32 %v2947, 0.5
        %v3059 = vmul.f32 %v2949, 0.5
        %v3060 = vmul.f32 %v3020, 0.5
        %v3061 = vmul.f32 %v3022, 0.5
        %v3062 = vmul.f32 %v2953, 0.5
        %v3063 = vmul.f32 %v2955, 0.5
        %v3064 = vmul.f32 %v3026, 0.5
        %v3065 = vmul.f32 %v3028, 0.5
        %v3066 = vmul.f32 %v2957, 0.5
        %v3067 = vmul.f32 %v2959, 0.5
        %v3068 = vmul.f32 %v3030, 0.5
        %v3069 = vmul.f32 %v3032, 0.5
        %v3070 = vmul.f32 %v2963, 0.5
        %v3071 = vmul.f32 %v2965, 0.5
        %v3072 = vmul.f32 %v3036, 0.5
        %v3073 = vmul.f32 %v3038, 0.5
        %v3074 = vmul.f32 %v2967, 0.5
        %v3075 = vmul.f32 %v2969, 0.5
        %v3076 = vmul.f32 %v3040, 0.5
        %v3077 = vmul.f32 %v3042, 0.5
        %v3078 = vmul.f32 %v2973, 0.5
        %v3079 = vmul.f32 %v2975, 0.5
        %v3080 = vmul.f32 %v3046, 0.5
        %v3081 = vmul.f32 %v3048, 0.5
        %v3082 = vmul.f32 %v2977, 0.5
        %v3083 = vmul.f32 %v2979, 0.5
        %v3084 = vmul.f32 %v3050, 0.5
        %v3085 = vmul.f32 %v3052, 0.5
        %v3086 = vmul.f32 %v2943, 0.70710677
        %v3087 = vmul.f32 %v2945, 0.70710677
        %v3088 = vmul.f32 %v3016, 0.70710677
        %v3089 = vmul.f32 %v3018, 0.70710677
        %v3090 = vmul.f32 %v2947, 0.70710677
        %v3091 = vmul.f32 %v2949, 0.70710677
        %v3092 = vmul.f32 %v3020, 0.70710677
        %v3093 = vmul.f32 %v3022, 0.70710677
        %v3094 = vmul.f32 %v2953, 0.70710677
        %v3095 = vmul.f32 %v2955, 0.70710677
        %v3096 = vmul.f32 %v3026, 0.70710677
        %v3097 = vmul.f32 %v3028, 0.70710677
        %v3098 = vmul.f32 %v2957, 0.70710677
        %v3099 = vmul.f32 %v2959, 0.70710677
        %v3100 = vmul.f32 %v3030, 0.70710677
        %v3101 = vmul.f32 %v3032, 0.70710677
        %v3102 = vmul.f32 %v2963, 0.70710677
        %v3103 = vmul.f32 %v2965, 0.70710677
        %v3104 = vmul.f32 %v3036, 0.70710677
        %v3105 = vmul.f32 %v3038, 0.70710677
        %v3106 = vmul.f32 %v2967, 0.70710677
        %v3107 = vmul.f32 %v2969, 0.70710677
        %v3108 = vmul.f32 %v3040, 0.70710677
        %v3109 = vmul.f32 %v3042, 0.70710677
        %v3110 = vmul.f32 %v2973, 0.70710677
        %v3111 = vmul.f32 %v2975, 0.70710677
        %v3112 = vmul.f32 %v3046, 0.70710677
        %v3113 = vmul.f32 %v3048, 0.70710677
        %v3114 = vmul.f32 %v2977, 0.70710677
        %v3115 = vmul.f32 %v2979, 0.70710677
        %v3116 = vmul.f32 %v3050, 0.70710677
        %v3117 = vmul.f32 %v3052, 0.70710677
        %v3118 = verf.f32.pop %v3086
        %v3119 = verf.f32.pop %v3087
        %v3120 = verf.f32.pop %v3088
        %v3121 = verf.f32.pop %v3089
        %v3122 = verf.f32.pop %v3090
        %v3123 = verf.f32.pop %v3091
        %v3124 = verf.f32.pop %v3092
        %v3125 = verf.f32.pop %v3093
        %v3126 = verf.f32.pop %v3094
        %v3127 = verf.f32.pop %v3095
        %v3128 = verf.f32.pop %v3096
        %v3129 = verf.f32.pop %v3097
        %v3130 = verf.f32.pop %v3098
        %v3131 = verf.f32.pop %v3099
        %v3132 = verf.f32.pop %v3100
        %v3133 = verf.f32.pop %v3101
        %v3134 = verf.f32.pop %v3102
        %v3135 = verf.f32.pop %v3103
        %v3136 = verf.f32.pop %v3104
        %v3137 = verf.f32.pop %v3105
        %v3138 = verf.f32.pop %v3106
        %v3139 = verf.f32.pop %v3107
        %v3140 = verf.f32.pop %v3108
        %v3141 = verf.f32.pop %v3109
        %v3142 = verf.f32.pop %v3110
        %v3143 = verf.f32.pop %v3111
        %v3144 = verf.f32.pop %v3112
        %v3145 = verf.f32.pop %v3113
        %v3146 = verf.f32.pop %v3114
        %v3147 = verf.f32.pop %v3115
        %v3148 = verf.f32.pop %v3116
        %v3149 = verf.f32.pop %v3117
        %v3150 = vadd.f32 %v3118, 1.0
        %v3151 = vadd.f32 %v3119, 1.0
        %v3152 = vadd.f32 %v3120, 1.0
        %v3153 = vadd.f32 %v3121, 1.0
        %v3154 = vadd.f32 %v3122, 1.0
        %v3155 = vadd.f32 %v3123, 1.0
        %v3156 = vadd.f32 %v3124, 1.0
        %v3157 = vadd.f32 %v3125, 1.0
        %v3158 = vadd.f32 %v3126, 1.0
        %v3159 = vadd.f32 %v3127, 1.0
        %v3160 = vadd.f32 %v3128, 1.0
        %v3161 = vadd.f32 %v3129, 1.0
        %v3162 = vadd.f32 %v3130, 1.0
        %v3163 = vadd.f32 %v3131, 1.0
        %v3164 = vadd.f32 %v3132, 1.0
        %v3165 = vadd.f32 %v3133, 1.0
        %v3166 = vadd.f32 %v3134, 1.0
        %v3167 = vadd.f32 %v3135, 1.0
        %v3168 = vadd.f32 %v3136, 1.0
        %v3169 = vadd.f32 %v3137, 1.0
        %v3170 = vadd.f32 %v3138, 1.0
        %v3171 = vadd.f32 %v3139, 1.0
        %v3172 = vadd.f32 %v3140, 1.0
        %v3173 = vadd.f32 %v3141, 1.0
        %v3174 = vadd.f32 %v3142, 1.0
        %v3175 = vadd.f32 %v3143, 1.0
        %v3176 = vadd.f32 %v3144, 1.0
        %v3177 = vadd.f32 %v3145, 1.0
        %v3178 = vadd.f32 %v3146, 1.0
        %v3179 = vadd.f32 %v3147, 1.0
        %v3180 = vadd.f32 %v3148, 1.0
        %v3181 = vadd.f32 %v3149, 1.0
        %v3182 = vmul.f32 %v3054, %v3150
        %v3183 = vmul.f32 %v3055, %v3151
        %v3184 = vmul.f32 %v3056, %v3152
        %v3185 = vmul.f32 %v3057, %v3153
        %v3186 = vmul.f32 %v3058, %v3154
        %v3187 = vmul.f32 %v3059, %v3155
        %v3188 = vmul.f32 %v3060, %v3156
        %v3189 = vmul.f32 %v3061, %v3157
        %v3190 = vmul.f32 %v3062, %v3158
        %v3191 = vmul.f32 %v3063, %v3159
        %v3192 = vmul.f32 %v3064, %v3160
        %v3193 = vmul.f32 %v3065, %v3161
        %v3194 = vmul.f32 %v3066, %v3162
        %v3195 = vmul.f32 %v3067, %v3163
        %v3196 = vmul.f32 %v3068, %v3164
        %v3197 = vmul.f32 %v3069, %v3165
        %v3198 = vmul.f32 %v3070, %v3166
        %v3199 = vmul.f32 %v3071, %v3167
        %v3200 = vmul.f32 %v3072, %v3168
        %v3201 = vmul.f32 %v3073, %v3169
        %v3202 = vmul.f32 %v3074, %v3170
        %v3203 = vmul.f32 %v3075, %v3171
        %v3204 = vmul.f32 %v3076, %v3172
        %v3205 = vmul.f32 %v3077, %v3173
        %v3206 = vmul.f32 %v3078, %v3174
        %v3207 = vmul.f32 %v3079, %v3175
        %v3208 = vmul.f32 %v3080, %v3176
        %v3209 = vmul.f32 %v3081, %v3177
        %v3210 = vmul.f32 %v3082, %v3178
        %v3211 = vmul.f32 %v3083, %v3179
        %v3212 = vmul.f32 %v3084, %v3180
        %v3213 = vmul.f32 %v3085, %v3181
        %v3214 = vpack.c.bf16 %v3186, %v3182
        %v3215 = vpack.c.bf16 %v3187, %v3183
        %v3216 = vpack.c.bf16 %v3188, %v3184
        %v3217 = vpack.c.bf16 %v3189, %v3185
        %v3218 = vpack.c.bf16 %v3194, %v3190
        %v3219 = vpack.c.bf16 %v3195, %v3191
        %v3220 = vpack.c.bf16 %v3196, %v3192
        %v3221 = vpack.c.bf16 %v3197, %v3193
        %v3222 = vpack.c.bf16 %v3202, %v3198
        %v3223 = vpack.c.bf16 %v3203, %v3199
        %v3224 = vpack.c.bf16 %v3204, %v3200
        %v3225 = vpack.c.bf16 %v3205, %v3201
        %v3226 = vpack.c.bf16 %v3210, %v3206
        %v3227 = vpack.c.bf16 %v3211, %v3207
        %v3228 = vpack.c.bf16 %v3212, %v3208
        %v3229 = vpack.c.bf16 %v3213, %v3209
        %v3230 = vld [vmem:[#allocation12] sm:$0xf]
        %v3231 = vld [vmem:[#allocation12 + $0x4] sm:$0xf]
        %v3232 = vld [vmem:[#allocation12 + $0x8] sm:$0xf]
        %v3233 = vld [vmem:[#allocation12 + $0xc] sm:$0xf]
        %v3234 = vld [vmem:[#allocation12 + $0x10] sm:$0xf]
        %v3235 = vld [vmem:[#allocation12 + $0x14] sm:$0xf]
        %v3236 = vld [vmem:[#allocation12 + $0x18] sm:$0xf]
        %v3237 = vld [vmem:[#allocation12 + $0x1c] sm:$0xf]
        %v3238 = vld [vmem:[#allocation12 + $0x20] sm:$0xf]
        %v3239 = vld [vmem:[#allocation12 + $0x24] sm:$0xf]
        %v3240 = vld [vmem:[#allocation12 + $0x28] sm:$0xf]
        %v3241 = vld [vmem:[#allocation12 + $0x2c] sm:$0xf]
        %v3242 = vld [vmem:[#allocation12 + $0x30] sm:$0xf]
        %v3243 = vld [vmem:[#allocation12 + $0x34] sm:$0xf]
        %v3244 = vld [vmem:[#allocation12 + $0x38] sm:$0xf]
        %v3245 = vld [vmem:[#allocation12 + $0x3c] sm:$0xf]
        %v3246 = vld [vmem:[#allocation12 + $0x40] sm:$0xf]
        %v3247 = vld [vmem:[#allocation12 + $0x44] sm:$0xf]
        %v3248 = vld [vmem:[#allocation12 + $0x48] sm:$0xf]
        %v3249 = vld [vmem:[#allocation12 + $0x4c] sm:$0xf]
        %v3250 = vld [vmem:[#allocation12 + $0x50] sm:$0xf]
        %v3251 = vld [vmem:[#allocation12 + $0x54] sm:$0xf]
        %v3252 = vld [vmem:[#allocation12 + $0x58] sm:$0xf]
        %v3253 = vld [vmem:[#allocation12 + $0x5c] sm:$0xf]
        %v3254 = vld [vmem:[#allocation12 + $0x60] sm:$0xf]
        %v3255 = vld [vmem:[#allocation12 + $0x64] sm:$0xf]
        %v3256 = vld [vmem:[#allocation12 + $0x68] sm:$0xf]
        %v3257 = vld [vmem:[#allocation12 + $0x6c] sm:$0xf]
        %v3258 = vld [vmem:[#allocation12 + $0x70] sm:$0xf]
        %v3259 = vld [vmem:[#allocation12 + $0x74] sm:$0xf]
        %v3260 = vld [vmem:[#allocation12 + $0x78] sm:$0xf]
        %v3261 = vld [vmem:[#allocation12 + $0x7c] sm:$0xf]
        %v3262 = vld [vmem:[#allocation12 + $0x80] sm:$0xf]
        %v3263 = vld [vmem:[#allocation12 + $0x84] sm:$0xf]
        %v3264 = vld [vmem:[#allocation12 + $0x88] sm:$0xf]
        %v3265 = vld [vmem:[#allocation12 + $0x8c] sm:$0xf]
        %v3266 = vld [vmem:[#allocation12 + $0x90] sm:$0xf]
        %v3267 = vld [vmem:[#allocation12 + $0x94] sm:$0xf]
        %v3268 = vld [vmem:[#allocation12 + $0x98] sm:$0xf]
        %v3269 = vld [vmem:[#allocation12 + $0x9c] sm:$0xf]
        %v3270 = vld [vmem:[#allocation12 + $0xa0] sm:$0xf]
        %v3271 = vld [vmem:[#allocation12 + $0xa4] sm:$0xf]
        %v3272 = vld [vmem:[#allocation12 + $0xa8] sm:$0xf]
        %v3273 = vld [vmem:[#allocation12 + $0xac] sm:$0xf]
        %v3274 = vld [vmem:[#allocation12 + $0xb0] sm:$0xf]
        %v3275 = vld [vmem:[#allocation12 + $0xb4] sm:$0xf]
        %v3276 = vld [vmem:[#allocation12 + $0xb8] sm:$0xf]
        %v3277 = vld [vmem:[#allocation12 + $0xbc] sm:$0xf]
        %v3278 = vld [vmem:[#allocation12 + $0xc0] sm:$0xf]
        %v3279 = vld [vmem:[#allocation12 + $0xc4] sm:$0xf]
        %v3280 = vld [vmem:[#allocation12 + $0xc8] sm:$0xf]
        %v3281 = vld [vmem:[#allocation12 + $0xcc] sm:$0xf]
        %v3282 = vld [vmem:[#allocation12 + $0xd0] sm:$0xf]
        %v3283 = vld [vmem:[#allocation12 + $0xd4] sm:$0xf]
        %v3284 = vld [vmem:[#allocation12 + $0xd8] sm:$0xf]
        %v3285 = vld [vmem:[#allocation12 + $0xdc] sm:$0xf]
        %v3286 = vld [vmem:[#allocation12 + $0xe0] sm:$0xf]
        %v3287 = vld [vmem:[#allocation12 + $0xe4] sm:$0xf]
        %v3288 = vld [vmem:[#allocation12 + $0xe8] sm:$0xf]
        %v3289 = vld [vmem:[#allocation12 + $0xec] sm:$0xf]
        %v3290 = vld [vmem:[#allocation12 + $0xf0] sm:$0xf]
        %v3291 = vld [vmem:[#allocation12 + $0xf4] sm:$0xf]
        %v3292 = vld [vmem:[#allocation12 + $0xf8] sm:$0xf]
        %v3293 = vld [vmem:[#allocation12 + $0xfc] sm:$0xf]
        %v3294 = vld [vmem:[#allocation13] sm:$0x1]
        %v3296 = vlaneseq
        %v3297 = vshrl.u32 %v3296, 7
        %v3298 = vsub.s32 0, %v3297
        %v3299 = vrot.slane %v3294, %v3298
        %v3365 = vunpack.c.l.b16 %v3230
        %v3366 = vunpack.c.l.b16 %v3231
        %v3367 = vunpack.c.l.b16 %v3232
        %v3368 = vunpack.c.l.b16 %v3233
        %v3369 = vunpack.c.l.b16 %v3234
        %v3370 = vunpack.c.l.b16 %v3235
        %v3371 = vunpack.c.l.b16 %v3236
        %v3372 = vunpack.c.l.b16 %v3237
        %v3373 = vunpack.c.l.b16 %v3238
        %v3374 = vunpack.c.l.b16 %v3239
        %v3375 = vunpack.c.l.b16 %v3240
        %v3376 = vunpack.c.l.b16 %v3241
        %v3377 = vunpack.c.l.b16 %v3242
        %v3378 = vunpack.c.l.b16 %v3243
        %v3379 = vunpack.c.l.b16 %v3244
        %v3380 = vunpack.c.l.b16 %v3245
        %v3381 = vunpack.c.l.b16 %v3246
        %v3382 = vunpack.c.l.b16 %v3247
        %v3383 = vunpack.c.l.b16 %v3248
        %v3384 = vunpack.c.l.b16 %v3249
        %v3385 = vunpack.c.l.b16 %v3250
        %v3386 = vunpack.c.l.b16 %v3251
        %v3387 = vunpack.c.l.b16 %v3252
        %v3388 = vunpack.c.l.b16 %v3253
        %v3389 = vunpack.c.l.b16 %v3254
        %v3390 = vunpack.c.l.b16 %v3255
        %v3391 = vunpack.c.l.b16 %v3256
        %v3392 = vunpack.c.l.b16 %v3257
        %v3393 = vunpack.c.l.b16 %v3258
        %v3394 = vunpack.c.l.b16 %v3259
        %v3395 = vunpack.c.l.b16 %v3260
        %v3396 = vunpack.c.l.b16 %v3261
        %v3397 = vunpack.c.l.b16 %v3262
        %v3398 = vunpack.c.l.b16 %v3263
        %v3399 = vunpack.c.l.b16 %v3264
        %v3400 = vunpack.c.l.b16 %v3265
        %v3401 = vunpack.c.l.b16 %v3266
        %v3402 = vunpack.c.l.b16 %v3267
        %v3403 = vunpack.c.l.b16 %v3268
        %v3404 = vunpack.c.l.b16 %v3269
        %v3405 = vunpack.c.l.b16 %v3270
        %v3406 = vunpack.c.l.b16 %v3271
        %v3407 = vunpack.c.l.b16 %v3272
        %v3408 = vunpack.c.l.b16 %v3273
        %v3409 = vunpack.c.l.b16 %v3274
        %v3410 = vunpack.c.l.b16 %v3275
        %v3411 = vunpack.c.l.b16 %v3276
        %v3412 = vunpack.c.l.b16 %v3277
        %v3413 = vunpack.c.l.b16 %v3278
        %v3414 = vunpack.c.l.b16 %v3279
        %v3415 = vunpack.c.l.b16 %v3280
        %v3416 = vunpack.c.l.b16 %v3281
        %v3417 = vunpack.c.l.b16 %v3282
        %v3418 = vunpack.c.l.b16 %v3283
        %v3419 = vunpack.c.l.b16 %v3284
        %v3420 = vunpack.c.l.b16 %v3285
        %v3421 = vunpack.c.l.b16 %v3286
        %v3422 = vunpack.c.l.b16 %v3287
        %v3423 = vunpack.c.l.b16 %v3288
        %v3424 = vunpack.c.l.b16 %v3289
        %v3425 = vunpack.c.l.b16 %v3290
        %v3426 = vunpack.c.l.b16 %v3291
        %v3427 = vunpack.c.l.b16 %v3292
        %v3428 = vunpack.c.l.b16 %v3293
        %v3429 = vpack.c.b16 %v3366, %v3365
        %v3430 = vpack.c.b16 %v3368, %v3367
        %v3431 = vpack.c.b16 %v3370, %v3369
        %v3432 = vpack.c.b16 %v3372, %v3371
        %v3433 = vpack.c.b16 %v3374, %v3373
        %v3434 = vpack.c.b16 %v3376, %v3375
        %v3435 = vpack.c.b16 %v3378, %v3377
        %v3436 = vpack.c.b16 %v3380, %v3379
        %v3437 = vpack.c.b16 %v3382, %v3381
        %v3438 = vpack.c.b16 %v3384, %v3383
        %v3439 = vpack.c.b16 %v3386, %v3385
        %v3440 = vpack.c.b16 %v3388, %v3387
        %v3441 = vpack.c.b16 %v3390, %v3389
        %v3442 = vpack.c.b16 %v3392, %v3391
        %v3443 = vpack.c.b16 %v3394, %v3393
        %v3444 = vpack.c.b16 %v3396, %v3395
        %v3445 = vpack.c.b16 %v3398, %v3397
        %v3446 = vpack.c.b16 %v3400, %v3399
        %v3447 = vpack.c.b16 %v3402, %v3401
        %v3448 = vpack.c.b16 %v3404, %v3403
        %v3449 = vpack.c.b16 %v3406, %v3405
        %v3450 = vpack.c.b16 %v3408, %v3407
        %v3451 = vpack.c.b16 %v3410, %v3409
        %v3452 = vpack.c.b16 %v3412, %v3411
        %v3453 = vpack.c.b16 %v3414, %v3413
        %v3454 = vpack.c.b16 %v3416, %v3415
        %v3455 = vpack.c.b16 %v3418, %v3417
        %v3456 = vpack.c.b16 %v3420, %v3419
        %v3457 = vpack.c.b16 %v3422, %v3421
        %v3458 = vpack.c.b16 %v3424, %v3423
        %v3459 = vpack.c.b16 %v3426, %v3425
        %v3460 = vpack.c.b16 %v3428, %v3427
        %3493 = vmatprep.subr.bf16.mxu0 0
        %3494 = vmatpush1.bf16.msra.mxu0 %v3429
        %3495 = vmatprep.subr.bf16.mxu0 0
        %3496 = vmatpush1.bf16.msra.mxu0 %v3430
        %3497 = vmatprep.subr.bf16.mxu0 0
        %3498 = vmatpush1.bf16.msra.mxu0 %v3431
        %3499 = vmatprep.subr.bf16.mxu0 0
        %3500 = vmatpush1.bf16.msra.mxu0 %v3432
        %3501 = vmatprep.subr.bf16.mxu0 0
        %3502 = vmatpush1.bf16.msra.mxu0 %v3433
        %3503 = vmatprep.subr.bf16.mxu0 0
        %3504 = vmatpush1.bf16.msra.mxu0 %v3434
        %3505 = vmatprep.subr.bf16.mxu0 0
        %3506 = vmatpush1.bf16.msra.mxu0 %v3435
        %3507 = vmatprep.subr.bf16.mxu0 0
        %3508 = vmatpush1.bf16.msra.mxu0 %v3436
        %3509 = vmatprep.subr.bf16.mxu0 0
        %3510 = vmatpush1.bf16.msra.mxu0 %v3437
        %3511 = vmatprep.subr.bf16.mxu0 0
        %3512 = vmatpush1.bf16.msra.mxu0 %v3438
        %3513 = vmatprep.subr.bf16.mxu0 0
        %3514 = vmatpush1.bf16.msra.mxu0 %v3439
        %3515 = vmatprep.subr.bf16.mxu0 0
        %3516 = vmatpush1.bf16.msra.mxu0 %v3440
        %3517 = vmatprep.subr.bf16.mxu0 0
        %3518 = vmatpush1.bf16.msra.mxu0 %v3441
        %3519 = vmatprep.subr.bf16.mxu0 0
        %3520 = vmatpush1.bf16.msra.mxu0 %v3442
        %3521 = vmatprep.subr.bf16.mxu0 0
        %3522 = vmatpush1.bf16.msra.mxu0 %v3443
        %3523 = vmatprep.subr.bf16.mxu0 0
        %3524 = vmatpush1.bf16.msra.mxu0 %v3444
        %3525 = vmatprep.mubr.bf16.mxu0 %v3215
        %3526 = vmatmul.mubr.bf16.gmra.mrb[0].mxu0 %v3214
        %v3527 = vpop.f32.mrb[0].mxu0
        %v3528 = vadd.f32 %v3299, %v3527
        %v3529 = vpop.f32.mrb[0].mxu0
        %v3530 = vpop.f32.mrb[0].mxu0
        %v3531 = vadd.f32 %v3299, %v3530
        %v3532 = vpop.f32.mrb[0].mxu0
        %3533 = vmatprep.mubr.bf16.mxu0 %v3219
        %3534 = vmatmul.mubr.bf16.gmra.mrb[0].mxu0 %v3218
        %v3535 = vpop.f32.mrb[0].mxu0
        %v3536 = vadd.f32 %v3299, %v3535
        %v3537 = vpop.f32.mrb[0].mxu0
        %v3538 = vpop.f32.mrb[0].mxu0
        %v3539 = vadd.f32 %v3299, %v3538
        %v3540 = vpop.f32.mrb[0].mxu0
        %3541 = vmatprep.mubr.bf16.mxu0 %v3223
        %3542 = vmatmul.mubr.bf16.gmra.mrb[0].mxu0 %v3222
        %v3543 = vpop.f32.mrb[0].mxu0
        %v3544 = vadd.f32 %v3299, %v3543
        %v3545 = vpop.f32.mrb[0].mxu0
        %v3546 = vpop.f32.mrb[0].mxu0
        %v3547 = vadd.f32 %v3299, %v3546
        %v3548 = vpop.f32.mrb[0].mxu0
        %3549 = vmatprep.mubr.bf16.mxu0 %v3227
        %3550 = vmatmul.mubr.bf16.gmra.mrb[0].mxu0 %v3226
        %v3551 = vpop.f32.mrb[0].mxu0
        %v3552 = vadd.f32 %v3299, %v3551
        %v3553 = vpop.f32.mrb[0].mxu0
        %v3554 = vpop.f32.mrb[0].mxu0
        %v3555 = vadd.f32 %v3299, %v3554
        %v3556 = vpop.f32.mrb[0].mxu0
        %3557 = vdwg.mxu0
        %3558 = vmatprep.subr.bf16.mxu0 0
        %3559 = vmatpush1.bf16.msra.mxu0 %v3445
        %3560 = vmatprep.subr.bf16.mxu0 0
        %3561 = vmatpush1.bf16.msra.mxu0 %v3446
        %3562 = vmatprep.subr.bf16.mxu0 0
        %3563 = vmatpush1.bf16.msra.mxu0 %v3447
        %3564 = vmatprep.subr.bf16.mxu0 0
        %3565 = vmatpush1.bf16.msra.mxu0 %v3448
        %3566 = vmatprep.subr.bf16.mxu0 0
        %3567 = vmatpush1.bf16.msra.mxu0 %v3449
        %3568 = vmatprep.subr.bf16.mxu0 0
        %3569 = vmatpush1.bf16.msra.mxu0 %v3450
        %3570 = vmatprep.subr.bf16.mxu0 0
        %3571 = vmatpush1.bf16.msra.mxu0 %v3451
        %3572 = vmatprep.subr.bf16.mxu0 0
        %3573 = vmatpush1.bf16.msra.mxu0 %v3452
        %3574 = vmatprep.subr.bf16.mxu0 0
        %3575 = vmatpush1.bf16.msra.mxu0 %v3453
        %3576 = vmatprep.subr.bf16.mxu0 0
        %3577 = vmatpush1.bf16.msra.mxu0 %v3454
        %3578 = vmatprep.subr.bf16.mxu0 0
        %3579 = vmatpush1.bf16.msra.mxu0 %v3455
        %3580 = vmatprep.subr.bf16.mxu0 0
        %3581 = vmatpush1.bf16.msra.mxu0 %v3456
        %3582 = vmatprep.subr.bf16.mxu0 0
        %3583 = vmatpush1.bf16.msra.mxu0 %v3457
        %3584 = vmatprep.subr.bf16.mxu0 0
        %3585 = vmatpush1.bf16.msra.mxu0 %v3458
        %3586 = vmatprep.subr.bf16.mxu0 0
        %3587 = vmatpush1.bf16.msra.mxu0 %v3459
        %3588 = vmatprep.subr.bf16.mxu0 0
        %3589 = vmatpush1.bf16.msra.mxu0 %v3460
        %3590 = vmatprep.mubr.bf16.mxu0 %v3217
        %3591 = vmatmul.mubr.bf16.gmra.mrb[0].mxu0 %v3216
        %v3592 = vpop.f32.mrb[0].mxu0
        %v3593 = vadd.f32 %v3528, %v3592
        %v3594 = vpop.f32.mrb[0].mxu0
        %v3595 = vpop.f32.mrb[0].mxu0
        %v3596 = vadd.f32 %v3531, %v3595
        %v3597 = vpop.f32.mrb[0].mxu0
        %3598 = vmatprep.mubr.bf16.mxu0 %v3221
        %3599 = vmatmul.mubr.bf16.gmra.mrb[0].mxu0 %v3220
        %v3600 = vpop.f32.mrb[0].mxu0
        %v3601 = vadd.f32 %v3536, %v3600
        %v3602 = vpop.f32.mrb[0].mxu0
        %v3603 = vpop.f32.mrb[0].mxu0
        %v3604 = vadd.f32 %v3539, %v3603
        %v3605 = vpop.f32.mrb[0].mxu0
        %3606 = vmatprep.mubr.bf16.mxu0 %v3225
        %3607 = vmatmul.mubr.bf16.gmra.mrb[0].mxu0 %v3224
        %v3608 = vpop.f32.mrb[0].mxu0
        %v3609 = vadd.f32 %v3544, %v3608
        %v3610 = vpop.f32.mrb[0].mxu0
        %v3611 = vpop.f32.mrb[0].mxu0
        %v3612 = vadd.f32 %v3547, %v3611
        %v3613 = vpop.f32.mrb[0].mxu0
        %3614 = vmatprep.mubr.bf16.mxu0 %v3229
        %3615 = vmatmul.mubr.bf16.gmra.mrb[0].mxu0 %v3228
        %v3616 = vpop.f32.mrb[0].mxu0
        %v3617 = vadd.f32 %v3552, %v3616
        %v3618 = vpop.f32.mrb[0].mxu0
        %v3619 = vpop.f32.mrb[0].mxu0
        %v3620 = vadd.f32 %v3555, %v3619
        %v3621 = vpop.f32.mrb[0].mxu0
        %3622 = vdwg.mxu0
        %v3623 = vadd.f32 %v2564, %v3593
        %v3624 = vadd.f32 %v2565, %v3596
        %v3625 = vadd.f32 %v2566, %v3601
        %v3626 = vadd.f32 %v2567, %v3604
        %v3627 = vadd.f32 %v2568, %v3609
        %v3628 = vadd.f32 %v2569, %v3612
        %v3629 = vadd.f32 %v2570, %v3617
        %v3630 = vadd.f32 %v2571, %v3620
        %3631 = vst [vmem:[%s639] sm:$0xff] %v3623
        %3632 = vst [vmem:[%s639 + $0x8] sm:$0xff] %v3624
        %3633 = vst [vmem:[%s639 + $0x10] sm:$0xff] %v3625
        %3634 = vst [vmem:[%s639 + $0x18] sm:$0xff] %v3626
        %3635 = vst [vmem:[%s639 + $0x20] sm:$0xff] %v3627
        %3636 = vst [vmem:[%s639 + $0x28] sm:$0xff] %v3628
        %3637 = vst [vmem:[%s639 + $0x30] sm:$0xff] %v3629
        %3638 = vst [vmem:[%s639 + $0x38] sm:$0xff] %v3630
        %s3639 = sand.u32 %s388, 1
        %s3640 = sand.u32 %s388, 1
        %s3641 = smul.addr %s3640, 64
        %s3642 = scalar_lea.vmem [#allocation15], %s3641
        // Predicated region
        $region113: #{swin_block_forward.2} parent=79 // pred_check
          %p3643 = pneg %p398
        $region114: #{swin_block_forward.2} parent=79 // pred_check_branch
          %3645 = sbr.rel (%p3643) target = $region116
        $region115: #{swin_block_forward.2} parent=79 // pred_region
          %s3646 = smul.u32 8, %s39
          %s3647 = smul.addr %s3646, 2
          %s3648 = sadd.s32 %s40, %s3647
          %s3649 = smul.addr %s38, 32
          %s3650 = sadd.s32 %s3648, %s3649
          %s3651 = smul.addr %s3650, 8
          %s3652 = scalar_lea.vmem %s15, %s3651
          // Predicated region
          $region117: #{swin_block_forward.2} parent=115 // pred_check
            _
          $region118: #{swin_block_forward.2} parent=115 // pred_check_branch
            %3654 = sbr.rel (0) target = $region120
          $region119: #{swin_block_forward.2} parent=115 // pred_region
            // Predicated region
            $region121: #{swin_block_forward.2} parent=119 // pred_check
              _
            $region122: #{swin_block_forward.2} parent=119 // pred_check_branch
              %3656 = sbr.rel (0) target = $region124
            $region123: #{swin_block_forward.2} parent=119 // pred_region
              // Predicated region
              $region136: #{swin_block_forward.2} parent=123 // pred_check
                _
              $region137: #{swin_block_forward.2} parent=123 // pred_check_branch
                %3685 = sbr.rel (0) target = $region139
              $region138: #{swin_block_forward.2} parent=123 // pred_region
                loop: start=0, step=1, limit=1
                $region140: #{swin_block_forward.2} parent=138 // loop_pre_header
                  _
                $region141: #{swin_block_forward.2} parent=138 // loop_header
                  %s3687 = sphi 0, %s3691
                  %p3688 = scmp.ge.s32.totalorder %s3687, 1
                  %s3692 = sphi %s3642, %s3642
                  %s3693 = sphi %s3652, %s3652
                $region142: #{swin_block_forward.2} parent=138 // loop_header_branch
                  %3690 = sbr.rel (%p3688) target = $region146
                $region143: #{swin_block_forward.2} parent=138 // loop_body
                  %v3694 = vld [vmem:[%s3692] sm:$0xff]
                  %3695 = vst [vmem:[%s3693] sm:$0xff] %v3694
                  %v3696 = vld [vmem:[%s3692 + $0x8] sm:$0xff]
                  %3697 = vst [vmem:[%s3693 + $0x10] sm:$0xff] %v3696
                  %v3698 = vld [vmem:[%s3692 + $0x10] sm:$0xff]
                  %3699 = vst [vmem:[%s3693 + $0x20] sm:$0xff] %v3698
                  %v3700 = vld [vmem:[%s3692 + $0x18] sm:$0xff]
                  %3701 = vst [vmem:[%s3693 + $0x30] sm:$0xff] %v3700
                  %v3702 = vld [vmem:[%s3692 + $0x20] sm:$0xff]
                  %3703 = vst [vmem:[%s3693 + $0x40] sm:$0xff] %v3702
                  %v3704 = vld [vmem:[%s3692 + $0x28] sm:$0xff]
                  %3705 = vst [vmem:[%s3693 + $0x50] sm:$0xff] %v3704
                  %v3706 = vld [vmem:[%s3692 + $0x30] sm:$0xff]
                  %3707 = vst [vmem:[%s3693 + $0x60] sm:$0xff] %v3706
                  %v3708 = vld [vmem:[%s3692 + $0x38] sm:$0xff]
                  %3709 = vst [vmem:[%s3693 + $0x70] sm:$0xff] %v3708
                $region144: #{swin_block_forward.2} parent=138 // loop_footer
                  %s3691 = sadd.s32 1, %s3687
                $region145: #{swin_block_forward.2} parent=138 // loop_footer_branch
                  %3686 = sbr.rel target = $region141
                $region146: #{swin_block_forward.2} parent=138 // loop_exit
                  _
              $region139: #{swin_block_forward.2} parent=123 // pred_fallthru
                _
              // Predicated region
              $region147: #{swin_block_forward.2} parent=123 // pred_check
                _
              $region148: #{swin_block_forward.2} parent=123 // pred_check_branch
                %3711 = sbr.rel target = $region150
              $region149: #{swin_block_forward.2} parent=123 // pred_region
                _
              $region150: #{swin_block_forward.2} parent=123 // pred_fallthru
                _
            $region124: #{swin_block_forward.2} parent=119 // pred_fallthru
              _
            // Predicated region
            $region125: #{swin_block_forward.2} parent=119 // pred_check
              _
            $region126: #{swin_block_forward.2} parent=119 // pred_check_branch
              %3658 = sbr.rel target = $region128
            $region127: #{swin_block_forward.2} parent=119 // pred_region
              loop: start=0, step=1, limit=1
              $region129: #{swin_block_forward.2} parent=127 // loop_pre_header
                _
              $region130: #{swin_block_forward.2} parent=127 // loop_header
                %s3661 = sphi 0, %s3665
                %p3662 = scmp.ge.s32.totalorder %s3661, 1
                %s3666 = sphi %s3642, %s3642
                %s3667 = sphi %s3652, %s3652
              $region131: #{swin_block_forward.2} parent=127 // loop_header_branch
                %3664 = sbr.rel (%p3662) target = $region135
              $region132: #{swin_block_forward.2} parent=127 // loop_body
                %v3668 = vld [vmem:[%s3666] sm:$0xff]
                %3669 = vst [vmem:[%s3667] sm:$0xff] %v3668
                %v3670 = vld [vmem:[%s3666 + $0x8] sm:$0xff]
                %3671 = vst [vmem:[%s3667 + $0x10] sm:$0xff] %v3670
                %v3672 = vld [vmem:[%s3666 + $0x10] sm:$0xff]
                %3673 = vst [vmem:[%s3667 + $0x20] sm:$0xff] %v3672
                %v3674 = vld [vmem:[%s3666 + $0x18] sm:$0xff]
                %3675 = vst [vmem:[%s3667 + $0x30] sm:$0xff] %v3674
                %v3676 = vld [vmem:[%s3666 + $0x20] sm:$0xff]
                %3677 = vst [vmem:[%s3667 + $0x40] sm:$0xff] %v3676
                %v3678 = vld [vmem:[%s3666 + $0x28] sm:$0xff]
                %3679 = vst [vmem:[%s3667 + $0x50] sm:$0xff] %v3678
                %v3680 = vld [vmem:[%s3666 + $0x30] sm:$0xff]
                %3681 = vst [vmem:[%s3667 + $0x60] sm:$0xff] %v3680
                %v3682 = vld [vmem:[%s3666 + $0x38] sm:$0xff]
                %3683 = vst [vmem:[%s3667 + $0x70] sm:$0xff] %v3682
              $region133: #{swin_block_forward.2} parent=127 // loop_footer
                %s3665 = sadd.s32 1, %s3661
              $region134: #{swin_block_forward.2} parent=127 // loop_footer_branch
                %3660 = sbr.rel target = $region130
              $region135: #{swin_block_forward.2} parent=127 // loop_exit
                _
            $region128: #{swin_block_forward.2} parent=119 // pred_fallthru
              _
          $region120: #{swin_block_forward.2} parent=115 // pred_fallthru
            _
          %3712 = vnop
        $region116: #{swin_block_forward.2} parent=79 // pred_fallthru
          _
      $region80: #{swin_block_forward.2} parent=5 // pred_fallthru
        _
      %p3713 = scmp.le.s32.totalorder 2, %s28
      // Predicated region
      $region151: #{swin_block_forward.2} parent=5 // pred_check
        %p3714 = pneg %p3713
      $region152: #{swin_block_forward.2} parent=5 // pred_check_branch
        %3716 = sbr.rel (%p3714) target = $region154
      $region153: #{swin_block_forward.2} parent=5 // pred_region
        %s3717 = ssub.s32 %s28, 2
        // Predicated region
        $region155: #{swin_block_forward.2} parent=153 // pred_check
          %p3718 = pneg %p404
        $region156: #{swin_block_forward.2} parent=153 // pred_check_branch
          %3720 = sbr.rel (%p3718) target = $region158
        $region157: #{swin_block_forward.2} parent=153 // pred_region
          %s3721 = sand.u32 %s389, 1
          %s3722 = sand.u32 %s389, 1
          %s3723 = smul.addr %s3722, 64
          %s3724 = scalar_lea.vmem [#allocation15], %s3723
        $region158: #{swin_block_forward.2} parent=153 // pred_fallthru
          _
      $region154: #{swin_block_forward.2} parent=5 // pred_fallthru
        _
    $region6: #{swin_block_forward.2} parent=1 // loop_footer
      %s32 = sadd.s32 1, %s28
    $region7: #{swin_block_forward.2} parent=1 // loop_footer_branch
      %27 = sbr.rel target = $region3
    $region8: #{swin_block_forward.2} parent=1 // loop_exit
      _
    %3725 = vsyncpa [#allocation3], 1
    %s3726 = scalar_lea.sflag [#allocation3], 1
    %3727 = vsyncpa %s3726, 1
    %3728 = vsyncpa [#allocation5], 1
    %3729 = vsyncpa [#allocation8], 1
    %3730 = vsyncpa [#allocation11], 1
    %3731 = vsyncpa [#allocation14], 1

</llo_original>
